<compile_context>
chip_gen: v5e
topology: v5e:2x2
jax: 0.10.0
libtpu: 0.0.40
codegen_flags: <defaults>
</compile_context>

<pallas_src>
import functools

import jax
import jax.numpy as jnp
from jax.experimental import pallas as pl
from jax.experimental.pallas import tpu as pltpu


# ---------------------------------------------------------------------------
# Pallas kernels
# ---------------------------------------------------------------------------

def _conv1x1_fused_kernel(x_ref, w_ref, o_ref, *, relu_cols):
    # x_ref: (TM, Cin)   w_ref: (Cin, Ctot)   o_ref: (TM, Ctot)
    # ReLU is applied only to the first `relu_cols` output channels; the pool
    # stem (last 32 channels) stays linear so the avg-pool can follow.
    y = jnp.dot(x_ref[...], w_ref[...], preferred_element_type=jnp.float32)
    cols = jax.lax.broadcasted_iota(jnp.int32, y.shape, 1)
    o_ref[...] = jnp.where(cols < relu_cols, jnp.maximum(y, 0.0), y)


def _conv3x3_relu_kernel(xf_ref, w_ref, o_ref, *, wp):
    # xf_ref: (1, Hp*Wp + 2, Cin)  zero-padded, spatially flattened image
    # w_ref : (9, Cin, Cout)       3x3 taps in (dy, dx) row-major order
    # o_ref : (1, H*Wp, Cout)      conv outputs for all padded-width columns
    #                              (the 2 border columns per row are garbage
    #                               and are dropped by the wrapper)
    m = o_ref.shape[1]
    cout = o_ref.shape[2]
    acc = jnp.zeros((m, cout), jnp.float32)
    for dy in range(3):
        for dx in range(3):
            s = dy * wp + dx                       # static slice offset
            patch = xf_ref[0, s:s + m, :]          # (m, Cin) contiguous rows
            acc = acc + jnp.dot(patch, w_ref[dy * 3 + dx],
                                preferred_element_type=jnp.float32)
    o_ref[0] = jnp.maximum(acc, 0.0)


def _avgpool3x3_relu_kernel(xf_ref, o_ref, *, wp):
    # Same flattened-padded layout as the 3x3 conv; count_include_pad=True
    # (PyTorch default) -> divide by 9 everywhere.  ReLU fused (the 1x1 conv
    # of the pool branch already ran before pooling, by linearity).
    m = o_ref.shape[1]
    acc = xf_ref[0, 0:m, :].astype(jnp.float32)
    for k in range(1, 9):
        dy, dx = k // 3, k % 3
        s = dy * wp + dx
        acc = acc + xf_ref[0, s:s + m, :]
    o_ref[0] = jnp.maximum(acc * (1.0 / 9.0), 0.0)


# ---------------------------------------------------------------------------
# Wrappers (layout plumbing only; compute stays in the kernels)
# ---------------------------------------------------------------------------

def conv1x1_fused(x_nhwc, w_cat, relu_cols, tm=512):
    """x_nhwc: (N,H,W,Cin), w_cat: (Cin,Ctot).  ReLU on first relu_cols cols."""
    N, H, W, Cin = x_nhwc.shape
    Ctot = w_cat.shape[1]
    M = N * H * W
    x2 = x_nhwc.reshape(M, Cin)

    tm = min(tm, M)
    Mp = pl.cdiv(M, tm) * tm
    if Mp != M:
        x2 = jnp.pad(x2, ((0, Mp - M), (0, 0)))

    out = pl.pallas_call(
        functools.partial(_conv1x1_fused_kernel, relu_cols=relu_cols),
        out_shape=jax.ShapeDtypeStruct((Mp, Ctot), jnp.float32),
        grid=(Mp // tm,),
        in_specs=[
            pl.BlockSpec((tm, Cin), lambda i: (i, 0)),
            pl.BlockSpec((Cin, Ctot), lambda i: (0, 0)),
        ],
        out_specs=pl.BlockSpec((tm, Ctot), lambda i: (i, 0)),
        compiler_params=pltpu.CompilerParams(
            dimension_semantics=("parallel",)),
    )(x2, w_cat)
    return out[:M].reshape(N, H, W, Ctot)


def _pad_and_flatten(x_nhwc):
    """Pad spatially by 1, flatten spatial dims, add 1 guard row front/back."""
    N, H, W, C = x_nhwc.shape
    Hp, Wp = H + 2, W + 2
    xf = jnp.pad(x_nhwc, ((0, 0), (1, 1), (1, 1), (0, 0)))
    xf = xf.reshape(N, Hp * Wp, C)
    xf = jnp.pad(xf, ((0, 0), (1, 1), (0, 0)))     # guards for corner taps
    return xf, Hp, Wp


def conv3x3_relu(x_nhwc, w):
    """x_nhwc: (N,H,W,Cin), w: (3,3,Cin,Cout), pad=1 stride=1, fused ReLU."""
    N, H, W, Cin = x_nhwc.shape
    Cout = w.shape[-1]
    xf, Hp, Wp = _pad_and_flatten(x_nhwc)          # (N, Hp*Wp + 2, Cin)
    L2 = Hp * Wp + 2
    M = H * Wp                                     # centers incl. border cols
    wk = w.reshape(9, Cin, Cout)

    yf = pl.pallas_call(
        functools.partial(_conv3x3_relu_kernel, wp=Wp),
        out_shape=jax.ShapeDtypeStruct((N, M, Cout), jnp.float32),
        grid=(N,),
        in_specs=[
            pl.BlockSpec((1, L2, Cin), lambda n: (n, 0, 0)),
            pl.BlockSpec((9, Cin, Cout), lambda n: (0, 0, 0)),
        ],
        out_specs=pl.BlockSpec((1, M, Cout), lambda n: (n, 0, 0)),
        compiler_params=pltpu.CompilerParams(
            dimension_semantics=("parallel",)),
    )(xf, wk)
    # drop the garbage left/right padding columns
    return yf.reshape(N, H, Wp, Cout)[:, :, 1:W + 1, :]


def avgpool3x3_relu(x_nhwc):
    """3x3 avg pool (stride 1, pad 1, count_include_pad=True) + fused ReLU."""
    N, H, W, C = x_nhwc.shape
    xf, Hp, Wp = _pad_and_flatten(x_nhwc)
    L2 = Hp * Wp + 2
    M = H * Wp

    yf = pl.pallas_call(
        functools.partial(_avgpool3x3_relu_kernel, wp=Wp),
        out_shape=jax.ShapeDtypeStruct((N, M, C), jnp.float32),
        grid=(N,),
        in_specs=[pl.BlockSpec((1, L2, C), lambda n: (n, 0, 0))],
        out_specs=pl.BlockSpec((1, M, C), lambda n: (n, 0, 0)),
        compiler_params=pltpu.CompilerParams(
            dimension_semantics=("parallel",)),
    )(xf)
    return yf.reshape(N, H, Wp, C)[:, :, 1:W + 1, :]


# ---------------------------------------------------------------------------
# InceptionD forward
# ---------------------------------------------------------------------------

def init_params(key, in_channels, pool_features):
    """Deterministic synthetic weights. Conv weights stored HWIO / (Cin,Cout)."""
    ks = jax.random.split(key, 7)
    s = 0.1

    def w1x1(k, cin, cout):
        return jax.random.normal(k, (cin, cout), jnp.float32) * s

    def w3x3(k, cin, cout):
        return jax.random.normal(k, (3, 3, cin, cout), jnp.float32) * s

    return {
        "branch0_1x1": w1x1(ks[0], in_channels, 64),
        "branch1_3x3_1": w1x1(ks[1], in_channels, 64),
        "branch1_3x3_2": w3x3(ks[2], 64, 64),
        "branch2_3x3_1": w1x1(ks[3], in_channels, 64),
        "branch2_3x3_2": w3x3(ks[4], 64, 96),
        "branch2_3x3_3": w3x3(ks[5], 96, 96),
        "branch_pool": w1x1(ks[6], in_channels, pool_features),
    }


@jax.jit
def inception_d_forward(x_nchw, params):
    # NCHW -> NHWC (lane dim = channels)
    x = jnp.transpose(x_nchw, (0, 2, 3, 1))

    # Merge the four 1x1 stems into one lane-dense matmul (Cin -> 224).
    # The pool stem's 1x1 is applied before pooling (valid: both are linear,
    # ReLU comes after the conv) so its columns must NOT be ReLU'd here.
    w_cat = jnp.concatenate(
        [params["branch0_1x1"], params["branch1_3x3_1"],
         params["branch2_3x3_1"], params["branch_pool"]], axis=1)
    pf = params["branch_pool"].shape[1]
    relu_cols = w_cat.shape[1] - pf                  # 64 + 64 + 64 = 192
    stems = conv1x1_fused(x, w_cat, relu_cols)       # (N, H, W, 224)

    branch0 = stems[..., 0:64]
    branch1 = conv3x3_relu(stems[..., 64:128], params["branch1_3x3_2"])
    branch2 = conv3x3_relu(stems[..., 128:192], params["branch2_3x3_2"])
    branch2 = conv3x3_relu(branch2, params["branch2_3x3_3"])
    branch_pool = avgpool3x3_relu(stems[..., 192:192 + pf])

    # TODO(synk): could write branches into channel slices of one NHWC buffer
    # (input_output_aliases) to skip this concat's extra HBM round trip.
    out = jnp.concatenate([branch0, branch1, branch2, branch_pool], axis=-1)
    # NHWC -> NCHW to match torch.cat(outputs, 1)
    return jnp.transpose(out, (0, 3, 1, 2))


# ---------------------------------------------------------------------------
# Pure-JAX reference (for correctness check only)
# ---------------------------------------------------------------------------

def _ref_forward(x_nchw, params):
    x = jnp.transpose(x_nchw, (0, 2, 3, 1))

    def conv(xx, w, kh):
        if w.ndim == 2:
            w = w.reshape(1, 1, *w.shape)
        pad = (kh - 1) // 2
        y = jax.lax.conv_general_dilated(
            xx, w, window_strides=(1, 1),
            padding=[(pad, pad), (pad, pad)],
            dimension_numbers=("NHWC", "HWIO", "NHWC"))
        return jax.nn.relu(y)

    b0 = conv(x, params["branch0_1x1"], 1)
    b1 = conv(conv(x, params["branch1_3x3_1"], 1), params["branch1_3x3_2"], 3)
    b2 = conv(x, params["branch2_3x3_1"], 1)
    b2 = conv(b2, params["branch2_3x3_2"], 3)
    b2 = conv(b2, params["branch2_3x3_3"], 3)
    pooled = jax.lax.reduce_window(
        x, 0.0, jax.lax.add, (1, 3, 3, 1), (1, 1, 1, 1),
        padding=((0, 0), (1, 1), (1, 1), (0, 0))) / 9.0
    bp = conv(pooled, params["branch_pool"], 1)
    out = jnp.concatenate([b0, b1, b2, bp], axis=-1)
    return jnp.transpose(out, (0, 3, 1, 2))


if __name__ == "__main__":
    N, C_IN, H, W = 2, 4, 16, 16
    POOL_FEATURES = 32

    key = jax.random.PRNGKey(0)
    kx, kp = jax.random.split(key)
    x = jax.random.normal(kx, (N, C_IN, H, W), jnp.float32)
    params = init_params(kp, C_IN, POOL_FEATURES)

    out = inception_d_forward(x, params)
    out = jax.block_until_ready(out)

    assert out.shape == (N, 64 + 64 + 96 + POOL_FEATURES, H, W), out.shape

    ref = jax.block_until_ready(_ref_forward(x, params))
    assert jnp.allclose(out, ref, atol=1e-4, rtol=1e-4), float(
        jnp.max(jnp.abs(out - ref)))

    print("KERNEL_OK")
</pallas_src>

<mosaic_0001>
module attributes {stable_mosaic.version = 11 : i64} {
  func.func @_conv1x1_fused_kernel(%arg0: i32, %arg1: memref<512x4xf32, #tpu.memory_space<vmem>>, %arg2: memref<4x224xf32, #tpu.memory_space<vmem>>, %arg3: memref<512x224xf32, #tpu.memory_space<vmem>>) attributes {dimension_semantics = [#tpu.dimension_semantics<parallel>], iteration_bounds = array<i64: 1>, scalar_prefetch = 0 : i64, scratch_operands = 0 : i64, tpu.core_type = #tpu.core_type<tc>, window_params = [{transform_indices = @transform_0, window_bounds = array<i64: 512, 4>}, {pipeline_mode = #tpu.pipeline_mode<synchronous>, transform_indices = @transform_1, window_bounds = array<i64: 4, 224>}, {transform_indices = @transform_2, window_bounds = array<i64: 512, 224>}]} {
    %c0 = arith.constant 0 : index
    %c0_0 = arith.constant 0 : index
    %0 = vector.load %arg1[%c0, %c0_0] : memref<512x4xf32, #tpu.memory_space<vmem>>, vector<512x4xf32>
    %c0_1 = arith.constant 0 : index
    %c0_2 = arith.constant 0 : index
    %1 = vector.load %arg2[%c0_1, %c0_2] : memref<4x224xf32, #tpu.memory_space<vmem>>, vector<4x224xf32>
    %cst = arith.constant dense<0.000000e+00> : vector<512x224xf32>
    %2 = tpu.matmul %0, %1, %cst {dimension_numbers = #tpu.dot_dimension_numbers<[1], [0], [0], [1], [0, 0, 1, 1], [], []>} : vector<512x4xf32>, vector<4x224xf32>, vector<512x224xf32> -> vector<512x224xf32>
    %3 = tpu.iota {dimensions = array<i32: 1>} : vector<512x224xi32>
    %c192_i32 = arith.constant 192 : i32
    %4 = vector.broadcast %c192_i32 : i32 to vector<512x224xi32>
    %5 = arith.cmpi slt, %3, %4 : vector<512x224xi32>
    %cst_3 = arith.constant 0.000000e+00 : f32
    %6 = vector.broadcast %cst_3 : f32 to vector<512x224xf32>
    %7 = arith.maximumf %2, %6 : vector<512x224xf32>
    %8 = arith.select %5, %7, %2 : vector<512x224xi1>, vector<512x224xf32>
    %c0_4 = arith.constant 0 : index
    %c0_5 = arith.constant 0 : index
    %9 = vector.load %arg3[%c0_4, %c0_5] : memref<512x224xf32, #tpu.memory_space<vmem>>, vector<512x224xf32>
    tpu.vector_store %arg3[%c0_4, %c0_5], %8 {strides = array<i32>} : memref<512x224xf32, #tpu.memory_space<vmem>>, vector<512x224xf32>,
    return
  }
  func.func @transform_0(%arg0: i32) -> (i32, i32) {
    %c0_i32 = arith.constant 0 : i32
    %c0_i32_0 = arith.constant 0 : i32
    return %arg0, %c0_i32 : i32, i32
  }
  func.func @transform_1(%arg0: i32) -> (i32, i32) {
    %c0_i32 = arith.constant 0 : i32
    %c0_i32_0 = arith.constant 0 : i32
    %c0_i32_1 = arith.constant 0 : i32
    return %c0_i32, %c0_i32_0 : i32, i32
  }
  func.func @transform_2(%arg0: i32) -> (i32, i32) {
    %c0_i32 = arith.constant 0 : i32
    %c0_i32_0 = arith.constant 0 : i32
    return %arg0, %c0_i32 : i32, i32
  }
}

module attributes {stable_mosaic.version = 11 : i64} {
  func.func @_avgpool3x3_relu_kernel(%arg0: i32, %arg1: memref<1x326x32xf32, #tpu.memory_space<vmem>>, %arg2: memref<1x288x32xf32, #tpu.memory_space<vmem>>) attributes {dimension_semantics = [#tpu.dimension_semantics<parallel>], iteration_bounds = array<i64: 2>, scalar_prefetch = 0 : i64, scratch_operands = 0 : i64, tpu.core_type = #tpu.core_type<tc>, window_params = [{transform_indices = @transform_0, window_bounds = array<i64: 1, 326, 32>}, {transform_indices = @transform_1, window_bounds = array<i64: 1, 288, 32>}]} {
    %c0 = arith.constant 0 : index
    %c0_0 = arith.constant 0 : index
    %c0_1 = arith.constant 0 : index
    %0 = vector.load %arg1[%c0, %c0_0, %c0_1] : memref<1x326x32xf32, #tpu.memory_space<vmem>>, vector<1x288x32xf32>
    %1 = vector.shape_cast %0 : vector<1x288x32xf32> to vector<288x32xf32>
    %c0_2 = arith.constant 0 : index
    %c1 = arith.constant 1 : index
    %c0_3 = arith.constant 0 : index
    %2 = vector.load %arg1[%c0_2, %c1, %c0_3] : memref<1x326x32xf32, #tpu.memory_space<vmem>>, vector<1x288x32xf32>
    %3 = vector.shape_cast %2 : vector<1x288x32xf32> to vector<288x32xf32>
    %4 = arith.addf %1, %3 : vector<288x32xf32>
    %c0_4 = arith.constant 0 : index
    %c2 = arith.constant 2 : index
    %c0_5 = arith.constant 0 : index
    %5 = vector.load %arg1[%c0_4, %c2, %c0_5] : memref<1x326x32xf32, #tpu.memory_space<vmem>>, vector<1x288x32xf32>
    %6 = vector.shape_cast %5 : vector<1x288x32xf32> to vector<288x32xf32>
    %7 = arith.addf %4, %6 : vector<288x32xf32>
    %c0_6 = arith.constant 0 : index
    %c18 = arith.constant 18 : index
    %c0_7 = arith.constant 0 : index
    %8 = vector.load %arg1[%c0_6, %c18, %c0_7] : memref<1x326x32xf32, #tpu.memory_space<vmem>>, vector<1x288x32xf32>
    %9 = vector.shape_cast %8 : vector<1x288x32xf32> to vector<288x32xf32>
    %10 = arith.addf %7, %9 : vector<288x32xf32>
    %c0_8 = arith.constant 0 : index
    %c19 = arith.constant 19 : index
    %c0_9 = arith.constant 0 : index
    %11 = vector.load %arg1[%c0_8, %c19, %c0_9] : memref<1x326x32xf32, #tpu.memory_space<vmem>>, vector<1x288x32xf32>
    %12 = vector.shape_cast %11 : vector<1x288x32xf32> to vector<288x32xf32>
    %13 = arith.addf %10, %12 : vector<288x32xf32>
    %c0_10 = arith.constant 0 : index
    %c20 = arith.constant 20 : index
    %c0_11 = arith.constant 0 : index
    %14 = vector.load %arg1[%c0_10, %c20, %c0_11] : memref<1x326x32xf32, #tpu.memory_space<vmem>>, vector<1x288x32xf32>
    %15 = vector.shape_cast %14 : vector<1x288x32xf32> to vector<288x32xf32>
    %16 = arith.addf %13, %15 : vector<288x32xf32>
    %c0_12 = arith.constant 0 : index
    %c36 = arith.constant 36 : index
    %c0_13 = arith.constant 0 : index
    %17 = vector.load %arg1[%c0_12, %c36, %c0_13] : memref<1x326x32xf32, #tpu.memory_space<vmem>>, vector<1x288x32xf32>
    %18 = vector.shape_cast %17 : vector<1x288x32xf32> to vector<288x32xf32>
    %19 = arith.addf %16, %18 : vector<288x32xf32>
    %c0_14 = arith.constant 0 : index
    %c37 = arith.constant 37 : index
    %c0_15 = arith.constant 0 : index
    %20 = vector.load %arg1[%c0_14, %c37, %c0_15] : memref<1x326x32xf32, #tpu.memory_space<vmem>>, vector<1x288x32xf32>
    %21 = vector.shape_cast %20 : vector<1x288x32xf32> to vector<288x32xf32>
    %22 = arith.addf %19, %21 : vector<288x32xf32>
    %c0_16 = arith.constant 0 : index
    %c38 = arith.constant 38 : index
    %c0_17 = arith.constant 0 : index
    %23 = vector.load %arg1[%c0_16, %c38, %c0_17] : memref<1x326x32xf32, #tpu.memory_space<vmem>>, vector<1x288x32xf32>
    %24 = vector.shape_cast %23 : vector<1x288x32xf32> to vector<288x32xf32>
    %25 = arith.addf %22, %24 : vector<288x32xf32>
    %cst = arith.constant 0.111111112 : f32
    %26 = vector.broadcast %cst : f32 to vector<288x32xf32>
    %27 = arith.mulf %25, %26 : vector<288x32xf32>
    %cst_18 = arith.constant 0.000000e+00 : f32
    %28 = vector.broadcast %cst_18 : f32 to vector<288x32xf32>
    %29 = arith.maximumf %27, %28 : vector<288x32xf32>
    %c0_19 = arith.constant 0 : index
    %c0_20 = arith.constant 0 : index
    %c0_21 = arith.constant 0 : index
    %30 = vector.load %arg2[%c0_19, %c0_20, %c0_21] : memref<1x288x32xf32, #tpu.memory_space<vmem>>, vector<1x288x32xf32>
    %31 = vector.shape_cast %30 : vector<1x288x32xf32> to vector<288x32xf32>
    %32 = vector.shape_cast %29 : vector<288x32xf32> to vector<1x288x32xf32>
    tpu.vector_store %arg2[%c0_19, %c0_20, %c0_21], %32 {strides = array<i32>} : memref<1x288x32xf32, #tpu.memory_space<vmem>>, vector<1x288x32xf32>,
    return
  }
  func.func @transform_0(%arg0: i32) -> (i32, i32, i32) {
    %c0_i32 = arith.constant 0 : i32
    %c0_i32_0 = arith.constant 0 : i32
    %c0_i32_1 = arith.constant 0 : i32
    return %arg0, %c0_i32, %c0_i32_0 : i32, i32, i32
  }
  func.func @transform_1(%arg0: i32) -> (i32, i32, i32) {
    %c0_i32 = arith.constant 0 : i32
    %c0_i32_0 = arith.constant 0 : i32
    %c0_i32_1 = arith.constant 0 : i32
    return %arg0, %c0_i32, %c0_i32_0 : i32, i32, i32
  }
}

module attributes {stable_mosaic.version = 11 : i64} {
  func.func @_conv3x3_relu_kernel(%arg0: i32, %arg1: memref<1x326x64xf32, #tpu.memory_space<vmem>>, %arg2: memref<9x64x96xf32, #tpu.memory_space<vmem>>, %arg3: memref<1x288x96xf32, #tpu.memory_space<vmem>>) attributes {dimension_semantics = [#tpu.dimension_semantics<parallel>], iteration_bounds = array<i64: 2>, scalar_prefetch = 0 : i64, scratch_operands = 0 : i64, tpu.core_type = #tpu.core_type<tc>, window_params = [{transform_indices = @transform_0, window_bounds = array<i64: 1, 326, 64>}, {pipeline_mode = #tpu.pipeline_mode<synchronous>, transform_indices = @transform_1, window_bounds = array<i64: 9, 64, 96>}, {transform_indices = @transform_2, window_bounds = array<i64: 1, 288, 96>}]} {
    %cst = arith.constant 0.000000e+00 : f32
    %0 = vector.broadcast %cst : f32 to vector<288x96xf32>
    %c0 = arith.constant 0 : index
    %c0_0 = arith.constant 0 : index
    %c0_1 = arith.constant 0 : index
    %1 = vector.load %arg1[%c0, %c0_0, %c0_1] : memref<1x326x64xf32, #tpu.memory_space<vmem>>, vector<1x288x64xf32>
    %2 = vector.shape_cast %1 : vector<1x288x64xf32> to vector<288x64xf32>
    %c0_2 = arith.constant 0 : index
    %c0_3 = arith.constant 0 : index
    %c0_4 = arith.constant 0 : index
    %3 = vector.load %arg2[%c0_2, %c0_3, %c0_4] : memref<9x64x96xf32, #tpu.memory_space<vmem>>, vector<1x64x96xf32>
    %4 = vector.shape_cast %3 : vector<1x64x96xf32> to vector<64x96xf32>
    %cst_5 = arith.constant dense<0.000000e+00> : vector<288x96xf32>
    %5 = tpu.matmul %2, %4, %cst_5 {dimension_numbers = #tpu.dot_dimension_numbers<[1], [0], [0], [1], [0, 0, 1, 1], [], []>} : vector<288x64xf32>, vector<64x96xf32>, vector<288x96xf32> -> vector<288x96xf32>
    %6 = arith.addf %0, %5 : vector<288x96xf32>
    %c0_6 = arith.constant 0 : index
    %c1 = arith.constant 1 : index
    %c0_7 = arith.constant 0 : index
    %7 = vector.load %arg1[%c0_6, %c1, %c0_7] : memref<1x326x64xf32, #tpu.memory_space<vmem>>, vector<1x288x64xf32>
    %8 = vector.shape_cast %7 : vector<1x288x64xf32> to vector<288x64xf32>
    %c1_8 = arith.constant 1 : index
    %c0_9 = arith.constant 0 : index
    %c0_10 = arith.constant 0 : index
    %9 = vector.load %arg2[%c1_8, %c0_9, %c0_10] : memref<9x64x96xf32, #tpu.memory_space<vmem>>, vector<1x64x96xf32>
    %10 = vector.shape_cast %9 : vector<1x64x96xf32> to vector<64x96xf32>
    %cst_11 = arith.constant dense<0.000000e+00> : vector<288x96xf32>
    %11 = tpu.matmul %8, %10, %cst_11 {dimension_numbers = #tpu.dot_dimension_numbers<[1], [0], [0], [1], [0, 0, 1, 1], [], []>} : vector<288x64xf32>, vector<64x96xf32>, vector<288x96xf32> -> vector<288x96xf32>
    %12 = arith.addf %6, %11 : vector<288x96xf32>
    %c0_12 = arith.constant 0 : index
    %c2 = arith.constant 2 : index
    %c0_13 = arith.constant 0 : index
    %13 = vector.load %arg1[%c0_12, %c2, %c0_13] : memref<1x326x64xf32, #tpu.memory_space<vmem>>, vector<1x288x64xf32>
    %14 = vector.shape_cast %13 : vector<1x288x64xf32> to vector<288x64xf32>
    %c2_14 = arith.constant 2 : index
    %c0_15 = arith.constant 0 : index
    %c0_16 = arith.constant 0 : index
    %15 = vector.load %arg2[%c2_14, %c0_15, %c0_16] : memref<9x64x96xf32, #tpu.memory_space<vmem>>, vector<1x64x96xf32>
    %16 = vector.shape_cast %15 : vector<1x64x96xf32> to vector<64x96xf32>
    %cst_17 = arith.constant dense<0.000000e+00> : vector<288x96xf32>
    %17 = tpu.matmul %14, %16, %cst_17 {dimension_numbers = #tpu.dot_dimension_numbers<[1], [0], [0], [1], [0, 0, 1, 1], [], []>} : vector<288x64xf32>, vector<64x96xf32>, vector<288x96xf32> -> vector<288x96xf32>
    %18 = arith.addf %12, %17 : vector<288x96xf32>
    %c0_18 = arith.constant 0 : index
    %c18 = arith.constant 18 : index
    %c0_19 = arith.constant 0 : index
    %19 = vector.load %arg1[%c0_18, %c18, %c0_19] : memref<1x326x64xf32, #tpu.memory_space<vmem>>, vector<1x288x64xf32>
    %20 = vector.shape_cast %19 : vector<1x288x64xf32> to vector<288x64xf32>
    %c3 = arith.constant 3 : index
    %c0_20 = arith.constant 0 : index
    %c0_21 = arith.constant 0 : index
    %21 = vector.load %arg2[%c3, %c0_20, %c0_21] : memref<9x64x96xf32, #tpu.memory_space<vmem>>, vector<1x64x96xf32>
    %22 = vector.shape_cast %21 : vector<1x64x96xf32> to vector<64x96xf32>
    %cst_22 = arith.constant dense<0.000000e+00> : vector<288x96xf32>
    %23 = tpu.matmul %20, %22, %cst_22 {dimension_numbers = #tpu.dot_dimension_numbers<[1], [0], [0], [1], [0, 0, 1, 1], [], []>} : vector<288x64xf32>, vector<64x96xf32>, vector<288x96xf32> -> vector<288x96xf32>
    %24 = arith.addf %18, %23 : vector<288x96xf32>
    %c0_23 = arith.constant 0 : index
    %c19 = arith.constant 19 : index
    %c0_24 = arith.constant 0 : index
    %25 = vector.load %arg1[%c0_23, %c19, %c0_24] : memref<1x326x64xf32, #tpu.memory_space<vmem>>, vector<1x288x64xf32>
    %26 = vector.shape_cast %25 : vector<1x288x64xf32> to vector<288x64xf32>
    %c4 = arith.constant 4 : index
    %c0_25 = arith.constant 0 : index
    %c0_26 = arith.constant 0 : index
    %27 = vector.load %arg2[%c4, %c0_25, %c0_26] : memref<9x64x96xf32, #tpu.memory_space<vmem>>, vector<1x64x96xf32>
    %28 = vector.shape_cast %27 : vector<1x64x96xf32> to vector<64x96xf32>
    %cst_27 = arith.constant dense<0.000000e+00> : vector<288x96xf32>
    %29 = tpu.matmul %26, %28, %cst_27 {dimension_numbers = #tpu.dot_dimension_numbers<[1], [0], [0], [1], [0, 0, 1, 1], [], []>} : vector<288x64xf32>, vector<64x96xf32>, vector<288x96xf32> -> vector<288x96xf32>
    %30 = arith.addf %24, %29 : vector<288x96xf32>
    %c0_28 = arith.constant 0 : index
    %c20 = arith.constant 20 : index
    %c0_29 = arith.constant 0 : index
    %31 = vector.load %arg1[%c0_28, %c20, %c0_29] : memref<1x326x64xf32, #tpu.memory_space<vmem>>, vector<1x288x64xf32>
    %32 = vector.shape_cast %31 : vector<1x288x64xf32> to vector<288x64xf32>
    %c5 = arith.constant 5 : index
    %c0_30 = arith.constant 0 : index
    %c0_31 = arith.constant 0 : index
    %33 = vector.load %arg2[%c5, %c0_30, %c0_31] : memref<9x64x96xf32, #tpu.memory_space<vmem>>, vector<1x64x96xf32>
    %34 = vector.shape_cast %33 : vector<1x64x96xf32> to vector<64x96xf32>
    %cst_32 = arith.constant dense<0.000000e+00> : vector<288x96xf32>
    %35 = tpu.matmul %32, %34, %cst_32 {dimension_numbers = #tpu.dot_dimension_numbers<[1], [0], [0], [1], [0, 0, 1, 1], [], []>} : vector<288x64xf32>, vector<64x96xf32>, vector<288x96xf32> -> vector<288x96xf32>
    %36 = arith.addf %30, %35 : vector<288x96xf32>
    %c0_33 = arith.constant 0 : index
    %c36 = arith.constant 36 : index
    %c0_34 = arith.constant 0 : index
    %37 = vector.load %arg1[%c0_33, %c36, %c0_34] : memref<1x326x64xf32, #tpu.memory_space<vmem>>, vector<1x288x64xf32>
    %38 = vector.shape_cast %37 : vector<1x288x64xf32> to vector<288x64xf32>
    %c6 = arith.constant 6 : index
    %c0_35 = arith.constant 0 : index
    %c0_36 = arith.constant 0 : index
    %39 = vector.load %arg2[%c6, %c0_35, %c0_36] : memref<9x64x96xf32, #tpu.memory_space<vmem>>, vector<1x64x96xf32>
    %40 = vector.shape_cast %39 : vector<1x64x96xf32> to vector<64x96xf32>
    %cst_37 = arith.constant dense<0.000000e+00> : vector<288x96xf32>
    %41 = tpu.matmul %38, %40, %cst_37 {dimension_numbers = #tpu.dot_dimension_numbers<[1], [0], [0], [1], [0, 0, 1, 1], [], []>} : vector<288x64xf32>, vector<64x96xf32>, vector<288x96xf32> -> vector<288x96xf32>
    %42 = arith.addf %36, %41 : vector<288x96xf32>
    %c0_38 = arith.constant 0 : index
    %c37 = arith.constant 37 : index
    %c0_39 = arith.constant 0 : index
    %43 = vector.load %arg1[%c0_38, %c37, %c0_39] : memref<1x326x64xf32, #tpu.memory_space<vmem>>, vector<1x288x64xf32>
    %44 = vector.shape_cast %43 : vector<1x288x64xf32> to vector<288x64xf32>
    %c7 = arith.constant 7 : index
    %c0_40 = arith.constant 0 : index
    %c0_41 = arith.constant 0 : index
    %45 = vector.load %arg2[%c7, %c0_40, %c0_41] : memref<9x64x96xf32, #tpu.memory_space<vmem>>, vector<1x64x96xf32>
    %46 = vector.shape_cast %45 : vector<1x64x96xf32> to vector<64x96xf32>
    %cst_42 = arith.constant dense<0.000000e+00> : vector<288x96xf32>
    %47 = tpu.matmul %44, %46, %cst_42 {dimension_numbers = #tpu.dot_dimension_numbers<[1], [0], [0], [1], [0, 0, 1, 1], [], []>} : vector<288x64xf32>, vector<64x96xf32>, vector<288x96xf32> -> vector<288x96xf32>
    %48 = arith.addf %42, %47 : vector<288x96xf32>
    %c0_43 = arith.constant 0 : index
    %c38 = arith.constant 38 : index
    %c0_44 = arith.constant 0 : index
    %49 = vector.load %arg1[%c0_43, %c38, %c0_44] : memref<1x326x64xf32, #tpu.memory_space<vmem>>, vector<1x288x64xf32>
    %50 = vector.shape_cast %49 : vector<1x288x64xf32> to vector<288x64xf32>
    %c8 = arith.constant 8 : index
    %c0_45 = arith.constant 0 : index
    %c0_46 = arith.constant 0 : index
    %51 = vector.load %arg2[%c8, %c0_45, %c0_46] : memref<9x64x96xf32, #tpu.memory_space<vmem>>, vector<1x64x96xf32>
    %52 = vector.shape_cast %51 : vector<1x64x96xf32> to vector<64x96xf32>
    %cst_47 = arith.constant dense<0.000000e+00> : vector<288x96xf32>
    %53 = tpu.matmul %50, %52, %cst_47 {dimension_numbers = #tpu.dot_dimension_numbers<[1], [0], [0], [1], [0, 0, 1, 1], [], []>} : vector<288x64xf32>, vector<64x96xf32>, vector<288x96xf32> -> vector<288x96xf32>
    %54 = arith.addf %48, %53 : vector<288x96xf32>
    %cst_48 = arith.constant 0.000000e+00 : f32
    %55 = vector.broadcast %cst_48 : f32 to vector<288x96xf32>
    %56 = arith.maximumf %54, %55 : vector<288x96xf32>
    %c0_49 = arith.constant 0 : index
    %c0_50 = arith.constant 0 : index
    %c0_51 = arith.constant 0 : index
    %57 = vector.load %arg3[%c0_49, %c0_50, %c0_51] : memref<1x288x96xf32, #tpu.memory_space<vmem>>, vector<1x288x96xf32>
    %58 = vector.shape_cast %57 : vector<1x288x96xf32> to vector<288x96xf32>
    %59 = vector.shape_cast %56 : vector<288x96xf32> to vector<1x288x96xf32>
    tpu.vector_store %arg3[%c0_49, %c0_50, %c0_51], %59 {strides = array<i32>} : memref<1x288x96xf32, #tpu.memory_space<vmem>>, vector<1x288x96xf32>,
    return
  }
  func.func @transform_0(%arg0: i32) -> (i32, i32, i32) {
    %c0_i32 = arith.constant 0 : i32
    %c0_i32_0 = arith.constant 0 : i32
    %c0_i32_1 = arith.constant 0 : i32
    return %arg0, %c0_i32, %c0_i32_0 : i32, i32, i32
  }
  func.func @transform_1(%arg0: i32) -> (i32, i32, i32) {
    %c0_i32 = arith.constant 0 : i32
    %c0_i32_0 = arith.constant 0 : i32
    %c0_i32_1 = arith.constant 0 : i32
    %c0_i32_2 = arith.constant 0 : i32
    return %c0_i32, %c0_i32_0, %c0_i32_1 : i32, i32, i32
  }
  func.func @transform_2(%arg0: i32) -> (i32, i32, i32) {
    %c0_i32 = arith.constant 0 : i32
    %c0_i32_0 = arith.constant 0 : i32
    %c0_i32_1 = arith.constant 0 : i32
    return %arg0, %c0_i32, %c0_i32_0 : i32, i32, i32
  }
}

module attributes {stable_mosaic.version = 11 : i64} {
  func.func @_conv3x3_relu_kernel(%arg0: i32, %arg1: memref<1x326x64xf32, #tpu.memory_space<vmem>>, %arg2: memref<9x64x64xf32, #tpu.memory_space<vmem>>, %arg3: memref<1x288x64xf32, #tpu.memory_space<vmem>>) attributes {dimension_semantics = [#tpu.dimension_semantics<parallel>], iteration_bounds = array<i64: 2>, scalar_prefetch = 0 : i64, scratch_operands = 0 : i64, tpu.core_type = #tpu.core_type<tc>, window_params = [{transform_indices = @transform_0, window_bounds = array<i64: 1, 326, 64>}, {pipeline_mode = #tpu.pipeline_mode<synchronous>, transform_indices = @transform_1, window_bounds = array<i64: 9, 64, 64>}, {transform_indices = @transform_2, window_bounds = array<i64: 1, 288, 64>}]} {
    %cst = arith.constant 0.000000e+00 : f32
    %0 = vector.broadcast %cst : f32 to vector<288x64xf32>
    %c0 = arith.constant 0 : index
    %c0_0 = arith.constant 0 : index
    %c0_1 = arith.constant 0 : index
    %1 = vector.load %arg1[%c0, %c0_0, %c0_1] : memref<1x326x64xf32, #tpu.memory_space<vmem>>, vector<1x288x64xf32>
    %2 = vector.shape_cast %1 : vector<1x288x64xf32> to vector<288x64xf32>
    %c0_2 = arith.constant 0 : index
    %c0_3 = arith.constant 0 : index
    %c0_4 = arith.constant 0 : index
    %3 = vector.load %arg2[%c0_2, %c0_3, %c0_4] : memref<9x64x64xf32, #tpu.memory_space<vmem>>, vector<1x64x64xf32>
    %4 = vector.shape_cast %3 : vector<1x64x64xf32> to vector<64x64xf32>
    %cst_5 = arith.constant dense<0.000000e+00> : vector<288x64xf32>
    %5 = tpu.matmul %2, %4, %cst_5 {dimension_numbers = #tpu.dot_dimension_numbers<[1], [0], [0], [1], [0, 0, 1, 1], [], []>} : vector<288x64xf32>, vector<64x64xf32>, vector<288x64xf32> -> vector<288x64xf32>
    %6 = arith.addf %0, %5 : vector<288x64xf32>
    %c0_6 = arith.constant 0 : index
    %c1 = arith.constant 1 : index
    %c0_7 = arith.constant 0 : index
    %7 = vector.load %arg1[%c0_6, %c1, %c0_7] : memref<1x326x64xf32, #tpu.memory_space<vmem>>, vector<1x288x64xf32>
    %8 = vector.shape_cast %7 : vector<1x288x64xf32> to vector<288x64xf32>
    %c1_8 = arith.constant 1 : index
    %c0_9 = arith.constant 0 : index
    %c0_10 = arith.constant 0 : index
    %9 = vector.load %arg2[%c1_8, %c0_9, %c0_10] : memref<9x64x64xf32, #tpu.memory_space<vmem>>, vector<1x64x64xf32>
    %10 = vector.shape_cast %9 : vector<1x64x64xf32> to vector<64x64xf32>
    %cst_11 = arith.constant dense<0.000000e+00> : vector<288x64xf32>
    %11 = tpu.matmul %8, %10, %cst_11 {dimension_numbers = #tpu.dot_dimension_numbers<[1], [0], [0], [1], [0, 0, 1, 1], [], []>} : vector<288x64xf32>, vector<64x64xf32>, vector<288x64xf32> -> vector<288x64xf32>
    %12 = arith.addf %6, %11 : vector<288x64xf32>
    %c0_12 = arith.constant 0 : index
    %c2 = arith.constant 2 : index
    %c0_13 = arith.constant 0 : index
    %13 = vector.load %arg1[%c0_12, %c2, %c0_13] : memref<1x326x64xf32, #tpu.memory_space<vmem>>, vector<1x288x64xf32>
    %14 = vector.shape_cast %13 : vector<1x288x64xf32> to vector<288x64xf32>
    %c2_14 = arith.constant 2 : index
    %c0_15 = arith.constant 0 : index
    %c0_16 = arith.constant 0 : index
    %15 = vector.load %arg2[%c2_14, %c0_15, %c0_16] : memref<9x64x64xf32, #tpu.memory_space<vmem>>, vector<1x64x64xf32>
    %16 = vector.shape_cast %15 : vector<1x64x64xf32> to vector<64x64xf32>
    %cst_17 = arith.constant dense<0.000000e+00> : vector<288x64xf32>
    %17 = tpu.matmul %14, %16, %cst_17 {dimension_numbers = #tpu.dot_dimension_numbers<[1], [0], [0], [1], [0, 0, 1, 1], [], []>} : vector<288x64xf32>, vector<64x64xf32>, vector<288x64xf32> -> vector<288x64xf32>
    %18 = arith.addf %12, %17 : vector<288x64xf32>
    %c0_18 = arith.constant 0 : index
    %c18 = arith.constant 18 : index
    %c0_19 = arith.constant 0 : index
    %19 = vector.load %arg1[%c0_18, %c18, %c0_19] : memref<1x326x64xf32, #tpu.memory_space<vmem>>, vector<1x288x64xf32>
    %20 = vector.shape_cast %19 : vector<1x288x64xf32> to vector<288x64xf32>
    %c3 = arith.constant 3 : index
    %c0_20 = arith.constant 0 : index
    %c0_21 = arith.constant 0 : index
    %21 = vector.load %arg2[%c3, %c0_20, %c0_21] : memref<9x64x64xf32, #tpu.memory_space<vmem>>, vector<1x64x64xf32>
    %22 = vector.shape_cast %21 : vector<1x64x64xf32> to vector<64x64xf32>
    %cst_22 = arith.constant dense<0.000000e+00> : vector<288x64xf32>
    %23 = tpu.matmul %20, %22, %cst_22 {dimension_numbers = #tpu.dot_dimension_numbers<[1], [0], [0], [1], [0, 0, 1, 1], [], []>} : vector<288x64xf32>, vector<64x64xf32>, vector<288x64xf32> -> vector<288x64xf32>
    %24 = arith.addf %18, %23 : vector<288x64xf32>
    %c0_23 = arith.constant 0 : index
    %c19 = arith.constant 19 : index
    %c0_24 = arith.constant 0 : index
    %25 = vector.load %arg1[%c0_23, %c19, %c0_24] : memref<1x326x64xf32, #tpu.memory_space<vmem>>, vector<1x288x64xf32>
    %26 = vector.shape_cast %25 : vector<1x288x64xf32> to vector<288x64xf32>
    %c4 = arith.constant 4 : index
    %c0_25 = arith.constant 0 : index
    %c0_26 = arith.constant 0 : index
    %27 = vector.load %arg2[%c4, %c0_25, %c0_26] : memref<9x64x64xf32, #tpu.memory_space<vmem>>, vector<1x64x64xf32>
    %28 = vector.shape_cast %27 : vector<1x64x64xf32> to vector<64x64xf32>
    %cst_27 = arith.constant dense<0.000000e+00> : vector<288x64xf32>
    %29 = tpu.matmul %26, %28, %cst_27 {dimension_numbers = #tpu.dot_dimension_numbers<[1], [0], [0], [1], [0, 0, 1, 1], [], []>} : vector<288x64xf32>, vector<64x64xf32>, vector<288x64xf32> -> vector<288x64xf32>
    %30 = arith.addf %24, %29 : vector<288x64xf32>
    %c0_28 = arith.constant 0 : index
    %c20 = arith.constant 20 : index
    %c0_29 = arith.constant 0 : index
    %31 = vector.load %arg1[%c0_28, %c20, %c0_29] : memref<1x326x64xf32, #tpu.memory_space<vmem>>, vector<1x288x64xf32>
    %32 = vector.shape_cast %31 : vector<1x288x64xf32> to vector<288x64xf32>
    %c5 = arith.constant 5 : index
    %c0_30 = arith.constant 0 : index
    %c0_31 = arith.constant 0 : index
    %33 = vector.load %arg2[%c5, %c0_30, %c0_31] : memref<9x64x64xf32, #tpu.memory_space<vmem>>, vector<1x64x64xf32>
    %34 = vector.shape_cast %33 : vector<1x64x64xf32> to vector<64x64xf32>
    %cst_32 = arith.constant dense<0.000000e+00> : vector<288x64xf32>
    %35 = tpu.matmul %32, %34, %cst_32 {dimension_numbers = #tpu.dot_dimension_numbers<[1], [0], [0], [1], [0, 0, 1, 1], [], []>} : vector<288x64xf32>, vector<64x64xf32>, vector<288x64xf32> -> vector<288x64xf32>
    %36 = arith.addf %30, %35 : vector<288x64xf32>
    %c0_33 = arith.constant 0 : index
    %c36 = arith.constant 36 : index
    %c0_34 = arith.constant 0 : index
    %37 = vector.load %arg1[%c0_33, %c36, %c0_34] : memref<1x326x64xf32, #tpu.memory_space<vmem>>, vector<1x288x64xf32>
    %38 = vector.shape_cast %37 : vector<1x288x64xf32> to vector<288x64xf32>
    %c6 = arith.constant 6 : index
    %c0_35 = arith.constant 0 : index
    %c0_36 = arith.constant 0 : index
    %39 = vector.load %arg2[%c6, %c0_35, %c0_36] : memref<9x64x64xf32, #tpu.memory_space<vmem>>, vector<1x64x64xf32>
    %40 = vector.shape_cast %39 : vector<1x64x64xf32> to vector<64x64xf32>
    %cst_37 = arith.constant dense<0.000000e+00> : vector<288x64xf32>
    %41 = tpu.matmul %38, %40, %cst_37 {dimension_numbers = #tpu.dot_dimension_numbers<[1], [0], [0], [1], [0, 0, 1, 1], [], []>} : vector<288x64xf32>, vector<64x64xf32>, vector<288x64xf32> -> vector<288x64xf32>
    %42 = arith.addf %36, %41 : vector<288x64xf32>
    %c0_38 = arith.constant 0 : index
    %c37 = arith.constant 37 : index
    %c0_39 = arith.constant 0 : index
    %43 = vector.load %arg1[%c0_38, %c37, %c0_39] : memref<1x326x64xf32, #tpu.memory_space<vmem>>, vector<1x288x64xf32>
    %44 = vector.shape_cast %43 : vector<1x288x64xf32> to vector<288x64xf32>
    %c7 = arith.constant 7 : index
    %c0_40 = arith.constant 0 : index
    %c0_41 = arith.constant 0 : index
    %45 = vector.load %arg2[%c7, %c0_40, %c0_41] : memref<9x64x64xf32, #tpu.memory_space<vmem>>, vector<1x64x64xf32>
    %46 = vector.shape_cast %45 : vector<1x64x64xf32> to vector<64x64xf32>
    %cst_42 = arith.constant dense<0.000000e+00> : vector<288x64xf32>
    %47 = tpu.matmul %44, %46, %cst_42 {dimension_numbers = #tpu.dot_dimension_numbers<[1], [0], [0], [1], [0, 0, 1, 1], [], []>} : vector<288x64xf32>, vector<64x64xf32>, vector<288x64xf32> -> vector<288x64xf32>
    %48 = arith.addf %42, %47 : vector<288x64xf32>
    %c0_43 = arith.constant 0 : index
    %c38 = arith.constant 38 : index
    %c0_44 = arith.constant 0 : index
    %49 = vector.load %arg1[%c0_43, %c38, %c0_44] : memref<1x326x64xf32, #tpu.memory_space<vmem>>, vector<1x288x64xf32>
    %50 = vector.shape_cast %49 : vector<1x288x64xf32> to vector<288x64xf32>
    %c8 = arith.constant 8 : index
    %c0_45 = arith.constant 0 : index
    %c0_46 = arith.constant 0 : index
    %51 = vector.load %arg2[%c8, %c0_45, %c0_46] : memref<9x64x64xf32, #tpu.memory_space<vmem>>, vector<1x64x64xf32>
    %52 = vector.shape_cast %51 : vector<1x64x64xf32> to vector<64x64xf32>
    %cst_47 = arith.constant dense<0.000000e+00> : vector<288x64xf32>
    %53 = tpu.matmul %50, %52, %cst_47 {dimension_numbers = #tpu.dot_dimension_numbers<[1], [0], [0], [1], [0, 0, 1, 1], [], []>} : vector<288x64xf32>, vector<64x64xf32>, vector<288x64xf32> -> vector<288x64xf32>
    %54 = arith.addf %48, %53 : vector<288x64xf32>
    %cst_48 = arith.constant 0.000000e+00 : f32
    %55 = vector.broadcast %cst_48 : f32 to vector<288x64xf32>
    %56 = arith.maximumf %54, %55 : vector<288x64xf32>
    %c0_49 = arith.constant 0 : index
    %c0_50 = arith.constant 0 : index
    %c0_51 = arith.constant 0 : index
    %57 = vector.load %arg3[%c0_49, %c0_50, %c0_51] : memref<1x288x64xf32, #tpu.memory_space<vmem>>, vector<1x288x64xf32>
    %58 = vector.shape_cast %57 : vector<1x288x64xf32> to vector<288x64xf32>
    %59 = vector.shape_cast %56 : vector<288x64xf32> to vector<1x288x64xf32>
    tpu.vector_store %arg3[%c0_49, %c0_50, %c0_51], %59 {strides = array<i32>} : memref<1x288x64xf32, #tpu.memory_space<vmem>>, vector<1x288x64xf32>,
    return
  }
  func.func @transform_0(%arg0: i32) -> (i32, i32, i32) {
    %c0_i32 = arith.constant 0 : i32
    %c0_i32_0 = arith.constant 0 : i32
    %c0_i32_1 = arith.constant 0 : i32
    return %arg0, %c0_i32, %c0_i32_0 : i32, i32, i32
  }
  func.func @transform_1(%arg0: i32) -> (i32, i32, i32) {
    %c0_i32 = arith.constant 0 : i32
    %c0_i32_0 = arith.constant 0 : i32
    %c0_i32_1 = arith.constant 0 : i32
    %c0_i32_2 = arith.constant 0 : i32
    return %c0_i32, %c0_i32_0, %c0_i32_1 : i32, i32, i32
  }
  func.func @transform_2(%arg0: i32) -> (i32, i32, i32) {
    %c0_i32 = arith.constant 0 : i32
    %c0_i32_0 = arith.constant 0 : i32
    %c0_i32_1 = arith.constant 0 : i32
    return %arg0, %c0_i32, %c0_i32_0 : i32, i32, i32
  }
}

module attributes {stable_mosaic.version = 11 : i64} {
  func.func @_conv3x3_relu_kernel(%arg0: i32, %arg1: memref<1x326x96xf32, #tpu.memory_space<vmem>>, %arg2: memref<9x96x96xf32, #tpu.memory_space<vmem>>, %arg3: memref<1x288x96xf32, #tpu.memory_space<vmem>>) attributes {dimension_semantics = [#tpu.dimension_semantics<parallel>], iteration_bounds = array<i64: 2>, scalar_prefetch = 0 : i64, scratch_operands = 0 : i64, tpu.core_type = #tpu.core_type<tc>, window_params = [{transform_indices = @transform_0, window_bounds = array<i64: 1, 326, 96>}, {pipeline_mode = #tpu.pipeline_mode<synchronous>, transform_indices = @transform_1, window_bounds = array<i64: 9, 96, 96>}, {transform_indices = @transform_2, window_bounds = array<i64: 1, 288, 96>}]} {
    %cst = arith.constant 0.000000e+00 : f32
    %0 = vector.broadcast %cst : f32 to vector<288x96xf32>
    %c0 = arith.constant 0 : index
    %c0_0 = arith.constant 0 : index
    %c0_1 = arith.constant 0 : index
    %1 = vector.load %arg1[%c0, %c0_0, %c0_1] : memref<1x326x96xf32, #tpu.memory_space<vmem>>, vector<1x288x96xf32>
    %2 = vector.shape_cast %1 : vector<1x288x96xf32> to vector<288x96xf32>
    %c0_2 = arith.constant 0 : index
    %c0_3 = arith.constant 0 : index
    %c0_4 = arith.constant 0 : index
    %3 = vector.load %arg2[%c0_2, %c0_3, %c0_4] : memref<9x96x96xf32, #tpu.memory_space<vmem>>, vector<1x96x96xf32>
    %4 = vector.shape_cast %3 : vector<1x96x96xf32> to vector<96x96xf32>
    %cst_5 = arith.constant dense<0.000000e+00> : vector<288x96xf32>
    %5 = tpu.matmul %2, %4, %cst_5 {dimension_numbers = #tpu.dot_dimension_numbers<[1], [0], [0], [1], [0, 0, 1, 1], [], []>} : vector<288x96xf32>, vector<96x96xf32>, vector<288x96xf32> -> vector<288x96xf32>
    %6 = arith.addf %0, %5 : vector<288x96xf32>
    %c0_6 = arith.constant 0 : index
    %c1 = arith.constant 1 : index
    %c0_7 = arith.constant 0 : index
    %7 = vector.load %arg1[%c0_6, %c1, %c0_7] : memref<1x326x96xf32, #tpu.memory_space<vmem>>, vector<1x288x96xf32>
    %8 = vector.shape_cast %7 : vector<1x288x96xf32> to vector<288x96xf32>
    %c1_8 = arith.constant 1 : index
    %c0_9 = arith.constant 0 : index
    %c0_10 = arith.constant 0 : index
    %9 = vector.load %arg2[%c1_8, %c0_9, %c0_10] : memref<9x96x96xf32, #tpu.memory_space<vmem>>, vector<1x96x96xf32>
    %10 = vector.shape_cast %9 : vector<1x96x96xf32> to vector<96x96xf32>
    %cst_11 = arith.constant dense<0.000000e+00> : vector<288x96xf32>
    %11 = tpu.matmul %8, %10, %cst_11 {dimension_numbers = #tpu.dot_dimension_numbers<[1], [0], [0], [1], [0, 0, 1, 1], [], []>} : vector<288x96xf32>, vector<96x96xf32>, vector<288x96xf32> -> vector<288x96xf32>
    %12 = arith.addf %6, %11 : vector<288x96xf32>
    %c0_12 = arith.constant 0 : index
    %c2 = arith.constant 2 : index
    %c0_13 = arith.constant 0 : index
    %13 = vector.load %arg1[%c0_12, %c2, %c0_13] : memref<1x326x96xf32, #tpu.memory_space<vmem>>, vector<1x288x96xf32>
    %14 = vector.shape_cast %13 : vector<1x288x96xf32> to vector<288x96xf32>
    %c2_14 = arith.constant 2 : index
    %c0_15 = arith.constant 0 : index
    %c0_16 = arith.constant 0 : index
    %15 = vector.load %arg2[%c2_14, %c0_15, %c0_16] : memref<9x96x96xf32, #tpu.memory_space<vmem>>, vector<1x96x96xf32>
    %16 = vector.shape_cast %15 : vector<1x96x96xf32> to vector<96x96xf32>
    %cst_17 = arith.constant dense<0.000000e+00> : vector<288x96xf32>
    %17 = tpu.matmul %14, %16, %cst_17 {dimension_numbers = #tpu.dot_dimension_numbers<[1], [0], [0], [1], [0, 0, 1, 1], [], []>} : vector<288x96xf32>, vector<96x96xf32>, vector<288x96xf32> -> vector<288x96xf32>
    %18 = arith.addf %12, %17 : vector<288x96xf32>
    %c0_18 = arith.constant 0 : index
    %c18 = arith.constant 18 : index
    %c0_19 = arith.constant 0 : index
    %19 = vector.load %arg1[%c0_18, %c18, %c0_19] : memref<1x326x96xf32, #tpu.memory_space<vmem>>, vector<1x288x96xf32>
    %20 = vector.shape_cast %19 : vector<1x288x96xf32> to vector<288x96xf32>
    %c3 = arith.constant 3 : index
    %c0_20 = arith.constant 0 : index
    %c0_21 = arith.constant 0 : index
    %21 = vector.load %arg2[%c3, %c0_20, %c0_21] : memref<9x96x96xf32, #tpu.memory_space<vmem>>, vector<1x96x96xf32>
    %22 = vector.shape_cast %21 : vector<1x96x96xf32> to vector<96x96xf32>
    %cst_22 = arith.constant dense<0.000000e+00> : vector<288x96xf32>
    %23 = tpu.matmul %20, %22, %cst_22 {dimension_numbers = #tpu.dot_dimension_numbers<[1], [0], [0], [1], [0, 0, 1, 1], [], []>} : vector<288x96xf32>, vector<96x96xf32>, vector<288x96xf32> -> vector<288x96xf32>
    %24 = arith.addf %18, %23 : vector<288x96xf32>
    %c0_23 = arith.constant 0 : index
    %c19 = arith.constant 19 : index
    %c0_24 = arith.constant 0 : index
    %25 = vector.load %arg1[%c0_23, %c19, %c0_24] : memref<1x326x96xf32, #tpu.memory_space<vmem>>, vector<1x288x96xf32>
    %26 = vector.shape_cast %25 : vector<1x288x96xf32> to vector<288x96xf32>
    %c4 = arith.constant 4 : index
    %c0_25 = arith.constant 0 : index
    %c0_26 = arith.constant 0 : index
    %27 = vector.load %arg2[%c4, %c0_25, %c0_26] : memref<9x96x96xf32, #tpu.memory_space<vmem>>, vector<1x96x96xf32>
    %28 = vector.shape_cast %27 : vector<1x96x96xf32> to vector<96x96xf32>
    %cst_27 = arith.constant dense<0.000000e+00> : vector<288x96xf32>
    %29 = tpu.matmul %26, %28, %cst_27 {dimension_numbers = #tpu.dot_dimension_numbers<[1], [0], [0], [1], [0, 0, 1, 1], [], []>} : vector<288x96xf32>, vector<96x96xf32>, vector<288x96xf32> -> vector<288x96xf32>
    %30 = arith.addf %24, %29 : vector<288x96xf32>
    %c0_28 = arith.constant 0 : index
    %c20 = arith.constant 20 : index
    %c0_29 = arith.constant 0 : index
    %31 = vector.load %arg1[%c0_28, %c20, %c0_29] : memref<1x326x96xf32, #tpu.memory_space<vmem>>, vector<1x288x96xf32>
    %32 = vector.shape_cast %31 : vector<1x288x96xf32> to vector<288x96xf32>
    %c5 = arith.constant 5 : index
    %c0_30 = arith.constant 0 : index
    %c0_31 = arith.constant 0 : index
    %33 = vector.load %arg2[%c5, %c0_30, %c0_31] : memref<9x96x96xf32, #tpu.memory_space<vmem>>, vector<1x96x96xf32>
    %34 = vector.shape_cast %33 : vector<1x96x96xf32> to vector<96x96xf32>
    %cst_32 = arith.constant dense<0.000000e+00> : vector<288x96xf32>
    %35 = tpu.matmul %32, %34, %cst_32 {dimension_numbers = #tpu.dot_dimension_numbers<[1], [0], [0], [1], [0, 0, 1, 1], [], []>} : vector<288x96xf32>, vector<96x96xf32>, vector<288x96xf32> -> vector<288x96xf32>
    %36 = arith.addf %30, %35 : vector<288x96xf32>
    %c0_33 = arith.constant 0 : index
    %c36 = arith.constant 36 : index
    %c0_34 = arith.constant 0 : index
    %37 = vector.load %arg1[%c0_33, %c36, %c0_34] : memref<1x326x96xf32, #tpu.memory_space<vmem>>, vector<1x288x96xf32>
    %38 = vector.shape_cast %37 : vector<1x288x96xf32> to vector<288x96xf32>
    %c6 = arith.constant 6 : index
    %c0_35 = arith.constant 0 : index
    %c0_36 = arith.constant 0 : index
    %39 = vector.load %arg2[%c6, %c0_35, %c0_36] : memref<9x96x96xf32, #tpu.memory_space<vmem>>, vector<1x96x96xf32>
    %40 = vector.shape_cast %39 : vector<1x96x96xf32> to vector<96x96xf32>
    %cst_37 = arith.constant dense<0.000000e+00> : vector<288x96xf32>
    %41 = tpu.matmul %38, %40, %cst_37 {dimension_numbers = #tpu.dot_dimension_numbers<[1], [0], [0], [1], [0, 0, 1, 1], [], []>} : vector<288x96xf32>, vector<96x96xf32>, vector<288x96xf32> -> vector<288x96xf32>
    %42 = arith.addf %36, %41 : vector<288x96xf32>
    %c0_38 = arith.constant 0 : index
    %c37 = arith.constant 37 : index
    %c0_39 = arith.constant 0 : index
    %43 = vector.load %arg1[%c0_38, %c37, %c0_39] : memref<1x326x96xf32, #tpu.memory_space<vmem>>, vector<1x288x96xf32>
    %44 = vector.shape_cast %43 : vector<1x288x96xf32> to vector<288x96xf32>
    %c7 = arith.constant 7 : index
    %c0_40 = arith.constant 0 : index
    %c0_41 = arith.constant 0 : index
    %45 = vector.load %arg2[%c7, %c0_40, %c0_41] : memref<9x96x96xf32, #tpu.memory_space<vmem>>, vector<1x96x96xf32>
    %46 = vector.shape_cast %45 : vector<1x96x96xf32> to vector<96x96xf32>
    %cst_42 = arith.constant dense<0.000000e+00> : vector<288x96xf32>
    %47 = tpu.matmul %44, %46, %cst_42 {dimension_numbers = #tpu.dot_dimension_numbers<[1], [0], [0], [1], [0, 0, 1, 1], [], []>} : vector<288x96xf32>, vector<96x96xf32>, vector<288x96xf32> -> vector<288x96xf32>
    %48 = arith.addf %42, %47 : vector<288x96xf32>
    %c0_43 = arith.constant 0 : index
    %c38 = arith.constant 38 : index
    %c0_44 = arith.constant 0 : index
    %49 = vector.load %arg1[%c0_43, %c38, %c0_44] : memref<1x326x96xf32, #tpu.memory_space<vmem>>, vector<1x288x96xf32>
    %50 = vector.shape_cast %49 : vector<1x288x96xf32> to vector<288x96xf32>
    %c8 = arith.constant 8 : index
    %c0_45 = arith.constant 0 : index
    %c0_46 = arith.constant 0 : index
    %51 = vector.load %arg2[%c8, %c0_45, %c0_46] : memref<9x96x96xf32, #tpu.memory_space<vmem>>, vector<1x96x96xf32>
    %52 = vector.shape_cast %51 : vector<1x96x96xf32> to vector<96x96xf32>
    %cst_47 = arith.constant dense<0.000000e+00> : vector<288x96xf32>
    %53 = tpu.matmul %50, %52, %cst_47 {dimension_numbers = #tpu.dot_dimension_numbers<[1], [0], [0], [1], [0, 0, 1, 1], [], []>} : vector<288x96xf32>, vector<96x96xf32>, vector<288x96xf32> -> vector<288x96xf32>
    %54 = arith.addf %48, %53 : vector<288x96xf32>
    %cst_48 = arith.constant 0.000000e+00 : f32
    %55 = vector.broadcast %cst_48 : f32 to vector<288x96xf32>
    %56 = arith.maximumf %54, %55 : vector<288x96xf32>
    %c0_49 = arith.constant 0 : index
    %c0_50 = arith.constant 0 : index
    %c0_51 = arith.constant 0 : index
    %57 = vector.load %arg3[%c0_49, %c0_50, %c0_51] : memref<1x288x96xf32, #tpu.memory_space<vmem>>, vector<1x288x96xf32>
    %58 = vector.shape_cast %57 : vector<1x288x96xf32> to vector<288x96xf32>
    %59 = vector.shape_cast %56 : vector<288x96xf32> to vector<1x288x96xf32>
    tpu.vector_store %arg3[%c0_49, %c0_50, %c0_51], %59 {strides = array<i32>} : memref<1x288x96xf32, #tpu.memory_space<vmem>>, vector<1x288x96xf32>,
    return
  }
  func.func @transform_0(%arg0: i32) -> (i32, i32, i32) {
    %c0_i32 = arith.constant 0 : i32
    %c0_i32_0 = arith.constant 0 : i32
    %c0_i32_1 = arith.constant 0 : i32
    return %arg0, %c0_i32, %c0_i32_0 : i32, i32, i32
  }
  func.func @transform_1(%arg0: i32) -> (i32, i32, i32) {
    %c0_i32 = arith.constant 0 : i32
    %c0_i32_0 = arith.constant 0 : i32
    %c0_i32_1 = arith.constant 0 : i32
    %c0_i32_2 = arith.constant 0 : i32
    return %c0_i32, %c0_i32_0, %c0_i32_1 : i32, i32, i32
  }
  func.func @transform_2(%arg0: i32) -> (i32, i32, i32) {
    %c0_i32 = arith.constant 0 : i32
    %c0_i32_0 = arith.constant 0 : i32
    %c0_i32_1 = arith.constant 0 : i32
    return %arg0, %c0_i32, %c0_i32_0 : i32, i32, i32
  }
}

</mosaic_0001>

<llo_original>
// kernel: inception_d_forward.5
$region0: #{inception_d_forward.5}
  #allocation0 [shape = 'u32[]', space=smem, size = 0x4, offset = 0x4, fixed_abs, tag = 'smem constant byte address 0x4 - core index']
  #allocation1 [shape = 'u32[72,128]{1,0:T(1,128)}', space=vmem, size = 0x9000, scoped, tag = 'internal scratch']
  %s0 = inlined_call_operand.vmem [shape: f32[512,4], index: 0, kind: input, shape index: {}]
  %s1 = inlined_call_operand.vmem [shape: f32[4,224], index: 1, kind: input, shape index: {}]
  %s2 = inlined_call_operand.vmem [shape: f32[512,224], index: 2, kind: output, shape index: {}]
  %s3 = sld [smem:[#allocation0]]
  $region18: #{inception_d_forward.5} parent=0
    _
  %s5 = ssub.s32 1, %s3
  %s6 = scalar_select 0, %s5, %s3
  // Predicated region
  $region2: #{inception_d_forward.5} parent=0 // pred_check
    _
  $region3: #{inception_d_forward.5} parent=0 // pred_check_branch
    %8 = sbr.rel (0) target = $region5
  $region4: #{inception_d_forward.5} parent=0 // pred_region
    _
  $region5: #{inception_d_forward.5} parent=0 // pred_fallthru
    _
  // Predicated region
  $region6: #{inception_d_forward.5} parent=0 // pred_check
    _
  $region7: #{inception_d_forward.5} parent=0 // pred_check_branch
    %10 = sbr.rel (0) target = $region9
  $region8: #{inception_d_forward.5} parent=0 // pred_region
    _
  $region9: #{inception_d_forward.5} parent=0 // pred_fallthru
    _
  %v11 = vld [vmem:[%s0] sm:$0xff]
  %v12 = vld [vmem:[%s0 + $0x8] sm:$0xff]
  %v13 = vld [vmem:[%s0 + $0x10] sm:$0xff]
  %v14 = vld [vmem:[%s0 + $0x18] sm:$0xff]
  %v15 = vld [vmem:[%s0 + $0x20] sm:$0xff]
  %v16 = vld [vmem:[%s0 + $0x28] sm:$0xff]
  %v17 = vld [vmem:[%s0 + $0x30] sm:$0xff]
  %v18 = vld [vmem:[%s0 + $0x38] sm:$0xff]
  %v19 = vld [vmem:[%s0 + $0x40] sm:$0xff]
  %v20 = vld [vmem:[%s0 + $0x48] sm:$0xff]
  %v21 = vld [vmem:[%s0 + $0x50] sm:$0xff]
  %v22 = vld [vmem:[%s0 + $0x58] sm:$0xff]
  %v23 = vld [vmem:[%s0 + $0x60] sm:$0xff]
  %v24 = vld [vmem:[%s0 + $0x68] sm:$0xff]
  %v25 = vld [vmem:[%s0 + $0x70] sm:$0xff]
  %v26 = vld [vmem:[%s0 + $0x78] sm:$0xff]
  %v27 = vld [vmem:[%s0 + $0x80] sm:$0xff]
  %v28 = vld [vmem:[%s0 + $0x88] sm:$0xff]
  %v29 = vld [vmem:[%s0 + $0x90] sm:$0xff]
  %v30 = vld [vmem:[%s0 + $0x98] sm:$0xff]
  %v31 = vld [vmem:[%s0 + $0xa0] sm:$0xff]
  %v32 = vld [vmem:[%s0 + $0xa8] sm:$0xff]
  %v33 = vld [vmem:[%s0 + $0xb0] sm:$0xff]
  %v34 = vld [vmem:[%s0 + $0xb8] sm:$0xff]
  %v35 = vld [vmem:[%s0 + $0xc0] sm:$0xff]
  %v36 = vld [vmem:[%s0 + $0xc8] sm:$0xff]
  %v37 = vld [vmem:[%s0 + $0xd0] sm:$0xff]
  %v38 = vld [vmem:[%s0 + $0xd8] sm:$0xff]
  %v39 = vld [vmem:[%s0 + $0xe0] sm:$0xff]
  %v40 = vld [vmem:[%s0 + $0xe8] sm:$0xff]
  %v41 = vld [vmem:[%s0 + $0xf0] sm:$0xff]
  %v42 = vld [vmem:[%s0 + $0xf8] sm:$0xff]
  %v43 = vld [vmem:[%s0 + $0x100] sm:$0xff]
  %v44 = vld [vmem:[%s0 + $0x108] sm:$0xff]
  %v45 = vld [vmem:[%s0 + $0x110] sm:$0xff]
  %v46 = vld [vmem:[%s0 + $0x118] sm:$0xff]
  %v47 = vld [vmem:[%s0 + $0x120] sm:$0xff]
  %v48 = vld [vmem:[%s0 + $0x128] sm:$0xff]
  %v49 = vld [vmem:[%s0 + $0x130] sm:$0xff]
  %v50 = vld [vmem:[%s0 + $0x138] sm:$0xff]
  %v51 = vld [vmem:[%s0 + $0x140] sm:$0xff]
  %v52 = vld [vmem:[%s0 + $0x148] sm:$0xff]
  %v53 = vld [vmem:[%s0 + $0x150] sm:$0xff]
  %v54 = vld [vmem:[%s0 + $0x158] sm:$0xff]
  %v55 = vld [vmem:[%s0 + $0x160] sm:$0xff]
  %v56 = vld [vmem:[%s0 + $0x168] sm:$0xff]
  %v57 = vld [vmem:[%s0 + $0x170] sm:$0xff]
  %v58 = vld [vmem:[%s0 + $0x178] sm:$0xff]
  %v59 = vld [vmem:[%s0 + $0x180] sm:$0xff]
  %v60 = vld [vmem:[%s0 + $0x188] sm:$0xff]
  %v61 = vld [vmem:[%s0 + $0x190] sm:$0xff]
  %v62 = vld [vmem:[%s0 + $0x198] sm:$0xff]
  %v63 = vld [vmem:[%s0 + $0x1a0] sm:$0xff]
  %v64 = vld [vmem:[%s0 + $0x1a8] sm:$0xff]
  %v65 = vld [vmem:[%s0 + $0x1b0] sm:$0xff]
  %v66 = vld [vmem:[%s0 + $0x1b8] sm:$0xff]
  %v67 = vld [vmem:[%s0 + $0x1c0] sm:$0xff]
  %v68 = vld [vmem:[%s0 + $0x1c8] sm:$0xff]
  %v69 = vld [vmem:[%s0 + $0x1d0] sm:$0xff]
  %v70 = vld [vmem:[%s0 + $0x1d8] sm:$0xff]
  %v71 = vld [vmem:[%s0 + $0x1e0] sm:$0xff]
  %v72 = vld [vmem:[%s0 + $0x1e8] sm:$0xff]
  %v73 = vld [vmem:[%s0 + $0x1f0] sm:$0xff]
  %v74 = vld [vmem:[%s0 + $0x1f8] sm:$0xff]
  %v75 = vld [vmem:[%s1] sm:$0xff]
  %77 = vst [vmem:[#allocation1] ss:$2 sm:$0xff] %v75
  %v78 = vld.sshfl [vmem:[#allocation1] sm:$0xff pattern:$0x75316420]
  %v79 = vld.sshfl [vmem:[#allocation1 + $0x8] sm:$0xff pattern:$0x75316420]
  %vm80 = vcmask 31744
  %v82 = vsel %vm80, %v11, 0
  %v85 = vsel %vm80, %v12, 0
  %v88 = vsel %vm80, %v13, 0
  %v91 = vsel %vm80, %v14, 0
  %v94 = vsel %vm80, %v15, 0
  %v97 = vsel %vm80, %v16, 0
  %v100 = vsel %vm80, %v17, 0
  %v103 = vsel %vm80, %v18, 0
  %v106 = vsel %vm80, %v19, 0
  %v109 = vsel %vm80, %v20, 0
  %v112 = vsel %vm80, %v21, 0
  %v115 = vsel %vm80, %v22, 0
  %v118 = vsel %vm80, %v23, 0
  %v121 = vsel %vm80, %v24, 0
  %v124 = vsel %vm80, %v25, 0
  %v127 = vsel %vm80, %v26, 0
  %v130 = vsel %vm80, %v27, 0
  %v133 = vsel %vm80, %v28, 0
  %v136 = vsel %vm80, %v29, 0
  %v139 = vsel %vm80, %v30, 0
  %v142 = vsel %vm80, %v31, 0
  %v145 = vsel %vm80, %v32, 0
  %v148 = vsel %vm80, %v33, 0
  %v151 = vsel %vm80, %v34, 0
  %v154 = vsel %vm80, %v35, 0
  %v157 = vsel %vm80, %v36, 0
  %v160 = vsel %vm80, %v37, 0
  %v163 = vsel %vm80, %v38, 0
  %v166 = vsel %vm80, %v39, 0
  %v169 = vsel %vm80, %v40, 0
  %v172 = vsel %vm80, %v41, 0
  %v175 = vsel %vm80, %v42, 0
  %v178 = vsel %vm80, %v43, 0
  %v181 = vsel %vm80, %v44, 0
  %v184 = vsel %vm80, %v45, 0
  %v187 = vsel %vm80, %v46, 0
  %v190 = vsel %vm80, %v47, 0
  %v193 = vsel %vm80, %v48, 0
  %v196 = vsel %vm80, %v49, 0
  %v199 = vsel %vm80, %v50, 0
  %v202 = vsel %vm80, %v51, 0
  %v205 = vsel %vm80, %v52, 0
  %v208 = vsel %vm80, %v53, 0
  %v211 = vsel %vm80, %v54, 0
  %v214 = vsel %vm80, %v55, 0
  %v217 = vsel %vm80, %v56, 0
  %v220 = vsel %vm80, %v57, 0
  %v223 = vsel %vm80, %v58, 0
  %v226 = vsel %vm80, %v59, 0
  %v229 = vsel %vm80, %v60, 0
  %v232 = vsel %vm80, %v61, 0
  %v235 = vsel %vm80, %v62, 0
  %v238 = vsel %vm80, %v63, 0
  %v241 = vsel %vm80, %v64, 0
  %v244 = vsel %vm80, %v65, 0
  %v247 = vsel %vm80, %v66, 0
  %v250 = vsel %vm80, %v67, 0
  %v253 = vsel %vm80, %v68, 0
  %v256 = vsel %vm80, %v69, 0
  %v259 = vsel %vm80, %v70, 0
  %v262 = vsel %vm80, %v71, 0
  %v265 = vsel %vm80, %v72, 0
  %v268 = vsel %vm80, %v73, 0
  %v271 = vsel %vm80, %v74, 0
  %vm273 = vcmask 1043456
  %v274 = vsel %vm273, %v78, 0
  %v276 = vsel %vm273, %v79, 0
  %278 = vmatpush.msra.mxu0 0.0
  %279 = vmatpush.msra.mxu0 0.0
  %280 = vmatpush.msra.mxu0 0.0
  %281 = vmatpush.msra.mxu0 0.0
  %282 = vmatpush.msra.mxu0 0.0
  %283 = vmatpush.msra.mxu0 0.0
  %284 = vmatpush.msra.mxu0 0.0
  %285 = vmatpush.msra.mxu0 0.0
  %286 = vmatpush.msra.mxu0 0.0
  %287 = vmatpush.msra.mxu0 0.0
  %288 = vmatpush.msra.mxu0 0.0
  %289 = vmatpush.msra.mxu0 0.0
  %290 = vmatpush.msra.mxu0 0.0
  %291 = vmatpush.msra.mxu0 0.0
  %292 = vmatpush.msra.mxu0 0.0
  %293 = vmatpush.msra.mxu0 %v274
  %294 = vmatmul.f32.gmra.mxu0 %v82
  %v295 = vpop.f32.mrf.mxu0
  %v296 = vadd.f32 0.0, %v295
  %297 = vmatmul.f32.gmra.mxu0 %v85
  %v298 = vpop.f32.mrf.mxu0
  %v299 = vadd.f32 0.0, %v298
  %300 = vmatmul.f32.gmra.mxu0 %v88
  %v301 = vpop.f32.mrf.mxu0
  %v302 = vadd.f32 0.0, %v301
  %303 = vmatmul.f32.gmra.mxu0 %v91
  %v304 = vpop.f32.mrf.mxu0
  %v305 = vadd.f32 0.0, %v304
  %306 = vmatmul.f32.gmra.mxu0 %v94
  %v307 = vpop.f32.mrf.mxu0
  %v308 = vadd.f32 0.0, %v307
  %309 = vmatmul.f32.gmra.mxu0 %v97
  %v310 = vpop.f32.mrf.mxu0
  %v311 = vadd.f32 0.0, %v310
  %312 = vmatmul.f32.gmra.mxu0 %v100
  %v313 = vpop.f32.mrf.mxu0
  %v314 = vadd.f32 0.0, %v313
  %315 = vmatmul.f32.gmra.mxu0 %v103
  %v316 = vpop.f32.mrf.mxu0
  %v317 = vadd.f32 0.0, %v316
  %318 = vmatmul.f32.gmra.mxu0 %v106
  %v319 = vpop.f32.mrf.mxu0
  %v320 = vadd.f32 0.0, %v319
  %321 = vmatmul.f32.gmra.mxu0 %v109
  %v322 = vpop.f32.mrf.mxu0
  %v323 = vadd.f32 0.0, %v322
  %324 = vmatmul.f32.gmra.mxu0 %v112
  %v325 = vpop.f32.mrf.mxu0
  %v326 = vadd.f32 0.0, %v325
  %327 = vmatmul.f32.gmra.mxu0 %v115
  %v328 = vpop.f32.mrf.mxu0
  %v329 = vadd.f32 0.0, %v328
  %330 = vmatmul.f32.gmra.mxu0 %v118
  %v331 = vpop.f32.mrf.mxu0
  %v332 = vadd.f32 0.0, %v331
  %333 = vmatmul.f32.gmra.mxu0 %v121
  %v334 = vpop.f32.mrf.mxu0
  %v335 = vadd.f32 0.0, %v334
  %336 = vmatmul.f32.gmra.mxu0 %v124
  %v337 = vpop.f32.mrf.mxu0
  %v338 = vadd.f32 0.0, %v337
  %339 = vmatmul.f32.gmra.mxu0 %v127
  %v340 = vpop.f32.mrf.mxu0
  %v341 = vadd.f32 0.0, %v340
  %342 = vmatmul.f32.gmra.mxu0 %v130
  %v343 = vpop.f32.mrf.mxu0
  %v344 = vadd.f32 0.0, %v343
  %345 = vmatmul.f32.gmra.mxu0 %v133
  %v346 = vpop.f32.mrf.mxu0
  %v347 = vadd.f32 0.0, %v346
  %348 = vmatmul.f32.gmra.mxu0 %v136
  %v349 = vpop.f32.mrf.mxu0
  %v350 = vadd.f32 0.0, %v349
  %351 = vmatmul.f32.gmra.mxu0 %v139
  %v352 = vpop.f32.mrf.mxu0
  %v353 = vadd.f32 0.0, %v352
  %354 = vmatmul.f32.gmra.mxu0 %v142
  %v355 = vpop.f32.mrf.mxu0
  %v356 = vadd.f32 0.0, %v355
  %357 = vmatmul.f32.gmra.mxu0 %v145
  %v358 = vpop.f32.mrf.mxu0
  %v359 = vadd.f32 0.0, %v358
  %360 = vmatmul.f32.gmra.mxu0 %v148
  %v361 = vpop.f32.mrf.mxu0
  %v362 = vadd.f32 0.0, %v361
  %363 = vmatmul.f32.gmra.mxu0 %v151
  %v364 = vpop.f32.mrf.mxu0
  %v365 = vadd.f32 0.0, %v364
  %366 = vmatmul.f32.gmra.mxu0 %v154
  %v367 = vpop.f32.mrf.mxu0
  %v368 = vadd.f32 0.0, %v367
  %369 = vmatmul.f32.gmra.mxu0 %v157
  %v370 = vpop.f32.mrf.mxu0
  %v371 = vadd.f32 0.0, %v370
  %372 = vmatmul.f32.gmra.mxu0 %v160
  %v373 = vpop.f32.mrf.mxu0
  %v374 = vadd.f32 0.0, %v373
  %375 = vmatmul.f32.gmra.mxu0 %v163
  %v376 = vpop.f32.mrf.mxu0
  %v377 = vadd.f32 0.0, %v376
  %378 = vmatmul.f32.gmra.mxu0 %v166
  %v379 = vpop.f32.mrf.mxu0
  %v380 = vadd.f32 0.0, %v379
  %381 = vmatmul.f32.gmra.mxu0 %v169
  %v382 = vpop.f32.mrf.mxu0
  %v383 = vadd.f32 0.0, %v382
  %384 = vmatmul.f32.gmra.mxu0 %v172
  %v385 = vpop.f32.mrf.mxu0
  %v386 = vadd.f32 0.0, %v385
  %387 = vmatmul.f32.gmra.mxu0 %v175
  %v388 = vpop.f32.mrf.mxu0
  %v389 = vadd.f32 0.0, %v388
  %390 = vmatmul.f32.gmra.mxu0 %v178
  %v391 = vpop.f32.mrf.mxu0
  %v392 = vadd.f32 0.0, %v391
  %393 = vmatmul.f32.gmra.mxu0 %v181
  %v394 = vpop.f32.mrf.mxu0
  %v395 = vadd.f32 0.0, %v394
  %396 = vmatmul.f32.gmra.mxu0 %v184
  %v397 = vpop.f32.mrf.mxu0
  %v398 = vadd.f32 0.0, %v397
  %399 = vmatmul.f32.gmra.mxu0 %v187
  %v400 = vpop.f32.mrf.mxu0
  %v401 = vadd.f32 0.0, %v400
  %402 = vmatmul.f32.gmra.mxu0 %v190
  %v403 = vpop.f32.mrf.mxu0
  %v404 = vadd.f32 0.0, %v403
  %405 = vmatmul.f32.gmra.mxu0 %v193
  %v406 = vpop.f32.mrf.mxu0
  %v407 = vadd.f32 0.0, %v406
  %408 = vmatmul.f32.gmra.mxu0 %v196
  %v409 = vpop.f32.mrf.mxu0
  %v410 = vadd.f32 0.0, %v409
  %411 = vmatmul.f32.gmra.mxu0 %v199
  %v412 = vpop.f32.mrf.mxu0
  %v413 = vadd.f32 0.0, %v412
  %414 = vmatmul.f32.gmra.mxu0 %v202
  %v415 = vpop.f32.mrf.mxu0
  %v416 = vadd.f32 0.0, %v415
  %417 = vmatmul.f32.gmra.mxu0 %v205
  %v418 = vpop.f32.mrf.mxu0
  %v419 = vadd.f32 0.0, %v418
  %420 = vmatmul.f32.gmra.mxu0 %v208
  %v421 = vpop.f32.mrf.mxu0
  %v422 = vadd.f32 0.0, %v421
  %423 = vmatmul.f32.gmra.mxu0 %v211
  %v424 = vpop.f32.mrf.mxu0
  %v425 = vadd.f32 0.0, %v424
  %426 = vmatmul.f32.gmra.mxu0 %v214
  %v427 = vpop.f32.mrf.mxu0
  %v428 = vadd.f32 0.0, %v427
  %429 = vmatmul.f32.gmra.mxu0 %v217
  %v430 = vpop.f32.mrf.mxu0
  %v431 = vadd.f32 0.0, %v430
  %432 = vmatmul.f32.gmra.mxu0 %v220
  %v433 = vpop.f32.mrf.mxu0
  %v434 = vadd.f32 0.0, %v433
  %435 = vmatmul.f32.gmra.mxu0 %v223
  %v436 = vpop.f32.mrf.mxu0
  %v437 = vadd.f32 0.0, %v436
  %438 = vmatmul.f32.gmra.mxu0 %v226
  %v439 = vpop.f32.mrf.mxu0
  %v440 = vadd.f32 0.0, %v439
  %441 = vmatmul.f32.gmra.mxu0 %v229
  %v442 = vpop.f32.mrf.mxu0
  %v443 = vadd.f32 0.0, %v442
  %444 = vmatmul.f32.gmra.mxu0 %v232
  %v445 = vpop.f32.mrf.mxu0
  %v446 = vadd.f32 0.0, %v445
  %447 = vmatmul.f32.gmra.mxu0 %v235
  %v448 = vpop.f32.mrf.mxu0
  %v449 = vadd.f32 0.0, %v448
  %450 = vmatmul.f32.gmra.mxu0 %v238
  %v451 = vpop.f32.mrf.mxu0
  %v452 = vadd.f32 0.0, %v451
  %453 = vmatmul.f32.gmra.mxu0 %v241
  %v454 = vpop.f32.mrf.mxu0
  %v455 = vadd.f32 0.0, %v454
  %456 = vmatmul.f32.gmra.mxu0 %v244
  %v457 = vpop.f32.mrf.mxu0
  %v458 = vadd.f32 0.0, %v457
  %459 = vmatmul.f32.gmra.mxu0 %v247
  %v460 = vpop.f32.mrf.mxu0
  %v461 = vadd.f32 0.0, %v460
  %462 = vmatmul.f32.gmra.mxu0 %v250
  %v463 = vpop.f32.mrf.mxu0
  %v464 = vadd.f32 0.0, %v463
  %465 = vmatmul.f32.gmra.mxu0 %v253
  %v466 = vpop.f32.mrf.mxu0
  %v467 = vadd.f32 0.0, %v466
  %468 = vmatmul.f32.gmra.mxu0 %v256
  %v469 = vpop.f32.mrf.mxu0
  %v470 = vadd.f32 0.0, %v469
  %471 = vmatmul.f32.gmra.mxu0 %v259
  %v472 = vpop.f32.mrf.mxu0
  %v473 = vadd.f32 0.0, %v472
  %474 = vmatmul.f32.gmra.mxu0 %v262
  %v475 = vpop.f32.mrf.mxu0
  %v476 = vadd.f32 0.0, %v475
  %477 = vmatmul.f32.gmra.mxu0 %v265
  %v478 = vpop.f32.mrf.mxu0
  %v479 = vadd.f32 0.0, %v478
  %480 = vmatmul.f32.gmra.mxu0 %v268
  %v481 = vpop.f32.mrf.mxu0
  %v482 = vadd.f32 0.0, %v481
  %483 = vmatmul.f32.gmra.mxu0 %v271
  %v484 = vpop.f32.mrf.mxu0
  %v485 = vadd.f32 0.0, %v484
  %486 = vdwg.mxu0
  %487 = vmatpush.msra.mxu0 0.0
  %488 = vmatpush.msra.mxu0 0.0
  %489 = vmatpush.msra.mxu0 0.0
  %490 = vmatpush.msra.mxu0 0.0
  %491 = vmatpush.msra.mxu0 0.0
  %492 = vmatpush.msra.mxu0 0.0
  %493 = vmatpush.msra.mxu0 0.0
  %494 = vmatpush.msra.mxu0 0.0
  %495 = vmatpush.msra.mxu0 0.0
  %496 = vmatpush.msra.mxu0 0.0
  %497 = vmatpush.msra.mxu0 0.0
  %498 = vmatpush.msra.mxu0 0.0
  %499 = vmatpush.msra.mxu0 0.0
  %500 = vmatpush.msra.mxu0 0.0
  %501 = vmatpush.msra.mxu0 0.0
  %502 = vmatpush.msra.mxu0 %v276
  %503 = vmatmul.f32.gmra.mxu0 %v82
  %v504 = vpop.f32.mrf.mxu0
  %v505 = vadd.f32 0.0, %v504
  %506 = vmatmul.f32.gmra.mxu0 %v85
  %v507 = vpop.f32.mrf.mxu0
  %v508 = vadd.f32 0.0, %v507
  %509 = vmatmul.f32.gmra.mxu0 %v88
  %v510 = vpop.f32.mrf.mxu0
  %v511 = vadd.f32 0.0, %v510
  %512 = vmatmul.f32.gmra.mxu0 %v91
  %v513 = vpop.f32.mrf.mxu0
  %v514 = vadd.f32 0.0, %v513
  %515 = vmatmul.f32.gmra.mxu0 %v94
  %v516 = vpop.f32.mrf.mxu0
  %v517 = vadd.f32 0.0, %v516
  %518 = vmatmul.f32.gmra.mxu0 %v97
  %v519 = vpop.f32.mrf.mxu0
  %v520 = vadd.f32 0.0, %v519
  %521 = vmatmul.f32.gmra.mxu0 %v100
  %v522 = vpop.f32.mrf.mxu0
  %v523 = vadd.f32 0.0, %v522
  %524 = vmatmul.f32.gmra.mxu0 %v103
  %v525 = vpop.f32.mrf.mxu0
  %v526 = vadd.f32 0.0, %v525
  %527 = vmatmul.f32.gmra.mxu0 %v106
  %v528 = vpop.f32.mrf.mxu0
  %v529 = vadd.f32 0.0, %v528
  %530 = vmatmul.f32.gmra.mxu0 %v109
  %v531 = vpop.f32.mrf.mxu0
  %v532 = vadd.f32 0.0, %v531
  %533 = vmatmul.f32.gmra.mxu0 %v112
  %v534 = vpop.f32.mrf.mxu0
  %v535 = vadd.f32 0.0, %v534
  %536 = vmatmul.f32.gmra.mxu0 %v115
  %v537 = vpop.f32.mrf.mxu0
  %v538 = vadd.f32 0.0, %v537
  %539 = vmatmul.f32.gmra.mxu0 %v118
  %v540 = vpop.f32.mrf.mxu0
  %v541 = vadd.f32 0.0, %v540
  %542 = vmatmul.f32.gmra.mxu0 %v121
  %v543 = vpop.f32.mrf.mxu0
  %v544 = vadd.f32 0.0, %v543
  %545 = vmatmul.f32.gmra.mxu0 %v124
  %v546 = vpop.f32.mrf.mxu0
  %v547 = vadd.f32 0.0, %v546
  %548 = vmatmul.f32.gmra.mxu0 %v127
  %v549 = vpop.f32.mrf.mxu0
  %v550 = vadd.f32 0.0, %v549
  %551 = vmatmul.f32.gmra.mxu0 %v130
  %v552 = vpop.f32.mrf.mxu0
  %v553 = vadd.f32 0.0, %v552
  %554 = vmatmul.f32.gmra.mxu0 %v133
  %v555 = vpop.f32.mrf.mxu0
  %v556 = vadd.f32 0.0, %v555
  %557 = vmatmul.f32.gmra.mxu0 %v136
  %v558 = vpop.f32.mrf.mxu0
  %v559 = vadd.f32 0.0, %v558
  %560 = vmatmul.f32.gmra.mxu0 %v139
  %v561 = vpop.f32.mrf.mxu0
  %v562 = vadd.f32 0.0, %v561
  %563 = vmatmul.f32.gmra.mxu0 %v142
  %v564 = vpop.f32.mrf.mxu0
  %v565 = vadd.f32 0.0, %v564
  %566 = vmatmul.f32.gmra.mxu0 %v145
  %v567 = vpop.f32.mrf.mxu0
  %v568 = vadd.f32 0.0, %v567
  %569 = vmatmul.f32.gmra.mxu0 %v148
  %v570 = vpop.f32.mrf.mxu0
  %v571 = vadd.f32 0.0, %v570
  %572 = vmatmul.f32.gmra.mxu0 %v151
  %v573 = vpop.f32.mrf.mxu0
  %v574 = vadd.f32 0.0, %v573
  %575 = vmatmul.f32.gmra.mxu0 %v154
  %v576 = vpop.f32.mrf.mxu0
  %v577 = vadd.f32 0.0, %v576
  %578 = vmatmul.f32.gmra.mxu0 %v157
  %v579 = vpop.f32.mrf.mxu0
  %v580 = vadd.f32 0.0, %v579
  %581 = vmatmul.f32.gmra.mxu0 %v160
  %v582 = vpop.f32.mrf.mxu0
  %v583 = vadd.f32 0.0, %v582
  %584 = vmatmul.f32.gmra.mxu0 %v163
  %v585 = vpop.f32.mrf.mxu0
  %v586 = vadd.f32 0.0, %v585
  %587 = vmatmul.f32.gmra.mxu0 %v166
  %v588 = vpop.f32.mrf.mxu0
  %v589 = vadd.f32 0.0, %v588
  %590 = vmatmul.f32.gmra.mxu0 %v169
  %v591 = vpop.f32.mrf.mxu0
  %v592 = vadd.f32 0.0, %v591
  %593 = vmatmul.f32.gmra.mxu0 %v172
  %v594 = vpop.f32.mrf.mxu0
  %v595 = vadd.f32 0.0, %v594
  %596 = vmatmul.f32.gmra.mxu0 %v175
  %v597 = vpop.f32.mrf.mxu0
  %v598 = vadd.f32 0.0, %v597
  %599 = vmatmul.f32.gmra.mxu0 %v178
  %v600 = vpop.f32.mrf.mxu0
  %v601 = vadd.f32 0.0, %v600
  %602 = vmatmul.f32.gmra.mxu0 %v181
  %v603 = vpop.f32.mrf.mxu0
  %v604 = vadd.f32 0.0, %v603
  %605 = vmatmul.f32.gmra.mxu0 %v184
  %v606 = vpop.f32.mrf.mxu0
  %v607 = vadd.f32 0.0, %v606
  %608 = vmatmul.f32.gmra.mxu0 %v187
  %v609 = vpop.f32.mrf.mxu0
  %v610 = vadd.f32 0.0, %v609
  %611 = vmatmul.f32.gmra.mxu0 %v190
  %v612 = vpop.f32.mrf.mxu0
  %v613 = vadd.f32 0.0, %v612
  %614 = vmatmul.f32.gmra.mxu0 %v193
  %v615 = vpop.f32.mrf.mxu0
  %v616 = vadd.f32 0.0, %v615
  %617 = vmatmul.f32.gmra.mxu0 %v196
  %v618 = vpop.f32.mrf.mxu0
  %v619 = vadd.f32 0.0, %v618
  %620 = vmatmul.f32.gmra.mxu0 %v199
  %v621 = vpop.f32.mrf.mxu0
  %v622 = vadd.f32 0.0, %v621
  %623 = vmatmul.f32.gmra.mxu0 %v202
  %v624 = vpop.f32.mrf.mxu0
  %v625 = vadd.f32 0.0, %v624
  %626 = vmatmul.f32.gmra.mxu0 %v205
  %v627 = vpop.f32.mrf.mxu0
  %v628 = vadd.f32 0.0, %v627
  %629 = vmatmul.f32.gmra.mxu0 %v208
  %v630 = vpop.f32.mrf.mxu0
  %v631 = vadd.f32 0.0, %v630
  %632 = vmatmul.f32.gmra.mxu0 %v211
  %v633 = vpop.f32.mrf.mxu0
  %v634 = vadd.f32 0.0, %v633
  %635 = vmatmul.f32.gmra.mxu0 %v214
  %v636 = vpop.f32.mrf.mxu0
  %v637 = vadd.f32 0.0, %v636
  %638 = vmatmul.f32.gmra.mxu0 %v217
  %v639 = vpop.f32.mrf.mxu0
  %v640 = vadd.f32 0.0, %v639
  %641 = vmatmul.f32.gmra.mxu0 %v220
  %v642 = vpop.f32.mrf.mxu0
  %v643 = vadd.f32 0.0, %v642
  %644 = vmatmul.f32.gmra.mxu0 %v223
  %v645 = vpop.f32.mrf.mxu0
  %v646 = vadd.f32 0.0, %v645
  %647 = vmatmul.f32.gmra.mxu0 %v226
  %v648 = vpop.f32.mrf.mxu0
  %v649 = vadd.f32 0.0, %v648
  %650 = vmatmul.f32.gmra.mxu0 %v229
  %v651 = vpop.f32.mrf.mxu0
  %v652 = vadd.f32 0.0, %v651
  %653 = vmatmul.f32.gmra.mxu0 %v232
  %v654 = vpop.f32.mrf.mxu0
  %v655 = vadd.f32 0.0, %v654
  %656 = vmatmul.f32.gmra.mxu0 %v235
  %v657 = vpop.f32.mrf.mxu0
  %v658 = vadd.f32 0.0, %v657
  %659 = vmatmul.f32.gmra.mxu0 %v238
  %v660 = vpop.f32.mrf.mxu0
  %v661 = vadd.f32 0.0, %v660
  %662 = vmatmul.f32.gmra.mxu0 %v241
  %v663 = vpop.f32.mrf.mxu0
  %v664 = vadd.f32 0.0, %v663
  %665 = vmatmul.f32.gmra.mxu0 %v244
  %v666 = vpop.f32.mrf.mxu0
  %v667 = vadd.f32 0.0, %v666
  %668 = vmatmul.f32.gmra.mxu0 %v247
  %v669 = vpop.f32.mrf.mxu0
  %v670 = vadd.f32 0.0, %v669
  %671 = vmatmul.f32.gmra.mxu0 %v250
  %v672 = vpop.f32.mrf.mxu0
  %v673 = vadd.f32 0.0, %v672
  %674 = vmatmul.f32.gmra.mxu0 %v253
  %v675 = vpop.f32.mrf.mxu0
  %v676 = vadd.f32 0.0, %v675
  %677 = vmatmul.f32.gmra.mxu0 %v256
  %v678 = vpop.f32.mrf.mxu0
  %v679 = vadd.f32 0.0, %v678
  %680 = vmatmul.f32.gmra.mxu0 %v259
  %v681 = vpop.f32.mrf.mxu0
  %v682 = vadd.f32 0.0, %v681
  %683 = vmatmul.f32.gmra.mxu0 %v262
  %v684 = vpop.f32.mrf.mxu0
  %v685 = vadd.f32 0.0, %v684
  %686 = vmatmul.f32.gmra.mxu0 %v265
  %v687 = vpop.f32.mrf.mxu0
  %v688 = vadd.f32 0.0, %v687
  %689 = vmatmul.f32.gmra.mxu0 %v268
  %v690 = vpop.f32.mrf.mxu0
  %v691 = vadd.f32 0.0, %v690
  %692 = vmatmul.f32.gmra.mxu0 %v271
  %v693 = vpop.f32.mrf.mxu0
  %v694 = vadd.f32 0.0, %v693
  %695 = vdwg.mxu0
  %v696 = vlaneseq
  %v697 = vand.u32 %v696, 127
  %v698 = vadd.s32 %v697, 128
  %vm699 = vcmp.lt.s32.totalorder %v697, 192
  %vm700 = vcmp.lt.s32.totalorder %v698, 192
  %v701 = vmax.f32 %v296, 0.0
  %v702 = vmax.f32 %v505, 0.0
  %v703 = vmax.f32 %v299, 0.0
  %v704 = vmax.f32 %v508, 0.0
  %v705 = vmax.f32 %v302, 0.0
  %v706 = vmax.f32 %v511, 0.0
  %v707 = vmax.f32 %v305, 0.0
  %v708 = vmax.f32 %v514, 0.0
  %v709 = vmax.f32 %v308, 0.0
  %v710 = vmax.f32 %v517, 0.0
  %v711 = vmax.f32 %v311, 0.0
  %v712 = vmax.f32 %v520, 0.0
  %v713 = vmax.f32 %v314, 0.0
  %v714 = vmax.f32 %v523, 0.0
  %v715 = vmax.f32 %v317, 0.0
  %v716 = vmax.f32 %v526, 0.0
  %v717 = vmax.f32 %v320, 0.0
  %v718 = vmax.f32 %v529, 0.0
  %v719 = vmax.f32 %v323, 0.0
  %v720 = vmax.f32 %v532, 0.0
  %v721 = vmax.f32 %v326, 0.0
  %v722 = vmax.f32 %v535, 0.0
  %v723 = vmax.f32 %v329, 0.0
  %v724 = vmax.f32 %v538, 0.0
  %v725 = vmax.f32 %v332, 0.0
  %v726 = vmax.f32 %v541, 0.0
  %v727 = vmax.f32 %v335, 0.0
  %v728 = vmax.f32 %v544, 0.0
  %v729 = vmax.f32 %v338, 0.0
  %v730 = vmax.f32 %v547, 0.0
  %v731 = vmax.f32 %v341, 0.0
  %v732 = vmax.f32 %v550, 0.0
  %v733 = vmax.f32 %v344, 0.0
  %v734 = vmax.f32 %v553, 0.0
  %v735 = vmax.f32 %v347, 0.0
  %v736 = vmax.f32 %v556, 0.0
  %v737 = vmax.f32 %v350, 0.0
  %v738 = vmax.f32 %v559, 0.0
  %v739 = vmax.f32 %v353, 0.0
  %v740 = vmax.f32 %v562, 0.0
  %v741 = vmax.f32 %v356, 0.0
  %v742 = vmax.f32 %v565, 0.0
  %v743 = vmax.f32 %v359, 0.0
  %v744 = vmax.f32 %v568, 0.0
  %v745 = vmax.f32 %v362, 0.0
  %v746 = vmax.f32 %v571, 0.0
  %v747 = vmax.f32 %v365, 0.0
  %v748 = vmax.f32 %v574, 0.0
  %v749 = vmax.f32 %v368, 0.0
  %v750 = vmax.f32 %v577, 0.0
  %v751 = vmax.f32 %v371, 0.0
  %v752 = vmax.f32 %v580, 0.0
  %v753 = vmax.f32 %v374, 0.0
  %v754 = vmax.f32 %v583, 0.0
  %v755 = vmax.f32 %v377, 0.0
  %v756 = vmax.f32 %v586, 0.0
  %v757 = vmax.f32 %v380, 0.0
  %v758 = vmax.f32 %v589, 0.0
  %v759 = vmax.f32 %v383, 0.0
  %v760 = vmax.f32 %v592, 0.0
  %v761 = vmax.f32 %v386, 0.0
  %v762 = vmax.f32 %v595, 0.0
  %v763 = vmax.f32 %v389, 0.0
  %v764 = vmax.f32 %v598, 0.0
  %v765 = vmax.f32 %v392, 0.0
  %v766 = vmax.f32 %v601, 0.0
  %v767 = vmax.f32 %v395, 0.0
  %v768 = vmax.f32 %v604, 0.0
  %v769 = vmax.f32 %v398, 0.0
  %v770 = vmax.f32 %v607, 0.0
  %v771 = vmax.f32 %v401, 0.0
  %v772 = vmax.f32 %v610, 0.0
  %v773 = vmax.f32 %v404, 0.0
  %v774 = vmax.f32 %v613, 0.0
  %v775 = vmax.f32 %v407, 0.0
  %v776 = vmax.f32 %v616, 0.0
  %v777 = vmax.f32 %v410, 0.0
  %v778 = vmax.f32 %v619, 0.0
  %v779 = vmax.f32 %v413, 0.0
  %v780 = vmax.f32 %v622, 0.0
  %v781 = vmax.f32 %v416, 0.0
  %v782 = vmax.f32 %v625, 0.0
  %v783 = vmax.f32 %v419, 0.0
  %v784 = vmax.f32 %v628, 0.0
  %v785 = vmax.f32 %v422, 0.0
  %v786 = vmax.f32 %v631, 0.0
  %v787 = vmax.f32 %v425, 0.0
  %v788 = vmax.f32 %v634, 0.0
  %v789 = vmax.f32 %v428, 0.0
  %v790 = vmax.f32 %v637, 0.0
  %v791 = vmax.f32 %v431, 0.0
  %v792 = vmax.f32 %v640, 0.0
  %v793 = vmax.f32 %v434, 0.0
  %v794 = vmax.f32 %v643, 0.0
  %v795 = vmax.f32 %v437, 0.0
  %v796 = vmax.f32 %v646, 0.0
  %v797 = vmax.f32 %v440, 0.0
  %v798 = vmax.f32 %v649, 0.0
  %v799 = vmax.f32 %v443, 0.0
  %v800 = vmax.f32 %v652, 0.0
  %v801 = vmax.f32 %v446, 0.0
  %v802 = vmax.f32 %v655, 0.0
  %v803 = vmax.f32 %v449, 0.0
  %v804 = vmax.f32 %v658, 0.0
  %v805 = vmax.f32 %v452, 0.0
  %v806 = vmax.f32 %v661, 0.0
  %v807 = vmax.f32 %v455, 0.0
  %v808 = vmax.f32 %v664, 0.0
  %v809 = vmax.f32 %v458, 0.0
  %v810 = vmax.f32 %v667, 0.0
  %v811 = vmax.f32 %v461, 0.0
  %v812 = vmax.f32 %v670, 0.0
  %v813 = vmax.f32 %v464, 0.0
  %v814 = vmax.f32 %v673, 0.0
  %v815 = vmax.f32 %v467, 0.0
  %v816 = vmax.f32 %v676, 0.0
  %v817 = vmax.f32 %v470, 0.0
  %v818 = vmax.f32 %v679, 0.0
  %v819 = vmax.f32 %v473, 0.0
  %v820 = vmax.f32 %v682, 0.0
  %v821 = vmax.f32 %v476, 0.0
  %v822 = vmax.f32 %v685, 0.0
  %v823 = vmax.f32 %v479, 0.0
  %v824 = vmax.f32 %v688, 0.0
  %v825 = vmax.f32 %v482, 0.0
  %v826 = vmax.f32 %v691, 0.0
  %v827 = vmax.f32 %v485, 0.0
  %v828 = vmax.f32 %v694, 0.0
  %v829 = vsel %vm699, %v701, %v296
  %v830 = vsel %vm700, %v702, %v505
  %v831 = vsel %vm699, %v703, %v299
  %v832 = vsel %vm700, %v704, %v508
  %v833 = vsel %vm699, %v705, %v302
  %v834 = vsel %vm700, %v706, %v511
  %v835 = vsel %vm699, %v707, %v305
  %v836 = vsel %vm700, %v708, %v514
  %v837 = vsel %vm699, %v709, %v308
  %v838 = vsel %vm700, %v710, %v517
  %v839 = vsel %vm699, %v711, %v311
  %v840 = vsel %vm700, %v712, %v520
  %v841 = vsel %vm699, %v713, %v314
  %v842 = vsel %vm700, %v714, %v523
  %v843 = vsel %vm699, %v715, %v317
  %v844 = vsel %vm700, %v716, %v526
  %v845 = vsel %vm699, %v717, %v320
  %v846 = vsel %vm700, %v718, %v529
  %v847 = vsel %vm699, %v719, %v323
  %v848 = vsel %vm700, %v720, %v532
  %v849 = vsel %vm699, %v721, %v326
  %v850 = vsel %vm700, %v722, %v535
  %v851 = vsel %vm699, %v723, %v329
  %v852 = vsel %vm700, %v724, %v538
  %v853 = vsel %vm699, %v725, %v332
  %v854 = vsel %vm700, %v726, %v541
  %v855 = vsel %vm699, %v727, %v335
  %v856 = vsel %vm700, %v728, %v544
  %v857 = vsel %vm699, %v729, %v338
  %v858 = vsel %vm700, %v730, %v547
  %v859 = vsel %vm699, %v731, %v341
  %v860 = vsel %vm700, %v732, %v550
  %v861 = vsel %vm699, %v733, %v344
  %v862 = vsel %vm700, %v734, %v553
  %v863 = vsel %vm699, %v735, %v347
  %v864 = vsel %vm700, %v736, %v556
  %v865 = vsel %vm699, %v737, %v350
  %v866 = vsel %vm700, %v738, %v559
  %v867 = vsel %vm699, %v739, %v353
  %v868 = vsel %vm700, %v740, %v562
  %v869 = vsel %vm699, %v741, %v356
  %v870 = vsel %vm700, %v742, %v565
  %v871 = vsel %vm699, %v743, %v359
  %v872 = vsel %vm700, %v744, %v568
  %v873 = vsel %vm699, %v745, %v362
  %v874 = vsel %vm700, %v746, %v571
  %v875 = vsel %vm699, %v747, %v365
  %v876 = vsel %vm700, %v748, %v574
  %v877 = vsel %vm699, %v749, %v368
  %v878 = vsel %vm700, %v750, %v577
  %v879 = vsel %vm699, %v751, %v371
  %v880 = vsel %vm700, %v752, %v580
  %v881 = vsel %vm699, %v753, %v374
  %v882 = vsel %vm700, %v754, %v583
  %v883 = vsel %vm699, %v755, %v377
  %v884 = vsel %vm700, %v756, %v586
  %v885 = vsel %vm699, %v757, %v380
  %v886 = vsel %vm700, %v758, %v589
  %v887 = vsel %vm699, %v759, %v383
  %v888 = vsel %vm700, %v760, %v592
  %v889 = vsel %vm699, %v761, %v386
  %v890 = vsel %vm700, %v762, %v595
  %v891 = vsel %vm699, %v763, %v389
  %v892 = vsel %vm700, %v764, %v598
  %v893 = vsel %vm699, %v765, %v392
  %v894 = vsel %vm700, %v766, %v601
  %v895 = vsel %vm699, %v767, %v395
  %v896 = vsel %vm700, %v768, %v604
  %v897 = vsel %vm699, %v769, %v398
  %v898 = vsel %vm700, %v770, %v607
  %v899 = vsel %vm699, %v771, %v401
  %v900 = vsel %vm700, %v772, %v610
  %v901 = vsel %vm699, %v773, %v404
  %v902 = vsel %vm700, %v774, %v613
  %v903 = vsel %vm699, %v775, %v407
  %v904 = vsel %vm700, %v776, %v616
  %v905 = vsel %vm699, %v777, %v410
  %v906 = vsel %vm700, %v778, %v619
  %v907 = vsel %vm699, %v779, %v413
  %v908 = vsel %vm700, %v780, %v622
  %v909 = vsel %vm699, %v781, %v416
  %v910 = vsel %vm700, %v782, %v625
  %v911 = vsel %vm699, %v783, %v419
  %v912 = vsel %vm700, %v784, %v628
  %v913 = vsel %vm699, %v785, %v422
  %v914 = vsel %vm700, %v786, %v631
  %v915 = vsel %vm699, %v787, %v425
  %v916 = vsel %vm700, %v788, %v634
  %v917 = vsel %vm699, %v789, %v428
  %v918 = vsel %vm700, %v790, %v637
  %v919 = vsel %vm699, %v791, %v431
  %v920 = vsel %vm700, %v792, %v640
  %v921 = vsel %vm699, %v793, %v434
  %v922 = vsel %vm700, %v794, %v643
  %v923 = vsel %vm699, %v795, %v437
  %v924 = vsel %vm700, %v796, %v646
  %v925 = vsel %vm699, %v797, %v440
  %v926 = vsel %vm700, %v798, %v649
  %v927 = vsel %vm699, %v799, %v443
  %v928 = vsel %vm700, %v800, %v652
  %v929 = vsel %vm699, %v801, %v446
  %v930 = vsel %vm700, %v802, %v655
  %v931 = vsel %vm699, %v803, %v449
  %v932 = vsel %vm700, %v804, %v658
  %v933 = vsel %vm699, %v805, %v452
  %v934 = vsel %vm700, %v806, %v661
  %v935 = vsel %vm699, %v807, %v455
  %v936 = vsel %vm700, %v808, %v664
  %v937 = vsel %vm699, %v809, %v458
  %v938 = vsel %vm700, %v810, %v667
  %v939 = vsel %vm699, %v811, %v461
  %v940 = vsel %vm700, %v812, %v670
  %v941 = vsel %vm699, %v813, %v464
  %v942 = vsel %vm700, %v814, %v673
  %v943 = vsel %vm699, %v815, %v467
  %v944 = vsel %vm700, %v816, %v676
  %v945 = vsel %vm699, %v817, %v470
  %v946 = vsel %vm700, %v818, %v679
  %v947 = vsel %vm699, %v819, %v473
  %v948 = vsel %vm700, %v820, %v682
  %v949 = vsel %vm699, %v821, %v476
  %v950 = vsel %vm700, %v822, %v685
  %v951 = vsel %vm699, %v823, %v479
  %v952 = vsel %vm700, %v824, %v688
  %v953 = vsel %vm699, %v825, %v482
  %v954 = vsel %vm700, %v826, %v691
  %v955 = vsel %vm699, %v827, %v485
  %v956 = vsel %vm700, %v828, %v694
  %957 = vst [vmem:[%s2] sm:$0xff] %v829
  %vm958 = vcmask 785408
  %959 = vst.msk [vmem:[%s2 + $0x8] sm:$0xff] %vm958, %v830
  %960 = vst [vmem:[%s2 + $0x10] sm:$0xff] %v831
  %961 = vst.msk [vmem:[%s2 + $0x18] sm:$0xff] %vm958, %v832
  %962 = vst [vmem:[%s2 + $0x20] sm:$0xff] %v833
  %963 = vst.msk [vmem:[%s2 + $0x28] sm:$0xff] %vm958, %v834
  %964 = vst [vmem:[%s2 + $0x30] sm:$0xff] %v835
  %965 = vst.msk [vmem:[%s2 + $0x38] sm:$0xff] %vm958, %v836
  %966 = vst [vmem:[%s2 + $0x40] sm:$0xff] %v837
  %967 = vst.msk [vmem:[%s2 + $0x48] sm:$0xff] %vm958, %v838
  %968 = vst [vmem:[%s2 + $0x50] sm:$0xff] %v839
  %969 = vst.msk [vmem:[%s2 + $0x58] sm:$0xff] %vm958, %v840
  %970 = vst [vmem:[%s2 + $0x60] sm:$0xff] %v841
  %971 = vst.msk [vmem:[%s2 + $0x68] sm:$0xff] %vm958, %v842
  %972 = vst [vmem:[%s2 + $0x70] sm:$0xff] %v843
  %973 = vst.msk [vmem:[%s2 + $0x78] sm:$0xff] %vm958, %v844
  %974 = vst [vmem:[%s2 + $0x80] sm:$0xff] %v845
  %975 = vst.msk [vmem:[%s2 + $0x88] sm:$0xff] %vm958, %v846
  %976 = vst [vmem:[%s2 + $0x90] sm:$0xff] %v847
  %977 = vst.msk [vmem:[%s2 + $0x98] sm:$0xff] %vm958, %v848
  %978 = vst [vmem:[%s2 + $0xa0] sm:$0xff] %v849
  %979 = vst.msk [vmem:[%s2 + $0xa8] sm:$0xff] %vm958, %v850
  %980 = vst [vmem:[%s2 + $0xb0] sm:$0xff] %v851
  %981 = vst.msk [vmem:[%s2 + $0xb8] sm:$0xff] %vm958, %v852
  %982 = vst [vmem:[%s2 + $0xc0] sm:$0xff] %v853
  %983 = vst.msk [vmem:[%s2 + $0xc8] sm:$0xff] %vm958, %v854
  %984 = vst [vmem:[%s2 + $0xd0] sm:$0xff] %v855
  %985 = vst.msk [vmem:[%s2 + $0xd8] sm:$0xff] %vm958, %v856
  %986 = vst [vmem:[%s2 + $0xe0] sm:$0xff] %v857
  %987 = vst.msk [vmem:[%s2 + $0xe8] sm:$0xff] %vm958, %v858
  %988 = vst [vmem:[%s2 + $0xf0] sm:$0xff] %v859
  %989 = vst.msk [vmem:[%s2 + $0xf8] sm:$0xff] %vm958, %v860
  %990 = vst [vmem:[%s2 + $0x100] sm:$0xff] %v861
  %991 = vst.msk [vmem:[%s2 + $0x108] sm:$0xff] %vm958, %v862
  %992 = vst [vmem:[%s2 + $0x110] sm:$0xff] %v863
  %993 = vst.msk [vmem:[%s2 + $0x118] sm:$0xff] %vm958, %v864
  %994 = vst [vmem:[%s2 + $0x120] sm:$0xff] %v865
  %995 = vst.msk [vmem:[%s2 + $0x128] sm:$0xff] %vm958, %v866
  %996 = vst [vmem:[%s2 + $0x130] sm:$0xff] %v867
  %997 = vst.msk [vmem:[%s2 + $0x138] sm:$0xff] %vm958, %v868
  %998 = vst [vmem:[%s2 + $0x140] sm:$0xff] %v869
  %999 = vst.msk [vmem:[%s2 + $0x148] sm:$0xff] %vm958, %v870
  %1000 = vst [vmem:[%s2 + $0x150] sm:$0xff] %v871
  %1001 = vst.msk [vmem:[%s2 + $0x158] sm:$0xff] %vm958, %v872
  %1002 = vst [vmem:[%s2 + $0x160] sm:$0xff] %v873
  %1003 = vst.msk [vmem:[%s2 + $0x168] sm:$0xff] %vm958, %v874
  %1004 = vst [vmem:[%s2 + $0x170] sm:$0xff] %v875
  %1005 = vst.msk [vmem:[%s2 + $0x178] sm:$0xff] %vm958, %v876
  %1006 = vst [vmem:[%s2 + $0x180] sm:$0xff] %v877
  %1007 = vst.msk [vmem:[%s2 + $0x188] sm:$0xff] %vm958, %v878
  %1008 = vst [vmem:[%s2 + $0x190] sm:$0xff] %v879
  %1009 = vst.msk [vmem:[%s2 + $0x198] sm:$0xff] %vm958, %v880
  %1010 = vst [vmem:[%s2 + $0x1a0] sm:$0xff] %v881
  %1011 = vst.msk [vmem:[%s2 + $0x1a8] sm:$0xff] %vm958, %v882
  %1012 = vst [vmem:[%s2 + $0x1b0] sm:$0xff] %v883
  %1013 = vst.msk [vmem:[%s2 + $0x1b8] sm:$0xff] %vm958, %v884
  %1014 = vst [vmem:[%s2 + $0x1c0] sm:$0xff] %v885
  %1015 = vst.msk [vmem:[%s2 + $0x1c8] sm:$0xff] %vm958, %v886
  %1016 = vst [vmem:[%s2 + $0x1d0] sm:$0xff] %v887
  %1017 = vst.msk [vmem:[%s2 + $0x1d8] sm:$0xff] %vm958, %v888
  %1018 = vst [vmem:[%s2 + $0x1e0] sm:$0xff] %v889
  %1019 = vst.msk [vmem:[%s2 + $0x1e8] sm:$0xff] %vm958, %v890
  %1020 = vst [vmem:[%s2 + $0x1f0] sm:$0xff] %v891
  %1021 = vst.msk [vmem:[%s2 + $0x1f8] sm:$0xff] %vm958, %v892
  %1022 = vst [vmem:[%s2 + $0x200] sm:$0xff] %v893
  %1023 = vst.msk [vmem:[%s2 + $0x208] sm:$0xff] %vm958, %v894
  %1024 = vst [vmem:[%s2 + $0x210] sm:$0xff] %v895
  %1025 = vst.msk [vmem:[%s2 + $0x218] sm:$0xff] %vm958, %v896
  %1026 = vst [vmem:[%s2 + $0x220] sm:$0xff] %v897
  %1027 = vst.msk [vmem:[%s2 + $0x228] sm:$0xff] %vm958, %v898
  %1028 = vst [vmem:[%s2 + $0x230] sm:$0xff] %v899
  %1029 = vst.msk [vmem:[%s2 + $0x238] sm:$0xff] %vm958, %v900
  %1030 = vst [vmem:[%s2 + $0x240] sm:$0xff] %v901
  %1031 = vst.msk [vmem:[%s2 + $0x248] sm:$0xff] %vm958, %v902
  %1032 = vst [vmem:[%s2 + $0x250] sm:$0xff] %v903
  %1033 = vst.msk [vmem:[%s2 + $0x258] sm:$0xff] %vm958, %v904
  %1034 = vst [vmem:[%s2 + $0x260] sm:$0xff] %v905
  %1035 = vst.msk [vmem:[%s2 + $0x268] sm:$0xff] %vm958, %v906
  %1036 = vst [vmem:[%s2 + $0x270] sm:$0xff] %v907
  %1037 = vst.msk [vmem:[%s2 + $0x278] sm:$0xff] %vm958, %v908
  %1038 = vst [vmem:[%s2 + $0x280] sm:$0xff] %v909
  %1039 = vst.msk [vmem:[%s2 + $0x288] sm:$0xff] %vm958, %v910
  %1040 = vst [vmem:[%s2 + $0x290] sm:$0xff] %v911
  %1041 = vst.msk [vmem:[%s2 + $0x298] sm:$0xff] %vm958, %v912
  %1042 = vst [vmem:[%s2 + $0x2a0] sm:$0xff] %v913
  %1043 = vst.msk [vmem:[%s2 + $0x2a8] sm:$0xff] %vm958, %v914
  %1044 = vst [vmem:[%s2 + $0x2b0] sm:$0xff] %v915
  %1045 = vst.msk [vmem:[%s2 + $0x2b8] sm:$0xff] %vm958, %v916
  %1046 = vst [vmem:[%s2 + $0x2c0] sm:$0xff] %v917
  %1047 = vst.msk [vmem:[%s2 + $0x2c8] sm:$0xff] %vm958, %v918
  %1048 = vst [vmem:[%s2 + $0x2d0] sm:$0xff] %v919
  %1049 = vst.msk [vmem:[%s2 + $0x2d8] sm:$0xff] %vm958, %v920
  %1050 = vst [vmem:[%s2 + $0x2e0] sm:$0xff] %v921
  %1051 = vst.msk [vmem:[%s2 + $0x2e8] sm:$0xff] %vm958, %v922
  %1052 = vst [vmem:[%s2 + $0x2f0] sm:$0xff] %v923
  %1053 = vst.msk [vmem:[%s2 + $0x2f8] sm:$0xff] %vm958, %v924
  %1054 = vst [vmem:[%s2 + $0x300] sm:$0xff] %v925
  %1055 = vst.msk [vmem:[%s2 + $0x308] sm:$0xff] %vm958, %v926
  %1056 = vst [vmem:[%s2 + $0x310] sm:$0xff] %v927
  %1057 = vst.msk [vmem:[%s2 + $0x318] sm:$0xff] %vm958, %v928
  %1058 = vst [vmem:[%s2 + $0x320] sm:$0xff] %v929
  %1059 = vst.msk [vmem:[%s2 + $0x328] sm:$0xff] %vm958, %v930
  %1060 = vst [vmem:[%s2 + $0x330] sm:$0xff] %v931
  %1061 = vst.msk [vmem:[%s2 + $0x338] sm:$0xff] %vm958, %v932
  %1062 = vst [vmem:[%s2 + $0x340] sm:$0xff] %v933
  %1063 = vst.msk [vmem:[%s2 + $0x348] sm:$0xff] %vm958, %v934
  %1064 = vst [vmem:[%s2 + $0x350] sm:$0xff] %v935
  %1065 = vst.msk [vmem:[%s2 + $0x358] sm:$0xff] %vm958, %v936
  %1066 = vst [vmem:[%s2 + $0x360] sm:$0xff] %v937
  %1067 = vst.msk [vmem:[%s2 + $0x368] sm:$0xff] %vm958, %v938
  %1068 = vst [vmem:[%s2 + $0x370] sm:$0xff] %v939
  %1069 = vst.msk [vmem:[%s2 + $0x378] sm:$0xff] %vm958, %v940
  %1070 = vst [vmem:[%s2 + $0x380] sm:$0xff] %v941
  %1071 = vst.msk [vmem:[%s2 + $0x388] sm:$0xff] %vm958, %v942
  %1072 = vst [vmem:[%s2 + $0x390] sm:$0xff] %v943
  %1073 = vst.msk [vmem:[%s2 + $0x398] sm:$0xff] %vm958, %v944
  %1074 = vst [vmem:[%s2 + $0x3a0] sm:$0xff] %v945
  %1075 = vst.msk [vmem:[%s2 + $0x3a8] sm:$0xff] %vm958, %v946
  %1076 = vst [vmem:[%s2 + $0x3b0] sm:$0xff] %v947
  %1077 = vst.msk [vmem:[%s2 + $0x3b8] sm:$0xff] %vm958, %v948
  %1078 = vst [vmem:[%s2 + $0x3c0] sm:$0xff] %v949
  %1079 = vst.msk [vmem:[%s2 + $0x3c8] sm:$0xff] %vm958, %v950
  %1080 = vst [vmem:[%s2 + $0x3d0] sm:$0xff] %v951
  %1081 = vst.msk [vmem:[%s2 + $0x3d8] sm:$0xff] %vm958, %v952
  %1082 = vst [vmem:[%s2 + $0x3e0] sm:$0xff] %v953
  %1083 = vst.msk [vmem:[%s2 + $0x3e8] sm:$0xff] %vm958, %v954
  %1084 = vst [vmem:[%s2 + $0x3f0] sm:$0xff] %v955
  %1085 = vst.msk [vmem:[%s2 + $0x3f8] sm:$0xff] %vm958, %v956
  // Predicated region
  $region10: #{inception_d_forward.5} parent=0 // pred_check
    _
  $region11: #{inception_d_forward.5} parent=0 // pred_check_branch
    %1087 = sbr.rel (0) target = $region13
  $region12: #{inception_d_forward.5} parent=0 // pred_region
    _
  $region13: #{inception_d_forward.5} parent=0 // pred_fallthru
    _
  // Predicated region
  $region14: #{inception_d_forward.5} parent=0 // pred_check
    _
  $region15: #{inception_d_forward.5} parent=0 // pred_check_branch
    %1089 = sbr.rel (0) target = $region17
  $region16: #{inception_d_forward.5} parent=0 // pred_region
    _
  $region17: #{inception_d_forward.5} parent=0 // pred_fallthru
    _

// kernel: inception_d_forward.9
$region0: #{inception_d_forward.9}
  #allocation0 [shape = 'u32[]', space=smem, size = 0x4, offset = 0x4, fixed_abs, tag = 'smem constant byte address 0x4 - core index']
  #allocation1 [shape = 'u32[72,128]{1,0:T(1,128)}', space=vmem, size = 0x9000, scoped, tag = 'internal scratch']
  %s0 = inlined_call_operand.vmem [shape: f32[2,326,32], index: 0, kind: input, shape index: {}]
  %s1 = inlined_call_operand.vmem [shape: f32[2,288,32], index: 1, kind: output, shape index: {}]
  %s2 = sld [smem:[#allocation0]]
  $region37: #{inception_d_forward.9} parent=0
    _
  %s4 = ssub.s32 1, %s2
  %s5 = scalar_select 0, %s4, %s2
  loop: start=0, step=1, limit=4
  $region2: #{inception_d_forward.9} parent=0 // loop_pre_header
    _
  $region3: #{inception_d_forward.9} parent=0 // loop_header
    %s7 = sphi 0, %s11
    %p8 = scmp.ge.s32.totalorder %s7, 4
    %s17 = sphi 0, %s19
    %s20 = sphi 0, %s17
    %s21 = sphi 0, %s20
    %s37 = sphi 0, %s21
    %s43 = sphi 0, %s45
    %s46 = sphi 0, %s43
    %s47 = sphi 0, %s46
    %s63 = sphi 0, %s47
  $region4: #{inception_d_forward.9} parent=0 // loop_header_branch
    %10 = sbr.rel (%p8) target = $region8
  $region5: #{inception_d_forward.9} parent=0 // loop_body
    %s12 = ssub.s32 %s7, 1
    %s13 = ssub.s32 %s7, 2
    %s14 = sadd.s32 %s7, 1
    %s15 = ssub.s32 %s7, %s14
    %p16 = scmp.eq.s32.totalorder %s15, 0
    %s18 = sadd.s32 %s17, 1
    %s19 = scalar_select %p16, %s17, %s18
    %p22 = pneg %p16
    %p23 = scmp.eq.s32.totalorder %s7, 1
    %p24 = por %p22, %p23
    %p25 = scmp.ne.s32.totalorder %s17, %s20
    %p26 = scmp.eq.s32.totalorder %s7, 0
    %p27 = por %p25, %p26
    %p28 = scmp.ne.s32.totalorder %s17, %s20
    %p29 = scmp.eq.s32.totalorder %s12, 1
    %p30 = por %p28, %p29
    %p31 = scmp.ne.s32.totalorder %s20, %s21
    %p32 = scmp.eq.s32.totalorder %s12, 0
    %p33 = por %p31, %p32
    %p34 = scmp.ne.s32.totalorder %s20, %s21
    %p35 = scmp.eq.s32.totalorder %s13, 1
    %p36 = por %p34, %p35
    %p38 = scmp.ne.s32.totalorder %s21, %s37
    %p39 = scmp.eq.s32.totalorder %s13, 0
    %p40 = por %p38, %p39
    %s41 = ssub.s32 %s7, %s14
    %p42 = scmp.eq.s32.totalorder %s41, 0
    %s44 = sadd.s32 %s43, 1
    %s45 = scalar_select %p42, %s43, %s44
    %p48 = pneg %p42
    %p49 = scmp.eq.s32.totalorder %s7, 1
    %p50 = por %p48, %p49
    %p51 = scmp.ne.s32.totalorder %s43, %s46
    %p52 = scmp.eq.s32.totalorder %s7, 0
    %p53 = por %p51, %p52
    %p54 = scmp.ne.s32.totalorder %s43, %s46
    %p55 = scmp.eq.s32.totalorder %s12, 1
    %p56 = por %p54, %p55
    %p57 = scmp.ne.s32.totalorder %s46, %s47
    %p58 = scmp.eq.s32.totalorder %s12, 0
    %p59 = por %p57, %p58
    %p60 = scmp.ne.s32.totalorder %s46, %s47
    %p61 = scmp.eq.s32.totalorder %s13, 1
    %p62 = por %p60, %p61
    %p64 = scmp.ne.s32.totalorder %s47, %s63
    %p65 = scmp.eq.s32.totalorder %s13, 0
    %p66 = por %p64, %p65
    %p67 = scmp.le.s32.totalorder 1, %s7
    %p68 = scmp.lt.s32.totalorder %s7, 3
    %p69 = pnand %p67, %p68
    %p70 = pneg %p69
    // Predicated region
    $region9: #{inception_d_forward.9} parent=5 // pred_check
      _
    $region10: #{inception_d_forward.9} parent=5 // pred_check_branch
      %72 = sbr.rel (%p69) target = $region12
    $region11: #{inception_d_forward.9} parent=5 // pred_region
      %s73 = ssub.s32 %s7, 1
    $region12: #{inception_d_forward.9} parent=5 // pred_fallthru
      _
    %p74 = scmp.lt.s32.totalorder %s7, 2
    // Predicated region
    $region13: #{inception_d_forward.9} parent=5 // pred_check
      %p75 = pneg %p74
    $region14: #{inception_d_forward.9} parent=5 // pred_check_branch
      %77 = sbr.rel (%p75) target = $region16
    $region15: #{inception_d_forward.9} parent=5 // pred_region
      // Predicated region
      $region17: #{inception_d_forward.9} parent=15 // pred_check
        %p78 = pneg %p27
      $region18: #{inception_d_forward.9} parent=15 // pred_check_branch
        %80 = sbr.rel (%p78) target = $region20
      $region19: #{inception_d_forward.9} parent=15 // pred_region
        %p81 = scmp.lt.s32.totalorder %s7, 1
        %s82 = scalar_select %p81, %s7, 1
        %s83 = smul.addr %s82, 41
        %s84 = smul.addr %s83, 8
        %s85 = scalar_lea.vmem %s0, %s84
      $region20: #{inception_d_forward.9} parent=15 // pred_fallthru
        _
    $region16: #{inception_d_forward.9} parent=5 // pred_fallthru
      _
    %p86 = scmp.le.s32.totalorder 1, %s7
    %p87 = scmp.lt.s32.totalorder %s7, 3
    %p88 = pnand %p86, %p87
    %p89 = pneg %p88
    // Predicated region
    $region21: #{inception_d_forward.9} parent=5 // pred_check
      _
    $region22: #{inception_d_forward.9} parent=5 // pred_check_branch
      %91 = sbr.rel (%p88) target = $region24
    $region23: #{inception_d_forward.9} parent=5 // pred_region
      %s92 = ssub.s32 %s7, 1
      %p93 = scmp.lt.s32.totalorder %s12, 1
      %s94 = scalar_select %p93, %s12, 1
      %s95 = smul.addr %s94, 41
      %s96 = smul.addr %s95, 8
      %s97 = scalar_lea.vmem %s0, %s96
      %p98 = pneg %p33
      %p99 = pneg %p30
      %p100 = pneg %p59
      %p101 = pneg %p56
      %p102 = scmp.lt.s32.totalorder %s12, 1
      %s103 = scalar_select %p102, %s12, 1
      %s104 = smul.addr %s103, 36
      %s105 = smul.addr %s104, 8
      %s106 = scalar_lea.vmem %s1, %s105
      %p107 = scmp.lt.s32.totalorder %s12, 1
      %s108 = scalar_select %p107, %s12, 1
      %s109 = smul.addr %s108, 41
      %s110 = smul.addr %s109, 8
      %s111 = scalar_lea.vmem %s0, %s110
      %p112 = scmp.lt.s32.totalorder %s12, 1
      %s113 = scalar_select %p112, %s12, 1
      %s114 = smul.addr %s113, 36
      %s115 = smul.addr %s114, 8
      %s116 = scalar_lea.vmem %s1, %s115
      %v117 = vld [vmem:[%s111] sm:$0xff]
      %v118 = vld [vmem:[%s111 + $0x8] sm:$0xff]
      %v119 = vld [vmem:[%s111 + $0x10] sm:$0xff]
      %v120 = vld [vmem:[%s111 + $0x18] sm:$0xff]
      %v121 = vld [vmem:[%s111 + $0x20] sm:$0xff]
      %v122 = vld [vmem:[%s111 + $0x28] sm:$0xff]
      %v123 = vld [vmem:[%s111 + $0x30] sm:$0xff]
      %v124 = vld [vmem:[%s111 + $0x38] sm:$0xff]
      %v125 = vld [vmem:[%s111 + $0x40] sm:$0xff]
      %v126 = vld [vmem:[%s111 + $0x48] sm:$0xff]
      %v127 = vld [vmem:[%s111 + $0x50] sm:$0xff]
      %v128 = vld [vmem:[%s111 + $0x58] sm:$0xff]
      %v129 = vld [vmem:[%s111 + $0x60] sm:$0xff]
      %v130 = vld [vmem:[%s111 + $0x68] sm:$0xff]
      %v131 = vld [vmem:[%s111 + $0x70] sm:$0xff]
      %v132 = vld [vmem:[%s111 + $0x78] sm:$0xff]
      %v133 = vld [vmem:[%s111 + $0x80] sm:$0xff]
      %v134 = vld [vmem:[%s111 + $0x88] sm:$0xff]
      %v135 = vld [vmem:[%s111 + $0x90] sm:$0xff]
      %v136 = vld [vmem:[%s111 + $0x98] sm:$0xff]
      %v137 = vld [vmem:[%s111 + $0xa0] sm:$0xff]
      %v138 = vld [vmem:[%s111 + $0xa8] sm:$0xff]
      %v139 = vld [vmem:[%s111 + $0xb0] sm:$0xff]
      %v140 = vld [vmem:[%s111 + $0xb8] sm:$0xff]
      %v141 = vld [vmem:[%s111 + $0xc0] sm:$0xff]
      %v142 = vld [vmem:[%s111 + $0xc8] sm:$0xff]
      %v143 = vld [vmem:[%s111 + $0xd0] sm:$0xff]
      %v144 = vld [vmem:[%s111 + $0xd8] sm:$0xff]
      %v145 = vld [vmem:[%s111 + $0xe0] sm:$0xff]
      %v146 = vld [vmem:[%s111 + $0xe8] sm:$0xff]
      %v147 = vld [vmem:[%s111 + $0xf0] sm:$0xff]
      %v148 = vld [vmem:[%s111 + $0xf8] sm:$0xff]
      %v149 = vld [vmem:[%s111 + $0x100] sm:$0xff]
      %v150 = vld [vmem:[%s111 + $0x108] sm:$0xff]
      %v151 = vld [vmem:[%s111 + $0x110] sm:$0xff]
      %v152 = vld [vmem:[%s111 + $0x118] sm:$0xff]
      %v153 = vld [vmem:[%s111 + $0x1] sm:$0xff]
      %v154 = vld [vmem:[%s111 + $0x9] sm:$0xff]
      %v155 = vld [vmem:[%s111 + $0x11] sm:$0xff]
      %v156 = vld [vmem:[%s111 + $0x19] sm:$0xff]
      %v157 = vld [vmem:[%s111 + $0x21] sm:$0xff]
      %v158 = vld [vmem:[%s111 + $0x29] sm:$0xff]
      %v159 = vld [vmem:[%s111 + $0x31] sm:$0xff]
      %v160 = vld [vmem:[%s111 + $0x39] sm:$0xff]
      %v161 = vld [vmem:[%s111 + $0x41] sm:$0xff]
      %v162 = vld [vmem:[%s111 + $0x49] sm:$0xff]
      %v163 = vld [vmem:[%s111 + $0x51] sm:$0xff]
      %v164 = vld [vmem:[%s111 + $0x59] sm:$0xff]
      %v165 = vld [vmem:[%s111 + $0x61] sm:$0xff]
      %v166 = vld [vmem:[%s111 + $0x69] sm:$0xff]
      %v167 = vld [vmem:[%s111 + $0x71] sm:$0xff]
      %v168 = vld [vmem:[%s111 + $0x79] sm:$0xff]
      %v169 = vld [vmem:[%s111 + $0x81] sm:$0xff]
      %v170 = vld [vmem:[%s111 + $0x89] sm:$0xff]
      %v171 = vld [vmem:[%s111 + $0x91] sm:$0xff]
      %v172 = vld [vmem:[%s111 + $0x99] sm:$0xff]
      %v173 = vld [vmem:[%s111 + $0xa1] sm:$0xff]
      %v174 = vld [vmem:[%s111 + $0xa9] sm:$0xff]
      %v175 = vld [vmem:[%s111 + $0xb1] sm:$0xff]
      %v176 = vld [vmem:[%s111 + $0xb9] sm:$0xff]
      %v177 = vld [vmem:[%s111 + $0xc1] sm:$0xff]
      %v178 = vld [vmem:[%s111 + $0xc9] sm:$0xff]
      %v179 = vld [vmem:[%s111 + $0xd1] sm:$0xff]
      %v180 = vld [vmem:[%s111 + $0xd9] sm:$0xff]
      %v181 = vld [vmem:[%s111 + $0xe1] sm:$0xff]
      %v182 = vld [vmem:[%s111 + $0xe9] sm:$0xff]
      %v183 = vld [vmem:[%s111 + $0xf1] sm:$0xff]
      %v184 = vld [vmem:[%s111 + $0xf9] sm:$0xff]
      %v185 = vld [vmem:[%s111 + $0x101] sm:$0xff]
      %v186 = vld [vmem:[%s111 + $0x109] sm:$0xff]
      %v187 = vld [vmem:[%s111 + $0x111] sm:$0xff]
      %v188 = vld [vmem:[%s111 + $0x119] sm:$0xff]
      %v189 = vadd.f32 %v117, %v153
      %v190 = vadd.f32 %v118, %v154
      %v191 = vadd.f32 %v119, %v155
      %v192 = vadd.f32 %v120, %v156
      %v193 = vadd.f32 %v121, %v157
      %v194 = vadd.f32 %v122, %v158
      %v195 = vadd.f32 %v123, %v159
      %v196 = vadd.f32 %v124, %v160
      %v197 = vadd.f32 %v125, %v161
      %v198 = vadd.f32 %v126, %v162
      %v199 = vadd.f32 %v127, %v163
      %v200 = vadd.f32 %v128, %v164
      %v201 = vadd.f32 %v129, %v165
      %v202 = vadd.f32 %v130, %v166
      %v203 = vadd.f32 %v131, %v167
      %v204 = vadd.f32 %v132, %v168
      %v205 = vadd.f32 %v133, %v169
      %v206 = vadd.f32 %v134, %v170
      %v207 = vadd.f32 %v135, %v171
      %v208 = vadd.f32 %v136, %v172
      %v209 = vadd.f32 %v137, %v173
      %v210 = vadd.f32 %v138, %v174
      %v211 = vadd.f32 %v139, %v175
      %v212 = vadd.f32 %v140, %v176
      %v213 = vadd.f32 %v141, %v177
      %v214 = vadd.f32 %v142, %v178
      %v215 = vadd.f32 %v143, %v179
      %v216 = vadd.f32 %v144, %v180
      %v217 = vadd.f32 %v145, %v181
      %v218 = vadd.f32 %v146, %v182
      %v219 = vadd.f32 %v147, %v183
      %v220 = vadd.f32 %v148, %v184
      %v221 = vadd.f32 %v149, %v185
      %v222 = vadd.f32 %v150, %v186
      %v223 = vadd.f32 %v151, %v187
      %v224 = vadd.f32 %v152, %v188
      %v225 = vld [vmem:[%s111 + $0x2] sm:$0xff]
      %v226 = vld [vmem:[%s111 + $0xa] sm:$0xff]
      %v227 = vld [vmem:[%s111 + $0x12] sm:$0xff]
      %v228 = vld [vmem:[%s111 + $0x1a] sm:$0xff]
      %v229 = vld [vmem:[%s111 + $0x22] sm:$0xff]
      %v230 = vld [vmem:[%s111 + $0x2a] sm:$0xff]
      %v231 = vld [vmem:[%s111 + $0x32] sm:$0xff]
      %v232 = vld [vmem:[%s111 + $0x3a] sm:$0xff]
      %v233 = vld [vmem:[%s111 + $0x42] sm:$0xff]
      %v234 = vld [vmem:[%s111 + $0x4a] sm:$0xff]
      %v235 = vld [vmem:[%s111 + $0x52] sm:$0xff]
      %v236 = vld [vmem:[%s111 + $0x5a] sm:$0xff]
      %v237 = vld [vmem:[%s111 + $0x62] sm:$0xff]
      %v238 = vld [vmem:[%s111 + $0x6a] sm:$0xff]
      %v239 = vld [vmem:[%s111 + $0x72] sm:$0xff]
      %v240 = vld [vmem:[%s111 + $0x7a] sm:$0xff]
      %v241 = vld [vmem:[%s111 + $0x82] sm:$0xff]
      %v242 = vld [vmem:[%s111 + $0x8a] sm:$0xff]
      %v243 = vld [vmem:[%s111 + $0x92] sm:$0xff]
      %v244 = vld [vmem:[%s111 + $0x9a] sm:$0xff]
      %v245 = vld [vmem:[%s111 + $0xa2] sm:$0xff]
      %v246 = vld [vmem:[%s111 + $0xaa] sm:$0xff]
      %v247 = vld [vmem:[%s111 + $0xb2] sm:$0xff]
      %v248 = vld [vmem:[%s111 + $0xba] sm:$0xff]
      %v249 = vld [vmem:[%s111 + $0xc2] sm:$0xff]
      %v250 = vld [vmem:[%s111 + $0xca] sm:$0xff]
      %v251 = vld [vmem:[%s111 + $0xd2] sm:$0xff]
      %v252 = vld [vmem:[%s111 + $0xda] sm:$0xff]
      %v253 = vld [vmem:[%s111 + $0xe2] sm:$0xff]
      %v254 = vld [vmem:[%s111 + $0xea] sm:$0xff]
      %v255 = vld [vmem:[%s111 + $0xf2] sm:$0xff]
      %v256 = vld [vmem:[%s111 + $0xfa] sm:$0xff]
      %v257 = vld [vmem:[%s111 + $0x102] sm:$0xff]
      %v258 = vld [vmem:[%s111 + $0x10a] sm:$0xff]
      %v259 = vld [vmem:[%s111 + $0x112] sm:$0xff]
      %v260 = vld [vmem:[%s111 + $0x11a] sm:$0xff]
      %v261 = vadd.f32 %v189, %v225
      %v262 = vadd.f32 %v190, %v226
      %v263 = vadd.f32 %v191, %v227
      %v264 = vadd.f32 %v192, %v228
      %v265 = vadd.f32 %v193, %v229
      %v266 = vadd.f32 %v194, %v230
      %v267 = vadd.f32 %v195, %v231
      %v268 = vadd.f32 %v196, %v232
      %v269 = vadd.f32 %v197, %v233
      %v270 = vadd.f32 %v198, %v234
      %v271 = vadd.f32 %v199, %v235
      %v272 = vadd.f32 %v200, %v236
      %v273 = vadd.f32 %v201, %v237
      %v274 = vadd.f32 %v202, %v238
      %v275 = vadd.f32 %v203, %v239
      %v276 = vadd.f32 %v204, %v240
      %v277 = vadd.f32 %v205, %v241
      %v278 = vadd.f32 %v206, %v242
      %v279 = vadd.f32 %v207, %v243
      %v280 = vadd.f32 %v208, %v244
      %v281 = vadd.f32 %v209, %v245
      %v282 = vadd.f32 %v210, %v246
      %v283 = vadd.f32 %v211, %v247
      %v284 = vadd.f32 %v212, %v248
      %v285 = vadd.f32 %v213, %v249
      %v286 = vadd.f32 %v214, %v250
      %v287 = vadd.f32 %v215, %v251
      %v288 = vadd.f32 %v216, %v252
      %v289 = vadd.f32 %v217, %v253
      %v290 = vadd.f32 %v218, %v254
      %v291 = vadd.f32 %v219, %v255
      %v292 = vadd.f32 %v220, %v256
      %v293 = vadd.f32 %v221, %v257
      %v294 = vadd.f32 %v222, %v258
      %v295 = vadd.f32 %v223, %v259
      %v296 = vadd.f32 %v224, %v260
      %v297 = vld [vmem:[%s111 + $0x122] sm:$0xff]
      %v298 = vld [vmem:[%s111 + $0x12a] sm:$0xff]
      %v299 = vadd.f32 %v261, %v227
      %v300 = vadd.f32 %v262, %v228
      %v301 = vadd.f32 %v263, %v229
      %v302 = vadd.f32 %v264, %v230
      %v303 = vadd.f32 %v265, %v231
      %v304 = vadd.f32 %v266, %v232
      %v305 = vadd.f32 %v267, %v233
      %v306 = vadd.f32 %v268, %v234
      %v307 = vadd.f32 %v269, %v235
      %v308 = vadd.f32 %v270, %v236
      %v309 = vadd.f32 %v271, %v237
      %v310 = vadd.f32 %v272, %v238
      %v311 = vadd.f32 %v273, %v239
      %v312 = vadd.f32 %v274, %v240
      %v313 = vadd.f32 %v275, %v241
      %v314 = vadd.f32 %v276, %v242
      %v315 = vadd.f32 %v277, %v243
      %v316 = vadd.f32 %v278, %v244
      %v317 = vadd.f32 %v279, %v245
      %v318 = vadd.f32 %v280, %v246
      %v319 = vadd.f32 %v281, %v247
      %v320 = vadd.f32 %v282, %v248
      %v321 = vadd.f32 %v283, %v249
      %v322 = vadd.f32 %v284, %v250
      %v323 = vadd.f32 %v285, %v251
      %v324 = vadd.f32 %v286, %v252
      %v325 = vadd.f32 %v287, %v253
      %v326 = vadd.f32 %v288, %v254
      %v327 = vadd.f32 %v289, %v255
      %v328 = vadd.f32 %v290, %v256
      %v329 = vadd.f32 %v291, %v257
      %v330 = vadd.f32 %v292, %v258
      %v331 = vadd.f32 %v293, %v259
      %v332 = vadd.f32 %v294, %v260
      %v333 = vadd.f32 %v295, %v297
      %v334 = vadd.f32 %v296, %v298
      %v335 = vld [vmem:[%s111 + $0x13] sm:$0xff]
      %v336 = vld [vmem:[%s111 + $0x1b] sm:$0xff]
      %v337 = vld [vmem:[%s111 + $0x23] sm:$0xff]
      %v338 = vld [vmem:[%s111 + $0x2b] sm:$0xff]
      %v339 = vld [vmem:[%s111 + $0x33] sm:$0xff]
      %v340 = vld [vmem:[%s111 + $0x3b] sm:$0xff]
      %v341 = vld [vmem:[%s111 + $0x43] sm:$0xff]
      %v342 = vld [vmem:[%s111 + $0x4b] sm:$0xff]
      %v343 = vld [vmem:[%s111 + $0x53] sm:$0xff]
      %v344 = vld [vmem:[%s111 + $0x5b] sm:$0xff]
      %v345 = vld [vmem:[%s111 + $0x63] sm:$0xff]
      %v346 = vld [vmem:[%s111 + $0x6b] sm:$0xff]
      %v347 = vld [vmem:[%s111 + $0x73] sm:$0xff]
      %v348 = vld [vmem:[%s111 + $0x7b] sm:$0xff]
      %v349 = vld [vmem:[%s111 + $0x83] sm:$0xff]
      %v350 = vld [vmem:[%s111 + $0x8b] sm:$0xff]
      %v351 = vld [vmem:[%s111 + $0x93] sm:$0xff]
      %v352 = vld [vmem:[%s111 + $0x9b] sm:$0xff]
      %v353 = vld [vmem:[%s111 + $0xa3] sm:$0xff]
      %v354 = vld [vmem:[%s111 + $0xab] sm:$0xff]
      %v355 = vld [vmem:[%s111 + $0xb3] sm:$0xff]
      %v356 = vld [vmem:[%s111 + $0xbb] sm:$0xff]
      %v357 = vld [vmem:[%s111 + $0xc3] sm:$0xff]
      %v358 = vld [vmem:[%s111 + $0xcb] sm:$0xff]
      %v359 = vld [vmem:[%s111 + $0xd3] sm:$0xff]
      %v360 = vld [vmem:[%s111 + $0xdb] sm:$0xff]
      %v361 = vld [vmem:[%s111 + $0xe3] sm:$0xff]
      %v362 = vld [vmem:[%s111 + $0xeb] sm:$0xff]
      %v363 = vld [vmem:[%s111 + $0xf3] sm:$0xff]
      %v364 = vld [vmem:[%s111 + $0xfb] sm:$0xff]
      %v365 = vld [vmem:[%s111 + $0x103] sm:$0xff]
      %v366 = vld [vmem:[%s111 + $0x10b] sm:$0xff]
      %v367 = vld [vmem:[%s111 + $0x113] sm:$0xff]
      %v368 = vld [vmem:[%s111 + $0x11b] sm:$0xff]
      %v369 = vld [vmem:[%s111 + $0x123] sm:$0xff]
      %v370 = vld [vmem:[%s111 + $0x12b] sm:$0xff]
      %v371 = vadd.f32 %v299, %v335
      %v372 = vadd.f32 %v300, %v336
      %v373 = vadd.f32 %v301, %v337
      %v374 = vadd.f32 %v302, %v338
      %v375 = vadd.f32 %v303, %v339
      %v376 = vadd.f32 %v304, %v340
      %v377 = vadd.f32 %v305, %v341
      %v378 = vadd.f32 %v306, %v342
      %v379 = vadd.f32 %v307, %v343
      %v380 = vadd.f32 %v308, %v344
      %v381 = vadd.f32 %v309, %v345
      %v382 = vadd.f32 %v310, %v346
      %v383 = vadd.f32 %v311, %v347
      %v384 = vadd.f32 %v312, %v348
      %v385 = vadd.f32 %v313, %v349
      %v386 = vadd.f32 %v314, %v350
      %v387 = vadd.f32 %v315, %v351
      %v388 = vadd.f32 %v316, %v352
      %v389 = vadd.f32 %v317, %v353
      %v390 = vadd.f32 %v318, %v354
      %v391 = vadd.f32 %v319, %v355
      %v392 = vadd.f32 %v320, %v356
      %v393 = vadd.f32 %v321, %v357
      %v394 = vadd.f32 %v322, %v358
      %v395 = vadd.f32 %v323, %v359
      %v396 = vadd.f32 %v324, %v360
      %v397 = vadd.f32 %v325, %v361
      %v398 = vadd.f32 %v326, %v362
      %v399 = vadd.f32 %v327, %v363
      %v400 = vadd.f32 %v328, %v364
      %v401 = vadd.f32 %v329, %v365
      %v402 = vadd.f32 %v330, %v366
      %v403 = vadd.f32 %v331, %v367
      %v404 = vadd.f32 %v332, %v368
      %v405 = vadd.f32 %v333, %v369
      %v406 = vadd.f32 %v334, %v370
      %v407 = vld [vmem:[%s111 + $0x14] sm:$0xff]
      %v408 = vld [vmem:[%s111 + $0x1c] sm:$0xff]
      %v409 = vld [vmem:[%s111 + $0x24] sm:$0xff]
      %v410 = vld [vmem:[%s111 + $0x2c] sm:$0xff]
      %v411 = vld [vmem:[%s111 + $0x34] sm:$0xff]
      %v412 = vld [vmem:[%s111 + $0x3c] sm:$0xff]
      %v413 = vld [vmem:[%s111 + $0x44] sm:$0xff]
      %v414 = vld [vmem:[%s111 + $0x4c] sm:$0xff]
      %v415 = vld [vmem:[%s111 + $0x54] sm:$0xff]
      %v416 = vld [vmem:[%s111 + $0x5c] sm:$0xff]
      %v417 = vld [vmem:[%s111 + $0x64] sm:$0xff]
      %v418 = vld [vmem:[%s111 + $0x6c] sm:$0xff]
      %v419 = vld [vmem:[%s111 + $0x74] sm:$0xff]
      %v420 = vld [vmem:[%s111 + $0x7c] sm:$0xff]
      %v421 = vld [vmem:[%s111 + $0x84] sm:$0xff]
      %v422 = vld [vmem:[%s111 + $0x8c] sm:$0xff]
      %v423 = vld [vmem:[%s111 + $0x94] sm:$0xff]
      %v424 = vld [vmem:[%s111 + $0x9c] sm:$0xff]
      %v425 = vld [vmem:[%s111 + $0xa4] sm:$0xff]
      %v426 = vld [vmem:[%s111 + $0xac] sm:$0xff]
      %v427 = vld [vmem:[%s111 + $0xb4] sm:$0xff]
      %v428 = vld [vmem:[%s111 + $0xbc] sm:$0xff]
      %v429 = vld [vmem:[%s111 + $0xc4] sm:$0xff]
      %v430 = vld [vmem:[%s111 + $0xcc] sm:$0xff]
      %v431 = vld [vmem:[%s111 + $0xd4] sm:$0xff]
      %v432 = vld [vmem:[%s111 + $0xdc] sm:$0xff]
      %v433 = vld [vmem:[%s111 + $0xe4] sm:$0xff]
      %v434 = vld [vmem:[%s111 + $0xec] sm:$0xff]
      %v435 = vld [vmem:[%s111 + $0xf4] sm:$0xff]
      %v436 = vld [vmem:[%s111 + $0xfc] sm:$0xff]
      %v437 = vld [vmem:[%s111 + $0x104] sm:$0xff]
      %v438 = vld [vmem:[%s111 + $0x10c] sm:$0xff]
      %v439 = vld [vmem:[%s111 + $0x114] sm:$0xff]
      %v440 = vld [vmem:[%s111 + $0x11c] sm:$0xff]
      %v441 = vld [vmem:[%s111 + $0x124] sm:$0xff]
      %v442 = vld [vmem:[%s111 + $0x12c] sm:$0xff]
      %v443 = vadd.f32 %v371, %v407
      %v444 = vadd.f32 %v372, %v408
      %v445 = vadd.f32 %v373, %v409
      %v446 = vadd.f32 %v374, %v410
      %v447 = vadd.f32 %v375, %v411
      %v448 = vadd.f32 %v376, %v412
      %v449 = vadd.f32 %v377, %v413
      %v450 = vadd.f32 %v378, %v414
      %v451 = vadd.f32 %v379, %v415
      %v452 = vadd.f32 %v380, %v416
      %v453 = vadd.f32 %v381, %v417
      %v454 = vadd.f32 %v382, %v418
      %v455 = vadd.f32 %v383, %v419
      %v456 = vadd.f32 %v384, %v420
      %v457 = vadd.f32 %v385, %v421
      %v458 = vadd.f32 %v386, %v422
      %v459 = vadd.f32 %v387, %v423
      %v460 = vadd.f32 %v388, %v424
      %v461 = vadd.f32 %v389, %v425
      %v462 = vadd.f32 %v390, %v426
      %v463 = vadd.f32 %v391, %v427
      %v464 = vadd.f32 %v392, %v428
      %v465 = vadd.f32 %v393, %v429
      %v466 = vadd.f32 %v394, %v430
      %v467 = vadd.f32 %v395, %v431
      %v468 = vadd.f32 %v396, %v432
      %v469 = vadd.f32 %v397, %v433
      %v470 = vadd.f32 %v398, %v434
      %v471 = vadd.f32 %v399, %v435
      %v472 = vadd.f32 %v400, %v436
      %v473 = vadd.f32 %v401, %v437
      %v474 = vadd.f32 %v402, %v438
      %v475 = vadd.f32 %v403, %v439
      %v476 = vadd.f32 %v404, %v440
      %v477 = vadd.f32 %v405, %v441
      %v478 = vadd.f32 %v406, %v442
      %v479 = vld [vmem:[%s111 + $0x134] sm:$0xff]
      %v480 = vld [vmem:[%s111 + $0x13c] sm:$0xff]
      %v481 = vadd.f32 %v443, %v409
      %v482 = vadd.f32 %v444, %v410
      %v483 = vadd.f32 %v445, %v411
      %v484 = vadd.f32 %v446, %v412
      %v485 = vadd.f32 %v447, %v413
      %v486 = vadd.f32 %v448, %v414
      %v487 = vadd.f32 %v449, %v415
      %v488 = vadd.f32 %v450, %v416
      %v489 = vadd.f32 %v451, %v417
      %v490 = vadd.f32 %v452, %v418
      %v491 = vadd.f32 %v453, %v419
      %v492 = vadd.f32 %v454, %v420
      %v493 = vadd.f32 %v455, %v421
      %v494 = vadd.f32 %v456, %v422
      %v495 = vadd.f32 %v457, %v423
      %v496 = vadd.f32 %v458, %v424
      %v497 = vadd.f32 %v459, %v425
      %v498 = vadd.f32 %v460, %v426
      %v499 = vadd.f32 %v461, %v427
      %v500 = vadd.f32 %v462, %v428
      %v501 = vadd.f32 %v463, %v429
      %v502 = vadd.f32 %v464, %v430
      %v503 = vadd.f32 %v465, %v431
      %v504 = vadd.f32 %v466, %v432
      %v505 = vadd.f32 %v467, %v433
      %v506 = vadd.f32 %v468, %v434
      %v507 = vadd.f32 %v469, %v435
      %v508 = vadd.f32 %v470, %v436
      %v509 = vadd.f32 %v471, %v437
      %v510 = vadd.f32 %v472, %v438
      %v511 = vadd.f32 %v473, %v439
      %v512 = vadd.f32 %v474, %v440
      %v513 = vadd.f32 %v475, %v441
      %v514 = vadd.f32 %v476, %v442
      %v515 = vadd.f32 %v477, %v479
      %v516 = vadd.f32 %v478, %v480
      %v517 = vld [vmem:[%s111 + $0x25] sm:$0xff]
      %v518 = vld [vmem:[%s111 + $0x2d] sm:$0xff]
      %v519 = vld [vmem:[%s111 + $0x35] sm:$0xff]
      %v520 = vld [vmem:[%s111 + $0x3d] sm:$0xff]
      %v521 = vld [vmem:[%s111 + $0x45] sm:$0xff]
      %v522 = vld [vmem:[%s111 + $0x4d] sm:$0xff]
      %v523 = vld [vmem:[%s111 + $0x55] sm:$0xff]
      %v524 = vld [vmem:[%s111 + $0x5d] sm:$0xff]
      %v525 = vld [vmem:[%s111 + $0x65] sm:$0xff]
      %v526 = vld [vmem:[%s111 + $0x6d] sm:$0xff]
      %v527 = vld [vmem:[%s111 + $0x75] sm:$0xff]
      %v528 = vld [vmem:[%s111 + $0x7d] sm:$0xff]
      %v529 = vld [vmem:[%s111 + $0x85] sm:$0xff]
      %v530 = vld [vmem:[%s111 + $0x8d] sm:$0xff]
      %v531 = vld [vmem:[%s111 + $0x95] sm:$0xff]
      %v532 = vld [vmem:[%s111 + $0x9d] sm:$0xff]
      %v533 = vld [vmem:[%s111 + $0xa5] sm:$0xff]
      %v534 = vld [vmem:[%s111 + $0xad] sm:$0xff]
      %v535 = vld [vmem:[%s111 + $0xb5] sm:$0xff]
      %v536 = vld [vmem:[%s111 + $0xbd] sm:$0xff]
      %v537 = vld [vmem:[%s111 + $0xc5] sm:$0xff]
      %v538 = vld [vmem:[%s111 + $0xcd] sm:$0xff]
      %v539 = vld [vmem:[%s111 + $0xd5] sm:$0xff]
      %v540 = vld [vmem:[%s111 + $0xdd] sm:$0xff]
      %v541 = vld [vmem:[%s111 + $0xe5] sm:$0xff]
      %v542 = vld [vmem:[%s111 + $0xed] sm:$0xff]
      %v543 = vld [vmem:[%s111 + $0xf5] sm:$0xff]
      %v544 = vld [vmem:[%s111 + $0xfd] sm:$0xff]
      %v545 = vld [vmem:[%s111 + $0x105] sm:$0xff]
      %v546 = vld [vmem:[%s111 + $0x10d] sm:$0xff]
      %v547 = vld [vmem:[%s111 + $0x115] sm:$0xff]
      %v548 = vld [vmem:[%s111 + $0x11d] sm:$0xff]
      %v549 = vld [vmem:[%s111 + $0x125] sm:$0xff]
      %v550 = vld [vmem:[%s111 + $0x12d] sm:$0xff]
      %v551 = vld [vmem:[%s111 + $0x135] sm:$0xff]
      %v552 = vld [vmem:[%s111 + $0x13d] sm:$0xff]
      %v553 = vadd.f32 %v481, %v517
      %v554 = vadd.f32 %v482, %v518
      %v555 = vadd.f32 %v483, %v519
      %v556 = vadd.f32 %v484, %v520
      %v557 = vadd.f32 %v485, %v521
      %v558 = vadd.f32 %v486, %v522
      %v559 = vadd.f32 %v487, %v523
      %v560 = vadd.f32 %v488, %v524
      %v561 = vadd.f32 %v489, %v525
      %v562 = vadd.f32 %v490, %v526
      %v563 = vadd.f32 %v491, %v527
      %v564 = vadd.f32 %v492, %v528
      %v565 = vadd.f32 %v493, %v529
      %v566 = vadd.f32 %v494, %v530
      %v567 = vadd.f32 %v495, %v531
      %v568 = vadd.f32 %v496, %v532
      %v569 = vadd.f32 %v497, %v533
      %v570 = vadd.f32 %v498, %v534
      %v571 = vadd.f32 %v499, %v535
      %v572 = vadd.f32 %v500, %v536
      %v573 = vadd.f32 %v501, %v537
      %v574 = vadd.f32 %v502, %v538
      %v575 = vadd.f32 %v503, %v539
      %v576 = vadd.f32 %v504, %v540
      %v577 = vadd.f32 %v505, %v541
      %v578 = vadd.f32 %v506, %v542
      %v579 = vadd.f32 %v507, %v543
      %v580 = vadd.f32 %v508, %v544
      %v581 = vadd.f32 %v509, %v545
      %v582 = vadd.f32 %v510, %v546
      %v583 = vadd.f32 %v511, %v547
      %v584 = vadd.f32 %v512, %v548
      %v585 = vadd.f32 %v513, %v549
      %v586 = vadd.f32 %v514, %v550
      %v587 = vadd.f32 %v515, %v551
      %v588 = vadd.f32 %v516, %v552
      %v589 = vld [vmem:[%s111 + $0x26] sm:$0xff]
      %v590 = vld [vmem:[%s111 + $0x2e] sm:$0xff]
      %v591 = vld [vmem:[%s111 + $0x36] sm:$0xff]
      %v592 = vld [vmem:[%s111 + $0x3e] sm:$0xff]
      %v593 = vld [vmem:[%s111 + $0x46] sm:$0xff]
      %v594 = vld [vmem:[%s111 + $0x4e] sm:$0xff]
      %v595 = vld [vmem:[%s111 + $0x56] sm:$0xff]
      %v596 = vld [vmem:[%s111 + $0x5e] sm:$0xff]
      %v597 = vld [vmem:[%s111 + $0x66] sm:$0xff]
      %v598 = vld [vmem:[%s111 + $0x6e] sm:$0xff]
      %v599 = vld [vmem:[%s111 + $0x76] sm:$0xff]
      %v600 = vld [vmem:[%s111 + $0x7e] sm:$0xff]
      %v601 = vld [vmem:[%s111 + $0x86] sm:$0xff]
      %v602 = vld [vmem:[%s111 + $0x8e] sm:$0xff]
      %v603 = vld [vmem:[%s111 + $0x96] sm:$0xff]
      %v604 = vld [vmem:[%s111 + $0x9e] sm:$0xff]
      %v605 = vld [vmem:[%s111 + $0xa6] sm:$0xff]
      %v606 = vld [vmem:[%s111 + $0xae] sm:$0xff]
      %v607 = vld [vmem:[%s111 + $0xb6] sm:$0xff]
      %v608 = vld [vmem:[%s111 + $0xbe] sm:$0xff]
      %v609 = vld [vmem:[%s111 + $0xc6] sm:$0xff]
      %v610 = vld [vmem:[%s111 + $0xce] sm:$0xff]
      %v611 = vld [vmem:[%s111 + $0xd6] sm:$0xff]
      %v612 = vld [vmem:[%s111 + $0xde] sm:$0xff]
      %v613 = vld [vmem:[%s111 + $0xe6] sm:$0xff]
      %v614 = vld [vmem:[%s111 + $0xee] sm:$0xff]
      %v615 = vld [vmem:[%s111 + $0xf6] sm:$0xff]
      %v616 = vld [vmem:[%s111 + $0xfe] sm:$0xff]
      %v617 = vld [vmem:[%s111 + $0x106] sm:$0xff]
      %v618 = vld [vmem:[%s111 + $0x10e] sm:$0xff]
      %v619 = vld [vmem:[%s111 + $0x116] sm:$0xff]
      %v620 = vld [vmem:[%s111 + $0x11e] sm:$0xff]
      %v621 = vld [vmem:[%s111 + $0x126] sm:$0xff]
      %v622 = vld [vmem:[%s111 + $0x12e] sm:$0xff]
      %v623 = vld [vmem:[%s111 + $0x136] sm:$0xff]
      %v624 = vld [vmem:[%s111 + $0x13e] sm:$0xff]
      %v625 = vadd.f32 %v553, %v589
      %v626 = vadd.f32 %v554, %v590
      %v627 = vadd.f32 %v555, %v591
      %v628 = vadd.f32 %v556, %v592
      %v629 = vadd.f32 %v557, %v593
      %v630 = vadd.f32 %v558, %v594
      %v631 = vadd.f32 %v559, %v595
      %v632 = vadd.f32 %v560, %v596
      %v633 = vadd.f32 %v561, %v597
      %v634 = vadd.f32 %v562, %v598
      %v635 = vadd.f32 %v563, %v599
      %v636 = vadd.f32 %v564, %v600
      %v637 = vadd.f32 %v565, %v601
      %v638 = vadd.f32 %v566, %v602
      %v639 = vadd.f32 %v567, %v603
      %v640 = vadd.f32 %v568, %v604
      %v641 = vadd.f32 %v569, %v605
      %v642 = vadd.f32 %v570, %v606
      %v643 = vadd.f32 %v571, %v607
      %v644 = vadd.f32 %v572, %v608
      %v645 = vadd.f32 %v573, %v609
      %v646 = vadd.f32 %v574, %v610
      %v647 = vadd.f32 %v575, %v611
      %v648 = vadd.f32 %v576, %v612
      %v649 = vadd.f32 %v577, %v613
      %v650 = vadd.f32 %v578, %v614
      %v651 = vadd.f32 %v579, %v615
      %v652 = vadd.f32 %v580, %v616
      %v653 = vadd.f32 %v581, %v617
      %v654 = vadd.f32 %v582, %v618
      %v655 = vadd.f32 %v583, %v619
      %v656 = vadd.f32 %v584, %v620
      %v657 = vadd.f32 %v585, %v621
      %v658 = vadd.f32 %v586, %v622
      %v659 = vadd.f32 %v587, %v623
      %v660 = vadd.f32 %v588, %v624
      %v661 = vmul.f32 %v625, 0.11111111
      %v662 = vmul.f32 %v626, 0.11111111
      %v663 = vmul.f32 %v627, 0.11111111
      %v664 = vmul.f32 %v628, 0.11111111
      %v665 = vmul.f32 %v629, 0.11111111
      %v666 = vmul.f32 %v630, 0.11111111
      %v667 = vmul.f32 %v631, 0.11111111
      %v668 = vmul.f32 %v632, 0.11111111
      %v669 = vmul.f32 %v633, 0.11111111
      %v670 = vmul.f32 %v634, 0.11111111
      %v671 = vmul.f32 %v635, 0.11111111
      %v672 = vmul.f32 %v636, 0.11111111
      %v673 = vmul.f32 %v637, 0.11111111
      %v674 = vmul.f32 %v638, 0.11111111
      %v675 = vmul.f32 %v639, 0.11111111
      %v676 = vmul.f32 %v640, 0.11111111
      %v677 = vmul.f32 %v641, 0.11111111
      %v678 = vmul.f32 %v642, 0.11111111
      %v679 = vmul.f32 %v643, 0.11111111
      %v680 = vmul.f32 %v644, 0.11111111
      %v681 = vmul.f32 %v645, 0.11111111
      %v682 = vmul.f32 %v646, 0.11111111
      %v683 = vmul.f32 %v647, 0.11111111
      %v684 = vmul.f32 %v648, 0.11111111
      %v685 = vmul.f32 %v649, 0.11111111
      %v686 = vmul.f32 %v650, 0.11111111
      %v687 = vmul.f32 %v651, 0.11111111
      %v688 = vmul.f32 %v652, 0.11111111
      %v689 = vmul.f32 %v653, 0.11111111
      %v690 = vmul.f32 %v654, 0.11111111
      %v691 = vmul.f32 %v655, 0.11111111
      %v692 = vmul.f32 %v656, 0.11111111
      %v693 = vmul.f32 %v657, 0.11111111
      %v694 = vmul.f32 %v658, 0.11111111
      %v695 = vmul.f32 %v659, 0.11111111
      %v696 = vmul.f32 %v660, 0.11111111
      %v697 = vmax.f32 %v661, 0.0
      %v698 = vmax.f32 %v662, 0.0
      %v699 = vmax.f32 %v663, 0.0
      %v700 = vmax.f32 %v664, 0.0
      %v701 = vmax.f32 %v665, 0.0
      %v702 = vmax.f32 %v666, 0.0
      %v703 = vmax.f32 %v667, 0.0
      %v704 = vmax.f32 %v668, 0.0
      %v705 = vmax.f32 %v669, 0.0
      %v706 = vmax.f32 %v670, 0.0
      %v707 = vmax.f32 %v671, 0.0
      %v708 = vmax.f32 %v672, 0.0
      %v709 = vmax.f32 %v673, 0.0
      %v710 = vmax.f32 %v674, 0.0
      %v711 = vmax.f32 %v675, 0.0
      %v712 = vmax.f32 %v676, 0.0
      %v713 = vmax.f32 %v677, 0.0
      %v714 = vmax.f32 %v678, 0.0
      %v715 = vmax.f32 %v679, 0.0
      %v716 = vmax.f32 %v680, 0.0
      %v717 = vmax.f32 %v681, 0.0
      %v718 = vmax.f32 %v682, 0.0
      %v719 = vmax.f32 %v683, 0.0
      %v720 = vmax.f32 %v684, 0.0
      %v721 = vmax.f32 %v685, 0.0
      %v722 = vmax.f32 %v686, 0.0
      %v723 = vmax.f32 %v687, 0.0
      %v724 = vmax.f32 %v688, 0.0
      %v725 = vmax.f32 %v689, 0.0
      %v726 = vmax.f32 %v690, 0.0
      %v727 = vmax.f32 %v691, 0.0
      %v728 = vmax.f32 %v692, 0.0
      %v729 = vmax.f32 %v693, 0.0
      %v730 = vmax.f32 %v694, 0.0
      %v731 = vmax.f32 %v695, 0.0
      %v732 = vmax.f32 %v696, 0.0
      %vm733 = vcmask 261120
      %734 = vst.msk [vmem:[%s116] sm:$0xff] %vm733, %v697
      %735 = vst.msk [vmem:[%s116 + $0x8] sm:$0xff] %vm733, %v698
      %736 = vst.msk [vmem:[%s116 + $0x10] sm:$0xff] %vm733, %v699
      %737 = vst.msk [vmem:[%s116 + $0x18] sm:$0xff] %vm733, %v700
      %738 = vst.msk [vmem:[%s116 + $0x20] sm:$0xff] %vm733, %v701
      %739 = vst.msk [vmem:[%s116 + $0x28] sm:$0xff] %vm733, %v702
      %740 = vst.msk [vmem:[%s116 + $0x30] sm:$0xff] %vm733, %v703
      %741 = vst.msk [vmem:[%s116 + $0x38] sm:$0xff] %vm733, %v704
      %742 = vst.msk [vmem:[%s116 + $0x40] sm:$0xff] %vm733, %v705
      %743 = vst.msk [vmem:[%s116 + $0x48] sm:$0xff] %vm733, %v706
      %744 = vst.msk [vmem:[%s116 + $0x50] sm:$0xff] %vm733, %v707
      %745 = vst.msk [vmem:[%s116 + $0x58] sm:$0xff] %vm733, %v708
      %746 = vst.msk [vmem:[%s116 + $0x60] sm:$0xff] %vm733, %v709
      %747 = vst.msk [vmem:[%s116 + $0x68] sm:$0xff] %vm733, %v710
      %748 = vst.msk [vmem:[%s116 + $0x70] sm:$0xff] %vm733, %v711
      %749 = vst.msk [vmem:[%s116 + $0x78] sm:$0xff] %vm733, %v712
      %750 = vst.msk [vmem:[%s116 + $0x80] sm:$0xff] %vm733, %v713
      %751 = vst.msk [vmem:[%s116 + $0x88] sm:$0xff] %vm733, %v714
      %752 = vst.msk [vmem:[%s116 + $0x90] sm:$0xff] %vm733, %v715
      %753 = vst.msk [vmem:[%s116 + $0x98] sm:$0xff] %vm733, %v716
      %754 = vst.msk [vmem:[%s116 + $0xa0] sm:$0xff] %vm733, %v717
      %755 = vst.msk [vmem:[%s116 + $0xa8] sm:$0xff] %vm733, %v718
      %756 = vst.msk [vmem:[%s116 + $0xb0] sm:$0xff] %vm733, %v719
      %757 = vst.msk [vmem:[%s116 + $0xb8] sm:$0xff] %vm733, %v720
      %758 = vst.msk [vmem:[%s116 + $0xc0] sm:$0xff] %vm733, %v721
      %759 = vst.msk [vmem:[%s116 + $0xc8] sm:$0xff] %vm733, %v722
      %760 = vst.msk [vmem:[%s116 + $0xd0] sm:$0xff] %vm733, %v723
      %761 = vst.msk [vmem:[%s116 + $0xd8] sm:$0xff] %vm733, %v724
      %762 = vst.msk [vmem:[%s116 + $0xe0] sm:$0xff] %vm733, %v725
      %763 = vst.msk [vmem:[%s116 + $0xe8] sm:$0xff] %vm733, %v726
      %764 = vst.msk [vmem:[%s116 + $0xf0] sm:$0xff] %vm733, %v727
      %765 = vst.msk [vmem:[%s116 + $0xf8] sm:$0xff] %vm733, %v728
      %766 = vst.msk [vmem:[%s116 + $0x100] sm:$0xff] %vm733, %v729
      %767 = vst.msk [vmem:[%s116 + $0x108] sm:$0xff] %vm733, %v730
      %768 = vst.msk [vmem:[%s116 + $0x110] sm:$0xff] %vm733, %v731
      %769 = vst.msk [vmem:[%s116 + $0x118] sm:$0xff] %vm733, %v732
      %p770 = scmp.lt.s32.totalorder %s12, 1
      %s771 = scalar_select %p770, %s12, 1
      %s772 = smul.addr %s771, 36
      %s773 = smul.addr %s772, 8
      %s774 = scalar_lea.vmem %s1, %s773
      // Predicated region
      $region25: #{inception_d_forward.9} parent=23 // pred_check
        %p775 = pneg %p56
      $region26: #{inception_d_forward.9} parent=23 // pred_check_branch
        %777 = sbr.rel (%p775) target = $region28
      $region27: #{inception_d_forward.9} parent=23 // pred_region
        _
      $region28: #{inception_d_forward.9} parent=23 // pred_fallthru
        _
    $region24: #{inception_d_forward.9} parent=5 // pred_fallthru
      _
    %p778 = scmp.le.s32.totalorder 2, %s7
    // Predicated region
    $region29: #{inception_d_forward.9} parent=5 // pred_check
      %p779 = pneg %p778
    $region30: #{inception_d_forward.9} parent=5 // pred_check_branch
      %781 = sbr.rel (%p779) target = $region32
    $region31: #{inception_d_forward.9} parent=5 // pred_region
      %s782 = ssub.s32 %s7, 2
      // Predicated region
      $region33: #{inception_d_forward.9} parent=31 // pred_check
        %p783 = pneg %p62
      $region34: #{inception_d_forward.9} parent=31 // pred_check_branch
        %785 = sbr.rel (%p783) target = $region36
      $region35: #{inception_d_forward.9} parent=31 // pred_region
        %p786 = scmp.lt.s32.totalorder %s13, 1
        %s787 = scalar_select %p786, %s13, 1
        %s788 = smul.addr %s787, 36
        %s789 = smul.addr %s788, 8
        %s790 = scalar_lea.vmem %s1, %s789
      $region36: #{inception_d_forward.9} parent=31 // pred_fallthru
        _
    $region32: #{inception_d_forward.9} parent=5 // pred_fallthru
      _
  $region6: #{inception_d_forward.9} parent=0 // loop_footer
    %s11 = sadd.s32 1, %s7
  $region7: #{inception_d_forward.9} parent=0 // loop_footer_branch
    %6 = sbr.rel target = $region3
  $region8: #{inception_d_forward.9} parent=0 // loop_exit
    _

// kernel: inception_d_forward.7
$region0: #{inception_d_forward.7}
  #allocation0 [shape = 'u32[]', space=smem, size = 0x4, offset = 0x4, fixed_abs, tag = 'smem constant byte address 0x4 - core index']
  #allocation1 [shape = 'u32[72,128]{1,0:T(1,128)}', space=vmem, size = 0x9000, scoped, tag = 'internal scratch']
  %s0 = inlined_call_operand.vmem [shape: f32[2,326,64], index: 0, kind: input, shape index: {}]
  %s1 = inlined_call_operand.vmem [shape: f32[9,64,96], index: 1, kind: input, shape index: {}]
  %s2 = inlined_call_operand.vmem [shape: f32[2,288,96], index: 2, kind: output, shape index: {}]
  %s3 = sld [smem:[#allocation0]]
  $region41: #{inception_d_forward.7} parent=0
    _
  %s5 = ssub.s32 1, %s3
  %s6 = scalar_select 0, %s5, %s3
  loop: start=0, step=1, limit=4
  $region2: #{inception_d_forward.7} parent=0 // loop_pre_header
    _
  $region3: #{inception_d_forward.7} parent=0 // loop_header
    %s8 = sphi 0, %s12
    %p9 = scmp.ge.s32.totalorder %s8, 4
    %s18 = sphi 0, %s20
    %s21 = sphi 0, %s18
    %s22 = sphi 0, %s21
    %s38 = sphi 0, %s22
    %s42 = sphi 0, %s42
    %s44 = sphi 0, %s42
    %s45 = sphi 0, %s44
    %s59 = sphi 0, %s45
    %s65 = sphi 0, %s67
    %s68 = sphi 0, %s65
    %s69 = sphi 0, %s68
    %s85 = sphi 0, %s69
  $region4: #{inception_d_forward.7} parent=0 // loop_header_branch
    %11 = sbr.rel (%p9) target = $region8
  $region5: #{inception_d_forward.7} parent=0 // loop_body
    %s13 = ssub.s32 %s8, 1
    %s14 = ssub.s32 %s8, 2
    %s15 = sadd.s32 %s8, 1
    %s16 = ssub.s32 %s8, %s15
    %p17 = scmp.eq.s32.totalorder %s16, 0
    %s19 = sadd.s32 %s18, 1
    %s20 = scalar_select %p17, %s18, %s19
    %p23 = pneg %p17
    %p24 = scmp.eq.s32.totalorder %s8, 1
    %p25 = por %p23, %p24
    %p26 = scmp.ne.s32.totalorder %s18, %s21
    %p27 = scmp.eq.s32.totalorder %s8, 0
    %p28 = por %p26, %p27
    %p29 = scmp.ne.s32.totalorder %s18, %s21
    %p30 = scmp.eq.s32.totalorder %s13, 1
    %p31 = por %p29, %p30
    %p32 = scmp.ne.s32.totalorder %s21, %s22
    %p33 = scmp.eq.s32.totalorder %s13, 0
    %p34 = por %p32, %p33
    %p35 = scmp.ne.s32.totalorder %s21, %s22
    %p36 = scmp.eq.s32.totalorder %s14, 1
    %p37 = por %p35, %p36
    %p39 = scmp.ne.s32.totalorder %s22, %s38
    %p40 = scmp.eq.s32.totalorder %s14, 0
    %p41 = por %p39, %p40
    %s43 = sadd.s32 %s42, 1
    %p46 = scmp.eq.s32.totalorder %s8, 1
    %p47 = scmp.ne.s32.totalorder %s42, %s44
    %p48 = scmp.eq.s32.totalorder %s8, 0
    %p49 = por %p47, %p48
    %p50 = scmp.ne.s32.totalorder %s42, %s44
    %p51 = scmp.eq.s32.totalorder %s13, 1
    %p52 = por %p50, %p51
    %p53 = scmp.ne.s32.totalorder %s44, %s45
    %p54 = scmp.eq.s32.totalorder %s13, 0
    %p55 = por %p53, %p54
    %p56 = scmp.ne.s32.totalorder %s44, %s45
    %p57 = scmp.eq.s32.totalorder %s14, 1
    %p58 = por %p56, %p57
    %p60 = scmp.ne.s32.totalorder %s45, %s59
    %p61 = scmp.eq.s32.totalorder %s14, 0
    %p62 = por %p60, %p61
    %s63 = ssub.s32 %s8, %s15
    %p64 = scmp.eq.s32.totalorder %s63, 0
    %s66 = sadd.s32 %s65, 1
    %s67 = scalar_select %p64, %s65, %s66
    %p70 = pneg %p64
    %p71 = scmp.eq.s32.totalorder %s8, 1
    %p72 = por %p70, %p71
    %p73 = scmp.ne.s32.totalorder %s65, %s68
    %p74 = scmp.eq.s32.totalorder %s8, 0
    %p75 = por %p73, %p74
    %p76 = scmp.ne.s32.totalorder %s65, %s68
    %p77 = scmp.eq.s32.totalorder %s13, 1
    %p78 = por %p76, %p77
    %p79 = scmp.ne.s32.totalorder %s68, %s69
    %p80 = scmp.eq.s32.totalorder %s13, 0
    %p81 = por %p79, %p80
    %p82 = scmp.ne.s32.totalorder %s68, %s69
    %p83 = scmp.eq.s32.totalorder %s14, 1
    %p84 = por %p82, %p83
    %p86 = scmp.ne.s32.totalorder %s69, %s85
    %p87 = scmp.eq.s32.totalorder %s14, 0
    %p88 = por %p86, %p87
    %p89 = scmp.le.s32.totalorder 1, %s8
    %p90 = scmp.lt.s32.totalorder %s8, 3
    %p91 = pnand %p89, %p90
    %p92 = pneg %p91
    // Predicated region
    $region9: #{inception_d_forward.7} parent=5 // pred_check
      _
    $region10: #{inception_d_forward.7} parent=5 // pred_check_branch
      %94 = sbr.rel (%p91) target = $region12
    $region11: #{inception_d_forward.7} parent=5 // pred_region
      %s95 = ssub.s32 %s8, 1
      // Predicated region
      $region13: #{inception_d_forward.7} parent=11 // pred_check
        %p96 = pneg %p55
      $region14: #{inception_d_forward.7} parent=11 // pred_check_branch
        %98 = sbr.rel (%p96) target = $region16
      $region15: #{inception_d_forward.7} parent=11 // pred_region
        _
      $region16: #{inception_d_forward.7} parent=11 // pred_fallthru
        _
    $region12: #{inception_d_forward.7} parent=5 // pred_fallthru
      _
    %p99 = scmp.lt.s32.totalorder %s8, 2
    // Predicated region
    $region17: #{inception_d_forward.7} parent=5 // pred_check
      %p100 = pneg %p99
    $region18: #{inception_d_forward.7} parent=5 // pred_check_branch
      %102 = sbr.rel (%p100) target = $region20
    $region19: #{inception_d_forward.7} parent=5 // pred_region
      // Predicated region
      $region21: #{inception_d_forward.7} parent=19 // pred_check
        %p103 = pneg %p28
      $region22: #{inception_d_forward.7} parent=19 // pred_check_branch
        %105 = sbr.rel (%p103) target = $region24
      $region23: #{inception_d_forward.7} parent=19 // pred_region
        %p106 = scmp.lt.s32.totalorder %s8, 1
        %s107 = scalar_select %p106, %s8, 1
        %s108 = smul.addr %s107, 41
        %s109 = smul.addr %s108, 8
        %s110 = scalar_lea.vmem %s0, %s109
      $region24: #{inception_d_forward.7} parent=19 // pred_fallthru
        _
    $region20: #{inception_d_forward.7} parent=5 // pred_fallthru
      _
    %p111 = scmp.le.s32.totalorder 1, %s8
    %p112 = scmp.lt.s32.totalorder %s8, 3
    %p113 = pnand %p111, %p112
    %p114 = pneg %p113
    // Predicated region
    $region25: #{inception_d_forward.7} parent=5 // pred_check
      _
    $region26: #{inception_d_forward.7} parent=5 // pred_check_branch
      %116 = sbr.rel (%p113) target = $region28
    $region27: #{inception_d_forward.7} parent=5 // pred_region
      %s117 = ssub.s32 %s8, 1
      %p118 = scmp.lt.s32.totalorder %s13, 1
      %s119 = scalar_select %p118, %s13, 1
      %s120 = smul.addr %s119, 41
      %s121 = smul.addr %s120, 8
      %s122 = scalar_lea.vmem %s0, %s121
      %p123 = pneg %p34
      %p124 = pneg %p31
      %p125 = pneg %p55
      %p126 = pneg %p52
      %p127 = pneg %p81
      %p128 = pneg %p78
      %p129 = scmp.lt.s32.totalorder %s13, 1
      %s130 = scalar_select %p129, %s13, 1
      %s131 = smul.addr %s130, 36
      %s132 = smul.addr %s131, 8
      %s133 = scalar_lea.vmem %s2, %s132
      %p134 = scmp.lt.s32.totalorder %s13, 1
      %s135 = scalar_select %p134, %s13, 1
      %s136 = smul.addr %s135, 41
      %s137 = smul.addr %s136, 8
      %s138 = scalar_lea.vmem %s0, %s137
      %p139 = scmp.lt.s32.totalorder %s13, 1
      %s140 = scalar_select %p139, %s13, 1
      %s141 = smul.addr %s140, 36
      %s142 = smul.addr %s141, 8
      %s143 = scalar_lea.vmem %s2, %s142
      %v144 = vld [vmem:[%s138] sm:$0xff]
      %v145 = vld [vmem:[%s138 + $0x8] sm:$0xff]
      %v146 = vld [vmem:[%s138 + $0x10] sm:$0xff]
      %v147 = vld [vmem:[%s138 + $0x18] sm:$0xff]
      %v148 = vld [vmem:[%s138 + $0x20] sm:$0xff]
      %v149 = vld [vmem:[%s138 + $0x28] sm:$0xff]
      %v150 = vld [vmem:[%s138 + $0x30] sm:$0xff]
      %v151 = vld [vmem:[%s138 + $0x38] sm:$0xff]
      %v152 = vld [vmem:[%s138 + $0x40] sm:$0xff]
      %v153 = vld [vmem:[%s138 + $0x48] sm:$0xff]
      %v154 = vld [vmem:[%s138 + $0x50] sm:$0xff]
      %v155 = vld [vmem:[%s138 + $0x58] sm:$0xff]
      %v156 = vld [vmem:[%s138 + $0x60] sm:$0xff]
      %v157 = vld [vmem:[%s138 + $0x68] sm:$0xff]
      %v158 = vld [vmem:[%s138 + $0x70] sm:$0xff]
      %v159 = vld [vmem:[%s138 + $0x78] sm:$0xff]
      %v160 = vld [vmem:[%s138 + $0x80] sm:$0xff]
      %v161 = vld [vmem:[%s138 + $0x88] sm:$0xff]
      %v162 = vld [vmem:[%s138 + $0x90] sm:$0xff]
      %v163 = vld [vmem:[%s138 + $0x98] sm:$0xff]
      %v164 = vld [vmem:[%s138 + $0xa0] sm:$0xff]
      %v165 = vld [vmem:[%s138 + $0xa8] sm:$0xff]
      %v166 = vld [vmem:[%s138 + $0xb0] sm:$0xff]
      %v167 = vld [vmem:[%s138 + $0xb8] sm:$0xff]
      %v168 = vld [vmem:[%s138 + $0xc0] sm:$0xff]
      %v169 = vld [vmem:[%s138 + $0xc8] sm:$0xff]
      %v170 = vld [vmem:[%s138 + $0xd0] sm:$0xff]
      %v171 = vld [vmem:[%s138 + $0xd8] sm:$0xff]
      %v172 = vld [vmem:[%s138 + $0xe0] sm:$0xff]
      %v173 = vld [vmem:[%s138 + $0xe8] sm:$0xff]
      %v174 = vld [vmem:[%s138 + $0xf0] sm:$0xff]
      %v175 = vld [vmem:[%s138 + $0xf8] sm:$0xff]
      %v176 = vld [vmem:[%s138 + $0x100] sm:$0xff]
      %v177 = vld [vmem:[%s138 + $0x108] sm:$0xff]
      %v178 = vld [vmem:[%s138 + $0x110] sm:$0xff]
      %v179 = vld [vmem:[%s138 + $0x118] sm:$0xff]
      %v180 = vld [vmem:[%s1] sm:$0xff]
      %v181 = vld [vmem:[%s1 + $0x8] sm:$0xff]
      %v182 = vld [vmem:[%s1 + $0x10] sm:$0xff]
      %v183 = vld [vmem:[%s1 + $0x18] sm:$0xff]
      %v184 = vld [vmem:[%s1 + $0x20] sm:$0xff]
      %v185 = vld [vmem:[%s1 + $0x28] sm:$0xff]
      %v186 = vld [vmem:[%s1 + $0x30] sm:$0xff]
      %v187 = vld [vmem:[%s1 + $0x38] sm:$0xff]
      %v188 = vld [vmem:[%s138 + $0x1] sm:$0xff]
      %v189 = vld [vmem:[%s138 + $0x9] sm:$0xff]
      %v190 = vld [vmem:[%s138 + $0x11] sm:$0xff]
      %v191 = vld [vmem:[%s138 + $0x19] sm:$0xff]
      %v192 = vld [vmem:[%s138 + $0x21] sm:$0xff]
      %v193 = vld [vmem:[%s138 + $0x29] sm:$0xff]
      %v194 = vld [vmem:[%s138 + $0x31] sm:$0xff]
      %v195 = vld [vmem:[%s138 + $0x39] sm:$0xff]
      %v196 = vld [vmem:[%s138 + $0x41] sm:$0xff]
      %v197 = vld [vmem:[%s138 + $0x49] sm:$0xff]
      %v198 = vld [vmem:[%s138 + $0x51] sm:$0xff]
      %v199 = vld [vmem:[%s138 + $0x59] sm:$0xff]
      %v200 = vld [vmem:[%s138 + $0x61] sm:$0xff]
      %v201 = vld [vmem:[%s138 + $0x69] sm:$0xff]
      %v202 = vld [vmem:[%s138 + $0x71] sm:$0xff]
      %v203 = vld [vmem:[%s138 + $0x79] sm:$0xff]
      %v204 = vld [vmem:[%s138 + $0x81] sm:$0xff]
      %v205 = vld [vmem:[%s138 + $0x89] sm:$0xff]
      %v206 = vld [vmem:[%s138 + $0x91] sm:$0xff]
      %v207 = vld [vmem:[%s138 + $0x99] sm:$0xff]
      %v208 = vld [vmem:[%s138 + $0xa1] sm:$0xff]
      %v209 = vld [vmem:[%s138 + $0xa9] sm:$0xff]
      %v210 = vld [vmem:[%s138 + $0xb1] sm:$0xff]
      %v211 = vld [vmem:[%s138 + $0xb9] sm:$0xff]
      %v212 = vld [vmem:[%s138 + $0xc1] sm:$0xff]
      %v213 = vld [vmem:[%s138 + $0xc9] sm:$0xff]
      %v214 = vld [vmem:[%s138 + $0xd1] sm:$0xff]
      %v215 = vld [vmem:[%s138 + $0xd9] sm:$0xff]
      %v216 = vld [vmem:[%s138 + $0xe1] sm:$0xff]
      %v217 = vld [vmem:[%s138 + $0xe9] sm:$0xff]
      %v218 = vld [vmem:[%s138 + $0xf1] sm:$0xff]
      %v219 = vld [vmem:[%s138 + $0xf9] sm:$0xff]
      %v220 = vld [vmem:[%s138 + $0x101] sm:$0xff]
      %v221 = vld [vmem:[%s138 + $0x109] sm:$0xff]
      %v222 = vld [vmem:[%s138 + $0x111] sm:$0xff]
      %v223 = vld [vmem:[%s138 + $0x119] sm:$0xff]
      %s224 = scalar_lea.vmem %s1, 64
      %v225 = vld [vmem:[%s224] sm:$0xff]
      %v226 = vld [vmem:[%s224 + $0x8] sm:$0xff]
      %v227 = vld [vmem:[%s224 + $0x10] sm:$0xff]
      %v228 = vld [vmem:[%s224 + $0x18] sm:$0xff]
      %v229 = vld [vmem:[%s224 + $0x20] sm:$0xff]
      %v230 = vld [vmem:[%s224 + $0x28] sm:$0xff]
      %v231 = vld [vmem:[%s224 + $0x30] sm:$0xff]
      %v232 = vld [vmem:[%s224 + $0x38] sm:$0xff]
      %vm233 = vcmask 523264
      %v235 = vsel %vm233, %v188, 0
      %v238 = vsel %vm233, %v189, 0
      %v241 = vsel %vm233, %v190, 0
      %v244 = vsel %vm233, %v191, 0
      %v247 = vsel %vm233, %v192, 0
      %v250 = vsel %vm233, %v193, 0
      %v253 = vsel %vm233, %v194, 0
      %v256 = vsel %vm233, %v195, 0
      %v259 = vsel %vm233, %v196, 0
      %v262 = vsel %vm233, %v197, 0
      %v265 = vsel %vm233, %v198, 0
      %v268 = vsel %vm233, %v199, 0
      %v271 = vsel %vm233, %v200, 0
      %v274 = vsel %vm233, %v201, 0
      %v277 = vsel %vm233, %v202, 0
      %v280 = vsel %vm233, %v203, 0
      %v283 = vsel %vm233, %v204, 0
      %v286 = vsel %vm233, %v205, 0
      %v289 = vsel %vm233, %v206, 0
      %v292 = vsel %vm233, %v207, 0
      %v295 = vsel %vm233, %v208, 0
      %v298 = vsel %vm233, %v209, 0
      %v301 = vsel %vm233, %v210, 0
      %v304 = vsel %vm233, %v211, 0
      %v307 = vsel %vm233, %v212, 0
      %v310 = vsel %vm233, %v213, 0
      %v313 = vsel %vm233, %v214, 0
      %v316 = vsel %vm233, %v215, 0
      %v319 = vsel %vm233, %v216, 0
      %v322 = vsel %vm233, %v217, 0
      %v325 = vsel %vm233, %v218, 0
      %v328 = vsel %vm233, %v219, 0
      %v331 = vsel %vm233, %v220, 0
      %v334 = vsel %vm233, %v221, 0
      %v337 = vsel %vm233, %v222, 0
      %v340 = vsel %vm233, %v223, 0
      %342 = vmatpush.msra.mxu0 0.0
      %343 = vmatpush.msra.mxu0 0.0
      %344 = vmatpush.msra.mxu0 0.0
      %345 = vmatpush.msra.mxu0 0.0
      %346 = vmatpush.msra.mxu0 0.0
      %347 = vmatpush.msra.mxu0 0.0
      %348 = vmatpush.msra.mxu0 0.0
      %349 = vmatpush.msra.mxu0 0.0
      %350 = vmatpush.msra.mxu0 %v232
      %351 = vmatpush.msra.mxu0 %v231
      %352 = vmatpush.msra.mxu0 %v230
      %353 = vmatpush.msra.mxu0 %v229
      %354 = vmatpush.msra.mxu0 %v228
      %355 = vmatpush.msra.mxu0 %v227
      %356 = vmatpush.msra.mxu0 %v226
      %357 = vmatpush.msra.mxu0 %v225
      %358 = vmatmul.f32.gmra.mxu0 %v235
      %v359 = vpop.f32.mrf.mxu0
      %v360 = vadd.f32 0.0, %v359
      %361 = vmatmul.f32.gmra.mxu0 %v238
      %v362 = vpop.f32.mrf.mxu0
      %v363 = vadd.f32 0.0, %v362
      %364 = vmatmul.f32.gmra.mxu0 %v241
      %v365 = vpop.f32.mrf.mxu0
      %v366 = vadd.f32 0.0, %v365
      %367 = vmatmul.f32.gmra.mxu0 %v244
      %v368 = vpop.f32.mrf.mxu0
      %v369 = vadd.f32 0.0, %v368
      %370 = vmatmul.f32.gmra.mxu0 %v247
      %v371 = vpop.f32.mrf.mxu0
      %v372 = vadd.f32 0.0, %v371
      %373 = vmatmul.f32.gmra.mxu0 %v250
      %v374 = vpop.f32.mrf.mxu0
      %v375 = vadd.f32 0.0, %v374
      %376 = vmatmul.f32.gmra.mxu0 %v253
      %v377 = vpop.f32.mrf.mxu0
      %v378 = vadd.f32 0.0, %v377
      %379 = vmatmul.f32.gmra.mxu0 %v256
      %v380 = vpop.f32.mrf.mxu0
      %v381 = vadd.f32 0.0, %v380
      %382 = vmatmul.f32.gmra.mxu0 %v259
      %v383 = vpop.f32.mrf.mxu0
      %v384 = vadd.f32 0.0, %v383
      %385 = vmatmul.f32.gmra.mxu0 %v262
      %v386 = vpop.f32.mrf.mxu0
      %v387 = vadd.f32 0.0, %v386
      %388 = vmatmul.f32.gmra.mxu0 %v265
      %v389 = vpop.f32.mrf.mxu0
      %v390 = vadd.f32 0.0, %v389
      %391 = vmatmul.f32.gmra.mxu0 %v268
      %v392 = vpop.f32.mrf.mxu0
      %v393 = vadd.f32 0.0, %v392
      %394 = vmatmul.f32.gmra.mxu0 %v271
      %v395 = vpop.f32.mrf.mxu0
      %v396 = vadd.f32 0.0, %v395
      %397 = vmatmul.f32.gmra.mxu0 %v274
      %v398 = vpop.f32.mrf.mxu0
      %v399 = vadd.f32 0.0, %v398
      %400 = vmatmul.f32.gmra.mxu0 %v277
      %v401 = vpop.f32.mrf.mxu0
      %v402 = vadd.f32 0.0, %v401
      %403 = vmatmul.f32.gmra.mxu0 %v280
      %v404 = vpop.f32.mrf.mxu0
      %v405 = vadd.f32 0.0, %v404
      %406 = vmatmul.f32.gmra.mxu0 %v283
      %v407 = vpop.f32.mrf.mxu0
      %v408 = vadd.f32 0.0, %v407
      %409 = vmatmul.f32.gmra.mxu0 %v286
      %v410 = vpop.f32.mrf.mxu0
      %v411 = vadd.f32 0.0, %v410
      %412 = vmatmul.f32.gmra.mxu0 %v289
      %v413 = vpop.f32.mrf.mxu0
      %v414 = vadd.f32 0.0, %v413
      %415 = vmatmul.f32.gmra.mxu0 %v292
      %v416 = vpop.f32.mrf.mxu0
      %v417 = vadd.f32 0.0, %v416
      %418 = vmatmul.f32.gmra.mxu0 %v295
      %v419 = vpop.f32.mrf.mxu0
      %v420 = vadd.f32 0.0, %v419
      %421 = vmatmul.f32.gmra.mxu0 %v298
      %v422 = vpop.f32.mrf.mxu0
      %v423 = vadd.f32 0.0, %v422
      %424 = vmatmul.f32.gmra.mxu0 %v301
      %v425 = vpop.f32.mrf.mxu0
      %v426 = vadd.f32 0.0, %v425
      %427 = vmatmul.f32.gmra.mxu0 %v304
      %v428 = vpop.f32.mrf.mxu0
      %v429 = vadd.f32 0.0, %v428
      %430 = vmatmul.f32.gmra.mxu0 %v307
      %v431 = vpop.f32.mrf.mxu0
      %v432 = vadd.f32 0.0, %v431
      %433 = vmatmul.f32.gmra.mxu0 %v310
      %v434 = vpop.f32.mrf.mxu0
      %v435 = vadd.f32 0.0, %v434
      %436 = vmatmul.f32.gmra.mxu0 %v313
      %v437 = vpop.f32.mrf.mxu0
      %v438 = vadd.f32 0.0, %v437
      %439 = vmatmul.f32.gmra.mxu0 %v316
      %v440 = vpop.f32.mrf.mxu0
      %v441 = vadd.f32 0.0, %v440
      %442 = vmatmul.f32.gmra.mxu0 %v319
      %v443 = vpop.f32.mrf.mxu0
      %v444 = vadd.f32 0.0, %v443
      %445 = vmatmul.f32.gmra.mxu0 %v322
      %v446 = vpop.f32.mrf.mxu0
      %v447 = vadd.f32 0.0, %v446
      %448 = vmatmul.f32.gmra.mxu0 %v325
      %v449 = vpop.f32.mrf.mxu0
      %v450 = vadd.f32 0.0, %v449
      %451 = vmatmul.f32.gmra.mxu0 %v328
      %v452 = vpop.f32.mrf.mxu0
      %v453 = vadd.f32 0.0, %v452
      %454 = vmatmul.f32.gmra.mxu0 %v331
      %v455 = vpop.f32.mrf.mxu0
      %v456 = vadd.f32 0.0, %v455
      %457 = vmatmul.f32.gmra.mxu0 %v334
      %v458 = vpop.f32.mrf.mxu0
      %v459 = vadd.f32 0.0, %v458
      %460 = vmatmul.f32.gmra.mxu0 %v337
      %v461 = vpop.f32.mrf.mxu0
      %v462 = vadd.f32 0.0, %v461
      %463 = vmatmul.f32.gmra.mxu0 %v340
      %v464 = vpop.f32.mrf.mxu0
      %v465 = vadd.f32 0.0, %v464
      %466 = vdwg.mxu0
      %v468 = vsel %vm233, %v144, 0
      %v471 = vsel %vm233, %v145, 0
      %v474 = vsel %vm233, %v146, 0
      %v477 = vsel %vm233, %v147, 0
      %v480 = vsel %vm233, %v148, 0
      %v483 = vsel %vm233, %v149, 0
      %v486 = vsel %vm233, %v150, 0
      %v489 = vsel %vm233, %v151, 0
      %v492 = vsel %vm233, %v152, 0
      %v495 = vsel %vm233, %v153, 0
      %v498 = vsel %vm233, %v154, 0
      %v501 = vsel %vm233, %v155, 0
      %v504 = vsel %vm233, %v156, 0
      %v507 = vsel %vm233, %v157, 0
      %v510 = vsel %vm233, %v158, 0
      %v513 = vsel %vm233, %v159, 0
      %v516 = vsel %vm233, %v160, 0
      %v519 = vsel %vm233, %v161, 0
      %v522 = vsel %vm233, %v162, 0
      %v525 = vsel %vm233, %v163, 0
      %v528 = vsel %vm233, %v164, 0
      %v531 = vsel %vm233, %v165, 0
      %v534 = vsel %vm233, %v166, 0
      %v537 = vsel %vm233, %v167, 0
      %v540 = vsel %vm233, %v168, 0
      %v543 = vsel %vm233, %v169, 0
      %v546 = vsel %vm233, %v170, 0
      %v549 = vsel %vm233, %v171, 0
      %v552 = vsel %vm233, %v172, 0
      %v555 = vsel %vm233, %v173, 0
      %v558 = vsel %vm233, %v174, 0
      %v561 = vsel %vm233, %v175, 0
      %v564 = vsel %vm233, %v176, 0
      %v567 = vsel %vm233, %v177, 0
      %v570 = vsel %vm233, %v178, 0
      %v573 = vsel %vm233, %v179, 0
      %575 = vmatpush.msra.mxu0 0.0
      %576 = vmatpush.msra.mxu0 0.0
      %577 = vmatpush.msra.mxu0 0.0
      %578 = vmatpush.msra.mxu0 0.0
      %579 = vmatpush.msra.mxu0 0.0
      %580 = vmatpush.msra.mxu0 0.0
      %581 = vmatpush.msra.mxu0 0.0
      %582 = vmatpush.msra.mxu0 0.0
      %583 = vmatpush.msra.mxu0 %v187
      %584 = vmatpush.msra.mxu0 %v186
      %585 = vmatpush.msra.mxu0 %v185
      %586 = vmatpush.msra.mxu0 %v184
      %587 = vmatpush.msra.mxu0 %v183
      %588 = vmatpush.msra.mxu0 %v182
      %589 = vmatpush.msra.mxu0 %v181
      %590 = vmatpush.msra.mxu0 %v180
      %591 = vmatmul.f32.gmra.mxu0 %v468
      %v592 = vpop.f32.mrf.mxu0
      %v593 = vadd.f32 %v360, %v592
      %594 = vmatmul.f32.gmra.mxu0 %v471
      %v595 = vpop.f32.mrf.mxu0
      %v596 = vadd.f32 %v363, %v595
      %597 = vmatmul.f32.gmra.mxu0 %v474
      %v598 = vpop.f32.mrf.mxu0
      %v599 = vadd.f32 %v366, %v598
      %600 = vmatmul.f32.gmra.mxu0 %v477
      %v601 = vpop.f32.mrf.mxu0
      %v602 = vadd.f32 %v369, %v601
      %603 = vmatmul.f32.gmra.mxu0 %v480
      %v604 = vpop.f32.mrf.mxu0
      %v605 = vadd.f32 %v372, %v604
      %606 = vmatmul.f32.gmra.mxu0 %v483
      %v607 = vpop.f32.mrf.mxu0
      %v608 = vadd.f32 %v375, %v607
      %609 = vmatmul.f32.gmra.mxu0 %v486
      %v610 = vpop.f32.mrf.mxu0
      %v611 = vadd.f32 %v378, %v610
      %612 = vmatmul.f32.gmra.mxu0 %v489
      %v613 = vpop.f32.mrf.mxu0
      %v614 = vadd.f32 %v381, %v613
      %615 = vmatmul.f32.gmra.mxu0 %v492
      %v616 = vpop.f32.mrf.mxu0
      %v617 = vadd.f32 %v384, %v616
      %618 = vmatmul.f32.gmra.mxu0 %v495
      %v619 = vpop.f32.mrf.mxu0
      %v620 = vadd.f32 %v387, %v619
      %621 = vmatmul.f32.gmra.mxu0 %v498
      %v622 = vpop.f32.mrf.mxu0
      %v623 = vadd.f32 %v390, %v622
      %624 = vmatmul.f32.gmra.mxu0 %v501
      %v625 = vpop.f32.mrf.mxu0
      %v626 = vadd.f32 %v393, %v625
      %627 = vmatmul.f32.gmra.mxu0 %v504
      %v628 = vpop.f32.mrf.mxu0
      %v629 = vadd.f32 %v396, %v628
      %630 = vmatmul.f32.gmra.mxu0 %v507
      %v631 = vpop.f32.mrf.mxu0
      %v632 = vadd.f32 %v399, %v631
      %633 = vmatmul.f32.gmra.mxu0 %v510
      %v634 = vpop.f32.mrf.mxu0
      %v635 = vadd.f32 %v402, %v634
      %636 = vmatmul.f32.gmra.mxu0 %v513
      %v637 = vpop.f32.mrf.mxu0
      %v638 = vadd.f32 %v405, %v637
      %639 = vmatmul.f32.gmra.mxu0 %v516
      %v640 = vpop.f32.mrf.mxu0
      %v641 = vadd.f32 %v408, %v640
      %642 = vmatmul.f32.gmra.mxu0 %v519
      %v643 = vpop.f32.mrf.mxu0
      %v644 = vadd.f32 %v411, %v643
      %645 = vmatmul.f32.gmra.mxu0 %v522
      %v646 = vpop.f32.mrf.mxu0
      %v647 = vadd.f32 %v414, %v646
      %648 = vmatmul.f32.gmra.mxu0 %v525
      %v649 = vpop.f32.mrf.mxu0
      %v650 = vadd.f32 %v417, %v649
      %651 = vmatmul.f32.gmra.mxu0 %v528
      %v652 = vpop.f32.mrf.mxu0
      %v653 = vadd.f32 %v420, %v652
      %654 = vmatmul.f32.gmra.mxu0 %v531
      %v655 = vpop.f32.mrf.mxu0
      %v656 = vadd.f32 %v423, %v655
      %657 = vmatmul.f32.gmra.mxu0 %v534
      %v658 = vpop.f32.mrf.mxu0
      %v659 = vadd.f32 %v426, %v658
      %660 = vmatmul.f32.gmra.mxu0 %v537
      %v661 = vpop.f32.mrf.mxu0
      %v662 = vadd.f32 %v429, %v661
      %663 = vmatmul.f32.gmra.mxu0 %v540
      %v664 = vpop.f32.mrf.mxu0
      %v665 = vadd.f32 %v432, %v664
      %666 = vmatmul.f32.gmra.mxu0 %v543
      %v667 = vpop.f32.mrf.mxu0
      %v668 = vadd.f32 %v435, %v667
      %669 = vmatmul.f32.gmra.mxu0 %v546
      %v670 = vpop.f32.mrf.mxu0
      %v671 = vadd.f32 %v438, %v670
      %672 = vmatmul.f32.gmra.mxu0 %v549
      %v673 = vpop.f32.mrf.mxu0
      %v674 = vadd.f32 %v441, %v673
      %675 = vmatmul.f32.gmra.mxu0 %v552
      %v676 = vpop.f32.mrf.mxu0
      %v677 = vadd.f32 %v444, %v676
      %678 = vmatmul.f32.gmra.mxu0 %v555
      %v679 = vpop.f32.mrf.mxu0
      %v680 = vadd.f32 %v447, %v679
      %681 = vmatmul.f32.gmra.mxu0 %v558
      %v682 = vpop.f32.mrf.mxu0
      %v683 = vadd.f32 %v450, %v682
      %684 = vmatmul.f32.gmra.mxu0 %v561
      %v685 = vpop.f32.mrf.mxu0
      %v686 = vadd.f32 %v453, %v685
      %687 = vmatmul.f32.gmra.mxu0 %v564
      %v688 = vpop.f32.mrf.mxu0
      %v689 = vadd.f32 %v456, %v688
      %690 = vmatmul.f32.gmra.mxu0 %v567
      %v691 = vpop.f32.mrf.mxu0
      %v692 = vadd.f32 %v459, %v691
      %693 = vmatmul.f32.gmra.mxu0 %v570
      %v694 = vpop.f32.mrf.mxu0
      %v695 = vadd.f32 %v462, %v694
      %696 = vmatmul.f32.gmra.mxu0 %v573
      %v697 = vpop.f32.mrf.mxu0
      %v698 = vadd.f32 %v465, %v697
      %699 = vdwg.mxu0
      %v700 = vld [vmem:[%s138 + $0x2] sm:$0xff]
      %v701 = vld [vmem:[%s138 + $0xa] sm:$0xff]
      %v702 = vld [vmem:[%s138 + $0x12] sm:$0xff]
      %v703 = vld [vmem:[%s138 + $0x1a] sm:$0xff]
      %v704 = vld [vmem:[%s138 + $0x22] sm:$0xff]
      %v705 = vld [vmem:[%s138 + $0x2a] sm:$0xff]
      %v706 = vld [vmem:[%s138 + $0x32] sm:$0xff]
      %v707 = vld [vmem:[%s138 + $0x3a] sm:$0xff]
      %v708 = vld [vmem:[%s138 + $0x42] sm:$0xff]
      %v709 = vld [vmem:[%s138 + $0x4a] sm:$0xff]
      %v710 = vld [vmem:[%s138 + $0x52] sm:$0xff]
      %v711 = vld [vmem:[%s138 + $0x5a] sm:$0xff]
      %v712 = vld [vmem:[%s138 + $0x62] sm:$0xff]
      %v713 = vld [vmem:[%s138 + $0x6a] sm:$0xff]
      %v714 = vld [vmem:[%s138 + $0x72] sm:$0xff]
      %v715 = vld [vmem:[%s138 + $0x7a] sm:$0xff]
      %v716 = vld [vmem:[%s138 + $0x82] sm:$0xff]
      %v717 = vld [vmem:[%s138 + $0x8a] sm:$0xff]
      %v718 = vld [vmem:[%s138 + $0x92] sm:$0xff]
      %v719 = vld [vmem:[%s138 + $0x9a] sm:$0xff]
      %v720 = vld [vmem:[%s138 + $0xa2] sm:$0xff]
      %v721 = vld [vmem:[%s138 + $0xaa] sm:$0xff]
      %v722 = vld [vmem:[%s138 + $0xb2] sm:$0xff]
      %v723 = vld [vmem:[%s138 + $0xba] sm:$0xff]
      %v724 = vld [vmem:[%s138 + $0xc2] sm:$0xff]
      %v725 = vld [vmem:[%s138 + $0xca] sm:$0xff]
      %v726 = vld [vmem:[%s138 + $0xd2] sm:$0xff]
      %v727 = vld [vmem:[%s138 + $0xda] sm:$0xff]
      %v728 = vld [vmem:[%s138 + $0xe2] sm:$0xff]
      %v729 = vld [vmem:[%s138 + $0xea] sm:$0xff]
      %v730 = vld [vmem:[%s138 + $0xf2] sm:$0xff]
      %v731 = vld [vmem:[%s138 + $0xfa] sm:$0xff]
      %v732 = vld [vmem:[%s138 + $0x102] sm:$0xff]
      %v733 = vld [vmem:[%s138 + $0x10a] sm:$0xff]
      %v734 = vld [vmem:[%s138 + $0x112] sm:$0xff]
      %v735 = vld [vmem:[%s138 + $0x11a] sm:$0xff]
      %s736 = scalar_lea.vmem %s1, 128
      %v737 = vld [vmem:[%s736] sm:$0xff]
      %v738 = vld [vmem:[%s736 + $0x8] sm:$0xff]
      %v739 = vld [vmem:[%s736 + $0x10] sm:$0xff]
      %v740 = vld [vmem:[%s736 + $0x18] sm:$0xff]
      %v741 = vld [vmem:[%s736 + $0x20] sm:$0xff]
      %v742 = vld [vmem:[%s736 + $0x28] sm:$0xff]
      %v743 = vld [vmem:[%s736 + $0x30] sm:$0xff]
      %v744 = vld [vmem:[%s736 + $0x38] sm:$0xff]
      %v746 = vsel %vm233, %v700, 0
      %v749 = vsel %vm233, %v701, 0
      %v752 = vsel %vm233, %v702, 0
      %v755 = vsel %vm233, %v703, 0
      %v758 = vsel %vm233, %v704, 0
      %v761 = vsel %vm233, %v705, 0
      %v764 = vsel %vm233, %v706, 0
      %v767 = vsel %vm233, %v707, 0
      %v770 = vsel %vm233, %v708, 0
      %v773 = vsel %vm233, %v709, 0
      %v776 = vsel %vm233, %v710, 0
      %v779 = vsel %vm233, %v711, 0
      %v782 = vsel %vm233, %v712, 0
      %v785 = vsel %vm233, %v713, 0
      %v788 = vsel %vm233, %v714, 0
      %v791 = vsel %vm233, %v715, 0
      %v794 = vsel %vm233, %v716, 0
      %v797 = vsel %vm233, %v717, 0
      %v800 = vsel %vm233, %v718, 0
      %v803 = vsel %vm233, %v719, 0
      %v806 = vsel %vm233, %v720, 0
      %v809 = vsel %vm233, %v721, 0
      %v812 = vsel %vm233, %v722, 0
      %v815 = vsel %vm233, %v723, 0
      %v818 = vsel %vm233, %v724, 0
      %v821 = vsel %vm233, %v725, 0
      %v824 = vsel %vm233, %v726, 0
      %v827 = vsel %vm233, %v727, 0
      %v830 = vsel %vm233, %v728, 0
      %v833 = vsel %vm233, %v729, 0
      %v836 = vsel %vm233, %v730, 0
      %v839 = vsel %vm233, %v731, 0
      %v842 = vsel %vm233, %v732, 0
      %v845 = vsel %vm233, %v733, 0
      %v848 = vsel %vm233, %v734, 0
      %v851 = vsel %vm233, %v735, 0
      %853 = vmatpush.msra.mxu0 0.0
      %854 = vmatpush.msra.mxu0 0.0
      %855 = vmatpush.msra.mxu0 0.0
      %856 = vmatpush.msra.mxu0 0.0
      %857 = vmatpush.msra.mxu0 0.0
      %858 = vmatpush.msra.mxu0 0.0
      %859 = vmatpush.msra.mxu0 0.0
      %860 = vmatpush.msra.mxu0 0.0
      %861 = vmatpush.msra.mxu0 %v744
      %862 = vmatpush.msra.mxu0 %v743
      %863 = vmatpush.msra.mxu0 %v742
      %864 = vmatpush.msra.mxu0 %v741
      %865 = vmatpush.msra.mxu0 %v740
      %866 = vmatpush.msra.mxu0 %v739
      %867 = vmatpush.msra.mxu0 %v738
      %868 = vmatpush.msra.mxu0 %v737
      %869 = vmatmul.f32.gmra.mxu0 %v746
      %v870 = vpop.f32.mrf.mxu0
      %v871 = vadd.f32 0.0, %v870
      %872 = vmatmul.f32.gmra.mxu0 %v749
      %v873 = vpop.f32.mrf.mxu0
      %v874 = vadd.f32 0.0, %v873
      %875 = vmatmul.f32.gmra.mxu0 %v752
      %v876 = vpop.f32.mrf.mxu0
      %v877 = vadd.f32 0.0, %v876
      %878 = vmatmul.f32.gmra.mxu0 %v755
      %v879 = vpop.f32.mrf.mxu0
      %v880 = vadd.f32 0.0, %v879
      %881 = vmatmul.f32.gmra.mxu0 %v758
      %v882 = vpop.f32.mrf.mxu0
      %v883 = vadd.f32 0.0, %v882
      %884 = vmatmul.f32.gmra.mxu0 %v761
      %v885 = vpop.f32.mrf.mxu0
      %v886 = vadd.f32 0.0, %v885
      %887 = vmatmul.f32.gmra.mxu0 %v764
      %v888 = vpop.f32.mrf.mxu0
      %v889 = vadd.f32 0.0, %v888
      %890 = vmatmul.f32.gmra.mxu0 %v767
      %v891 = vpop.f32.mrf.mxu0
      %v892 = vadd.f32 0.0, %v891
      %893 = vmatmul.f32.gmra.mxu0 %v770
      %v894 = vpop.f32.mrf.mxu0
      %v895 = vadd.f32 0.0, %v894
      %896 = vmatmul.f32.gmra.mxu0 %v773
      %v897 = vpop.f32.mrf.mxu0
      %v898 = vadd.f32 0.0, %v897
      %899 = vmatmul.f32.gmra.mxu0 %v776
      %v900 = vpop.f32.mrf.mxu0
      %v901 = vadd.f32 0.0, %v900
      %902 = vmatmul.f32.gmra.mxu0 %v779
      %v903 = vpop.f32.mrf.mxu0
      %v904 = vadd.f32 0.0, %v903
      %905 = vmatmul.f32.gmra.mxu0 %v782
      %v906 = vpop.f32.mrf.mxu0
      %v907 = vadd.f32 0.0, %v906
      %908 = vmatmul.f32.gmra.mxu0 %v785
      %v909 = vpop.f32.mrf.mxu0
      %v910 = vadd.f32 0.0, %v909
      %911 = vmatmul.f32.gmra.mxu0 %v788
      %v912 = vpop.f32.mrf.mxu0
      %v913 = vadd.f32 0.0, %v912
      %914 = vmatmul.f32.gmra.mxu0 %v791
      %v915 = vpop.f32.mrf.mxu0
      %v916 = vadd.f32 0.0, %v915
      %917 = vmatmul.f32.gmra.mxu0 %v794
      %v918 = vpop.f32.mrf.mxu0
      %v919 = vadd.f32 0.0, %v918
      %920 = vmatmul.f32.gmra.mxu0 %v797
      %v921 = vpop.f32.mrf.mxu0
      %v922 = vadd.f32 0.0, %v921
      %923 = vmatmul.f32.gmra.mxu0 %v800
      %v924 = vpop.f32.mrf.mxu0
      %v925 = vadd.f32 0.0, %v924
      %926 = vmatmul.f32.gmra.mxu0 %v803
      %v927 = vpop.f32.mrf.mxu0
      %v928 = vadd.f32 0.0, %v927
      %929 = vmatmul.f32.gmra.mxu0 %v806
      %v930 = vpop.f32.mrf.mxu0
      %v931 = vadd.f32 0.0, %v930
      %932 = vmatmul.f32.gmra.mxu0 %v809
      %v933 = vpop.f32.mrf.mxu0
      %v934 = vadd.f32 0.0, %v933
      %935 = vmatmul.f32.gmra.mxu0 %v812
      %v936 = vpop.f32.mrf.mxu0
      %v937 = vadd.f32 0.0, %v936
      %938 = vmatmul.f32.gmra.mxu0 %v815
      %v939 = vpop.f32.mrf.mxu0
      %v940 = vadd.f32 0.0, %v939
      %941 = vmatmul.f32.gmra.mxu0 %v818
      %v942 = vpop.f32.mrf.mxu0
      %v943 = vadd.f32 0.0, %v942
      %944 = vmatmul.f32.gmra.mxu0 %v821
      %v945 = vpop.f32.mrf.mxu0
      %v946 = vadd.f32 0.0, %v945
      %947 = vmatmul.f32.gmra.mxu0 %v824
      %v948 = vpop.f32.mrf.mxu0
      %v949 = vadd.f32 0.0, %v948
      %950 = vmatmul.f32.gmra.mxu0 %v827
      %v951 = vpop.f32.mrf.mxu0
      %v952 = vadd.f32 0.0, %v951
      %953 = vmatmul.f32.gmra.mxu0 %v830
      %v954 = vpop.f32.mrf.mxu0
      %v955 = vadd.f32 0.0, %v954
      %956 = vmatmul.f32.gmra.mxu0 %v833
      %v957 = vpop.f32.mrf.mxu0
      %v958 = vadd.f32 0.0, %v957
      %959 = vmatmul.f32.gmra.mxu0 %v836
      %v960 = vpop.f32.mrf.mxu0
      %v961 = vadd.f32 0.0, %v960
      %962 = vmatmul.f32.gmra.mxu0 %v839
      %v963 = vpop.f32.mrf.mxu0
      %v964 = vadd.f32 0.0, %v963
      %965 = vmatmul.f32.gmra.mxu0 %v842
      %v966 = vpop.f32.mrf.mxu0
      %v967 = vadd.f32 0.0, %v966
      %968 = vmatmul.f32.gmra.mxu0 %v845
      %v969 = vpop.f32.mrf.mxu0
      %v970 = vadd.f32 0.0, %v969
      %971 = vmatmul.f32.gmra.mxu0 %v848
      %v972 = vpop.f32.mrf.mxu0
      %v973 = vadd.f32 0.0, %v972
      %974 = vmatmul.f32.gmra.mxu0 %v851
      %v975 = vpop.f32.mrf.mxu0
      %v976 = vadd.f32 0.0, %v975
      %977 = vdwg.mxu0
      %v978 = vadd.f32 %v593, %v871
      %v979 = vadd.f32 %v596, %v874
      %v980 = vadd.f32 %v599, %v877
      %v981 = vadd.f32 %v602, %v880
      %v982 = vadd.f32 %v605, %v883
      %v983 = vadd.f32 %v608, %v886
      %v984 = vadd.f32 %v611, %v889
      %v985 = vadd.f32 %v614, %v892
      %v986 = vadd.f32 %v617, %v895
      %v987 = vadd.f32 %v620, %v898
      %v988 = vadd.f32 %v623, %v901
      %v989 = vadd.f32 %v626, %v904
      %v990 = vadd.f32 %v629, %v907
      %v991 = vadd.f32 %v632, %v910
      %v992 = vadd.f32 %v635, %v913
      %v993 = vadd.f32 %v638, %v916
      %v994 = vadd.f32 %v641, %v919
      %v995 = vadd.f32 %v644, %v922
      %v996 = vadd.f32 %v647, %v925
      %v997 = vadd.f32 %v650, %v928
      %v998 = vadd.f32 %v653, %v931
      %v999 = vadd.f32 %v656, %v934
      %v1000 = vadd.f32 %v659, %v937
      %v1001 = vadd.f32 %v662, %v940
      %v1002 = vadd.f32 %v665, %v943
      %v1003 = vadd.f32 %v668, %v946
      %v1004 = vadd.f32 %v671, %v949
      %v1005 = vadd.f32 %v674, %v952
      %v1006 = vadd.f32 %v677, %v955
      %v1007 = vadd.f32 %v680, %v958
      %v1008 = vadd.f32 %v683, %v961
      %v1009 = vadd.f32 %v686, %v964
      %v1010 = vadd.f32 %v689, %v967
      %v1011 = vadd.f32 %v692, %v970
      %v1012 = vadd.f32 %v695, %v973
      %v1013 = vadd.f32 %v698, %v976
      %v1014 = vld [vmem:[%s138 + $0x12] sm:$0xff]
      %v1015 = vld [vmem:[%s138 + $0x1a] sm:$0xff]
      %v1016 = vld [vmem:[%s138 + $0x22] sm:$0xff]
      %v1017 = vld [vmem:[%s138 + $0x2a] sm:$0xff]
      %v1018 = vld [vmem:[%s138 + $0x32] sm:$0xff]
      %v1019 = vld [vmem:[%s138 + $0x3a] sm:$0xff]
      %v1020 = vld [vmem:[%s138 + $0x42] sm:$0xff]
      %v1021 = vld [vmem:[%s138 + $0x4a] sm:$0xff]
      %v1022 = vld [vmem:[%s138 + $0x52] sm:$0xff]
      %v1023 = vld [vmem:[%s138 + $0x5a] sm:$0xff]
      %v1024 = vld [vmem:[%s138 + $0x62] sm:$0xff]
      %v1025 = vld [vmem:[%s138 + $0x6a] sm:$0xff]
      %v1026 = vld [vmem:[%s138 + $0x72] sm:$0xff]
      %v1027 = vld [vmem:[%s138 + $0x7a] sm:$0xff]
      %v1028 = vld [vmem:[%s138 + $0x82] sm:$0xff]
      %v1029 = vld [vmem:[%s138 + $0x8a] sm:$0xff]
      %v1030 = vld [vmem:[%s138 + $0x92] sm:$0xff]
      %v1031 = vld [vmem:[%s138 + $0x9a] sm:$0xff]
      %v1032 = vld [vmem:[%s138 + $0xa2] sm:$0xff]
      %v1033 = vld [vmem:[%s138 + $0xaa] sm:$0xff]
      %v1034 = vld [vmem:[%s138 + $0xb2] sm:$0xff]
      %v1035 = vld [vmem:[%s138 + $0xba] sm:$0xff]
      %v1036 = vld [vmem:[%s138 + $0xc2] sm:$0xff]
      %v1037 = vld [vmem:[%s138 + $0xca] sm:$0xff]
      %v1038 = vld [vmem:[%s138 + $0xd2] sm:$0xff]
      %v1039 = vld [vmem:[%s138 + $0xda] sm:$0xff]
      %v1040 = vld [vmem:[%s138 + $0xe2] sm:$0xff]
      %v1041 = vld [vmem:[%s138 + $0xea] sm:$0xff]
      %v1042 = vld [vmem:[%s138 + $0xf2] sm:$0xff]
      %v1043 = vld [vmem:[%s138 + $0xfa] sm:$0xff]
      %v1044 = vld [vmem:[%s138 + $0x102] sm:$0xff]
      %v1045 = vld [vmem:[%s138 + $0x10a] sm:$0xff]
      %v1046 = vld [vmem:[%s138 + $0x112] sm:$0xff]
      %v1047 = vld [vmem:[%s138 + $0x11a] sm:$0xff]
      %v1048 = vld [vmem:[%s138 + $0x122] sm:$0xff]
      %v1049 = vld [vmem:[%s138 + $0x12a] sm:$0xff]
      %s1050 = scalar_lea.vmem %s1, 192
      %v1051 = vld [vmem:[%s1050] sm:$0xff]
      %v1052 = vld [vmem:[%s1050 + $0x8] sm:$0xff]
      %v1053 = vld [vmem:[%s1050 + $0x10] sm:$0xff]
      %v1054 = vld [vmem:[%s1050 + $0x18] sm:$0xff]
      %v1055 = vld [vmem:[%s1050 + $0x20] sm:$0xff]
      %v1056 = vld [vmem:[%s1050 + $0x28] sm:$0xff]
      %v1057 = vld [vmem:[%s1050 + $0x30] sm:$0xff]
      %v1058 = vld [vmem:[%s1050 + $0x38] sm:$0xff]
      %v1060 = vsel %vm233, %v1014, 0
      %v1063 = vsel %vm233, %v1015, 0
      %v1066 = vsel %vm233, %v1016, 0
      %v1069 = vsel %vm233, %v1017, 0
      %v1072 = vsel %vm233, %v1018, 0
      %v1075 = vsel %vm233, %v1019, 0
      %v1078 = vsel %vm233, %v1020, 0
      %v1081 = vsel %vm233, %v1021, 0
      %v1084 = vsel %vm233, %v1022, 0
      %v1087 = vsel %vm233, %v1023, 0
      %v1090 = vsel %vm233, %v1024, 0
      %v1093 = vsel %vm233, %v1025, 0
      %v1096 = vsel %vm233, %v1026, 0
      %v1099 = vsel %vm233, %v1027, 0
      %v1102 = vsel %vm233, %v1028, 0
      %v1105 = vsel %vm233, %v1029, 0
      %v1108 = vsel %vm233, %v1030, 0
      %v1111 = vsel %vm233, %v1031, 0
      %v1114 = vsel %vm233, %v1032, 0
      %v1117 = vsel %vm233, %v1033, 0
      %v1120 = vsel %vm233, %v1034, 0
      %v1123 = vsel %vm233, %v1035, 0
      %v1126 = vsel %vm233, %v1036, 0
      %v1129 = vsel %vm233, %v1037, 0
      %v1132 = vsel %vm233, %v1038, 0
      %v1135 = vsel %vm233, %v1039, 0
      %v1138 = vsel %vm233, %v1040, 0
      %v1141 = vsel %vm233, %v1041, 0
      %v1144 = vsel %vm233, %v1042, 0
      %v1147 = vsel %vm233, %v1043, 0
      %v1150 = vsel %vm233, %v1044, 0
      %v1153 = vsel %vm233, %v1045, 0
      %v1156 = vsel %vm233, %v1046, 0
      %v1159 = vsel %vm233, %v1047, 0
      %v1162 = vsel %vm233, %v1048, 0
      %v1165 = vsel %vm233, %v1049, 0
      %1167 = vmatpush.msra.mxu0 0.0
      %1168 = vmatpush.msra.mxu0 0.0
      %1169 = vmatpush.msra.mxu0 0.0
      %1170 = vmatpush.msra.mxu0 0.0
      %1171 = vmatpush.msra.mxu0 0.0
      %1172 = vmatpush.msra.mxu0 0.0
      %1173 = vmatpush.msra.mxu0 0.0
      %1174 = vmatpush.msra.mxu0 0.0
      %1175 = vmatpush.msra.mxu0 %v1058
      %1176 = vmatpush.msra.mxu0 %v1057
      %1177 = vmatpush.msra.mxu0 %v1056
      %1178 = vmatpush.msra.mxu0 %v1055
      %1179 = vmatpush.msra.mxu0 %v1054
      %1180 = vmatpush.msra.mxu0 %v1053
      %1181 = vmatpush.msra.mxu0 %v1052
      %1182 = vmatpush.msra.mxu0 %v1051
      %1183 = vmatmul.f32.gmra.mxu0 %v1060
      %v1184 = vpop.f32.mrf.mxu0
      %v1185 = vadd.f32 0.0, %v1184
      %1186 = vmatmul.f32.gmra.mxu0 %v1063
      %v1187 = vpop.f32.mrf.mxu0
      %v1188 = vadd.f32 0.0, %v1187
      %1189 = vmatmul.f32.gmra.mxu0 %v1066
      %v1190 = vpop.f32.mrf.mxu0
      %v1191 = vadd.f32 0.0, %v1190
      %1192 = vmatmul.f32.gmra.mxu0 %v1069
      %v1193 = vpop.f32.mrf.mxu0
      %v1194 = vadd.f32 0.0, %v1193
      %1195 = vmatmul.f32.gmra.mxu0 %v1072
      %v1196 = vpop.f32.mrf.mxu0
      %v1197 = vadd.f32 0.0, %v1196
      %1198 = vmatmul.f32.gmra.mxu0 %v1075
      %v1199 = vpop.f32.mrf.mxu0
      %v1200 = vadd.f32 0.0, %v1199
      %1201 = vmatmul.f32.gmra.mxu0 %v1078
      %v1202 = vpop.f32.mrf.mxu0
      %v1203 = vadd.f32 0.0, %v1202
      %1204 = vmatmul.f32.gmra.mxu0 %v1081
      %v1205 = vpop.f32.mrf.mxu0
      %v1206 = vadd.f32 0.0, %v1205
      %1207 = vmatmul.f32.gmra.mxu0 %v1084
      %v1208 = vpop.f32.mrf.mxu0
      %v1209 = vadd.f32 0.0, %v1208
      %1210 = vmatmul.f32.gmra.mxu0 %v1087
      %v1211 = vpop.f32.mrf.mxu0
      %v1212 = vadd.f32 0.0, %v1211
      %1213 = vmatmul.f32.gmra.mxu0 %v1090
      %v1214 = vpop.f32.mrf.mxu0
      %v1215 = vadd.f32 0.0, %v1214
      %1216 = vmatmul.f32.gmra.mxu0 %v1093
      %v1217 = vpop.f32.mrf.mxu0
      %v1218 = vadd.f32 0.0, %v1217
      %1219 = vmatmul.f32.gmra.mxu0 %v1096
      %v1220 = vpop.f32.mrf.mxu0
      %v1221 = vadd.f32 0.0, %v1220
      %1222 = vmatmul.f32.gmra.mxu0 %v1099
      %v1223 = vpop.f32.mrf.mxu0
      %v1224 = vadd.f32 0.0, %v1223
      %1225 = vmatmul.f32.gmra.mxu0 %v1102
      %v1226 = vpop.f32.mrf.mxu0
      %v1227 = vadd.f32 0.0, %v1226
      %1228 = vmatmul.f32.gmra.mxu0 %v1105
      %v1229 = vpop.f32.mrf.mxu0
      %v1230 = vadd.f32 0.0, %v1229
      %1231 = vmatmul.f32.gmra.mxu0 %v1108
      %v1232 = vpop.f32.mrf.mxu0
      %v1233 = vadd.f32 0.0, %v1232
      %1234 = vmatmul.f32.gmra.mxu0 %v1111
      %v1235 = vpop.f32.mrf.mxu0
      %v1236 = vadd.f32 0.0, %v1235
      %1237 = vmatmul.f32.gmra.mxu0 %v1114
      %v1238 = vpop.f32.mrf.mxu0
      %v1239 = vadd.f32 0.0, %v1238
      %1240 = vmatmul.f32.gmra.mxu0 %v1117
      %v1241 = vpop.f32.mrf.mxu0
      %v1242 = vadd.f32 0.0, %v1241
      %1243 = vmatmul.f32.gmra.mxu0 %v1120
      %v1244 = vpop.f32.mrf.mxu0
      %v1245 = vadd.f32 0.0, %v1244
      %1246 = vmatmul.f32.gmra.mxu0 %v1123
      %v1247 = vpop.f32.mrf.mxu0
      %v1248 = vadd.f32 0.0, %v1247
      %1249 = vmatmul.f32.gmra.mxu0 %v1126
      %v1250 = vpop.f32.mrf.mxu0
      %v1251 = vadd.f32 0.0, %v1250
      %1252 = vmatmul.f32.gmra.mxu0 %v1129
      %v1253 = vpop.f32.mrf.mxu0
      %v1254 = vadd.f32 0.0, %v1253
      %1255 = vmatmul.f32.gmra.mxu0 %v1132
      %v1256 = vpop.f32.mrf.mxu0
      %v1257 = vadd.f32 0.0, %v1256
      %1258 = vmatmul.f32.gmra.mxu0 %v1135
      %v1259 = vpop.f32.mrf.mxu0
      %v1260 = vadd.f32 0.0, %v1259
      %1261 = vmatmul.f32.gmra.mxu0 %v1138
      %v1262 = vpop.f32.mrf.mxu0
      %v1263 = vadd.f32 0.0, %v1262
      %1264 = vmatmul.f32.gmra.mxu0 %v1141
      %v1265 = vpop.f32.mrf.mxu0
      %v1266 = vadd.f32 0.0, %v1265
      %1267 = vmatmul.f32.gmra.mxu0 %v1144
      %v1268 = vpop.f32.mrf.mxu0
      %v1269 = vadd.f32 0.0, %v1268
      %1270 = vmatmul.f32.gmra.mxu0 %v1147
      %v1271 = vpop.f32.mrf.mxu0
      %v1272 = vadd.f32 0.0, %v1271
      %1273 = vmatmul.f32.gmra.mxu0 %v1150
      %v1274 = vpop.f32.mrf.mxu0
      %v1275 = vadd.f32 0.0, %v1274
      %1276 = vmatmul.f32.gmra.mxu0 %v1153
      %v1277 = vpop.f32.mrf.mxu0
      %v1278 = vadd.f32 0.0, %v1277
      %1279 = vmatmul.f32.gmra.mxu0 %v1156
      %v1280 = vpop.f32.mrf.mxu0
      %v1281 = vadd.f32 0.0, %v1280
      %1282 = vmatmul.f32.gmra.mxu0 %v1159
      %v1283 = vpop.f32.mrf.mxu0
      %v1284 = vadd.f32 0.0, %v1283
      %1285 = vmatmul.f32.gmra.mxu0 %v1162
      %v1286 = vpop.f32.mrf.mxu0
      %v1287 = vadd.f32 0.0, %v1286
      %1288 = vmatmul.f32.gmra.mxu0 %v1165
      %v1289 = vpop.f32.mrf.mxu0
      %v1290 = vadd.f32 0.0, %v1289
      %1291 = vdwg.mxu0
      %v1292 = vadd.f32 %v978, %v1185
      %v1293 = vadd.f32 %v979, %v1188
      %v1294 = vadd.f32 %v980, %v1191
      %v1295 = vadd.f32 %v981, %v1194
      %v1296 = vadd.f32 %v982, %v1197
      %v1297 = vadd.f32 %v983, %v1200
      %v1298 = vadd.f32 %v984, %v1203
      %v1299 = vadd.f32 %v985, %v1206
      %v1300 = vadd.f32 %v986, %v1209
      %v1301 = vadd.f32 %v987, %v1212
      %v1302 = vadd.f32 %v988, %v1215
      %v1303 = vadd.f32 %v989, %v1218
      %v1304 = vadd.f32 %v990, %v1221
      %v1305 = vadd.f32 %v991, %v1224
      %v1306 = vadd.f32 %v992, %v1227
      %v1307 = vadd.f32 %v993, %v1230
      %v1308 = vadd.f32 %v994, %v1233
      %v1309 = vadd.f32 %v995, %v1236
      %v1310 = vadd.f32 %v996, %v1239
      %v1311 = vadd.f32 %v997, %v1242
      %v1312 = vadd.f32 %v998, %v1245
      %v1313 = vadd.f32 %v999, %v1248
      %v1314 = vadd.f32 %v1000, %v1251
      %v1315 = vadd.f32 %v1001, %v1254
      %v1316 = vadd.f32 %v1002, %v1257
      %v1317 = vadd.f32 %v1003, %v1260
      %v1318 = vadd.f32 %v1004, %v1263
      %v1319 = vadd.f32 %v1005, %v1266
      %v1320 = vadd.f32 %v1006, %v1269
      %v1321 = vadd.f32 %v1007, %v1272
      %v1322 = vadd.f32 %v1008, %v1275
      %v1323 = vadd.f32 %v1009, %v1278
      %v1324 = vadd.f32 %v1010, %v1281
      %v1325 = vadd.f32 %v1011, %v1284
      %v1326 = vadd.f32 %v1012, %v1287
      %v1327 = vadd.f32 %v1013, %v1290
      %v1328 = vld [vmem:[%s138 + $0x13] sm:$0xff]
      %v1329 = vld [vmem:[%s138 + $0x1b] sm:$0xff]
      %v1330 = vld [vmem:[%s138 + $0x23] sm:$0xff]
      %v1331 = vld [vmem:[%s138 + $0x2b] sm:$0xff]
      %v1332 = vld [vmem:[%s138 + $0x33] sm:$0xff]
      %v1333 = vld [vmem:[%s138 + $0x3b] sm:$0xff]
      %v1334 = vld [vmem:[%s138 + $0x43] sm:$0xff]
      %v1335 = vld [vmem:[%s138 + $0x4b] sm:$0xff]
      %v1336 = vld [vmem:[%s138 + $0x53] sm:$0xff]
      %v1337 = vld [vmem:[%s138 + $0x5b] sm:$0xff]
      %v1338 = vld [vmem:[%s138 + $0x63] sm:$0xff]
      %v1339 = vld [vmem:[%s138 + $0x6b] sm:$0xff]
      %v1340 = vld [vmem:[%s138 + $0x73] sm:$0xff]
      %v1341 = vld [vmem:[%s138 + $0x7b] sm:$0xff]
      %v1342 = vld [vmem:[%s138 + $0x83] sm:$0xff]
      %v1343 = vld [vmem:[%s138 + $0x8b] sm:$0xff]
      %v1344 = vld [vmem:[%s138 + $0x93] sm:$0xff]
      %v1345 = vld [vmem:[%s138 + $0x9b] sm:$0xff]
      %v1346 = vld [vmem:[%s138 + $0xa3] sm:$0xff]
      %v1347 = vld [vmem:[%s138 + $0xab] sm:$0xff]
      %v1348 = vld [vmem:[%s138 + $0xb3] sm:$0xff]
      %v1349 = vld [vmem:[%s138 + $0xbb] sm:$0xff]
      %v1350 = vld [vmem:[%s138 + $0xc3] sm:$0xff]
      %v1351 = vld [vmem:[%s138 + $0xcb] sm:$0xff]
      %v1352 = vld [vmem:[%s138 + $0xd3] sm:$0xff]
      %v1353 = vld [vmem:[%s138 + $0xdb] sm:$0xff]
      %v1354 = vld [vmem:[%s138 + $0xe3] sm:$0xff]
      %v1355 = vld [vmem:[%s138 + $0xeb] sm:$0xff]
      %v1356 = vld [vmem:[%s138 + $0xf3] sm:$0xff]
      %v1357 = vld [vmem:[%s138 + $0xfb] sm:$0xff]
      %v1358 = vld [vmem:[%s138 + $0x103] sm:$0xff]
      %v1359 = vld [vmem:[%s138 + $0x10b] sm:$0xff]
      %v1360 = vld [vmem:[%s138 + $0x113] sm:$0xff]
      %v1361 = vld [vmem:[%s138 + $0x11b] sm:$0xff]
      %v1362 = vld [vmem:[%s138 + $0x123] sm:$0xff]
      %v1363 = vld [vmem:[%s138 + $0x12b] sm:$0xff]
      %s1364 = scalar_lea.vmem %s1, 256
      %v1365 = vld [vmem:[%s1364] sm:$0xff]
      %v1366 = vld [vmem:[%s1364 + $0x8] sm:$0xff]
      %v1367 = vld [vmem:[%s1364 + $0x10] sm:$0xff]
      %v1368 = vld [vmem:[%s1364 + $0x18] sm:$0xff]
      %v1369 = vld [vmem:[%s1364 + $0x20] sm:$0xff]
      %v1370 = vld [vmem:[%s1364 + $0x28] sm:$0xff]
      %v1371 = vld [vmem:[%s1364 + $0x30] sm:$0xff]
      %v1372 = vld [vmem:[%s1364 + $0x38] sm:$0xff]
      %v1374 = vsel %vm233, %v1328, 0
      %v1377 = vsel %vm233, %v1329, 0
      %v1380 = vsel %vm233, %v1330, 0
      %v1383 = vsel %vm233, %v1331, 0
      %v1386 = vsel %vm233, %v1332, 0
      %v1389 = vsel %vm233, %v1333, 0
      %v1392 = vsel %vm233, %v1334, 0
      %v1395 = vsel %vm233, %v1335, 0
      %v1398 = vsel %vm233, %v1336, 0
      %v1401 = vsel %vm233, %v1337, 0
      %v1404 = vsel %vm233, %v1338, 0
      %v1407 = vsel %vm233, %v1339, 0
      %v1410 = vsel %vm233, %v1340, 0
      %v1413 = vsel %vm233, %v1341, 0
      %v1416 = vsel %vm233, %v1342, 0
      %v1419 = vsel %vm233, %v1343, 0
      %v1422 = vsel %vm233, %v1344, 0
      %v1425 = vsel %vm233, %v1345, 0
      %v1428 = vsel %vm233, %v1346, 0
      %v1431 = vsel %vm233, %v1347, 0
      %v1434 = vsel %vm233, %v1348, 0
      %v1437 = vsel %vm233, %v1349, 0
      %v1440 = vsel %vm233, %v1350, 0
      %v1443 = vsel %vm233, %v1351, 0
      %v1446 = vsel %vm233, %v1352, 0
      %v1449 = vsel %vm233, %v1353, 0
      %v1452 = vsel %vm233, %v1354, 0
      %v1455 = vsel %vm233, %v1355, 0
      %v1458 = vsel %vm233, %v1356, 0
      %v1461 = vsel %vm233, %v1357, 0
      %v1464 = vsel %vm233, %v1358, 0
      %v1467 = vsel %vm233, %v1359, 0
      %v1470 = vsel %vm233, %v1360, 0
      %v1473 = vsel %vm233, %v1361, 0
      %v1476 = vsel %vm233, %v1362, 0
      %v1479 = vsel %vm233, %v1363, 0
      %1481 = vmatpush.msra.mxu0 0.0
      %1482 = vmatpush.msra.mxu0 0.0
      %1483 = vmatpush.msra.mxu0 0.0
      %1484 = vmatpush.msra.mxu0 0.0
      %1485 = vmatpush.msra.mxu0 0.0
      %1486 = vmatpush.msra.mxu0 0.0
      %1487 = vmatpush.msra.mxu0 0.0
      %1488 = vmatpush.msra.mxu0 0.0
      %1489 = vmatpush.msra.mxu0 %v1372
      %1490 = vmatpush.msra.mxu0 %v1371
      %1491 = vmatpush.msra.mxu0 %v1370
      %1492 = vmatpush.msra.mxu0 %v1369
      %1493 = vmatpush.msra.mxu0 %v1368
      %1494 = vmatpush.msra.mxu0 %v1367
      %1495 = vmatpush.msra.mxu0 %v1366
      %1496 = vmatpush.msra.mxu0 %v1365
      %1497 = vmatmul.f32.gmra.mxu0 %v1374
      %v1498 = vpop.f32.mrf.mxu0
      %v1499 = vadd.f32 0.0, %v1498
      %1500 = vmatmul.f32.gmra.mxu0 %v1377
      %v1501 = vpop.f32.mrf.mxu0
      %v1502 = vadd.f32 0.0, %v1501
      %1503 = vmatmul.f32.gmra.mxu0 %v1380
      %v1504 = vpop.f32.mrf.mxu0
      %v1505 = vadd.f32 0.0, %v1504
      %1506 = vmatmul.f32.gmra.mxu0 %v1383
      %v1507 = vpop.f32.mrf.mxu0
      %v1508 = vadd.f32 0.0, %v1507
      %1509 = vmatmul.f32.gmra.mxu0 %v1386
      %v1510 = vpop.f32.mrf.mxu0
      %v1511 = vadd.f32 0.0, %v1510
      %1512 = vmatmul.f32.gmra.mxu0 %v1389
      %v1513 = vpop.f32.mrf.mxu0
      %v1514 = vadd.f32 0.0, %v1513
      %1515 = vmatmul.f32.gmra.mxu0 %v1392
      %v1516 = vpop.f32.mrf.mxu0
      %v1517 = vadd.f32 0.0, %v1516
      %1518 = vmatmul.f32.gmra.mxu0 %v1395
      %v1519 = vpop.f32.mrf.mxu0
      %v1520 = vadd.f32 0.0, %v1519
      %1521 = vmatmul.f32.gmra.mxu0 %v1398
      %v1522 = vpop.f32.mrf.mxu0
      %v1523 = vadd.f32 0.0, %v1522
      %1524 = vmatmul.f32.gmra.mxu0 %v1401
      %v1525 = vpop.f32.mrf.mxu0
      %v1526 = vadd.f32 0.0, %v1525
      %1527 = vmatmul.f32.gmra.mxu0 %v1404
      %v1528 = vpop.f32.mrf.mxu0
      %v1529 = vadd.f32 0.0, %v1528
      %1530 = vmatmul.f32.gmra.mxu0 %v1407
      %v1531 = vpop.f32.mrf.mxu0
      %v1532 = vadd.f32 0.0, %v1531
      %1533 = vmatmul.f32.gmra.mxu0 %v1410
      %v1534 = vpop.f32.mrf.mxu0
      %v1535 = vadd.f32 0.0, %v1534
      %1536 = vmatmul.f32.gmra.mxu0 %v1413
      %v1537 = vpop.f32.mrf.mxu0
      %v1538 = vadd.f32 0.0, %v1537
      %1539 = vmatmul.f32.gmra.mxu0 %v1416
      %v1540 = vpop.f32.mrf.mxu0
      %v1541 = vadd.f32 0.0, %v1540
      %1542 = vmatmul.f32.gmra.mxu0 %v1419
      %v1543 = vpop.f32.mrf.mxu0
      %v1544 = vadd.f32 0.0, %v1543
      %1545 = vmatmul.f32.gmra.mxu0 %v1422
      %v1546 = vpop.f32.mrf.mxu0
      %v1547 = vadd.f32 0.0, %v1546
      %1548 = vmatmul.f32.gmra.mxu0 %v1425
      %v1549 = vpop.f32.mrf.mxu0
      %v1550 = vadd.f32 0.0, %v1549
      %1551 = vmatmul.f32.gmra.mxu0 %v1428
      %v1552 = vpop.f32.mrf.mxu0
      %v1553 = vadd.f32 0.0, %v1552
      %1554 = vmatmul.f32.gmra.mxu0 %v1431
      %v1555 = vpop.f32.mrf.mxu0
      %v1556 = vadd.f32 0.0, %v1555
      %1557 = vmatmul.f32.gmra.mxu0 %v1434
      %v1558 = vpop.f32.mrf.mxu0
      %v1559 = vadd.f32 0.0, %v1558
      %1560 = vmatmul.f32.gmra.mxu0 %v1437
      %v1561 = vpop.f32.mrf.mxu0
      %v1562 = vadd.f32 0.0, %v1561
      %1563 = vmatmul.f32.gmra.mxu0 %v1440
      %v1564 = vpop.f32.mrf.mxu0
      %v1565 = vadd.f32 0.0, %v1564
      %1566 = vmatmul.f32.gmra.mxu0 %v1443
      %v1567 = vpop.f32.mrf.mxu0
      %v1568 = vadd.f32 0.0, %v1567
      %1569 = vmatmul.f32.gmra.mxu0 %v1446
      %v1570 = vpop.f32.mrf.mxu0
      %v1571 = vadd.f32 0.0, %v1570
      %1572 = vmatmul.f32.gmra.mxu0 %v1449
      %v1573 = vpop.f32.mrf.mxu0
      %v1574 = vadd.f32 0.0, %v1573
      %1575 = vmatmul.f32.gmra.mxu0 %v1452
      %v1576 = vpop.f32.mrf.mxu0
      %v1577 = vadd.f32 0.0, %v1576
      %1578 = vmatmul.f32.gmra.mxu0 %v1455
      %v1579 = vpop.f32.mrf.mxu0
      %v1580 = vadd.f32 0.0, %v1579
      %1581 = vmatmul.f32.gmra.mxu0 %v1458
      %v1582 = vpop.f32.mrf.mxu0
      %v1583 = vadd.f32 0.0, %v1582
      %1584 = vmatmul.f32.gmra.mxu0 %v1461
      %v1585 = vpop.f32.mrf.mxu0
      %v1586 = vadd.f32 0.0, %v1585
      %1587 = vmatmul.f32.gmra.mxu0 %v1464
      %v1588 = vpop.f32.mrf.mxu0
      %v1589 = vadd.f32 0.0, %v1588
      %1590 = vmatmul.f32.gmra.mxu0 %v1467
      %v1591 = vpop.f32.mrf.mxu0
      %v1592 = vadd.f32 0.0, %v1591
      %1593 = vmatmul.f32.gmra.mxu0 %v1470
      %v1594 = vpop.f32.mrf.mxu0
      %v1595 = vadd.f32 0.0, %v1594
      %1596 = vmatmul.f32.gmra.mxu0 %v1473
      %v1597 = vpop.f32.mrf.mxu0
      %v1598 = vadd.f32 0.0, %v1597
      %1599 = vmatmul.f32.gmra.mxu0 %v1476
      %v1600 = vpop.f32.mrf.mxu0
      %v1601 = vadd.f32 0.0, %v1600
      %1602 = vmatmul.f32.gmra.mxu0 %v1479
      %v1603 = vpop.f32.mrf.mxu0
      %v1604 = vadd.f32 0.0, %v1603
      %1605 = vdwg.mxu0
      %v1606 = vadd.f32 %v1292, %v1499
      %v1607 = vadd.f32 %v1293, %v1502
      %v1608 = vadd.f32 %v1294, %v1505
      %v1609 = vadd.f32 %v1295, %v1508
      %v1610 = vadd.f32 %v1296, %v1511
      %v1611 = vadd.f32 %v1297, %v1514
      %v1612 = vadd.f32 %v1298, %v1517
      %v1613 = vadd.f32 %v1299, %v1520
      %v1614 = vadd.f32 %v1300, %v1523
      %v1615 = vadd.f32 %v1301, %v1526
      %v1616 = vadd.f32 %v1302, %v1529
      %v1617 = vadd.f32 %v1303, %v1532
      %v1618 = vadd.f32 %v1304, %v1535
      %v1619 = vadd.f32 %v1305, %v1538
      %v1620 = vadd.f32 %v1306, %v1541
      %v1621 = vadd.f32 %v1307, %v1544
      %v1622 = vadd.f32 %v1308, %v1547
      %v1623 = vadd.f32 %v1309, %v1550
      %v1624 = vadd.f32 %v1310, %v1553
      %v1625 = vadd.f32 %v1311, %v1556
      %v1626 = vadd.f32 %v1312, %v1559
      %v1627 = vadd.f32 %v1313, %v1562
      %v1628 = vadd.f32 %v1314, %v1565
      %v1629 = vadd.f32 %v1315, %v1568
      %v1630 = vadd.f32 %v1316, %v1571
      %v1631 = vadd.f32 %v1317, %v1574
      %v1632 = vadd.f32 %v1318, %v1577
      %v1633 = vadd.f32 %v1319, %v1580
      %v1634 = vadd.f32 %v1320, %v1583
      %v1635 = vadd.f32 %v1321, %v1586
      %v1636 = vadd.f32 %v1322, %v1589
      %v1637 = vadd.f32 %v1323, %v1592
      %v1638 = vadd.f32 %v1324, %v1595
      %v1639 = vadd.f32 %v1325, %v1598
      %v1640 = vadd.f32 %v1326, %v1601
      %v1641 = vadd.f32 %v1327, %v1604
      %v1642 = vld [vmem:[%s138 + $0x14] sm:$0xff]
      %v1643 = vld [vmem:[%s138 + $0x1c] sm:$0xff]
      %v1644 = vld [vmem:[%s138 + $0x24] sm:$0xff]
      %v1645 = vld [vmem:[%s138 + $0x2c] sm:$0xff]
      %v1646 = vld [vmem:[%s138 + $0x34] sm:$0xff]
      %v1647 = vld [vmem:[%s138 + $0x3c] sm:$0xff]
      %v1648 = vld [vmem:[%s138 + $0x44] sm:$0xff]
      %v1649 = vld [vmem:[%s138 + $0x4c] sm:$0xff]
      %v1650 = vld [vmem:[%s138 + $0x54] sm:$0xff]
      %v1651 = vld [vmem:[%s138 + $0x5c] sm:$0xff]
      %v1652 = vld [vmem:[%s138 + $0x64] sm:$0xff]
      %v1653 = vld [vmem:[%s138 + $0x6c] sm:$0xff]
      %v1654 = vld [vmem:[%s138 + $0x74] sm:$0xff]
      %v1655 = vld [vmem:[%s138 + $0x7c] sm:$0xff]
      %v1656 = vld [vmem:[%s138 + $0x84] sm:$0xff]
      %v1657 = vld [vmem:[%s138 + $0x8c] sm:$0xff]
      %v1658 = vld [vmem:[%s138 + $0x94] sm:$0xff]
      %v1659 = vld [vmem:[%s138 + $0x9c] sm:$0xff]
      %v1660 = vld [vmem:[%s138 + $0xa4] sm:$0xff]
      %v1661 = vld [vmem:[%s138 + $0xac] sm:$0xff]
      %v1662 = vld [vmem:[%s138 + $0xb4] sm:$0xff]
      %v1663 = vld [vmem:[%s138 + $0xbc] sm:$0xff]
      %v1664 = vld [vmem:[%s138 + $0xc4] sm:$0xff]
      %v1665 = vld [vmem:[%s138 + $0xcc] sm:$0xff]
      %v1666 = vld [vmem:[%s138 + $0xd4] sm:$0xff]
      %v1667 = vld [vmem:[%s138 + $0xdc] sm:$0xff]
      %v1668 = vld [vmem:[%s138 + $0xe4] sm:$0xff]
      %v1669 = vld [vmem:[%s138 + $0xec] sm:$0xff]
      %v1670 = vld [vmem:[%s138 + $0xf4] sm:$0xff]
      %v1671 = vld [vmem:[%s138 + $0xfc] sm:$0xff]
      %v1672 = vld [vmem:[%s138 + $0x104] sm:$0xff]
      %v1673 = vld [vmem:[%s138 + $0x10c] sm:$0xff]
      %v1674 = vld [vmem:[%s138 + $0x114] sm:$0xff]
      %v1675 = vld [vmem:[%s138 + $0x11c] sm:$0xff]
      %v1676 = vld [vmem:[%s138 + $0x124] sm:$0xff]
      %v1677 = vld [vmem:[%s138 + $0x12c] sm:$0xff]
      %s1678 = scalar_lea.vmem %s1, 320
      %v1679 = vld [vmem:[%s1678] sm:$0xff]
      %v1680 = vld [vmem:[%s1678 + $0x8] sm:$0xff]
      %v1681 = vld [vmem:[%s1678 + $0x10] sm:$0xff]
      %v1682 = vld [vmem:[%s1678 + $0x18] sm:$0xff]
      %v1683 = vld [vmem:[%s1678 + $0x20] sm:$0xff]
      %v1684 = vld [vmem:[%s1678 + $0x28] sm:$0xff]
      %v1685 = vld [vmem:[%s1678 + $0x30] sm:$0xff]
      %v1686 = vld [vmem:[%s1678 + $0x38] sm:$0xff]
      %v1688 = vsel %vm233, %v1642, 0
      %v1691 = vsel %vm233, %v1643, 0
      %v1694 = vsel %vm233, %v1644, 0
      %v1697 = vsel %vm233, %v1645, 0
      %v1700 = vsel %vm233, %v1646, 0
      %v1703 = vsel %vm233, %v1647, 0
      %v1706 = vsel %vm233, %v1648, 0
      %v1709 = vsel %vm233, %v1649, 0
      %v1712 = vsel %vm233, %v1650, 0
      %v1715 = vsel %vm233, %v1651, 0
      %v1718 = vsel %vm233, %v1652, 0
      %v1721 = vsel %vm233, %v1653, 0
      %v1724 = vsel %vm233, %v1654, 0
      %v1727 = vsel %vm233, %v1655, 0
      %v1730 = vsel %vm233, %v1656, 0
      %v1733 = vsel %vm233, %v1657, 0
      %v1736 = vsel %vm233, %v1658, 0
      %v1739 = vsel %vm233, %v1659, 0
      %v1742 = vsel %vm233, %v1660, 0
      %v1745 = vsel %vm233, %v1661, 0
      %v1748 = vsel %vm233, %v1662, 0
      %v1751 = vsel %vm233, %v1663, 0
      %v1754 = vsel %vm233, %v1664, 0
      %v1757 = vsel %vm233, %v1665, 0
      %v1760 = vsel %vm233, %v1666, 0
      %v1763 = vsel %vm233, %v1667, 0
      %v1766 = vsel %vm233, %v1668, 0
      %v1769 = vsel %vm233, %v1669, 0
      %v1772 = vsel %vm233, %v1670, 0
      %v1775 = vsel %vm233, %v1671, 0
      %v1778 = vsel %vm233, %v1672, 0
      %v1781 = vsel %vm233, %v1673, 0
      %v1784 = vsel %vm233, %v1674, 0
      %v1787 = vsel %vm233, %v1675, 0
      %v1790 = vsel %vm233, %v1676, 0
      %v1793 = vsel %vm233, %v1677, 0
      %1795 = vmatpush.msra.mxu0 0.0
      %1796 = vmatpush.msra.mxu0 0.0
      %1797 = vmatpush.msra.mxu0 0.0
      %1798 = vmatpush.msra.mxu0 0.0
      %1799 = vmatpush.msra.mxu0 0.0
      %1800 = vmatpush.msra.mxu0 0.0
      %1801 = vmatpush.msra.mxu0 0.0
      %1802 = vmatpush.msra.mxu0 0.0
      %1803 = vmatpush.msra.mxu0 %v1686
      %1804 = vmatpush.msra.mxu0 %v1685
      %1805 = vmatpush.msra.mxu0 %v1684
      %1806 = vmatpush.msra.mxu0 %v1683
      %1807 = vmatpush.msra.mxu0 %v1682
      %1808 = vmatpush.msra.mxu0 %v1681
      %1809 = vmatpush.msra.mxu0 %v1680
      %1810 = vmatpush.msra.mxu0 %v1679
      %1811 = vmatmul.f32.gmra.mxu0 %v1688
      %v1812 = vpop.f32.mrf.mxu0
      %v1813 = vadd.f32 0.0, %v1812
      %1814 = vmatmul.f32.gmra.mxu0 %v1691
      %v1815 = vpop.f32.mrf.mxu0
      %v1816 = vadd.f32 0.0, %v1815
      %1817 = vmatmul.f32.gmra.mxu0 %v1694
      %v1818 = vpop.f32.mrf.mxu0
      %v1819 = vadd.f32 0.0, %v1818
      %1820 = vmatmul.f32.gmra.mxu0 %v1697
      %v1821 = vpop.f32.mrf.mxu0
      %v1822 = vadd.f32 0.0, %v1821
      %1823 = vmatmul.f32.gmra.mxu0 %v1700
      %v1824 = vpop.f32.mrf.mxu0
      %v1825 = vadd.f32 0.0, %v1824
      %1826 = vmatmul.f32.gmra.mxu0 %v1703
      %v1827 = vpop.f32.mrf.mxu0
      %v1828 = vadd.f32 0.0, %v1827
      %1829 = vmatmul.f32.gmra.mxu0 %v1706
      %v1830 = vpop.f32.mrf.mxu0
      %v1831 = vadd.f32 0.0, %v1830
      %1832 = vmatmul.f32.gmra.mxu0 %v1709
      %v1833 = vpop.f32.mrf.mxu0
      %v1834 = vadd.f32 0.0, %v1833
      %1835 = vmatmul.f32.gmra.mxu0 %v1712
      %v1836 = vpop.f32.mrf.mxu0
      %v1837 = vadd.f32 0.0, %v1836
      %1838 = vmatmul.f32.gmra.mxu0 %v1715
      %v1839 = vpop.f32.mrf.mxu0
      %v1840 = vadd.f32 0.0, %v1839
      %1841 = vmatmul.f32.gmra.mxu0 %v1718
      %v1842 = vpop.f32.mrf.mxu0
      %v1843 = vadd.f32 0.0, %v1842
      %1844 = vmatmul.f32.gmra.mxu0 %v1721
      %v1845 = vpop.f32.mrf.mxu0
      %v1846 = vadd.f32 0.0, %v1845
      %1847 = vmatmul.f32.gmra.mxu0 %v1724
      %v1848 = vpop.f32.mrf.mxu0
      %v1849 = vadd.f32 0.0, %v1848
      %1850 = vmatmul.f32.gmra.mxu0 %v1727
      %v1851 = vpop.f32.mrf.mxu0
      %v1852 = vadd.f32 0.0, %v1851
      %1853 = vmatmul.f32.gmra.mxu0 %v1730
      %v1854 = vpop.f32.mrf.mxu0
      %v1855 = vadd.f32 0.0, %v1854
      %1856 = vmatmul.f32.gmra.mxu0 %v1733
      %v1857 = vpop.f32.mrf.mxu0
      %v1858 = vadd.f32 0.0, %v1857
      %1859 = vmatmul.f32.gmra.mxu0 %v1736
      %v1860 = vpop.f32.mrf.mxu0
      %v1861 = vadd.f32 0.0, %v1860
      %1862 = vmatmul.f32.gmra.mxu0 %v1739
      %v1863 = vpop.f32.mrf.mxu0
      %v1864 = vadd.f32 0.0, %v1863
      %1865 = vmatmul.f32.gmra.mxu0 %v1742
      %v1866 = vpop.f32.mrf.mxu0
      %v1867 = vadd.f32 0.0, %v1866
      %1868 = vmatmul.f32.gmra.mxu0 %v1745
      %v1869 = vpop.f32.mrf.mxu0
      %v1870 = vadd.f32 0.0, %v1869
      %1871 = vmatmul.f32.gmra.mxu0 %v1748
      %v1872 = vpop.f32.mrf.mxu0
      %v1873 = vadd.f32 0.0, %v1872
      %1874 = vmatmul.f32.gmra.mxu0 %v1751
      %v1875 = vpop.f32.mrf.mxu0
      %v1876 = vadd.f32 0.0, %v1875
      %1877 = vmatmul.f32.gmra.mxu0 %v1754
      %v1878 = vpop.f32.mrf.mxu0
      %v1879 = vadd.f32 0.0, %v1878
      %1880 = vmatmul.f32.gmra.mxu0 %v1757
      %v1881 = vpop.f32.mrf.mxu0
      %v1882 = vadd.f32 0.0, %v1881
      %1883 = vmatmul.f32.gmra.mxu0 %v1760
      %v1884 = vpop.f32.mrf.mxu0
      %v1885 = vadd.f32 0.0, %v1884
      %1886 = vmatmul.f32.gmra.mxu0 %v1763
      %v1887 = vpop.f32.mrf.mxu0
      %v1888 = vadd.f32 0.0, %v1887
      %1889 = vmatmul.f32.gmra.mxu0 %v1766
      %v1890 = vpop.f32.mrf.mxu0
      %v1891 = vadd.f32 0.0, %v1890
      %1892 = vmatmul.f32.gmra.mxu0 %v1769
      %v1893 = vpop.f32.mrf.mxu0
      %v1894 = vadd.f32 0.0, %v1893
      %1895 = vmatmul.f32.gmra.mxu0 %v1772
      %v1896 = vpop.f32.mrf.mxu0
      %v1897 = vadd.f32 0.0, %v1896
      %1898 = vmatmul.f32.gmra.mxu0 %v1775
      %v1899 = vpop.f32.mrf.mxu0
      %v1900 = vadd.f32 0.0, %v1899
      %1901 = vmatmul.f32.gmra.mxu0 %v1778
      %v1902 = vpop.f32.mrf.mxu0
      %v1903 = vadd.f32 0.0, %v1902
      %1904 = vmatmul.f32.gmra.mxu0 %v1781
      %v1905 = vpop.f32.mrf.mxu0
      %v1906 = vadd.f32 0.0, %v1905
      %1907 = vmatmul.f32.gmra.mxu0 %v1784
      %v1908 = vpop.f32.mrf.mxu0
      %v1909 = vadd.f32 0.0, %v1908
      %1910 = vmatmul.f32.gmra.mxu0 %v1787
      %v1911 = vpop.f32.mrf.mxu0
      %v1912 = vadd.f32 0.0, %v1911
      %1913 = vmatmul.f32.gmra.mxu0 %v1790
      %v1914 = vpop.f32.mrf.mxu0
      %v1915 = vadd.f32 0.0, %v1914
      %1916 = vmatmul.f32.gmra.mxu0 %v1793
      %v1917 = vpop.f32.mrf.mxu0
      %v1918 = vadd.f32 0.0, %v1917
      %1919 = vdwg.mxu0
      %v1920 = vadd.f32 %v1606, %v1813
      %v1921 = vadd.f32 %v1607, %v1816
      %v1922 = vadd.f32 %v1608, %v1819
      %v1923 = vadd.f32 %v1609, %v1822
      %v1924 = vadd.f32 %v1610, %v1825
      %v1925 = vadd.f32 %v1611, %v1828
      %v1926 = vadd.f32 %v1612, %v1831
      %v1927 = vadd.f32 %v1613, %v1834
      %v1928 = vadd.f32 %v1614, %v1837
      %v1929 = vadd.f32 %v1615, %v1840
      %v1930 = vadd.f32 %v1616, %v1843
      %v1931 = vadd.f32 %v1617, %v1846
      %v1932 = vadd.f32 %v1618, %v1849
      %v1933 = vadd.f32 %v1619, %v1852
      %v1934 = vadd.f32 %v1620, %v1855
      %v1935 = vadd.f32 %v1621, %v1858
      %v1936 = vadd.f32 %v1622, %v1861
      %v1937 = vadd.f32 %v1623, %v1864
      %v1938 = vadd.f32 %v1624, %v1867
      %v1939 = vadd.f32 %v1625, %v1870
      %v1940 = vadd.f32 %v1626, %v1873
      %v1941 = vadd.f32 %v1627, %v1876
      %v1942 = vadd.f32 %v1628, %v1879
      %v1943 = vadd.f32 %v1629, %v1882
      %v1944 = vadd.f32 %v1630, %v1885
      %v1945 = vadd.f32 %v1631, %v1888
      %v1946 = vadd.f32 %v1632, %v1891
      %v1947 = vadd.f32 %v1633, %v1894
      %v1948 = vadd.f32 %v1634, %v1897
      %v1949 = vadd.f32 %v1635, %v1900
      %v1950 = vadd.f32 %v1636, %v1903
      %v1951 = vadd.f32 %v1637, %v1906
      %v1952 = vadd.f32 %v1638, %v1909
      %v1953 = vadd.f32 %v1639, %v1912
      %v1954 = vadd.f32 %v1640, %v1915
      %v1955 = vadd.f32 %v1641, %v1918
      %v1956 = vld [vmem:[%s138 + $0x24] sm:$0xff]
      %v1957 = vld [vmem:[%s138 + $0x2c] sm:$0xff]
      %v1958 = vld [vmem:[%s138 + $0x34] sm:$0xff]
      %v1959 = vld [vmem:[%s138 + $0x3c] sm:$0xff]
      %v1960 = vld [vmem:[%s138 + $0x44] sm:$0xff]
      %v1961 = vld [vmem:[%s138 + $0x4c] sm:$0xff]
      %v1962 = vld [vmem:[%s138 + $0x54] sm:$0xff]
      %v1963 = vld [vmem:[%s138 + $0x5c] sm:$0xff]
      %v1964 = vld [vmem:[%s138 + $0x64] sm:$0xff]
      %v1965 = vld [vmem:[%s138 + $0x6c] sm:$0xff]
      %v1966 = vld [vmem:[%s138 + $0x74] sm:$0xff]
      %v1967 = vld [vmem:[%s138 + $0x7c] sm:$0xff]
      %v1968 = vld [vmem:[%s138 + $0x84] sm:$0xff]
      %v1969 = vld [vmem:[%s138 + $0x8c] sm:$0xff]
      %v1970 = vld [vmem:[%s138 + $0x94] sm:$0xff]
      %v1971 = vld [vmem:[%s138 + $0x9c] sm:$0xff]
      %v1972 = vld [vmem:[%s138 + $0xa4] sm:$0xff]
      %v1973 = vld [vmem:[%s138 + $0xac] sm:$0xff]
      %v1974 = vld [vmem:[%s138 + $0xb4] sm:$0xff]
      %v1975 = vld [vmem:[%s138 + $0xbc] sm:$0xff]
      %v1976 = vld [vmem:[%s138 + $0xc4] sm:$0xff]
      %v1977 = vld [vmem:[%s138 + $0xcc] sm:$0xff]
      %v1978 = vld [vmem:[%s138 + $0xd4] sm:$0xff]
      %v1979 = vld [vmem:[%s138 + $0xdc] sm:$0xff]
      %v1980 = vld [vmem:[%s138 + $0xe4] sm:$0xff]
      %v1981 = vld [vmem:[%s138 + $0xec] sm:$0xff]
      %v1982 = vld [vmem:[%s138 + $0xf4] sm:$0xff]
      %v1983 = vld [vmem:[%s138 + $0xfc] sm:$0xff]
      %v1984 = vld [vmem:[%s138 + $0x104] sm:$0xff]
      %v1985 = vld [vmem:[%s138 + $0x10c] sm:$0xff]
      %v1986 = vld [vmem:[%s138 + $0x114] sm:$0xff]
      %v1987 = vld [vmem:[%s138 + $0x11c] sm:$0xff]
      %v1988 = vld [vmem:[%s138 + $0x124] sm:$0xff]
      %v1989 = vld [vmem:[%s138 + $0x12c] sm:$0xff]
      %v1990 = vld [vmem:[%s138 + $0x134] sm:$0xff]
      %v1991 = vld [vmem:[%s138 + $0x13c] sm:$0xff]
      %s1992 = scalar_lea.vmem %s1, 384
      %v1993 = vld [vmem:[%s1992] sm:$0xff]
      %v1994 = vld [vmem:[%s1992 + $0x8] sm:$0xff]
      %v1995 = vld [vmem:[%s1992 + $0x10] sm:$0xff]
      %v1996 = vld [vmem:[%s1992 + $0x18] sm:$0xff]
      %v1997 = vld [vmem:[%s1992 + $0x20] sm:$0xff]
      %v1998 = vld [vmem:[%s1992 + $0x28] sm:$0xff]
      %v1999 = vld [vmem:[%s1992 + $0x30] sm:$0xff]
      %v2000 = vld [vmem:[%s1992 + $0x38] sm:$0xff]
      %v2002 = vsel %vm233, %v1956, 0
      %v2005 = vsel %vm233, %v1957, 0
      %v2008 = vsel %vm233, %v1958, 0
      %v2011 = vsel %vm233, %v1959, 0
      %v2014 = vsel %vm233, %v1960, 0
      %v2017 = vsel %vm233, %v1961, 0
      %v2020 = vsel %vm233, %v1962, 0
      %v2023 = vsel %vm233, %v1963, 0
      %v2026 = vsel %vm233, %v1964, 0
      %v2029 = vsel %vm233, %v1965, 0
      %v2032 = vsel %vm233, %v1966, 0
      %v2035 = vsel %vm233, %v1967, 0
      %v2038 = vsel %vm233, %v1968, 0
      %v2041 = vsel %vm233, %v1969, 0
      %v2044 = vsel %vm233, %v1970, 0
      %v2047 = vsel %vm233, %v1971, 0
      %v2050 = vsel %vm233, %v1972, 0
      %v2053 = vsel %vm233, %v1973, 0
      %v2056 = vsel %vm233, %v1974, 0
      %v2059 = vsel %vm233, %v1975, 0
      %v2062 = vsel %vm233, %v1976, 0
      %v2065 = vsel %vm233, %v1977, 0
      %v2068 = vsel %vm233, %v1978, 0
      %v2071 = vsel %vm233, %v1979, 0
      %v2074 = vsel %vm233, %v1980, 0
      %v2077 = vsel %vm233, %v1981, 0
      %v2080 = vsel %vm233, %v1982, 0
      %v2083 = vsel %vm233, %v1983, 0
      %v2086 = vsel %vm233, %v1984, 0
      %v2089 = vsel %vm233, %v1985, 0
      %v2092 = vsel %vm233, %v1986, 0
      %v2095 = vsel %vm233, %v1987, 0
      %v2098 = vsel %vm233, %v1988, 0
      %v2101 = vsel %vm233, %v1989, 0
      %v2104 = vsel %vm233, %v1990, 0
      %v2107 = vsel %vm233, %v1991, 0
      %2109 = vmatpush.msra.mxu0 0.0
      %2110 = vmatpush.msra.mxu0 0.0
      %2111 = vmatpush.msra.mxu0 0.0
      %2112 = vmatpush.msra.mxu0 0.0
      %2113 = vmatpush.msra.mxu0 0.0
      %2114 = vmatpush.msra.mxu0 0.0
      %2115 = vmatpush.msra.mxu0 0.0
      %2116 = vmatpush.msra.mxu0 0.0
      %2117 = vmatpush.msra.mxu0 %v2000
      %2118 = vmatpush.msra.mxu0 %v1999
      %2119 = vmatpush.msra.mxu0 %v1998
      %2120 = vmatpush.msra.mxu0 %v1997
      %2121 = vmatpush.msra.mxu0 %v1996
      %2122 = vmatpush.msra.mxu0 %v1995
      %2123 = vmatpush.msra.mxu0 %v1994
      %2124 = vmatpush.msra.mxu0 %v1993
      %2125 = vmatmul.f32.gmra.mxu0 %v2002
      %v2126 = vpop.f32.mrf.mxu0
      %v2127 = vadd.f32 0.0, %v2126
      %2128 = vmatmul.f32.gmra.mxu0 %v2005
      %v2129 = vpop.f32.mrf.mxu0
      %v2130 = vadd.f32 0.0, %v2129
      %2131 = vmatmul.f32.gmra.mxu0 %v2008
      %v2132 = vpop.f32.mrf.mxu0
      %v2133 = vadd.f32 0.0, %v2132
      %2134 = vmatmul.f32.gmra.mxu0 %v2011
      %v2135 = vpop.f32.mrf.mxu0
      %v2136 = vadd.f32 0.0, %v2135
      %2137 = vmatmul.f32.gmra.mxu0 %v2014
      %v2138 = vpop.f32.mrf.mxu0
      %v2139 = vadd.f32 0.0, %v2138
      %2140 = vmatmul.f32.gmra.mxu0 %v2017
      %v2141 = vpop.f32.mrf.mxu0
      %v2142 = vadd.f32 0.0, %v2141
      %2143 = vmatmul.f32.gmra.mxu0 %v2020
      %v2144 = vpop.f32.mrf.mxu0
      %v2145 = vadd.f32 0.0, %v2144
      %2146 = vmatmul.f32.gmra.mxu0 %v2023
      %v2147 = vpop.f32.mrf.mxu0
      %v2148 = vadd.f32 0.0, %v2147
      %2149 = vmatmul.f32.gmra.mxu0 %v2026
      %v2150 = vpop.f32.mrf.mxu0
      %v2151 = vadd.f32 0.0, %v2150
      %2152 = vmatmul.f32.gmra.mxu0 %v2029
      %v2153 = vpop.f32.mrf.mxu0
      %v2154 = vadd.f32 0.0, %v2153
      %2155 = vmatmul.f32.gmra.mxu0 %v2032
      %v2156 = vpop.f32.mrf.mxu0
      %v2157 = vadd.f32 0.0, %v2156
      %2158 = vmatmul.f32.gmra.mxu0 %v2035
      %v2159 = vpop.f32.mrf.mxu0
      %v2160 = vadd.f32 0.0, %v2159
      %2161 = vmatmul.f32.gmra.mxu0 %v2038
      %v2162 = vpop.f32.mrf.mxu0
      %v2163 = vadd.f32 0.0, %v2162
      %2164 = vmatmul.f32.gmra.mxu0 %v2041
      %v2165 = vpop.f32.mrf.mxu0
      %v2166 = vadd.f32 0.0, %v2165
      %2167 = vmatmul.f32.gmra.mxu0 %v2044
      %v2168 = vpop.f32.mrf.mxu0
      %v2169 = vadd.f32 0.0, %v2168
      %2170 = vmatmul.f32.gmra.mxu0 %v2047
      %v2171 = vpop.f32.mrf.mxu0
      %v2172 = vadd.f32 0.0, %v2171
      %2173 = vmatmul.f32.gmra.mxu0 %v2050
      %v2174 = vpop.f32.mrf.mxu0
      %v2175 = vadd.f32 0.0, %v2174
      %2176 = vmatmul.f32.gmra.mxu0 %v2053
      %v2177 = vpop.f32.mrf.mxu0
      %v2178 = vadd.f32 0.0, %v2177
      %2179 = vmatmul.f32.gmra.mxu0 %v2056
      %v2180 = vpop.f32.mrf.mxu0
      %v2181 = vadd.f32 0.0, %v2180
      %2182 = vmatmul.f32.gmra.mxu0 %v2059
      %v2183 = vpop.f32.mrf.mxu0
      %v2184 = vadd.f32 0.0, %v2183
      %2185 = vmatmul.f32.gmra.mxu0 %v2062
      %v2186 = vpop.f32.mrf.mxu0
      %v2187 = vadd.f32 0.0, %v2186
      %2188 = vmatmul.f32.gmra.mxu0 %v2065
      %v2189 = vpop.f32.mrf.mxu0
      %v2190 = vadd.f32 0.0, %v2189
      %2191 = vmatmul.f32.gmra.mxu0 %v2068
      %v2192 = vpop.f32.mrf.mxu0
      %v2193 = vadd.f32 0.0, %v2192
      %2194 = vmatmul.f32.gmra.mxu0 %v2071
      %v2195 = vpop.f32.mrf.mxu0
      %v2196 = vadd.f32 0.0, %v2195
      %2197 = vmatmul.f32.gmra.mxu0 %v2074
      %v2198 = vpop.f32.mrf.mxu0
      %v2199 = vadd.f32 0.0, %v2198
      %2200 = vmatmul.f32.gmra.mxu0 %v2077
      %v2201 = vpop.f32.mrf.mxu0
      %v2202 = vadd.f32 0.0, %v2201
      %2203 = vmatmul.f32.gmra.mxu0 %v2080
      %v2204 = vpop.f32.mrf.mxu0
      %v2205 = vadd.f32 0.0, %v2204
      %2206 = vmatmul.f32.gmra.mxu0 %v2083
      %v2207 = vpop.f32.mrf.mxu0
      %v2208 = vadd.f32 0.0, %v2207
      %2209 = vmatmul.f32.gmra.mxu0 %v2086
      %v2210 = vpop.f32.mrf.mxu0
      %v2211 = vadd.f32 0.0, %v2210
      %2212 = vmatmul.f32.gmra.mxu0 %v2089
      %v2213 = vpop.f32.mrf.mxu0
      %v2214 = vadd.f32 0.0, %v2213
      %2215 = vmatmul.f32.gmra.mxu0 %v2092
      %v2216 = vpop.f32.mrf.mxu0
      %v2217 = vadd.f32 0.0, %v2216
      %2218 = vmatmul.f32.gmra.mxu0 %v2095
      %v2219 = vpop.f32.mrf.mxu0
      %v2220 = vadd.f32 0.0, %v2219
      %2221 = vmatmul.f32.gmra.mxu0 %v2098
      %v2222 = vpop.f32.mrf.mxu0
      %v2223 = vadd.f32 0.0, %v2222
      %2224 = vmatmul.f32.gmra.mxu0 %v2101
      %v2225 = vpop.f32.mrf.mxu0
      %v2226 = vadd.f32 0.0, %v2225
      %2227 = vmatmul.f32.gmra.mxu0 %v2104
      %v2228 = vpop.f32.mrf.mxu0
      %v2229 = vadd.f32 0.0, %v2228
      %2230 = vmatmul.f32.gmra.mxu0 %v2107
      %v2231 = vpop.f32.mrf.mxu0
      %v2232 = vadd.f32 0.0, %v2231
      %2233 = vdwg.mxu0
      %v2234 = vadd.f32 %v1920, %v2127
      %v2235 = vadd.f32 %v1921, %v2130
      %v2236 = vadd.f32 %v1922, %v2133
      %v2237 = vadd.f32 %v1923, %v2136
      %v2238 = vadd.f32 %v1924, %v2139
      %v2239 = vadd.f32 %v1925, %v2142
      %v2240 = vadd.f32 %v1926, %v2145
      %v2241 = vadd.f32 %v1927, %v2148
      %v2242 = vadd.f32 %v1928, %v2151
      %v2243 = vadd.f32 %v1929, %v2154
      %v2244 = vadd.f32 %v1930, %v2157
      %v2245 = vadd.f32 %v1931, %v2160
      %v2246 = vadd.f32 %v1932, %v2163
      %v2247 = vadd.f32 %v1933, %v2166
      %v2248 = vadd.f32 %v1934, %v2169
      %v2249 = vadd.f32 %v1935, %v2172
      %v2250 = vadd.f32 %v1936, %v2175
      %v2251 = vadd.f32 %v1937, %v2178
      %v2252 = vadd.f32 %v1938, %v2181
      %v2253 = vadd.f32 %v1939, %v2184
      %v2254 = vadd.f32 %v1940, %v2187
      %v2255 = vadd.f32 %v1941, %v2190
      %v2256 = vadd.f32 %v1942, %v2193
      %v2257 = vadd.f32 %v1943, %v2196
      %v2258 = vadd.f32 %v1944, %v2199
      %v2259 = vadd.f32 %v1945, %v2202
      %v2260 = vadd.f32 %v1946, %v2205
      %v2261 = vadd.f32 %v1947, %v2208
      %v2262 = vadd.f32 %v1948, %v2211
      %v2263 = vadd.f32 %v1949, %v2214
      %v2264 = vadd.f32 %v1950, %v2217
      %v2265 = vadd.f32 %v1951, %v2220
      %v2266 = vadd.f32 %v1952, %v2223
      %v2267 = vadd.f32 %v1953, %v2226
      %v2268 = vadd.f32 %v1954, %v2229
      %v2269 = vadd.f32 %v1955, %v2232
      %v2270 = vld [vmem:[%s138 + $0x25] sm:$0xff]
      %v2271 = vld [vmem:[%s138 + $0x2d] sm:$0xff]
      %v2272 = vld [vmem:[%s138 + $0x35] sm:$0xff]
      %v2273 = vld [vmem:[%s138 + $0x3d] sm:$0xff]
      %v2274 = vld [vmem:[%s138 + $0x45] sm:$0xff]
      %v2275 = vld [vmem:[%s138 + $0x4d] sm:$0xff]
      %v2276 = vld [vmem:[%s138 + $0x55] sm:$0xff]
      %v2277 = vld [vmem:[%s138 + $0x5d] sm:$0xff]
      %v2278 = vld [vmem:[%s138 + $0x65] sm:$0xff]
      %v2279 = vld [vmem:[%s138 + $0x6d] sm:$0xff]
      %v2280 = vld [vmem:[%s138 + $0x75] sm:$0xff]
      %v2281 = vld [vmem:[%s138 + $0x7d] sm:$0xff]
      %v2282 = vld [vmem:[%s138 + $0x85] sm:$0xff]
      %v2283 = vld [vmem:[%s138 + $0x8d] sm:$0xff]
      %v2284 = vld [vmem:[%s138 + $0x95] sm:$0xff]
      %v2285 = vld [vmem:[%s138 + $0x9d] sm:$0xff]
      %v2286 = vld [vmem:[%s138 + $0xa5] sm:$0xff]
      %v2287 = vld [vmem:[%s138 + $0xad] sm:$0xff]
      %v2288 = vld [vmem:[%s138 + $0xb5] sm:$0xff]
      %v2289 = vld [vmem:[%s138 + $0xbd] sm:$0xff]
      %v2290 = vld [vmem:[%s138 + $0xc5] sm:$0xff]
      %v2291 = vld [vmem:[%s138 + $0xcd] sm:$0xff]
      %v2292 = vld [vmem:[%s138 + $0xd5] sm:$0xff]
      %v2293 = vld [vmem:[%s138 + $0xdd] sm:$0xff]
      %v2294 = vld [vmem:[%s138 + $0xe5] sm:$0xff]
      %v2295 = vld [vmem:[%s138 + $0xed] sm:$0xff]
      %v2296 = vld [vmem:[%s138 + $0xf5] sm:$0xff]
      %v2297 = vld [vmem:[%s138 + $0xfd] sm:$0xff]
      %v2298 = vld [vmem:[%s138 + $0x105] sm:$0xff]
      %v2299 = vld [vmem:[%s138 + $0x10d] sm:$0xff]
      %v2300 = vld [vmem:[%s138 + $0x115] sm:$0xff]
      %v2301 = vld [vmem:[%s138 + $0x11d] sm:$0xff]
      %v2302 = vld [vmem:[%s138 + $0x125] sm:$0xff]
      %v2303 = vld [vmem:[%s138 + $0x12d] sm:$0xff]
      %v2304 = vld [vmem:[%s138 + $0x135] sm:$0xff]
      %v2305 = vld [vmem:[%s138 + $0x13d] sm:$0xff]
      %s2306 = scalar_lea.vmem %s1, 448
      %v2307 = vld [vmem:[%s2306] sm:$0xff]
      %v2308 = vld [vmem:[%s2306 + $0x8] sm:$0xff]
      %v2309 = vld [vmem:[%s2306 + $0x10] sm:$0xff]
      %v2310 = vld [vmem:[%s2306 + $0x18] sm:$0xff]
      %v2311 = vld [vmem:[%s2306 + $0x20] sm:$0xff]
      %v2312 = vld [vmem:[%s2306 + $0x28] sm:$0xff]
      %v2313 = vld [vmem:[%s2306 + $0x30] sm:$0xff]
      %v2314 = vld [vmem:[%s2306 + $0x38] sm:$0xff]
      %v2316 = vsel %vm233, %v2270, 0
      %v2319 = vsel %vm233, %v2271, 0
      %v2322 = vsel %vm233, %v2272, 0
      %v2325 = vsel %vm233, %v2273, 0
      %v2328 = vsel %vm233, %v2274, 0
      %v2331 = vsel %vm233, %v2275, 0
      %v2334 = vsel %vm233, %v2276, 0
      %v2337 = vsel %vm233, %v2277, 0
      %v2340 = vsel %vm233, %v2278, 0
      %v2343 = vsel %vm233, %v2279, 0
      %v2346 = vsel %vm233, %v2280, 0
      %v2349 = vsel %vm233, %v2281, 0
      %v2352 = vsel %vm233, %v2282, 0
      %v2355 = vsel %vm233, %v2283, 0
      %v2358 = vsel %vm233, %v2284, 0
      %v2361 = vsel %vm233, %v2285, 0
      %v2364 = vsel %vm233, %v2286, 0
      %v2367 = vsel %vm233, %v2287, 0
      %v2370 = vsel %vm233, %v2288, 0
      %v2373 = vsel %vm233, %v2289, 0
      %v2376 = vsel %vm233, %v2290, 0
      %v2379 = vsel %vm233, %v2291, 0
      %v2382 = vsel %vm233, %v2292, 0
      %v2385 = vsel %vm233, %v2293, 0
      %v2388 = vsel %vm233, %v2294, 0
      %v2391 = vsel %vm233, %v2295, 0
      %v2394 = vsel %vm233, %v2296, 0
      %v2397 = vsel %vm233, %v2297, 0
      %v2400 = vsel %vm233, %v2298, 0
      %v2403 = vsel %vm233, %v2299, 0
      %v2406 = vsel %vm233, %v2300, 0
      %v2409 = vsel %vm233, %v2301, 0
      %v2412 = vsel %vm233, %v2302, 0
      %v2415 = vsel %vm233, %v2303, 0
      %v2418 = vsel %vm233, %v2304, 0
      %v2421 = vsel %vm233, %v2305, 0
      %2423 = vmatpush.msra.mxu0 0.0
      %2424 = vmatpush.msra.mxu0 0.0
      %2425 = vmatpush.msra.mxu0 0.0
      %2426 = vmatpush.msra.mxu0 0.0
      %2427 = vmatpush.msra.mxu0 0.0
      %2428 = vmatpush.msra.mxu0 0.0
      %2429 = vmatpush.msra.mxu0 0.0
      %2430 = vmatpush.msra.mxu0 0.0
      %2431 = vmatpush.msra.mxu0 %v2314
      %2432 = vmatpush.msra.mxu0 %v2313
      %2433 = vmatpush.msra.mxu0 %v2312
      %2434 = vmatpush.msra.mxu0 %v2311
      %2435 = vmatpush.msra.mxu0 %v2310
      %2436 = vmatpush.msra.mxu0 %v2309
      %2437 = vmatpush.msra.mxu0 %v2308
      %2438 = vmatpush.msra.mxu0 %v2307
      %2439 = vmatmul.f32.gmra.mxu0 %v2316
      %v2440 = vpop.f32.mrf.mxu0
      %v2441 = vadd.f32 0.0, %v2440
      %2442 = vmatmul.f32.gmra.mxu0 %v2319
      %v2443 = vpop.f32.mrf.mxu0
      %v2444 = vadd.f32 0.0, %v2443
      %2445 = vmatmul.f32.gmra.mxu0 %v2322
      %v2446 = vpop.f32.mrf.mxu0
      %v2447 = vadd.f32 0.0, %v2446
      %2448 = vmatmul.f32.gmra.mxu0 %v2325
      %v2449 = vpop.f32.mrf.mxu0
      %v2450 = vadd.f32 0.0, %v2449
      %2451 = vmatmul.f32.gmra.mxu0 %v2328
      %v2452 = vpop.f32.mrf.mxu0
      %v2453 = vadd.f32 0.0, %v2452
      %2454 = vmatmul.f32.gmra.mxu0 %v2331
      %v2455 = vpop.f32.mrf.mxu0
      %v2456 = vadd.f32 0.0, %v2455
      %2457 = vmatmul.f32.gmra.mxu0 %v2334
      %v2458 = vpop.f32.mrf.mxu0
      %v2459 = vadd.f32 0.0, %v2458
      %2460 = vmatmul.f32.gmra.mxu0 %v2337
      %v2461 = vpop.f32.mrf.mxu0
      %v2462 = vadd.f32 0.0, %v2461
      %2463 = vmatmul.f32.gmra.mxu0 %v2340
      %v2464 = vpop.f32.mrf.mxu0
      %v2465 = vadd.f32 0.0, %v2464
      %2466 = vmatmul.f32.gmra.mxu0 %v2343
      %v2467 = vpop.f32.mrf.mxu0
      %v2468 = vadd.f32 0.0, %v2467
      %2469 = vmatmul.f32.gmra.mxu0 %v2346
      %v2470 = vpop.f32.mrf.mxu0
      %v2471 = vadd.f32 0.0, %v2470
      %2472 = vmatmul.f32.gmra.mxu0 %v2349
      %v2473 = vpop.f32.mrf.mxu0
      %v2474 = vadd.f32 0.0, %v2473
      %2475 = vmatmul.f32.gmra.mxu0 %v2352
      %v2476 = vpop.f32.mrf.mxu0
      %v2477 = vadd.f32 0.0, %v2476
      %2478 = vmatmul.f32.gmra.mxu0 %v2355
      %v2479 = vpop.f32.mrf.mxu0
      %v2480 = vadd.f32 0.0, %v2479
      %2481 = vmatmul.f32.gmra.mxu0 %v2358
      %v2482 = vpop.f32.mrf.mxu0
      %v2483 = vadd.f32 0.0, %v2482
      %2484 = vmatmul.f32.gmra.mxu0 %v2361
      %v2485 = vpop.f32.mrf.mxu0
      %v2486 = vadd.f32 0.0, %v2485
      %2487 = vmatmul.f32.gmra.mxu0 %v2364
      %v2488 = vpop.f32.mrf.mxu0
      %v2489 = vadd.f32 0.0, %v2488
      %2490 = vmatmul.f32.gmra.mxu0 %v2367
      %v2491 = vpop.f32.mrf.mxu0
      %v2492 = vadd.f32 0.0, %v2491
      %2493 = vmatmul.f32.gmra.mxu0 %v2370
      %v2494 = vpop.f32.mrf.mxu0
      %v2495 = vadd.f32 0.0, %v2494
      %2496 = vmatmul.f32.gmra.mxu0 %v2373
      %v2497 = vpop.f32.mrf.mxu0
      %v2498 = vadd.f32 0.0, %v2497
      %2499 = vmatmul.f32.gmra.mxu0 %v2376
      %v2500 = vpop.f32.mrf.mxu0
      %v2501 = vadd.f32 0.0, %v2500
      %2502 = vmatmul.f32.gmra.mxu0 %v2379
      %v2503 = vpop.f32.mrf.mxu0
      %v2504 = vadd.f32 0.0, %v2503
      %2505 = vmatmul.f32.gmra.mxu0 %v2382
      %v2506 = vpop.f32.mrf.mxu0
      %v2507 = vadd.f32 0.0, %v2506
      %2508 = vmatmul.f32.gmra.mxu0 %v2385
      %v2509 = vpop.f32.mrf.mxu0
      %v2510 = vadd.f32 0.0, %v2509
      %2511 = vmatmul.f32.gmra.mxu0 %v2388
      %v2512 = vpop.f32.mrf.mxu0
      %v2513 = vadd.f32 0.0, %v2512
      %2514 = vmatmul.f32.gmra.mxu0 %v2391
      %v2515 = vpop.f32.mrf.mxu0
      %v2516 = vadd.f32 0.0, %v2515
      %2517 = vmatmul.f32.gmra.mxu0 %v2394
      %v2518 = vpop.f32.mrf.mxu0
      %v2519 = vadd.f32 0.0, %v2518
      %2520 = vmatmul.f32.gmra.mxu0 %v2397
      %v2521 = vpop.f32.mrf.mxu0
      %v2522 = vadd.f32 0.0, %v2521
      %2523 = vmatmul.f32.gmra.mxu0 %v2400
      %v2524 = vpop.f32.mrf.mxu0
      %v2525 = vadd.f32 0.0, %v2524
      %2526 = vmatmul.f32.gmra.mxu0 %v2403
      %v2527 = vpop.f32.mrf.mxu0
      %v2528 = vadd.f32 0.0, %v2527
      %2529 = vmatmul.f32.gmra.mxu0 %v2406
      %v2530 = vpop.f32.mrf.mxu0
      %v2531 = vadd.f32 0.0, %v2530
      %2532 = vmatmul.f32.gmra.mxu0 %v2409
      %v2533 = vpop.f32.mrf.mxu0
      %v2534 = vadd.f32 0.0, %v2533
      %2535 = vmatmul.f32.gmra.mxu0 %v2412
      %v2536 = vpop.f32.mrf.mxu0
      %v2537 = vadd.f32 0.0, %v2536
      %2538 = vmatmul.f32.gmra.mxu0 %v2415
      %v2539 = vpop.f32.mrf.mxu0
      %v2540 = vadd.f32 0.0, %v2539
      %2541 = vmatmul.f32.gmra.mxu0 %v2418
      %v2542 = vpop.f32.mrf.mxu0
      %v2543 = vadd.f32 0.0, %v2542
      %2544 = vmatmul.f32.gmra.mxu0 %v2421
      %v2545 = vpop.f32.mrf.mxu0
      %v2546 = vadd.f32 0.0, %v2545
      %2547 = vdwg.mxu0
      %v2548 = vadd.f32 %v2234, %v2441
      %v2549 = vadd.f32 %v2235, %v2444
      %v2550 = vadd.f32 %v2236, %v2447
      %v2551 = vadd.f32 %v2237, %v2450
      %v2552 = vadd.f32 %v2238, %v2453
      %v2553 = vadd.f32 %v2239, %v2456
      %v2554 = vadd.f32 %v2240, %v2459
      %v2555 = vadd.f32 %v2241, %v2462
      %v2556 = vadd.f32 %v2242, %v2465
      %v2557 = vadd.f32 %v2243, %v2468
      %v2558 = vadd.f32 %v2244, %v2471
      %v2559 = vadd.f32 %v2245, %v2474
      %v2560 = vadd.f32 %v2246, %v2477
      %v2561 = vadd.f32 %v2247, %v2480
      %v2562 = vadd.f32 %v2248, %v2483
      %v2563 = vadd.f32 %v2249, %v2486
      %v2564 = vadd.f32 %v2250, %v2489
      %v2565 = vadd.f32 %v2251, %v2492
      %v2566 = vadd.f32 %v2252, %v2495
      %v2567 = vadd.f32 %v2253, %v2498
      %v2568 = vadd.f32 %v2254, %v2501
      %v2569 = vadd.f32 %v2255, %v2504
      %v2570 = vadd.f32 %v2256, %v2507
      %v2571 = vadd.f32 %v2257, %v2510
      %v2572 = vadd.f32 %v2258, %v2513
      %v2573 = vadd.f32 %v2259, %v2516
      %v2574 = vadd.f32 %v2260, %v2519
      %v2575 = vadd.f32 %v2261, %v2522
      %v2576 = vadd.f32 %v2262, %v2525
      %v2577 = vadd.f32 %v2263, %v2528
      %v2578 = vadd.f32 %v2264, %v2531
      %v2579 = vadd.f32 %v2265, %v2534
      %v2580 = vadd.f32 %v2266, %v2537
      %v2581 = vadd.f32 %v2267, %v2540
      %v2582 = vadd.f32 %v2268, %v2543
      %v2583 = vadd.f32 %v2269, %v2546
      %v2584 = vld [vmem:[%s138 + $0x26] sm:$0xff]
      %v2585 = vld [vmem:[%s138 + $0x2e] sm:$0xff]
      %v2586 = vld [vmem:[%s138 + $0x36] sm:$0xff]
      %v2587 = vld [vmem:[%s138 + $0x3e] sm:$0xff]
      %v2588 = vld [vmem:[%s138 + $0x46] sm:$0xff]
      %v2589 = vld [vmem:[%s138 + $0x4e] sm:$0xff]
      %v2590 = vld [vmem:[%s138 + $0x56] sm:$0xff]
      %v2591 = vld [vmem:[%s138 + $0x5e] sm:$0xff]
      %v2592 = vld [vmem:[%s138 + $0x66] sm:$0xff]
      %v2593 = vld [vmem:[%s138 + $0x6e] sm:$0xff]
      %v2594 = vld [vmem:[%s138 + $0x76] sm:$0xff]
      %v2595 = vld [vmem:[%s138 + $0x7e] sm:$0xff]
      %v2596 = vld [vmem:[%s138 + $0x86] sm:$0xff]
      %v2597 = vld [vmem:[%s138 + $0x8e] sm:$0xff]
      %v2598 = vld [vmem:[%s138 + $0x96] sm:$0xff]
      %v2599 = vld [vmem:[%s138 + $0x9e] sm:$0xff]
      %v2600 = vld [vmem:[%s138 + $0xa6] sm:$0xff]
      %v2601 = vld [vmem:[%s138 + $0xae] sm:$0xff]
      %v2602 = vld [vmem:[%s138 + $0xb6] sm:$0xff]
      %v2603 = vld [vmem:[%s138 + $0xbe] sm:$0xff]
      %v2604 = vld [vmem:[%s138 + $0xc6] sm:$0xff]
      %v2605 = vld [vmem:[%s138 + $0xce] sm:$0xff]
      %v2606 = vld [vmem:[%s138 + $0xd6] sm:$0xff]
      %v2607 = vld [vmem:[%s138 + $0xde] sm:$0xff]
      %v2608 = vld [vmem:[%s138 + $0xe6] sm:$0xff]
      %v2609 = vld [vmem:[%s138 + $0xee] sm:$0xff]
      %v2610 = vld [vmem:[%s138 + $0xf6] sm:$0xff]
      %v2611 = vld [vmem:[%s138 + $0xfe] sm:$0xff]
      %v2612 = vld [vmem:[%s138 + $0x106] sm:$0xff]
      %v2613 = vld [vmem:[%s138 + $0x10e] sm:$0xff]
      %v2614 = vld [vmem:[%s138 + $0x116] sm:$0xff]
      %v2615 = vld [vmem:[%s138 + $0x11e] sm:$0xff]
      %v2616 = vld [vmem:[%s138 + $0x126] sm:$0xff]
      %v2617 = vld [vmem:[%s138 + $0x12e] sm:$0xff]
      %v2618 = vld [vmem:[%s138 + $0x136] sm:$0xff]
      %v2619 = vld [vmem:[%s138 + $0x13e] sm:$0xff]
      %s2620 = scalar_lea.vmem %s1, 512
      %v2621 = vld [vmem:[%s2620] sm:$0xff]
      %v2622 = vld [vmem:[%s2620 + $0x8] sm:$0xff]
      %v2623 = vld [vmem:[%s2620 + $0x10] sm:$0xff]
      %v2624 = vld [vmem:[%s2620 + $0x18] sm:$0xff]
      %v2625 = vld [vmem:[%s2620 + $0x20] sm:$0xff]
      %v2626 = vld [vmem:[%s2620 + $0x28] sm:$0xff]
      %v2627 = vld [vmem:[%s2620 + $0x30] sm:$0xff]
      %v2628 = vld [vmem:[%s2620 + $0x38] sm:$0xff]
      %v2630 = vsel %vm233, %v2584, 0
      %v2633 = vsel %vm233, %v2585, 0
      %v2636 = vsel %vm233, %v2586, 0
      %v2639 = vsel %vm233, %v2587, 0
      %v2642 = vsel %vm233, %v2588, 0
      %v2645 = vsel %vm233, %v2589, 0
      %v2648 = vsel %vm233, %v2590, 0
      %v2651 = vsel %vm233, %v2591, 0
      %v2654 = vsel %vm233, %v2592, 0
      %v2657 = vsel %vm233, %v2593, 0
      %v2660 = vsel %vm233, %v2594, 0
      %v2663 = vsel %vm233, %v2595, 0
      %v2666 = vsel %vm233, %v2596, 0
      %v2669 = vsel %vm233, %v2597, 0
      %v2672 = vsel %vm233, %v2598, 0
      %v2675 = vsel %vm233, %v2599, 0
      %v2678 = vsel %vm233, %v2600, 0
      %v2681 = vsel %vm233, %v2601, 0
      %v2684 = vsel %vm233, %v2602, 0
      %v2687 = vsel %vm233, %v2603, 0
      %v2690 = vsel %vm233, %v2604, 0
      %v2693 = vsel %vm233, %v2605, 0
      %v2696 = vsel %vm233, %v2606, 0
      %v2699 = vsel %vm233, %v2607, 0
      %v2702 = vsel %vm233, %v2608, 0
      %v2705 = vsel %vm233, %v2609, 0
      %v2708 = vsel %vm233, %v2610, 0
      %v2711 = vsel %vm233, %v2611, 0
      %v2714 = vsel %vm233, %v2612, 0
      %v2717 = vsel %vm233, %v2613, 0
      %v2720 = vsel %vm233, %v2614, 0
      %v2723 = vsel %vm233, %v2615, 0
      %v2726 = vsel %vm233, %v2616, 0
      %v2729 = vsel %vm233, %v2617, 0
      %v2732 = vsel %vm233, %v2618, 0
      %v2735 = vsel %vm233, %v2619, 0
      %2737 = vmatpush.msra.mxu0 0.0
      %2738 = vmatpush.msra.mxu0 0.0
      %2739 = vmatpush.msra.mxu0 0.0
      %2740 = vmatpush.msra.mxu0 0.0
      %2741 = vmatpush.msra.mxu0 0.0
      %2742 = vmatpush.msra.mxu0 0.0
      %2743 = vmatpush.msra.mxu0 0.0
      %2744 = vmatpush.msra.mxu0 0.0
      %2745 = vmatpush.msra.mxu0 %v2628
      %2746 = vmatpush.msra.mxu0 %v2627
      %2747 = vmatpush.msra.mxu0 %v2626
      %2748 = vmatpush.msra.mxu0 %v2625
      %2749 = vmatpush.msra.mxu0 %v2624
      %2750 = vmatpush.msra.mxu0 %v2623
      %2751 = vmatpush.msra.mxu0 %v2622
      %2752 = vmatpush.msra.mxu0 %v2621
      %2753 = vmatmul.f32.gmra.mxu0 %v2630
      %v2754 = vpop.f32.mrf.mxu0
      %v2755 = vadd.f32 0.0, %v2754
      %2756 = vmatmul.f32.gmra.mxu0 %v2633
      %v2757 = vpop.f32.mrf.mxu0
      %v2758 = vadd.f32 0.0, %v2757
      %2759 = vmatmul.f32.gmra.mxu0 %v2636
      %v2760 = vpop.f32.mrf.mxu0
      %v2761 = vadd.f32 0.0, %v2760
      %2762 = vmatmul.f32.gmra.mxu0 %v2639
      %v2763 = vpop.f32.mrf.mxu0
      %v2764 = vadd.f32 0.0, %v2763
      %2765 = vmatmul.f32.gmra.mxu0 %v2642
      %v2766 = vpop.f32.mrf.mxu0
      %v2767 = vadd.f32 0.0, %v2766
      %2768 = vmatmul.f32.gmra.mxu0 %v2645
      %v2769 = vpop.f32.mrf.mxu0
      %v2770 = vadd.f32 0.0, %v2769
      %2771 = vmatmul.f32.gmra.mxu0 %v2648
      %v2772 = vpop.f32.mrf.mxu0
      %v2773 = vadd.f32 0.0, %v2772
      %2774 = vmatmul.f32.gmra.mxu0 %v2651
      %v2775 = vpop.f32.mrf.mxu0
      %v2776 = vadd.f32 0.0, %v2775
      %2777 = vmatmul.f32.gmra.mxu0 %v2654
      %v2778 = vpop.f32.mrf.mxu0
      %v2779 = vadd.f32 0.0, %v2778
      %2780 = vmatmul.f32.gmra.mxu0 %v2657
      %v2781 = vpop.f32.mrf.mxu0
      %v2782 = vadd.f32 0.0, %v2781
      %2783 = vmatmul.f32.gmra.mxu0 %v2660
      %v2784 = vpop.f32.mrf.mxu0
      %v2785 = vadd.f32 0.0, %v2784
      %2786 = vmatmul.f32.gmra.mxu0 %v2663
      %v2787 = vpop.f32.mrf.mxu0
      %v2788 = vadd.f32 0.0, %v2787
      %2789 = vmatmul.f32.gmra.mxu0 %v2666
      %v2790 = vpop.f32.mrf.mxu0
      %v2791 = vadd.f32 0.0, %v2790
      %2792 = vmatmul.f32.gmra.mxu0 %v2669
      %v2793 = vpop.f32.mrf.mxu0
      %v2794 = vadd.f32 0.0, %v2793
      %2795 = vmatmul.f32.gmra.mxu0 %v2672
      %v2796 = vpop.f32.mrf.mxu0
      %v2797 = vadd.f32 0.0, %v2796
      %2798 = vmatmul.f32.gmra.mxu0 %v2675
      %v2799 = vpop.f32.mrf.mxu0
      %v2800 = vadd.f32 0.0, %v2799
      %2801 = vmatmul.f32.gmra.mxu0 %v2678
      %v2802 = vpop.f32.mrf.mxu0
      %v2803 = vadd.f32 0.0, %v2802
      %2804 = vmatmul.f32.gmra.mxu0 %v2681
      %v2805 = vpop.f32.mrf.mxu0
      %v2806 = vadd.f32 0.0, %v2805
      %2807 = vmatmul.f32.gmra.mxu0 %v2684
      %v2808 = vpop.f32.mrf.mxu0
      %v2809 = vadd.f32 0.0, %v2808
      %2810 = vmatmul.f32.gmra.mxu0 %v2687
      %v2811 = vpop.f32.mrf.mxu0
      %v2812 = vadd.f32 0.0, %v2811
      %2813 = vmatmul.f32.gmra.mxu0 %v2690
      %v2814 = vpop.f32.mrf.mxu0
      %v2815 = vadd.f32 0.0, %v2814
      %2816 = vmatmul.f32.gmra.mxu0 %v2693
      %v2817 = vpop.f32.mrf.mxu0
      %v2818 = vadd.f32 0.0, %v2817
      %2819 = vmatmul.f32.gmra.mxu0 %v2696
      %v2820 = vpop.f32.mrf.mxu0
      %v2821 = vadd.f32 0.0, %v2820
      %2822 = vmatmul.f32.gmra.mxu0 %v2699
      %v2823 = vpop.f32.mrf.mxu0
      %v2824 = vadd.f32 0.0, %v2823
      %2825 = vmatmul.f32.gmra.mxu0 %v2702
      %v2826 = vpop.f32.mrf.mxu0
      %v2827 = vadd.f32 0.0, %v2826
      %2828 = vmatmul.f32.gmra.mxu0 %v2705
      %v2829 = vpop.f32.mrf.mxu0
      %v2830 = vadd.f32 0.0, %v2829
      %2831 = vmatmul.f32.gmra.mxu0 %v2708
      %v2832 = vpop.f32.mrf.mxu0
      %v2833 = vadd.f32 0.0, %v2832
      %2834 = vmatmul.f32.gmra.mxu0 %v2711
      %v2835 = vpop.f32.mrf.mxu0
      %v2836 = vadd.f32 0.0, %v2835
      %2837 = vmatmul.f32.gmra.mxu0 %v2714
      %v2838 = vpop.f32.mrf.mxu0
      %v2839 = vadd.f32 0.0, %v2838
      %2840 = vmatmul.f32.gmra.mxu0 %v2717
      %v2841 = vpop.f32.mrf.mxu0
      %v2842 = vadd.f32 0.0, %v2841
      %2843 = vmatmul.f32.gmra.mxu0 %v2720
      %v2844 = vpop.f32.mrf.mxu0
      %v2845 = vadd.f32 0.0, %v2844
      %2846 = vmatmul.f32.gmra.mxu0 %v2723
      %v2847 = vpop.f32.mrf.mxu0
      %v2848 = vadd.f32 0.0, %v2847
      %2849 = vmatmul.f32.gmra.mxu0 %v2726
      %v2850 = vpop.f32.mrf.mxu0
      %v2851 = vadd.f32 0.0, %v2850
      %2852 = vmatmul.f32.gmra.mxu0 %v2729
      %v2853 = vpop.f32.mrf.mxu0
      %v2854 = vadd.f32 0.0, %v2853
      %2855 = vmatmul.f32.gmra.mxu0 %v2732
      %v2856 = vpop.f32.mrf.mxu0
      %v2857 = vadd.f32 0.0, %v2856
      %2858 = vmatmul.f32.gmra.mxu0 %v2735
      %v2859 = vpop.f32.mrf.mxu0
      %v2860 = vadd.f32 0.0, %v2859
      %2861 = vdwg.mxu0
      %v2862 = vadd.f32 %v2548, %v2755
      %v2863 = vadd.f32 %v2549, %v2758
      %v2864 = vadd.f32 %v2550, %v2761
      %v2865 = vadd.f32 %v2551, %v2764
      %v2866 = vadd.f32 %v2552, %v2767
      %v2867 = vadd.f32 %v2553, %v2770
      %v2868 = vadd.f32 %v2554, %v2773
      %v2869 = vadd.f32 %v2555, %v2776
      %v2870 = vadd.f32 %v2556, %v2779
      %v2871 = vadd.f32 %v2557, %v2782
      %v2872 = vadd.f32 %v2558, %v2785
      %v2873 = vadd.f32 %v2559, %v2788
      %v2874 = vadd.f32 %v2560, %v2791
      %v2875 = vadd.f32 %v2561, %v2794
      %v2876 = vadd.f32 %v2562, %v2797
      %v2877 = vadd.f32 %v2563, %v2800
      %v2878 = vadd.f32 %v2564, %v2803
      %v2879 = vadd.f32 %v2565, %v2806
      %v2880 = vadd.f32 %v2566, %v2809
      %v2881 = vadd.f32 %v2567, %v2812
      %v2882 = vadd.f32 %v2568, %v2815
      %v2883 = vadd.f32 %v2569, %v2818
      %v2884 = vadd.f32 %v2570, %v2821
      %v2885 = vadd.f32 %v2571, %v2824
      %v2886 = vadd.f32 %v2572, %v2827
      %v2887 = vadd.f32 %v2573, %v2830
      %v2888 = vadd.f32 %v2574, %v2833
      %v2889 = vadd.f32 %v2575, %v2836
      %v2890 = vadd.f32 %v2576, %v2839
      %v2891 = vadd.f32 %v2577, %v2842
      %v2892 = vadd.f32 %v2578, %v2845
      %v2893 = vadd.f32 %v2579, %v2848
      %v2894 = vadd.f32 %v2580, %v2851
      %v2895 = vadd.f32 %v2581, %v2854
      %v2896 = vadd.f32 %v2582, %v2857
      %v2897 = vadd.f32 %v2583, %v2860
      %v2898 = vmax.f32 %v2862, 0.0
      %v2899 = vmax.f32 %v2863, 0.0
      %v2900 = vmax.f32 %v2864, 0.0
      %v2901 = vmax.f32 %v2865, 0.0
      %v2902 = vmax.f32 %v2866, 0.0
      %v2903 = vmax.f32 %v2867, 0.0
      %v2904 = vmax.f32 %v2868, 0.0
      %v2905 = vmax.f32 %v2869, 0.0
      %v2906 = vmax.f32 %v2870, 0.0
      %v2907 = vmax.f32 %v2871, 0.0
      %v2908 = vmax.f32 %v2872, 0.0
      %v2909 = vmax.f32 %v2873, 0.0
      %v2910 = vmax.f32 %v2874, 0.0
      %v2911 = vmax.f32 %v2875, 0.0
      %v2912 = vmax.f32 %v2876, 0.0
      %v2913 = vmax.f32 %v2877, 0.0
      %v2914 = vmax.f32 %v2878, 0.0
      %v2915 = vmax.f32 %v2879, 0.0
      %v2916 = vmax.f32 %v2880, 0.0
      %v2917 = vmax.f32 %v2881, 0.0
      %v2918 = vmax.f32 %v2882, 0.0
      %v2919 = vmax.f32 %v2883, 0.0
      %v2920 = vmax.f32 %v2884, 0.0
      %v2921 = vmax.f32 %v2885, 0.0
      %v2922 = vmax.f32 %v2886, 0.0
      %v2923 = vmax.f32 %v2887, 0.0
      %v2924 = vmax.f32 %v2888, 0.0
      %v2925 = vmax.f32 %v2889, 0.0
      %v2926 = vmax.f32 %v2890, 0.0
      %v2927 = vmax.f32 %v2891, 0.0
      %v2928 = vmax.f32 %v2892, 0.0
      %v2929 = vmax.f32 %v2893, 0.0
      %v2930 = vmax.f32 %v2894, 0.0
      %v2931 = vmax.f32 %v2895, 0.0
      %v2932 = vmax.f32 %v2896, 0.0
      %v2933 = vmax.f32 %v2897, 0.0
      %vm2934 = vcmask 785408
      %2935 = vst.msk [vmem:[%s143] sm:$0xff] %vm2934, %v2898
      %2936 = vst.msk [vmem:[%s143 + $0x8] sm:$0xff] %vm2934, %v2899
      %2937 = vst.msk [vmem:[%s143 + $0x10] sm:$0xff] %vm2934, %v2900
      %2938 = vst.msk [vmem:[%s143 + $0x18] sm:$0xff] %vm2934, %v2901
      %2939 = vst.msk [vmem:[%s143 + $0x20] sm:$0xff] %vm2934, %v2902
      %2940 = vst.msk [vmem:[%s143 + $0x28] sm:$0xff] %vm2934, %v2903
      %2941 = vst.msk [vmem:[%s143 + $0x30] sm:$0xff] %vm2934, %v2904
      %2942 = vst.msk [vmem:[%s143 + $0x38] sm:$0xff] %vm2934, %v2905
      %2943 = vst.msk [vmem:[%s143 + $0x40] sm:$0xff] %vm2934, %v2906
      %2944 = vst.msk [vmem:[%s143 + $0x48] sm:$0xff] %vm2934, %v2907
      %2945 = vst.msk [vmem:[%s143 + $0x50] sm:$0xff] %vm2934, %v2908
      %2946 = vst.msk [vmem:[%s143 + $0x58] sm:$0xff] %vm2934, %v2909
      %2947 = vst.msk [vmem:[%s143 + $0x60] sm:$0xff] %vm2934, %v2910
      %2948 = vst.msk [vmem:[%s143 + $0x68] sm:$0xff] %vm2934, %v2911
      %2949 = vst.msk [vmem:[%s143 + $0x70] sm:$0xff] %vm2934, %v2912
      %2950 = vst.msk [vmem:[%s143 + $0x78] sm:$0xff] %vm2934, %v2913
      %2951 = vst.msk [vmem:[%s143 + $0x80] sm:$0xff] %vm2934, %v2914
      %2952 = vst.msk [vmem:[%s143 + $0x88] sm:$0xff] %vm2934, %v2915
      %2953 = vst.msk [vmem:[%s143 + $0x90] sm:$0xff] %vm2934, %v2916
      %2954 = vst.msk [vmem:[%s143 + $0x98] sm:$0xff] %vm2934, %v2917
      %2955 = vst.msk [vmem:[%s143 + $0xa0] sm:$0xff] %vm2934, %v2918
      %2956 = vst.msk [vmem:[%s143 + $0xa8] sm:$0xff] %vm2934, %v2919
      %2957 = vst.msk [vmem:[%s143 + $0xb0] sm:$0xff] %vm2934, %v2920
      %2958 = vst.msk [vmem:[%s143 + $0xb8] sm:$0xff] %vm2934, %v2921
      %2959 = vst.msk [vmem:[%s143 + $0xc0] sm:$0xff] %vm2934, %v2922
      %2960 = vst.msk [vmem:[%s143 + $0xc8] sm:$0xff] %vm2934, %v2923
      %2961 = vst.msk [vmem:[%s143 + $0xd0] sm:$0xff] %vm2934, %v2924
      %2962 = vst.msk [vmem:[%s143 + $0xd8] sm:$0xff] %vm2934, %v2925
      %2963 = vst.msk [vmem:[%s143 + $0xe0] sm:$0xff] %vm2934, %v2926
      %2964 = vst.msk [vmem:[%s143 + $0xe8] sm:$0xff] %vm2934, %v2927
      %2965 = vst.msk [vmem:[%s143 + $0xf0] sm:$0xff] %vm2934, %v2928
      %2966 = vst.msk [vmem:[%s143 + $0xf8] sm:$0xff] %vm2934, %v2929
      %2967 = vst.msk [vmem:[%s143 + $0x100] sm:$0xff] %vm2934, %v2930
      %2968 = vst.msk [vmem:[%s143 + $0x108] sm:$0xff] %vm2934, %v2931
      %2969 = vst.msk [vmem:[%s143 + $0x110] sm:$0xff] %vm2934, %v2932
      %2970 = vst.msk [vmem:[%s143 + $0x118] sm:$0xff] %vm2934, %v2933
      %p2971 = scmp.lt.s32.totalorder %s13, 1
      %s2972 = scalar_select %p2971, %s13, 1
      %s2973 = smul.addr %s2972, 36
      %s2974 = smul.addr %s2973, 8
      %s2975 = scalar_lea.vmem %s2, %s2974
      // Predicated region
      $region29: #{inception_d_forward.7} parent=27 // pred_check
        %p2976 = pneg %p78
      $region30: #{inception_d_forward.7} parent=27 // pred_check_branch
        %2978 = sbr.rel (%p2976) target = $region32
      $region31: #{inception_d_forward.7} parent=27 // pred_region
        _
      $region32: #{inception_d_forward.7} parent=27 // pred_fallthru
        _
    $region28: #{inception_d_forward.7} parent=5 // pred_fallthru
      _
    %p2979 = scmp.le.s32.totalorder 2, %s8
    // Predicated region
    $region33: #{inception_d_forward.7} parent=5 // pred_check
      %p2980 = pneg %p2979
    $region34: #{inception_d_forward.7} parent=5 // pred_check_branch
      %2982 = sbr.rel (%p2980) target = $region36
    $region35: #{inception_d_forward.7} parent=5 // pred_region
      %s2983 = ssub.s32 %s8, 2
      // Predicated region
      $region37: #{inception_d_forward.7} parent=35 // pred_check
        %p2984 = pneg %p84
      $region38: #{inception_d_forward.7} parent=35 // pred_check_branch
        %2986 = sbr.rel (%p2984) target = $region40
      $region39: #{inception_d_forward.7} parent=35 // pred_region
        %p2987 = scmp.lt.s32.totalorder %s14, 1
        %s2988 = scalar_select %p2987, %s14, 1
        %s2989 = smul.addr %s2988, 36
        %s2990 = smul.addr %s2989, 8
        %s2991 = scalar_lea.vmem %s2, %s2990
      $region40: #{inception_d_forward.7} parent=35 // pred_fallthru
        _
    $region36: #{inception_d_forward.7} parent=5 // pred_fallthru
      _
  $region6: #{inception_d_forward.7} parent=0 // loop_footer
    %s12 = sadd.s32 1, %s8
  $region7: #{inception_d_forward.7} parent=0 // loop_footer_branch
    %7 = sbr.rel target = $region3
  $region8: #{inception_d_forward.7} parent=0 // loop_exit
    _

// kernel: inception_d_forward.6
$region0: #{inception_d_forward.6}
  #allocation0 [shape = 'u32[]', space=smem, size = 0x4, offset = 0x4, fixed_abs, tag = 'smem constant byte address 0x4 - core index']
  #allocation1 [shape = 'u32[72,128]{1,0:T(1,128)}', space=vmem, size = 0x9000, scoped, tag = 'internal scratch']
  %s0 = inlined_call_operand.vmem [shape: f32[2,326,64], index: 0, kind: input, shape index: {}]
  %s1 = inlined_call_operand.vmem [shape: f32[9,64,64], index: 1, kind: input, shape index: {}]
  %s2 = inlined_call_operand.vmem [shape: f32[2,288,64], index: 2, kind: output, shape index: {}]
  %s3 = sld [smem:[#allocation0]]
  $region41: #{inception_d_forward.6} parent=0
    _
  %s5 = ssub.s32 1, %s3
  %s6 = scalar_select 0, %s5, %s3
  loop: start=0, step=1, limit=4
  $region2: #{inception_d_forward.6} parent=0 // loop_pre_header
    _
  $region3: #{inception_d_forward.6} parent=0 // loop_header
    %s8 = sphi 0, %s12
    %p9 = scmp.ge.s32.totalorder %s8, 4
    %s18 = sphi 0, %s20
    %s21 = sphi 0, %s18
    %s22 = sphi 0, %s21
    %s38 = sphi 0, %s22
    %s42 = sphi 0, %s42
    %s44 = sphi 0, %s42
    %s45 = sphi 0, %s44
    %s59 = sphi 0, %s45
    %s65 = sphi 0, %s67
    %s68 = sphi 0, %s65
    %s69 = sphi 0, %s68
    %s85 = sphi 0, %s69
  $region4: #{inception_d_forward.6} parent=0 // loop_header_branch
    %11 = sbr.rel (%p9) target = $region8
  $region5: #{inception_d_forward.6} parent=0 // loop_body
    %s13 = ssub.s32 %s8, 1
    %s14 = ssub.s32 %s8, 2
    %s15 = sadd.s32 %s8, 1
    %s16 = ssub.s32 %s8, %s15
    %p17 = scmp.eq.s32.totalorder %s16, 0
    %s19 = sadd.s32 %s18, 1
    %s20 = scalar_select %p17, %s18, %s19
    %p23 = pneg %p17
    %p24 = scmp.eq.s32.totalorder %s8, 1
    %p25 = por %p23, %p24
    %p26 = scmp.ne.s32.totalorder %s18, %s21
    %p27 = scmp.eq.s32.totalorder %s8, 0
    %p28 = por %p26, %p27
    %p29 = scmp.ne.s32.totalorder %s18, %s21
    %p30 = scmp.eq.s32.totalorder %s13, 1
    %p31 = por %p29, %p30
    %p32 = scmp.ne.s32.totalorder %s21, %s22
    %p33 = scmp.eq.s32.totalorder %s13, 0
    %p34 = por %p32, %p33
    %p35 = scmp.ne.s32.totalorder %s21, %s22
    %p36 = scmp.eq.s32.totalorder %s14, 1
    %p37 = por %p35, %p36
    %p39 = scmp.ne.s32.totalorder %s22, %s38
    %p40 = scmp.eq.s32.totalorder %s14, 0
    %p41 = por %p39, %p40
    %s43 = sadd.s32 %s42, 1
    %p46 = scmp.eq.s32.totalorder %s8, 1
    %p47 = scmp.ne.s32.totalorder %s42, %s44
    %p48 = scmp.eq.s32.totalorder %s8, 0
    %p49 = por %p47, %p48
    %p50 = scmp.ne.s32.totalorder %s42, %s44
    %p51 = scmp.eq.s32.totalorder %s13, 1
    %p52 = por %p50, %p51
    %p53 = scmp.ne.s32.totalorder %s44, %s45
    %p54 = scmp.eq.s32.totalorder %s13, 0
    %p55 = por %p53, %p54
    %p56 = scmp.ne.s32.totalorder %s44, %s45
    %p57 = scmp.eq.s32.totalorder %s14, 1
    %p58 = por %p56, %p57
    %p60 = scmp.ne.s32.totalorder %s45, %s59
    %p61 = scmp.eq.s32.totalorder %s14, 0
    %p62 = por %p60, %p61
    %s63 = ssub.s32 %s8, %s15
    %p64 = scmp.eq.s32.totalorder %s63, 0
    %s66 = sadd.s32 %s65, 1
    %s67 = scalar_select %p64, %s65, %s66
    %p70 = pneg %p64
    %p71 = scmp.eq.s32.totalorder %s8, 1
    %p72 = por %p70, %p71
    %p73 = scmp.ne.s32.totalorder %s65, %s68
    %p74 = scmp.eq.s32.totalorder %s8, 0
    %p75 = por %p73, %p74
    %p76 = scmp.ne.s32.totalorder %s65, %s68
    %p77 = scmp.eq.s32.totalorder %s13, 1
    %p78 = por %p76, %p77
    %p79 = scmp.ne.s32.totalorder %s68, %s69
    %p80 = scmp.eq.s32.totalorder %s13, 0
    %p81 = por %p79, %p80
    %p82 = scmp.ne.s32.totalorder %s68, %s69
    %p83 = scmp.eq.s32.totalorder %s14, 1
    %p84 = por %p82, %p83
    %p86 = scmp.ne.s32.totalorder %s69, %s85
    %p87 = scmp.eq.s32.totalorder %s14, 0
    %p88 = por %p86, %p87
    %p89 = scmp.le.s32.totalorder 1, %s8
    %p90 = scmp.lt.s32.totalorder %s8, 3
    %p91 = pnand %p89, %p90
    %p92 = pneg %p91
    // Predicated region
    $region9: #{inception_d_forward.6} parent=5 // pred_check
      _
    $region10: #{inception_d_forward.6} parent=5 // pred_check_branch
      %94 = sbr.rel (%p91) target = $region12
    $region11: #{inception_d_forward.6} parent=5 // pred_region
      %s95 = ssub.s32 %s8, 1
      // Predicated region
      $region13: #{inception_d_forward.6} parent=11 // pred_check
        %p96 = pneg %p55
      $region14: #{inception_d_forward.6} parent=11 // pred_check_branch
        %98 = sbr.rel (%p96) target = $region16
      $region15: #{inception_d_forward.6} parent=11 // pred_region
        _
      $region16: #{inception_d_forward.6} parent=11 // pred_fallthru
        _
    $region12: #{inception_d_forward.6} parent=5 // pred_fallthru
      _
    %p99 = scmp.lt.s32.totalorder %s8, 2
    // Predicated region
    $region17: #{inception_d_forward.6} parent=5 // pred_check
      %p100 = pneg %p99
    $region18: #{inception_d_forward.6} parent=5 // pred_check_branch
      %102 = sbr.rel (%p100) target = $region20
    $region19: #{inception_d_forward.6} parent=5 // pred_region
      // Predicated region
      $region21: #{inception_d_forward.6} parent=19 // pred_check
        %p103 = pneg %p28
      $region22: #{inception_d_forward.6} parent=19 // pred_check_branch
        %105 = sbr.rel (%p103) target = $region24
      $region23: #{inception_d_forward.6} parent=19 // pred_region
        %p106 = scmp.lt.s32.totalorder %s8, 1
        %s107 = scalar_select %p106, %s8, 1
        %s108 = smul.addr %s107, 41
        %s109 = smul.addr %s108, 8
        %s110 = scalar_lea.vmem %s0, %s109
      $region24: #{inception_d_forward.6} parent=19 // pred_fallthru
        _
    $region20: #{inception_d_forward.6} parent=5 // pred_fallthru
      _
    %p111 = scmp.le.s32.totalorder 1, %s8
    %p112 = scmp.lt.s32.totalorder %s8, 3
    %p113 = pnand %p111, %p112
    %p114 = pneg %p113
    // Predicated region
    $region25: #{inception_d_forward.6} parent=5 // pred_check
      _
    $region26: #{inception_d_forward.6} parent=5 // pred_check_branch
      %116 = sbr.rel (%p113) target = $region28
    $region27: #{inception_d_forward.6} parent=5 // pred_region
      %s117 = ssub.s32 %s8, 1
      %p118 = scmp.lt.s32.totalorder %s13, 1
      %s119 = scalar_select %p118, %s13, 1
      %s120 = smul.addr %s119, 41
      %s121 = smul.addr %s120, 8
      %s122 = scalar_lea.vmem %s0, %s121
      %p123 = pneg %p34
      %p124 = pneg %p31
      %p125 = pneg %p55
      %p126 = pneg %p52
      %p127 = pneg %p81
      %p128 = pneg %p78
      %p129 = scmp.lt.s32.totalorder %s13, 1
      %s130 = scalar_select %p129, %s13, 1
      %s131 = smul.addr %s130, 36
      %s132 = smul.addr %s131, 8
      %s133 = scalar_lea.vmem %s2, %s132
      %p134 = scmp.lt.s32.totalorder %s13, 1
      %s135 = scalar_select %p134, %s13, 1
      %s136 = smul.addr %s135, 41
      %s137 = smul.addr %s136, 8
      %s138 = scalar_lea.vmem %s0, %s137
      %p139 = scmp.lt.s32.totalorder %s13, 1
      %s140 = scalar_select %p139, %s13, 1
      %s141 = smul.addr %s140, 36
      %s142 = smul.addr %s141, 8
      %s143 = scalar_lea.vmem %s2, %s142
      %v144 = vld [vmem:[%s138] sm:$0xff]
      %v145 = vld [vmem:[%s138 + $0x8] sm:$0xff]
      %v146 = vld [vmem:[%s138 + $0x10] sm:$0xff]
      %v147 = vld [vmem:[%s138 + $0x18] sm:$0xff]
      %v148 = vld [vmem:[%s138 + $0x20] sm:$0xff]
      %v149 = vld [vmem:[%s138 + $0x28] sm:$0xff]
      %v150 = vld [vmem:[%s138 + $0x30] sm:$0xff]
      %v151 = vld [vmem:[%s138 + $0x38] sm:$0xff]
      %v152 = vld [vmem:[%s138 + $0x40] sm:$0xff]
      %v153 = vld [vmem:[%s138 + $0x48] sm:$0xff]
      %v154 = vld [vmem:[%s138 + $0x50] sm:$0xff]
      %v155 = vld [vmem:[%s138 + $0x58] sm:$0xff]
      %v156 = vld [vmem:[%s138 + $0x60] sm:$0xff]
      %v157 = vld [vmem:[%s138 + $0x68] sm:$0xff]
      %v158 = vld [vmem:[%s138 + $0x70] sm:$0xff]
      %v159 = vld [vmem:[%s138 + $0x78] sm:$0xff]
      %v160 = vld [vmem:[%s138 + $0x80] sm:$0xff]
      %v161 = vld [vmem:[%s138 + $0x88] sm:$0xff]
      %v162 = vld [vmem:[%s138 + $0x90] sm:$0xff]
      %v163 = vld [vmem:[%s138 + $0x98] sm:$0xff]
      %v164 = vld [vmem:[%s138 + $0xa0] sm:$0xff]
      %v165 = vld [vmem:[%s138 + $0xa8] sm:$0xff]
      %v166 = vld [vmem:[%s138 + $0xb0] sm:$0xff]
      %v167 = vld [vmem:[%s138 + $0xb8] sm:$0xff]
      %v168 = vld [vmem:[%s138 + $0xc0] sm:$0xff]
      %v169 = vld [vmem:[%s138 + $0xc8] sm:$0xff]
      %v170 = vld [vmem:[%s138 + $0xd0] sm:$0xff]
      %v171 = vld [vmem:[%s138 + $0xd8] sm:$0xff]
      %v172 = vld [vmem:[%s138 + $0xe0] sm:$0xff]
      %v173 = vld [vmem:[%s138 + $0xe8] sm:$0xff]
      %v174 = vld [vmem:[%s138 + $0xf0] sm:$0xff]
      %v175 = vld [vmem:[%s138 + $0xf8] sm:$0xff]
      %v176 = vld [vmem:[%s138 + $0x100] sm:$0xff]
      %v177 = vld [vmem:[%s138 + $0x108] sm:$0xff]
      %v178 = vld [vmem:[%s138 + $0x110] sm:$0xff]
      %v179 = vld [vmem:[%s138 + $0x118] sm:$0xff]
      %v180 = vld [vmem:[%s1] sm:$0xff]
      %v181 = vld [vmem:[%s1 + $0x8] sm:$0xff]
      %v182 = vld [vmem:[%s1 + $0x10] sm:$0xff]
      %v183 = vld [vmem:[%s1 + $0x18] sm:$0xff]
      %v184 = vld [vmem:[%s1 + $0x20] sm:$0xff]
      %v185 = vld [vmem:[%s1 + $0x28] sm:$0xff]
      %v186 = vld [vmem:[%s1 + $0x30] sm:$0xff]
      %v187 = vld [vmem:[%s1 + $0x38] sm:$0xff]
      %v188 = vld [vmem:[%s138 + $0x1] sm:$0xff]
      %v189 = vld [vmem:[%s138 + $0x9] sm:$0xff]
      %v190 = vld [vmem:[%s138 + $0x11] sm:$0xff]
      %v191 = vld [vmem:[%s138 + $0x19] sm:$0xff]
      %v192 = vld [vmem:[%s138 + $0x21] sm:$0xff]
      %v193 = vld [vmem:[%s138 + $0x29] sm:$0xff]
      %v194 = vld [vmem:[%s138 + $0x31] sm:$0xff]
      %v195 = vld [vmem:[%s138 + $0x39] sm:$0xff]
      %v196 = vld [vmem:[%s138 + $0x41] sm:$0xff]
      %v197 = vld [vmem:[%s138 + $0x49] sm:$0xff]
      %v198 = vld [vmem:[%s138 + $0x51] sm:$0xff]
      %v199 = vld [vmem:[%s138 + $0x59] sm:$0xff]
      %v200 = vld [vmem:[%s138 + $0x61] sm:$0xff]
      %v201 = vld [vmem:[%s138 + $0x69] sm:$0xff]
      %v202 = vld [vmem:[%s138 + $0x71] sm:$0xff]
      %v203 = vld [vmem:[%s138 + $0x79] sm:$0xff]
      %v204 = vld [vmem:[%s138 + $0x81] sm:$0xff]
      %v205 = vld [vmem:[%s138 + $0x89] sm:$0xff]
      %v206 = vld [vmem:[%s138 + $0x91] sm:$0xff]
      %v207 = vld [vmem:[%s138 + $0x99] sm:$0xff]
      %v208 = vld [vmem:[%s138 + $0xa1] sm:$0xff]
      %v209 = vld [vmem:[%s138 + $0xa9] sm:$0xff]
      %v210 = vld [vmem:[%s138 + $0xb1] sm:$0xff]
      %v211 = vld [vmem:[%s138 + $0xb9] sm:$0xff]
      %v212 = vld [vmem:[%s138 + $0xc1] sm:$0xff]
      %v213 = vld [vmem:[%s138 + $0xc9] sm:$0xff]
      %v214 = vld [vmem:[%s138 + $0xd1] sm:$0xff]
      %v215 = vld [vmem:[%s138 + $0xd9] sm:$0xff]
      %v216 = vld [vmem:[%s138 + $0xe1] sm:$0xff]
      %v217 = vld [vmem:[%s138 + $0xe9] sm:$0xff]
      %v218 = vld [vmem:[%s138 + $0xf1] sm:$0xff]
      %v219 = vld [vmem:[%s138 + $0xf9] sm:$0xff]
      %v220 = vld [vmem:[%s138 + $0x101] sm:$0xff]
      %v221 = vld [vmem:[%s138 + $0x109] sm:$0xff]
      %v222 = vld [vmem:[%s138 + $0x111] sm:$0xff]
      %v223 = vld [vmem:[%s138 + $0x119] sm:$0xff]
      %s224 = scalar_lea.vmem %s1, 64
      %v225 = vld [vmem:[%s224] sm:$0xff]
      %v226 = vld [vmem:[%s224 + $0x8] sm:$0xff]
      %v227 = vld [vmem:[%s224 + $0x10] sm:$0xff]
      %v228 = vld [vmem:[%s224 + $0x18] sm:$0xff]
      %v229 = vld [vmem:[%s224 + $0x20] sm:$0xff]
      %v230 = vld [vmem:[%s224 + $0x28] sm:$0xff]
      %v231 = vld [vmem:[%s224 + $0x30] sm:$0xff]
      %v232 = vld [vmem:[%s224 + $0x38] sm:$0xff]
      %vm233 = vcmask 523264
      %v235 = vsel %vm233, %v188, 0
      %v238 = vsel %vm233, %v189, 0
      %v241 = vsel %vm233, %v190, 0
      %v244 = vsel %vm233, %v191, 0
      %v247 = vsel %vm233, %v192, 0
      %v250 = vsel %vm233, %v193, 0
      %v253 = vsel %vm233, %v194, 0
      %v256 = vsel %vm233, %v195, 0
      %v259 = vsel %vm233, %v196, 0
      %v262 = vsel %vm233, %v197, 0
      %v265 = vsel %vm233, %v198, 0
      %v268 = vsel %vm233, %v199, 0
      %v271 = vsel %vm233, %v200, 0
      %v274 = vsel %vm233, %v201, 0
      %v277 = vsel %vm233, %v202, 0
      %v280 = vsel %vm233, %v203, 0
      %v283 = vsel %vm233, %v204, 0
      %v286 = vsel %vm233, %v205, 0
      %v289 = vsel %vm233, %v206, 0
      %v292 = vsel %vm233, %v207, 0
      %v295 = vsel %vm233, %v208, 0
      %v298 = vsel %vm233, %v209, 0
      %v301 = vsel %vm233, %v210, 0
      %v304 = vsel %vm233, %v211, 0
      %v307 = vsel %vm233, %v212, 0
      %v310 = vsel %vm233, %v213, 0
      %v313 = vsel %vm233, %v214, 0
      %v316 = vsel %vm233, %v215, 0
      %v319 = vsel %vm233, %v216, 0
      %v322 = vsel %vm233, %v217, 0
      %v325 = vsel %vm233, %v218, 0
      %v328 = vsel %vm233, %v219, 0
      %v331 = vsel %vm233, %v220, 0
      %v334 = vsel %vm233, %v221, 0
      %v337 = vsel %vm233, %v222, 0
      %v340 = vsel %vm233, %v223, 0
      %342 = vmatpush.msra.mxu0 0.0
      %343 = vmatpush.msra.mxu0 0.0
      %344 = vmatpush.msra.mxu0 0.0
      %345 = vmatpush.msra.mxu0 0.0
      %346 = vmatpush.msra.mxu0 0.0
      %347 = vmatpush.msra.mxu0 0.0
      %348 = vmatpush.msra.mxu0 0.0
      %349 = vmatpush.msra.mxu0 0.0
      %350 = vmatpush.msra.mxu0 %v232
      %351 = vmatpush.msra.mxu0 %v231
      %352 = vmatpush.msra.mxu0 %v230
      %353 = vmatpush.msra.mxu0 %v229
      %354 = vmatpush.msra.mxu0 %v228
      %355 = vmatpush.msra.mxu0 %v227
      %356 = vmatpush.msra.mxu0 %v226
      %357 = vmatpush.msra.mxu0 %v225
      %358 = vmatmul.f32.gmra.mxu0 %v235
      %v359 = vpop.f32.mrf.mxu0
      %v360 = vadd.f32 0.0, %v359
      %361 = vmatmul.f32.gmra.mxu0 %v238
      %v362 = vpop.f32.mrf.mxu0
      %v363 = vadd.f32 0.0, %v362
      %364 = vmatmul.f32.gmra.mxu0 %v241
      %v365 = vpop.f32.mrf.mxu0
      %v366 = vadd.f32 0.0, %v365
      %367 = vmatmul.f32.gmra.mxu0 %v244
      %v368 = vpop.f32.mrf.mxu0
      %v369 = vadd.f32 0.0, %v368
      %370 = vmatmul.f32.gmra.mxu0 %v247
      %v371 = vpop.f32.mrf.mxu0
      %v372 = vadd.f32 0.0, %v371
      %373 = vmatmul.f32.gmra.mxu0 %v250
      %v374 = vpop.f32.mrf.mxu0
      %v375 = vadd.f32 0.0, %v374
      %376 = vmatmul.f32.gmra.mxu0 %v253
      %v377 = vpop.f32.mrf.mxu0
      %v378 = vadd.f32 0.0, %v377
      %379 = vmatmul.f32.gmra.mxu0 %v256
      %v380 = vpop.f32.mrf.mxu0
      %v381 = vadd.f32 0.0, %v380
      %382 = vmatmul.f32.gmra.mxu0 %v259
      %v383 = vpop.f32.mrf.mxu0
      %v384 = vadd.f32 0.0, %v383
      %385 = vmatmul.f32.gmra.mxu0 %v262
      %v386 = vpop.f32.mrf.mxu0
      %v387 = vadd.f32 0.0, %v386
      %388 = vmatmul.f32.gmra.mxu0 %v265
      %v389 = vpop.f32.mrf.mxu0
      %v390 = vadd.f32 0.0, %v389
      %391 = vmatmul.f32.gmra.mxu0 %v268
      %v392 = vpop.f32.mrf.mxu0
      %v393 = vadd.f32 0.0, %v392
      %394 = vmatmul.f32.gmra.mxu0 %v271
      %v395 = vpop.f32.mrf.mxu0
      %v396 = vadd.f32 0.0, %v395
      %397 = vmatmul.f32.gmra.mxu0 %v274
      %v398 = vpop.f32.mrf.mxu0
      %v399 = vadd.f32 0.0, %v398
      %400 = vmatmul.f32.gmra.mxu0 %v277
      %v401 = vpop.f32.mrf.mxu0
      %v402 = vadd.f32 0.0, %v401
      %403 = vmatmul.f32.gmra.mxu0 %v280
      %v404 = vpop.f32.mrf.mxu0
      %v405 = vadd.f32 0.0, %v404
      %406 = vmatmul.f32.gmra.mxu0 %v283
      %v407 = vpop.f32.mrf.mxu0
      %v408 = vadd.f32 0.0, %v407
      %409 = vmatmul.f32.gmra.mxu0 %v286
      %v410 = vpop.f32.mrf.mxu0
      %v411 = vadd.f32 0.0, %v410
      %412 = vmatmul.f32.gmra.mxu0 %v289
      %v413 = vpop.f32.mrf.mxu0
      %v414 = vadd.f32 0.0, %v413
      %415 = vmatmul.f32.gmra.mxu0 %v292
      %v416 = vpop.f32.mrf.mxu0
      %v417 = vadd.f32 0.0, %v416
      %418 = vmatmul.f32.gmra.mxu0 %v295
      %v419 = vpop.f32.mrf.mxu0
      %v420 = vadd.f32 0.0, %v419
      %421 = vmatmul.f32.gmra.mxu0 %v298
      %v422 = vpop.f32.mrf.mxu0
      %v423 = vadd.f32 0.0, %v422
      %424 = vmatmul.f32.gmra.mxu0 %v301
      %v425 = vpop.f32.mrf.mxu0
      %v426 = vadd.f32 0.0, %v425
      %427 = vmatmul.f32.gmra.mxu0 %v304
      %v428 = vpop.f32.mrf.mxu0
      %v429 = vadd.f32 0.0, %v428
      %430 = vmatmul.f32.gmra.mxu0 %v307
      %v431 = vpop.f32.mrf.mxu0
      %v432 = vadd.f32 0.0, %v431
      %433 = vmatmul.f32.gmra.mxu0 %v310
      %v434 = vpop.f32.mrf.mxu0
      %v435 = vadd.f32 0.0, %v434
      %436 = vmatmul.f32.gmra.mxu0 %v313
      %v437 = vpop.f32.mrf.mxu0
      %v438 = vadd.f32 0.0, %v437
      %439 = vmatmul.f32.gmra.mxu0 %v316
      %v440 = vpop.f32.mrf.mxu0
      %v441 = vadd.f32 0.0, %v440
      %442 = vmatmul.f32.gmra.mxu0 %v319
      %v443 = vpop.f32.mrf.mxu0
      %v444 = vadd.f32 0.0, %v443
      %445 = vmatmul.f32.gmra.mxu0 %v322
      %v446 = vpop.f32.mrf.mxu0
      %v447 = vadd.f32 0.0, %v446
      %448 = vmatmul.f32.gmra.mxu0 %v325
      %v449 = vpop.f32.mrf.mxu0
      %v450 = vadd.f32 0.0, %v449
      %451 = vmatmul.f32.gmra.mxu0 %v328
      %v452 = vpop.f32.mrf.mxu0
      %v453 = vadd.f32 0.0, %v452
      %454 = vmatmul.f32.gmra.mxu0 %v331
      %v455 = vpop.f32.mrf.mxu0
      %v456 = vadd.f32 0.0, %v455
      %457 = vmatmul.f32.gmra.mxu0 %v334
      %v458 = vpop.f32.mrf.mxu0
      %v459 = vadd.f32 0.0, %v458
      %460 = vmatmul.f32.gmra.mxu0 %v337
      %v461 = vpop.f32.mrf.mxu0
      %v462 = vadd.f32 0.0, %v461
      %463 = vmatmul.f32.gmra.mxu0 %v340
      %v464 = vpop.f32.mrf.mxu0
      %v465 = vadd.f32 0.0, %v464
      %466 = vdwg.mxu0
      %v468 = vsel %vm233, %v144, 0
      %v471 = vsel %vm233, %v145, 0
      %v474 = vsel %vm233, %v146, 0
      %v477 = vsel %vm233, %v147, 0
      %v480 = vsel %vm233, %v148, 0
      %v483 = vsel %vm233, %v149, 0
      %v486 = vsel %vm233, %v150, 0
      %v489 = vsel %vm233, %v151, 0
      %v492 = vsel %vm233, %v152, 0
      %v495 = vsel %vm233, %v153, 0
      %v498 = vsel %vm233, %v154, 0
      %v501 = vsel %vm233, %v155, 0
      %v504 = vsel %vm233, %v156, 0
      %v507 = vsel %vm233, %v157, 0
      %v510 = vsel %vm233, %v158, 0
      %v513 = vsel %vm233, %v159, 0
      %v516 = vsel %vm233, %v160, 0
      %v519 = vsel %vm233, %v161, 0
      %v522 = vsel %vm233, %v162, 0
      %v525 = vsel %vm233, %v163, 0
      %v528 = vsel %vm233, %v164, 0
      %v531 = vsel %vm233, %v165, 0
      %v534 = vsel %vm233, %v166, 0
      %v537 = vsel %vm233, %v167, 0
      %v540 = vsel %vm233, %v168, 0
      %v543 = vsel %vm233, %v169, 0
      %v546 = vsel %vm233, %v170, 0
      %v549 = vsel %vm233, %v171, 0
      %v552 = vsel %vm233, %v172, 0
      %v555 = vsel %vm233, %v173, 0
      %v558 = vsel %vm233, %v174, 0
      %v561 = vsel %vm233, %v175, 0
      %v564 = vsel %vm233, %v176, 0
      %v567 = vsel %vm233, %v177, 0
      %v570 = vsel %vm233, %v178, 0
      %v573 = vsel %vm233, %v179, 0
      %575 = vmatpush.msra.mxu0 0.0
      %576 = vmatpush.msra.mxu0 0.0
      %577 = vmatpush.msra.mxu0 0.0
      %578 = vmatpush.msra.mxu0 0.0
      %579 = vmatpush.msra.mxu0 0.0
      %580 = vmatpush.msra.mxu0 0.0
      %581 = vmatpush.msra.mxu0 0.0
      %582 = vmatpush.msra.mxu0 0.0
      %583 = vmatpush.msra.mxu0 %v187
      %584 = vmatpush.msra.mxu0 %v186
      %585 = vmatpush.msra.mxu0 %v185
      %586 = vmatpush.msra.mxu0 %v184
      %587 = vmatpush.msra.mxu0 %v183
      %588 = vmatpush.msra.mxu0 %v182
      %589 = vmatpush.msra.mxu0 %v181
      %590 = vmatpush.msra.mxu0 %v180
      %591 = vmatmul.f32.gmra.mxu0 %v468
      %v592 = vpop.f32.mrf.mxu0
      %v593 = vadd.f32 %v360, %v592
      %594 = vmatmul.f32.gmra.mxu0 %v471
      %v595 = vpop.f32.mrf.mxu0
      %v596 = vadd.f32 %v363, %v595
      %597 = vmatmul.f32.gmra.mxu0 %v474
      %v598 = vpop.f32.mrf.mxu0
      %v599 = vadd.f32 %v366, %v598
      %600 = vmatmul.f32.gmra.mxu0 %v477
      %v601 = vpop.f32.mrf.mxu0
      %v602 = vadd.f32 %v369, %v601
      %603 = vmatmul.f32.gmra.mxu0 %v480
      %v604 = vpop.f32.mrf.mxu0
      %v605 = vadd.f32 %v372, %v604
      %606 = vmatmul.f32.gmra.mxu0 %v483
      %v607 = vpop.f32.mrf.mxu0
      %v608 = vadd.f32 %v375, %v607
      %609 = vmatmul.f32.gmra.mxu0 %v486
      %v610 = vpop.f32.mrf.mxu0
      %v611 = vadd.f32 %v378, %v610
      %612 = vmatmul.f32.gmra.mxu0 %v489
      %v613 = vpop.f32.mrf.mxu0
      %v614 = vadd.f32 %v381, %v613
      %615 = vmatmul.f32.gmra.mxu0 %v492
      %v616 = vpop.f32.mrf.mxu0
      %v617 = vadd.f32 %v384, %v616
      %618 = vmatmul.f32.gmra.mxu0 %v495
      %v619 = vpop.f32.mrf.mxu0
      %v620 = vadd.f32 %v387, %v619
      %621 = vmatmul.f32.gmra.mxu0 %v498
      %v622 = vpop.f32.mrf.mxu0
      %v623 = vadd.f32 %v390, %v622
      %624 = vmatmul.f32.gmra.mxu0 %v501
      %v625 = vpop.f32.mrf.mxu0
      %v626 = vadd.f32 %v393, %v625
      %627 = vmatmul.f32.gmra.mxu0 %v504
      %v628 = vpop.f32.mrf.mxu0
      %v629 = vadd.f32 %v396, %v628
      %630 = vmatmul.f32.gmra.mxu0 %v507
      %v631 = vpop.f32.mrf.mxu0
      %v632 = vadd.f32 %v399, %v631
      %633 = vmatmul.f32.gmra.mxu0 %v510
      %v634 = vpop.f32.mrf.mxu0
      %v635 = vadd.f32 %v402, %v634
      %636 = vmatmul.f32.gmra.mxu0 %v513
      %v637 = vpop.f32.mrf.mxu0
      %v638 = vadd.f32 %v405, %v637
      %639 = vmatmul.f32.gmra.mxu0 %v516
      %v640 = vpop.f32.mrf.mxu0
      %v641 = vadd.f32 %v408, %v640
      %642 = vmatmul.f32.gmra.mxu0 %v519
      %v643 = vpop.f32.mrf.mxu0
      %v644 = vadd.f32 %v411, %v643
      %645 = vmatmul.f32.gmra.mxu0 %v522
      %v646 = vpop.f32.mrf.mxu0
      %v647 = vadd.f32 %v414, %v646
      %648 = vmatmul.f32.gmra.mxu0 %v525
      %v649 = vpop.f32.mrf.mxu0
      %v650 = vadd.f32 %v417, %v649
      %651 = vmatmul.f32.gmra.mxu0 %v528
      %v652 = vpop.f32.mrf.mxu0
      %v653 = vadd.f32 %v420, %v652
      %654 = vmatmul.f32.gmra.mxu0 %v531
      %v655 = vpop.f32.mrf.mxu0
      %v656 = vadd.f32 %v423, %v655
      %657 = vmatmul.f32.gmra.mxu0 %v534
      %v658 = vpop.f32.mrf.mxu0
      %v659 = vadd.f32 %v426, %v658
      %660 = vmatmul.f32.gmra.mxu0 %v537
      %v661 = vpop.f32.mrf.mxu0
      %v662 = vadd.f32 %v429, %v661
      %663 = vmatmul.f32.gmra.mxu0 %v540
      %v664 = vpop.f32.mrf.mxu0
      %v665 = vadd.f32 %v432, %v664
      %666 = vmatmul.f32.gmra.mxu0 %v543
      %v667 = vpop.f32.mrf.mxu0
      %v668 = vadd.f32 %v435, %v667
      %669 = vmatmul.f32.gmra.mxu0 %v546
      %v670 = vpop.f32.mrf.mxu0
      %v671 = vadd.f32 %v438, %v670
      %672 = vmatmul.f32.gmra.mxu0 %v549
      %v673 = vpop.f32.mrf.mxu0
      %v674 = vadd.f32 %v441, %v673
      %675 = vmatmul.f32.gmra.mxu0 %v552
      %v676 = vpop.f32.mrf.mxu0
      %v677 = vadd.f32 %v444, %v676
      %678 = vmatmul.f32.gmra.mxu0 %v555
      %v679 = vpop.f32.mrf.mxu0
      %v680 = vadd.f32 %v447, %v679
      %681 = vmatmul.f32.gmra.mxu0 %v558
      %v682 = vpop.f32.mrf.mxu0
      %v683 = vadd.f32 %v450, %v682
      %684 = vmatmul.f32.gmra.mxu0 %v561
      %v685 = vpop.f32.mrf.mxu0
      %v686 = vadd.f32 %v453, %v685
      %687 = vmatmul.f32.gmra.mxu0 %v564
      %v688 = vpop.f32.mrf.mxu0
      %v689 = vadd.f32 %v456, %v688
      %690 = vmatmul.f32.gmra.mxu0 %v567
      %v691 = vpop.f32.mrf.mxu0
      %v692 = vadd.f32 %v459, %v691
      %693 = vmatmul.f32.gmra.mxu0 %v570
      %v694 = vpop.f32.mrf.mxu0
      %v695 = vadd.f32 %v462, %v694
      %696 = vmatmul.f32.gmra.mxu0 %v573
      %v697 = vpop.f32.mrf.mxu0
      %v698 = vadd.f32 %v465, %v697
      %699 = vdwg.mxu0
      %v700 = vld [vmem:[%s138 + $0x2] sm:$0xff]
      %v701 = vld [vmem:[%s138 + $0xa] sm:$0xff]
      %v702 = vld [vmem:[%s138 + $0x12] sm:$0xff]
      %v703 = vld [vmem:[%s138 + $0x1a] sm:$0xff]
      %v704 = vld [vmem:[%s138 + $0x22] sm:$0xff]
      %v705 = vld [vmem:[%s138 + $0x2a] sm:$0xff]
      %v706 = vld [vmem:[%s138 + $0x32] sm:$0xff]
      %v707 = vld [vmem:[%s138 + $0x3a] sm:$0xff]
      %v708 = vld [vmem:[%s138 + $0x42] sm:$0xff]
      %v709 = vld [vmem:[%s138 + $0x4a] sm:$0xff]
      %v710 = vld [vmem:[%s138 + $0x52] sm:$0xff]
      %v711 = vld [vmem:[%s138 + $0x5a] sm:$0xff]
      %v712 = vld [vmem:[%s138 + $0x62] sm:$0xff]
      %v713 = vld [vmem:[%s138 + $0x6a] sm:$0xff]
      %v714 = vld [vmem:[%s138 + $0x72] sm:$0xff]
      %v715 = vld [vmem:[%s138 + $0x7a] sm:$0xff]
      %v716 = vld [vmem:[%s138 + $0x82] sm:$0xff]
      %v717 = vld [vmem:[%s138 + $0x8a] sm:$0xff]
      %v718 = vld [vmem:[%s138 + $0x92] sm:$0xff]
      %v719 = vld [vmem:[%s138 + $0x9a] sm:$0xff]
      %v720 = vld [vmem:[%s138 + $0xa2] sm:$0xff]
      %v721 = vld [vmem:[%s138 + $0xaa] sm:$0xff]
      %v722 = vld [vmem:[%s138 + $0xb2] sm:$0xff]
      %v723 = vld [vmem:[%s138 + $0xba] sm:$0xff]
      %v724 = vld [vmem:[%s138 + $0xc2] sm:$0xff]
      %v725 = vld [vmem:[%s138 + $0xca] sm:$0xff]
      %v726 = vld [vmem:[%s138 + $0xd2] sm:$0xff]
      %v727 = vld [vmem:[%s138 + $0xda] sm:$0xff]
      %v728 = vld [vmem:[%s138 + $0xe2] sm:$0xff]
      %v729 = vld [vmem:[%s138 + $0xea] sm:$0xff]
      %v730 = vld [vmem:[%s138 + $0xf2] sm:$0xff]
      %v731 = vld [vmem:[%s138 + $0xfa] sm:$0xff]
      %v732 = vld [vmem:[%s138 + $0x102] sm:$0xff]
      %v733 = vld [vmem:[%s138 + $0x10a] sm:$0xff]
      %v734 = vld [vmem:[%s138 + $0x112] sm:$0xff]
      %v735 = vld [vmem:[%s138 + $0x11a] sm:$0xff]
      %s736 = scalar_lea.vmem %s1, 128
      %v737 = vld [vmem:[%s736] sm:$0xff]
      %v738 = vld [vmem:[%s736 + $0x8] sm:$0xff]
      %v739 = vld [vmem:[%s736 + $0x10] sm:$0xff]
      %v740 = vld [vmem:[%s736 + $0x18] sm:$0xff]
      %v741 = vld [vmem:[%s736 + $0x20] sm:$0xff]
      %v742 = vld [vmem:[%s736 + $0x28] sm:$0xff]
      %v743 = vld [vmem:[%s736 + $0x30] sm:$0xff]
      %v744 = vld [vmem:[%s736 + $0x38] sm:$0xff]
      %v746 = vsel %vm233, %v700, 0
      %v749 = vsel %vm233, %v701, 0
      %v752 = vsel %vm233, %v702, 0
      %v755 = vsel %vm233, %v703, 0
      %v758 = vsel %vm233, %v704, 0
      %v761 = vsel %vm233, %v705, 0
      %v764 = vsel %vm233, %v706, 0
      %v767 = vsel %vm233, %v707, 0
      %v770 = vsel %vm233, %v708, 0
      %v773 = vsel %vm233, %v709, 0
      %v776 = vsel %vm233, %v710, 0
      %v779 = vsel %vm233, %v711, 0
      %v782 = vsel %vm233, %v712, 0
      %v785 = vsel %vm233, %v713, 0
      %v788 = vsel %vm233, %v714, 0
      %v791 = vsel %vm233, %v715, 0
      %v794 = vsel %vm233, %v716, 0
      %v797 = vsel %vm233, %v717, 0
      %v800 = vsel %vm233, %v718, 0
      %v803 = vsel %vm233, %v719, 0
      %v806 = vsel %vm233, %v720, 0
      %v809 = vsel %vm233, %v721, 0
      %v812 = vsel %vm233, %v722, 0
      %v815 = vsel %vm233, %v723, 0
      %v818 = vsel %vm233, %v724, 0
      %v821 = vsel %vm233, %v725, 0
      %v824 = vsel %vm233, %v726, 0
      %v827 = vsel %vm233, %v727, 0
      %v830 = vsel %vm233, %v728, 0
      %v833 = vsel %vm233, %v729, 0
      %v836 = vsel %vm233, %v730, 0
      %v839 = vsel %vm233, %v731, 0
      %v842 = vsel %vm233, %v732, 0
      %v845 = vsel %vm233, %v733, 0
      %v848 = vsel %vm233, %v734, 0
      %v851 = vsel %vm233, %v735, 0
      %853 = vmatpush.msra.mxu0 0.0
      %854 = vmatpush.msra.mxu0 0.0
      %855 = vmatpush.msra.mxu0 0.0
      %856 = vmatpush.msra.mxu0 0.0
      %857 = vmatpush.msra.mxu0 0.0
      %858 = vmatpush.msra.mxu0 0.0
      %859 = vmatpush.msra.mxu0 0.0
      %860 = vmatpush.msra.mxu0 0.0
      %861 = vmatpush.msra.mxu0 %v744
      %862 = vmatpush.msra.mxu0 %v743
      %863 = vmatpush.msra.mxu0 %v742
      %864 = vmatpush.msra.mxu0 %v741
      %865 = vmatpush.msra.mxu0 %v740
      %866 = vmatpush.msra.mxu0 %v739
      %867 = vmatpush.msra.mxu0 %v738
      %868 = vmatpush.msra.mxu0 %v737
      %869 = vmatmul.f32.gmra.mxu0 %v746
      %v870 = vpop.f32.mrf.mxu0
      %v871 = vadd.f32 0.0, %v870
      %872 = vmatmul.f32.gmra.mxu0 %v749
      %v873 = vpop.f32.mrf.mxu0
      %v874 = vadd.f32 0.0, %v873
      %875 = vmatmul.f32.gmra.mxu0 %v752
      %v876 = vpop.f32.mrf.mxu0
      %v877 = vadd.f32 0.0, %v876
      %878 = vmatmul.f32.gmra.mxu0 %v755
      %v879 = vpop.f32.mrf.mxu0
      %v880 = vadd.f32 0.0, %v879
      %881 = vmatmul.f32.gmra.mxu0 %v758
      %v882 = vpop.f32.mrf.mxu0
      %v883 = vadd.f32 0.0, %v882
      %884 = vmatmul.f32.gmra.mxu0 %v761
      %v885 = vpop.f32.mrf.mxu0
      %v886 = vadd.f32 0.0, %v885
      %887 = vmatmul.f32.gmra.mxu0 %v764
      %v888 = vpop.f32.mrf.mxu0
      %v889 = vadd.f32 0.0, %v888
      %890 = vmatmul.f32.gmra.mxu0 %v767
      %v891 = vpop.f32.mrf.mxu0
      %v892 = vadd.f32 0.0, %v891
      %893 = vmatmul.f32.gmra.mxu0 %v770
      %v894 = vpop.f32.mrf.mxu0
      %v895 = vadd.f32 0.0, %v894
      %896 = vmatmul.f32.gmra.mxu0 %v773
      %v897 = vpop.f32.mrf.mxu0
      %v898 = vadd.f32 0.0, %v897
      %899 = vmatmul.f32.gmra.mxu0 %v776
      %v900 = vpop.f32.mrf.mxu0
      %v901 = vadd.f32 0.0, %v900
      %902 = vmatmul.f32.gmra.mxu0 %v779
      %v903 = vpop.f32.mrf.mxu0
      %v904 = vadd.f32 0.0, %v903
      %905 = vmatmul.f32.gmra.mxu0 %v782
      %v906 = vpop.f32.mrf.mxu0
      %v907 = vadd.f32 0.0, %v906
      %908 = vmatmul.f32.gmra.mxu0 %v785
      %v909 = vpop.f32.mrf.mxu0
      %v910 = vadd.f32 0.0, %v909
      %911 = vmatmul.f32.gmra.mxu0 %v788
      %v912 = vpop.f32.mrf.mxu0
      %v913 = vadd.f32 0.0, %v912
      %914 = vmatmul.f32.gmra.mxu0 %v791
      %v915 = vpop.f32.mrf.mxu0
      %v916 = vadd.f32 0.0, %v915
      %917 = vmatmul.f32.gmra.mxu0 %v794
      %v918 = vpop.f32.mrf.mxu0
      %v919 = vadd.f32 0.0, %v918
      %920 = vmatmul.f32.gmra.mxu0 %v797
      %v921 = vpop.f32.mrf.mxu0
      %v922 = vadd.f32 0.0, %v921
      %923 = vmatmul.f32.gmra.mxu0 %v800
      %v924 = vpop.f32.mrf.mxu0
      %v925 = vadd.f32 0.0, %v924
      %926 = vmatmul.f32.gmra.mxu0 %v803
      %v927 = vpop.f32.mrf.mxu0
      %v928 = vadd.f32 0.0, %v927
      %929 = vmatmul.f32.gmra.mxu0 %v806
      %v930 = vpop.f32.mrf.mxu0
      %v931 = vadd.f32 0.0, %v930
      %932 = vmatmul.f32.gmra.mxu0 %v809
      %v933 = vpop.f32.mrf.mxu0
      %v934 = vadd.f32 0.0, %v933
      %935 = vmatmul.f32.gmra.mxu0 %v812
      %v936 = vpop.f32.mrf.mxu0
      %v937 = vadd.f32 0.0, %v936
      %938 = vmatmul.f32.gmra.mxu0 %v815
      %v939 = vpop.f32.mrf.mxu0
      %v940 = vadd.f32 0.0, %v939
      %941 = vmatmul.f32.gmra.mxu0 %v818
      %v942 = vpop.f32.mrf.mxu0
      %v943 = vadd.f32 0.0, %v942
      %944 = vmatmul.f32.gmra.mxu0 %v821
      %v945 = vpop.f32.mrf.mxu0
      %v946 = vadd.f32 0.0, %v945
      %947 = vmatmul.f32.gmra.mxu0 %v824
      %v948 = vpop.f32.mrf.mxu0
      %v949 = vadd.f32 0.0, %v948
      %950 = vmatmul.f32.gmra.mxu0 %v827
      %v951 = vpop.f32.mrf.mxu0
      %v952 = vadd.f32 0.0, %v951
      %953 = vmatmul.f32.gmra.mxu0 %v830
      %v954 = vpop.f32.mrf.mxu0
      %v955 = vadd.f32 0.0, %v954
      %956 = vmatmul.f32.gmra.mxu0 %v833
      %v957 = vpop.f32.mrf.mxu0
      %v958 = vadd.f32 0.0, %v957
      %959 = vmatmul.f32.gmra.mxu0 %v836
      %v960 = vpop.f32.mrf.mxu0
      %v961 = vadd.f32 0.0, %v960
      %962 = vmatmul.f32.gmra.mxu0 %v839
      %v963 = vpop.f32.mrf.mxu0
      %v964 = vadd.f32 0.0, %v963
      %965 = vmatmul.f32.gmra.mxu0 %v842
      %v966 = vpop.f32.mrf.mxu0
      %v967 = vadd.f32 0.0, %v966
      %968 = vmatmul.f32.gmra.mxu0 %v845
      %v969 = vpop.f32.mrf.mxu0
      %v970 = vadd.f32 0.0, %v969
      %971 = vmatmul.f32.gmra.mxu0 %v848
      %v972 = vpop.f32.mrf.mxu0
      %v973 = vadd.f32 0.0, %v972
      %974 = vmatmul.f32.gmra.mxu0 %v851
      %v975 = vpop.f32.mrf.mxu0
      %v976 = vadd.f32 0.0, %v975
      %977 = vdwg.mxu0
      %v978 = vadd.f32 %v593, %v871
      %v979 = vadd.f32 %v596, %v874
      %v980 = vadd.f32 %v599, %v877
      %v981 = vadd.f32 %v602, %v880
      %v982 = vadd.f32 %v605, %v883
      %v983 = vadd.f32 %v608, %v886
      %v984 = vadd.f32 %v611, %v889
      %v985 = vadd.f32 %v614, %v892
      %v986 = vadd.f32 %v617, %v895
      %v987 = vadd.f32 %v620, %v898
      %v988 = vadd.f32 %v623, %v901
      %v989 = vadd.f32 %v626, %v904
      %v990 = vadd.f32 %v629, %v907
      %v991 = vadd.f32 %v632, %v910
      %v992 = vadd.f32 %v635, %v913
      %v993 = vadd.f32 %v638, %v916
      %v994 = vadd.f32 %v641, %v919
      %v995 = vadd.f32 %v644, %v922
      %v996 = vadd.f32 %v647, %v925
      %v997 = vadd.f32 %v650, %v928
      %v998 = vadd.f32 %v653, %v931
      %v999 = vadd.f32 %v656, %v934
      %v1000 = vadd.f32 %v659, %v937
      %v1001 = vadd.f32 %v662, %v940
      %v1002 = vadd.f32 %v665, %v943
      %v1003 = vadd.f32 %v668, %v946
      %v1004 = vadd.f32 %v671, %v949
      %v1005 = vadd.f32 %v674, %v952
      %v1006 = vadd.f32 %v677, %v955
      %v1007 = vadd.f32 %v680, %v958
      %v1008 = vadd.f32 %v683, %v961
      %v1009 = vadd.f32 %v686, %v964
      %v1010 = vadd.f32 %v689, %v967
      %v1011 = vadd.f32 %v692, %v970
      %v1012 = vadd.f32 %v695, %v973
      %v1013 = vadd.f32 %v698, %v976
      %v1014 = vld [vmem:[%s138 + $0x12] sm:$0xff]
      %v1015 = vld [vmem:[%s138 + $0x1a] sm:$0xff]
      %v1016 = vld [vmem:[%s138 + $0x22] sm:$0xff]
      %v1017 = vld [vmem:[%s138 + $0x2a] sm:$0xff]
      %v1018 = vld [vmem:[%s138 + $0x32] sm:$0xff]
      %v1019 = vld [vmem:[%s138 + $0x3a] sm:$0xff]
      %v1020 = vld [vmem:[%s138 + $0x42] sm:$0xff]
      %v1021 = vld [vmem:[%s138 + $0x4a] sm:$0xff]
      %v1022 = vld [vmem:[%s138 + $0x52] sm:$0xff]
      %v1023 = vld [vmem:[%s138 + $0x5a] sm:$0xff]
      %v1024 = vld [vmem:[%s138 + $0x62] sm:$0xff]
      %v1025 = vld [vmem:[%s138 + $0x6a] sm:$0xff]
      %v1026 = vld [vmem:[%s138 + $0x72] sm:$0xff]
      %v1027 = vld [vmem:[%s138 + $0x7a] sm:$0xff]
      %v1028 = vld [vmem:[%s138 + $0x82] sm:$0xff]
      %v1029 = vld [vmem:[%s138 + $0x8a] sm:$0xff]
      %v1030 = vld [vmem:[%s138 + $0x92] sm:$0xff]
      %v1031 = vld [vmem:[%s138 + $0x9a] sm:$0xff]
      %v1032 = vld [vmem:[%s138 + $0xa2] sm:$0xff]
      %v1033 = vld [vmem:[%s138 + $0xaa] sm:$0xff]
      %v1034 = vld [vmem:[%s138 + $0xb2] sm:$0xff]
      %v1035 = vld [vmem:[%s138 + $0xba] sm:$0xff]
      %v1036 = vld [vmem:[%s138 + $0xc2] sm:$0xff]
      %v1037 = vld [vmem:[%s138 + $0xca] sm:$0xff]
      %v1038 = vld [vmem:[%s138 + $0xd2] sm:$0xff]
      %v1039 = vld [vmem:[%s138 + $0xda] sm:$0xff]
      %v1040 = vld [vmem:[%s138 + $0xe2] sm:$0xff]
      %v1041 = vld [vmem:[%s138 + $0xea] sm:$0xff]
      %v1042 = vld [vmem:[%s138 + $0xf2] sm:$0xff]
      %v1043 = vld [vmem:[%s138 + $0xfa] sm:$0xff]
      %v1044 = vld [vmem:[%s138 + $0x102] sm:$0xff]
      %v1045 = vld [vmem:[%s138 + $0x10a] sm:$0xff]
      %v1046 = vld [vmem:[%s138 + $0x112] sm:$0xff]
      %v1047 = vld [vmem:[%s138 + $0x11a] sm:$0xff]
      %v1048 = vld [vmem:[%s138 + $0x122] sm:$0xff]
      %v1049 = vld [vmem:[%s138 + $0x12a] sm:$0xff]
      %s1050 = scalar_lea.vmem %s1, 192
      %v1051 = vld [vmem:[%s1050] sm:$0xff]
      %v1052 = vld [vmem:[%s1050 + $0x8] sm:$0xff]
      %v1053 = vld [vmem:[%s1050 + $0x10] sm:$0xff]
      %v1054 = vld [vmem:[%s1050 + $0x18] sm:$0xff]
      %v1055 = vld [vmem:[%s1050 + $0x20] sm:$0xff]
      %v1056 = vld [vmem:[%s1050 + $0x28] sm:$0xff]
      %v1057 = vld [vmem:[%s1050 + $0x30] sm:$0xff]
      %v1058 = vld [vmem:[%s1050 + $0x38] sm:$0xff]
      %v1060 = vsel %vm233, %v1014, 0
      %v1063 = vsel %vm233, %v1015, 0
      %v1066 = vsel %vm233, %v1016, 0
      %v1069 = vsel %vm233, %v1017, 0
      %v1072 = vsel %vm233, %v1018, 0
      %v1075 = vsel %vm233, %v1019, 0
      %v1078 = vsel %vm233, %v1020, 0
      %v1081 = vsel %vm233, %v1021, 0
      %v1084 = vsel %vm233, %v1022, 0
      %v1087 = vsel %vm233, %v1023, 0
      %v1090 = vsel %vm233, %v1024, 0
      %v1093 = vsel %vm233, %v1025, 0
      %v1096 = vsel %vm233, %v1026, 0
      %v1099 = vsel %vm233, %v1027, 0
      %v1102 = vsel %vm233, %v1028, 0
      %v1105 = vsel %vm233, %v1029, 0
      %v1108 = vsel %vm233, %v1030, 0
      %v1111 = vsel %vm233, %v1031, 0
      %v1114 = vsel %vm233, %v1032, 0
      %v1117 = vsel %vm233, %v1033, 0
      %v1120 = vsel %vm233, %v1034, 0
      %v1123 = vsel %vm233, %v1035, 0
      %v1126 = vsel %vm233, %v1036, 0
      %v1129 = vsel %vm233, %v1037, 0
      %v1132 = vsel %vm233, %v1038, 0
      %v1135 = vsel %vm233, %v1039, 0
      %v1138 = vsel %vm233, %v1040, 0
      %v1141 = vsel %vm233, %v1041, 0
      %v1144 = vsel %vm233, %v1042, 0
      %v1147 = vsel %vm233, %v1043, 0
      %v1150 = vsel %vm233, %v1044, 0
      %v1153 = vsel %vm233, %v1045, 0
      %v1156 = vsel %vm233, %v1046, 0
      %v1159 = vsel %vm233, %v1047, 0
      %v1162 = vsel %vm233, %v1048, 0
      %v1165 = vsel %vm233, %v1049, 0
      %1167 = vmatpush.msra.mxu0 0.0
      %1168 = vmatpush.msra.mxu0 0.0
      %1169 = vmatpush.msra.mxu0 0.0
      %1170 = vmatpush.msra.mxu0 0.0
      %1171 = vmatpush.msra.mxu0 0.0
      %1172 = vmatpush.msra.mxu0 0.0
      %1173 = vmatpush.msra.mxu0 0.0
      %1174 = vmatpush.msra.mxu0 0.0
      %1175 = vmatpush.msra.mxu0 %v1058
      %1176 = vmatpush.msra.mxu0 %v1057
      %1177 = vmatpush.msra.mxu0 %v1056
      %1178 = vmatpush.msra.mxu0 %v1055
      %1179 = vmatpush.msra.mxu0 %v1054
      %1180 = vmatpush.msra.mxu0 %v1053
      %1181 = vmatpush.msra.mxu0 %v1052
      %1182 = vmatpush.msra.mxu0 %v1051
      %1183 = vmatmul.f32.gmra.mxu0 %v1060
      %v1184 = vpop.f32.mrf.mxu0
      %v1185 = vadd.f32 0.0, %v1184
      %1186 = vmatmul.f32.gmra.mxu0 %v1063
      %v1187 = vpop.f32.mrf.mxu0
      %v1188 = vadd.f32 0.0, %v1187
      %1189 = vmatmul.f32.gmra.mxu0 %v1066
      %v1190 = vpop.f32.mrf.mxu0
      %v1191 = vadd.f32 0.0, %v1190
      %1192 = vmatmul.f32.gmra.mxu0 %v1069
      %v1193 = vpop.f32.mrf.mxu0
      %v1194 = vadd.f32 0.0, %v1193
      %1195 = vmatmul.f32.gmra.mxu0 %v1072
      %v1196 = vpop.f32.mrf.mxu0
      %v1197 = vadd.f32 0.0, %v1196
      %1198 = vmatmul.f32.gmra.mxu0 %v1075
      %v1199 = vpop.f32.mrf.mxu0
      %v1200 = vadd.f32 0.0, %v1199
      %1201 = vmatmul.f32.gmra.mxu0 %v1078
      %v1202 = vpop.f32.mrf.mxu0
      %v1203 = vadd.f32 0.0, %v1202
      %1204 = vmatmul.f32.gmra.mxu0 %v1081
      %v1205 = vpop.f32.mrf.mxu0
      %v1206 = vadd.f32 0.0, %v1205
      %1207 = vmatmul.f32.gmra.mxu0 %v1084
      %v1208 = vpop.f32.mrf.mxu0
      %v1209 = vadd.f32 0.0, %v1208
      %1210 = vmatmul.f32.gmra.mxu0 %v1087
      %v1211 = vpop.f32.mrf.mxu0
      %v1212 = vadd.f32 0.0, %v1211
      %1213 = vmatmul.f32.gmra.mxu0 %v1090
      %v1214 = vpop.f32.mrf.mxu0
      %v1215 = vadd.f32 0.0, %v1214
      %1216 = vmatmul.f32.gmra.mxu0 %v1093
      %v1217 = vpop.f32.mrf.mxu0
      %v1218 = vadd.f32 0.0, %v1217
      %1219 = vmatmul.f32.gmra.mxu0 %v1096
      %v1220 = vpop.f32.mrf.mxu0
      %v1221 = vadd.f32 0.0, %v1220
      %1222 = vmatmul.f32.gmra.mxu0 %v1099
      %v1223 = vpop.f32.mrf.mxu0
      %v1224 = vadd.f32 0.0, %v1223
      %1225 = vmatmul.f32.gmra.mxu0 %v1102
      %v1226 = vpop.f32.mrf.mxu0
      %v1227 = vadd.f32 0.0, %v1226
      %1228 = vmatmul.f32.gmra.mxu0 %v1105
      %v1229 = vpop.f32.mrf.mxu0
      %v1230 = vadd.f32 0.0, %v1229
      %1231 = vmatmul.f32.gmra.mxu0 %v1108
      %v1232 = vpop.f32.mrf.mxu0
      %v1233 = vadd.f32 0.0, %v1232
      %1234 = vmatmul.f32.gmra.mxu0 %v1111
      %v1235 = vpop.f32.mrf.mxu0
      %v1236 = vadd.f32 0.0, %v1235
      %1237 = vmatmul.f32.gmra.mxu0 %v1114
      %v1238 = vpop.f32.mrf.mxu0
      %v1239 = vadd.f32 0.0, %v1238
      %1240 = vmatmul.f32.gmra.mxu0 %v1117
      %v1241 = vpop.f32.mrf.mxu0
      %v1242 = vadd.f32 0.0, %v1241
      %1243 = vmatmul.f32.gmra.mxu0 %v1120
      %v1244 = vpop.f32.mrf.mxu0
      %v1245 = vadd.f32 0.0, %v1244
      %1246 = vmatmul.f32.gmra.mxu0 %v1123
      %v1247 = vpop.f32.mrf.mxu0
      %v1248 = vadd.f32 0.0, %v1247
      %1249 = vmatmul.f32.gmra.mxu0 %v1126
      %v1250 = vpop.f32.mrf.mxu0
      %v1251 = vadd.f32 0.0, %v1250
      %1252 = vmatmul.f32.gmra.mxu0 %v1129
      %v1253 = vpop.f32.mrf.mxu0
      %v1254 = vadd.f32 0.0, %v1253
      %1255 = vmatmul.f32.gmra.mxu0 %v1132
      %v1256 = vpop.f32.mrf.mxu0
      %v1257 = vadd.f32 0.0, %v1256
      %1258 = vmatmul.f32.gmra.mxu0 %v1135
      %v1259 = vpop.f32.mrf.mxu0
      %v1260 = vadd.f32 0.0, %v1259
      %1261 = vmatmul.f32.gmra.mxu0 %v1138
      %v1262 = vpop.f32.mrf.mxu0
      %v1263 = vadd.f32 0.0, %v1262
      %1264 = vmatmul.f32.gmra.mxu0 %v1141
      %v1265 = vpop.f32.mrf.mxu0
      %v1266 = vadd.f32 0.0, %v1265
      %1267 = vmatmul.f32.gmra.mxu0 %v1144
      %v1268 = vpop.f32.mrf.mxu0
      %v1269 = vadd.f32 0.0, %v1268
      %1270 = vmatmul.f32.gmra.mxu0 %v1147
      %v1271 = vpop.f32.mrf.mxu0
      %v1272 = vadd.f32 0.0, %v1271
      %1273 = vmatmul.f32.gmra.mxu0 %v1150
      %v1274 = vpop.f32.mrf.mxu0
      %v1275 = vadd.f32 0.0, %v1274
      %1276 = vmatmul.f32.gmra.mxu0 %v1153
      %v1277 = vpop.f32.mrf.mxu0
      %v1278 = vadd.f32 0.0, %v1277
      %1279 = vmatmul.f32.gmra.mxu0 %v1156
      %v1280 = vpop.f32.mrf.mxu0
      %v1281 = vadd.f32 0.0, %v1280
      %1282 = vmatmul.f32.gmra.mxu0 %v1159
      %v1283 = vpop.f32.mrf.mxu0
      %v1284 = vadd.f32 0.0, %v1283
      %1285 = vmatmul.f32.gmra.mxu0 %v1162
      %v1286 = vpop.f32.mrf.mxu0
      %v1287 = vadd.f32 0.0, %v1286
      %1288 = vmatmul.f32.gmra.mxu0 %v1165
      %v1289 = vpop.f32.mrf.mxu0
      %v1290 = vadd.f32 0.0, %v1289
      %1291 = vdwg.mxu0
      %v1292 = vadd.f32 %v978, %v1185
      %v1293 = vadd.f32 %v979, %v1188
      %v1294 = vadd.f32 %v980, %v1191
      %v1295 = vadd.f32 %v981, %v1194
      %v1296 = vadd.f32 %v982, %v1197
      %v1297 = vadd.f32 %v983, %v1200
      %v1298 = vadd.f32 %v984, %v1203
      %v1299 = vadd.f32 %v985, %v1206
      %v1300 = vadd.f32 %v986, %v1209
      %v1301 = vadd.f32 %v987, %v1212
      %v1302 = vadd.f32 %v988, %v1215
      %v1303 = vadd.f32 %v989, %v1218
      %v1304 = vadd.f32 %v990, %v1221
      %v1305 = vadd.f32 %v991, %v1224
      %v1306 = vadd.f32 %v992, %v1227
      %v1307 = vadd.f32 %v993, %v1230
      %v1308 = vadd.f32 %v994, %v1233
      %v1309 = vadd.f32 %v995, %v1236
      %v1310 = vadd.f32 %v996, %v1239
      %v1311 = vadd.f32 %v997, %v1242
      %v1312 = vadd.f32 %v998, %v1245
      %v1313 = vadd.f32 %v999, %v1248
      %v1314 = vadd.f32 %v1000, %v1251
      %v1315 = vadd.f32 %v1001, %v1254
      %v1316 = vadd.f32 %v1002, %v1257
      %v1317 = vadd.f32 %v1003, %v1260
      %v1318 = vadd.f32 %v1004, %v1263
      %v1319 = vadd.f32 %v1005, %v1266
      %v1320 = vadd.f32 %v1006, %v1269
      %v1321 = vadd.f32 %v1007, %v1272
      %v1322 = vadd.f32 %v1008, %v1275
      %v1323 = vadd.f32 %v1009, %v1278
      %v1324 = vadd.f32 %v1010, %v1281
      %v1325 = vadd.f32 %v1011, %v1284
      %v1326 = vadd.f32 %v1012, %v1287
      %v1327 = vadd.f32 %v1013, %v1290
      %v1328 = vld [vmem:[%s138 + $0x13] sm:$0xff]
      %v1329 = vld [vmem:[%s138 + $0x1b] sm:$0xff]
      %v1330 = vld [vmem:[%s138 + $0x23] sm:$0xff]
      %v1331 = vld [vmem:[%s138 + $0x2b] sm:$0xff]
      %v1332 = vld [vmem:[%s138 + $0x33] sm:$0xff]
      %v1333 = vld [vmem:[%s138 + $0x3b] sm:$0xff]
      %v1334 = vld [vmem:[%s138 + $0x43] sm:$0xff]
      %v1335 = vld [vmem:[%s138 + $0x4b] sm:$0xff]
      %v1336 = vld [vmem:[%s138 + $0x53] sm:$0xff]
      %v1337 = vld [vmem:[%s138 + $0x5b] sm:$0xff]
      %v1338 = vld [vmem:[%s138 + $0x63] sm:$0xff]
      %v1339 = vld [vmem:[%s138 + $0x6b] sm:$0xff]
      %v1340 = vld [vmem:[%s138 + $0x73] sm:$0xff]
      %v1341 = vld [vmem:[%s138 + $0x7b] sm:$0xff]
      %v1342 = vld [vmem:[%s138 + $0x83] sm:$0xff]
      %v1343 = vld [vmem:[%s138 + $0x8b] sm:$0xff]
      %v1344 = vld [vmem:[%s138 + $0x93] sm:$0xff]
      %v1345 = vld [vmem:[%s138 + $0x9b] sm:$0xff]
      %v1346 = vld [vmem:[%s138 + $0xa3] sm:$0xff]
      %v1347 = vld [vmem:[%s138 + $0xab] sm:$0xff]
      %v1348 = vld [vmem:[%s138 + $0xb3] sm:$0xff]
      %v1349 = vld [vmem:[%s138 + $0xbb] sm:$0xff]
      %v1350 = vld [vmem:[%s138 + $0xc3] sm:$0xff]
      %v1351 = vld [vmem:[%s138 + $0xcb] sm:$0xff]
      %v1352 = vld [vmem:[%s138 + $0xd3] sm:$0xff]
      %v1353 = vld [vmem:[%s138 + $0xdb] sm:$0xff]
      %v1354 = vld [vmem:[%s138 + $0xe3] sm:$0xff]
      %v1355 = vld [vmem:[%s138 + $0xeb] sm:$0xff]
      %v1356 = vld [vmem:[%s138 + $0xf3] sm:$0xff]
      %v1357 = vld [vmem:[%s138 + $0xfb] sm:$0xff]
      %v1358 = vld [vmem:[%s138 + $0x103] sm:$0xff]
      %v1359 = vld [vmem:[%s138 + $0x10b] sm:$0xff]
      %v1360 = vld [vmem:[%s138 + $0x113] sm:$0xff]
      %v1361 = vld [vmem:[%s138 + $0x11b] sm:$0xff]
      %v1362 = vld [vmem:[%s138 + $0x123] sm:$0xff]
      %v1363 = vld [vmem:[%s138 + $0x12b] sm:$0xff]
      %s1364 = scalar_lea.vmem %s1, 256
      %v1365 = vld [vmem:[%s1364] sm:$0xff]
      %v1366 = vld [vmem:[%s1364 + $0x8] sm:$0xff]
      %v1367 = vld [vmem:[%s1364 + $0x10] sm:$0xff]
      %v1368 = vld [vmem:[%s1364 + $0x18] sm:$0xff]
      %v1369 = vld [vmem:[%s1364 + $0x20] sm:$0xff]
      %v1370 = vld [vmem:[%s1364 + $0x28] sm:$0xff]
      %v1371 = vld [vmem:[%s1364 + $0x30] sm:$0xff]
      %v1372 = vld [vmem:[%s1364 + $0x38] sm:$0xff]
      %v1374 = vsel %vm233, %v1328, 0
      %v1377 = vsel %vm233, %v1329, 0
      %v1380 = vsel %vm233, %v1330, 0
      %v1383 = vsel %vm233, %v1331, 0
      %v1386 = vsel %vm233, %v1332, 0
      %v1389 = vsel %vm233, %v1333, 0
      %v1392 = vsel %vm233, %v1334, 0
      %v1395 = vsel %vm233, %v1335, 0
      %v1398 = vsel %vm233, %v1336, 0
      %v1401 = vsel %vm233, %v1337, 0
      %v1404 = vsel %vm233, %v1338, 0
      %v1407 = vsel %vm233, %v1339, 0
      %v1410 = vsel %vm233, %v1340, 0
      %v1413 = vsel %vm233, %v1341, 0
      %v1416 = vsel %vm233, %v1342, 0
      %v1419 = vsel %vm233, %v1343, 0
      %v1422 = vsel %vm233, %v1344, 0
      %v1425 = vsel %vm233, %v1345, 0
      %v1428 = vsel %vm233, %v1346, 0
      %v1431 = vsel %vm233, %v1347, 0
      %v1434 = vsel %vm233, %v1348, 0
      %v1437 = vsel %vm233, %v1349, 0
      %v1440 = vsel %vm233, %v1350, 0
      %v1443 = vsel %vm233, %v1351, 0
      %v1446 = vsel %vm233, %v1352, 0
      %v1449 = vsel %vm233, %v1353, 0
      %v1452 = vsel %vm233, %v1354, 0
      %v1455 = vsel %vm233, %v1355, 0
      %v1458 = vsel %vm233, %v1356, 0
      %v1461 = vsel %vm233, %v1357, 0
      %v1464 = vsel %vm233, %v1358, 0
      %v1467 = vsel %vm233, %v1359, 0
      %v1470 = vsel %vm233, %v1360, 0
      %v1473 = vsel %vm233, %v1361, 0
      %v1476 = vsel %vm233, %v1362, 0
      %v1479 = vsel %vm233, %v1363, 0
      %1481 = vmatpush.msra.mxu0 0.0
      %1482 = vmatpush.msra.mxu0 0.0
      %1483 = vmatpush.msra.mxu0 0.0
      %1484 = vmatpush.msra.mxu0 0.0
      %1485 = vmatpush.msra.mxu0 0.0
      %1486 = vmatpush.msra.mxu0 0.0
      %1487 = vmatpush.msra.mxu0 0.0
      %1488 = vmatpush.msra.mxu0 0.0
      %1489 = vmatpush.msra.mxu0 %v1372
      %1490 = vmatpush.msra.mxu0 %v1371
      %1491 = vmatpush.msra.mxu0 %v1370
      %1492 = vmatpush.msra.mxu0 %v1369
      %1493 = vmatpush.msra.mxu0 %v1368
      %1494 = vmatpush.msra.mxu0 %v1367
      %1495 = vmatpush.msra.mxu0 %v1366
      %1496 = vmatpush.msra.mxu0 %v1365
      %1497 = vmatmul.f32.gmra.mxu0 %v1374
      %v1498 = vpop.f32.mrf.mxu0
      %v1499 = vadd.f32 0.0, %v1498
      %1500 = vmatmul.f32.gmra.mxu0 %v1377
      %v1501 = vpop.f32.mrf.mxu0
      %v1502 = vadd.f32 0.0, %v1501
      %1503 = vmatmul.f32.gmra.mxu0 %v1380
      %v1504 = vpop.f32.mrf.mxu0
      %v1505 = vadd.f32 0.0, %v1504
      %1506 = vmatmul.f32.gmra.mxu0 %v1383
      %v1507 = vpop.f32.mrf.mxu0
      %v1508 = vadd.f32 0.0, %v1507
      %1509 = vmatmul.f32.gmra.mxu0 %v1386
      %v1510 = vpop.f32.mrf.mxu0
      %v1511 = vadd.f32 0.0, %v1510
      %1512 = vmatmul.f32.gmra.mxu0 %v1389
      %v1513 = vpop.f32.mrf.mxu0
      %v1514 = vadd.f32 0.0, %v1513
      %1515 = vmatmul.f32.gmra.mxu0 %v1392
      %v1516 = vpop.f32.mrf.mxu0
      %v1517 = vadd.f32 0.0, %v1516
      %1518 = vmatmul.f32.gmra.mxu0 %v1395
      %v1519 = vpop.f32.mrf.mxu0
      %v1520 = vadd.f32 0.0, %v1519
      %1521 = vmatmul.f32.gmra.mxu0 %v1398
      %v1522 = vpop.f32.mrf.mxu0
      %v1523 = vadd.f32 0.0, %v1522
      %1524 = vmatmul.f32.gmra.mxu0 %v1401
      %v1525 = vpop.f32.mrf.mxu0
      %v1526 = vadd.f32 0.0, %v1525
      %1527 = vmatmul.f32.gmra.mxu0 %v1404
      %v1528 = vpop.f32.mrf.mxu0
      %v1529 = vadd.f32 0.0, %v1528
      %1530 = vmatmul.f32.gmra.mxu0 %v1407
      %v1531 = vpop.f32.mrf.mxu0
      %v1532 = vadd.f32 0.0, %v1531
      %1533 = vmatmul.f32.gmra.mxu0 %v1410
      %v1534 = vpop.f32.mrf.mxu0
      %v1535 = vadd.f32 0.0, %v1534
      %1536 = vmatmul.f32.gmra.mxu0 %v1413
      %v1537 = vpop.f32.mrf.mxu0
      %v1538 = vadd.f32 0.0, %v1537
      %1539 = vmatmul.f32.gmra.mxu0 %v1416
      %v1540 = vpop.f32.mrf.mxu0
      %v1541 = vadd.f32 0.0, %v1540
      %1542 = vmatmul.f32.gmra.mxu0 %v1419
      %v1543 = vpop.f32.mrf.mxu0
      %v1544 = vadd.f32 0.0, %v1543
      %1545 = vmatmul.f32.gmra.mxu0 %v1422
      %v1546 = vpop.f32.mrf.mxu0
      %v1547 = vadd.f32 0.0, %v1546
      %1548 = vmatmul.f32.gmra.mxu0 %v1425
      %v1549 = vpop.f32.mrf.mxu0
      %v1550 = vadd.f32 0.0, %v1549
      %1551 = vmatmul.f32.gmra.mxu0 %v1428
      %v1552 = vpop.f32.mrf.mxu0
      %v1553 = vadd.f32 0.0, %v1552
      %1554 = vmatmul.f32.gmra.mxu0 %v1431
      %v1555 = vpop.f32.mrf.mxu0
      %v1556 = vadd.f32 0.0, %v1555
      %1557 = vmatmul.f32.gmra.mxu0 %v1434
      %v1558 = vpop.f32.mrf.mxu0
      %v1559 = vadd.f32 0.0, %v1558
      %1560 = vmatmul.f32.gmra.mxu0 %v1437
      %v1561 = vpop.f32.mrf.mxu0
      %v1562 = vadd.f32 0.0, %v1561
      %1563 = vmatmul.f32.gmra.mxu0 %v1440
      %v1564 = vpop.f32.mrf.mxu0
      %v1565 = vadd.f32 0.0, %v1564
      %1566 = vmatmul.f32.gmra.mxu0 %v1443
      %v1567 = vpop.f32.mrf.mxu0
      %v1568 = vadd.f32 0.0, %v1567
      %1569 = vmatmul.f32.gmra.mxu0 %v1446
      %v1570 = vpop.f32.mrf.mxu0
      %v1571 = vadd.f32 0.0, %v1570
      %1572 = vmatmul.f32.gmra.mxu0 %v1449
      %v1573 = vpop.f32.mrf.mxu0
      %v1574 = vadd.f32 0.0, %v1573
      %1575 = vmatmul.f32.gmra.mxu0 %v1452
      %v1576 = vpop.f32.mrf.mxu0
      %v1577 = vadd.f32 0.0, %v1576
      %1578 = vmatmul.f32.gmra.mxu0 %v1455
      %v1579 = vpop.f32.mrf.mxu0
      %v1580 = vadd.f32 0.0, %v1579
      %1581 = vmatmul.f32.gmra.mxu0 %v1458
      %v1582 = vpop.f32.mrf.mxu0
      %v1583 = vadd.f32 0.0, %v1582
      %1584 = vmatmul.f32.gmra.mxu0 %v1461
      %v1585 = vpop.f32.mrf.mxu0
      %v1586 = vadd.f32 0.0, %v1585
      %1587 = vmatmul.f32.gmra.mxu0 %v1464
      %v1588 = vpop.f32.mrf.mxu0
      %v1589 = vadd.f32 0.0, %v1588
      %1590 = vmatmul.f32.gmra.mxu0 %v1467
      %v1591 = vpop.f32.mrf.mxu0
      %v1592 = vadd.f32 0.0, %v1591
      %1593 = vmatmul.f32.gmra.mxu0 %v1470
      %v1594 = vpop.f32.mrf.mxu0
      %v1595 = vadd.f32 0.0, %v1594
      %1596 = vmatmul.f32.gmra.mxu0 %v1473
      %v1597 = vpop.f32.mrf.mxu0
      %v1598 = vadd.f32 0.0, %v1597
      %1599 = vmatmul.f32.gmra.mxu0 %v1476
      %v1600 = vpop.f32.mrf.mxu0
      %v1601 = vadd.f32 0.0, %v1600
      %1602 = vmatmul.f32.gmra.mxu0 %v1479
      %v1603 = vpop.f32.mrf.mxu0
      %v1604 = vadd.f32 0.0, %v1603
      %1605 = vdwg.mxu0
      %v1606 = vadd.f32 %v1292, %v1499
      %v1607 = vadd.f32 %v1293, %v1502
      %v1608 = vadd.f32 %v1294, %v1505
      %v1609 = vadd.f32 %v1295, %v1508
      %v1610 = vadd.f32 %v1296, %v1511
      %v1611 = vadd.f32 %v1297, %v1514
      %v1612 = vadd.f32 %v1298, %v1517
      %v1613 = vadd.f32 %v1299, %v1520
      %v1614 = vadd.f32 %v1300, %v1523
      %v1615 = vadd.f32 %v1301, %v1526
      %v1616 = vadd.f32 %v1302, %v1529
      %v1617 = vadd.f32 %v1303, %v1532
      %v1618 = vadd.f32 %v1304, %v1535
      %v1619 = vadd.f32 %v1305, %v1538
      %v1620 = vadd.f32 %v1306, %v1541
      %v1621 = vadd.f32 %v1307, %v1544
      %v1622 = vadd.f32 %v1308, %v1547
      %v1623 = vadd.f32 %v1309, %v1550
      %v1624 = vadd.f32 %v1310, %v1553
      %v1625 = vadd.f32 %v1311, %v1556
      %v1626 = vadd.f32 %v1312, %v1559
      %v1627 = vadd.f32 %v1313, %v1562
      %v1628 = vadd.f32 %v1314, %v1565
      %v1629 = vadd.f32 %v1315, %v1568
      %v1630 = vadd.f32 %v1316, %v1571
      %v1631 = vadd.f32 %v1317, %v1574
      %v1632 = vadd.f32 %v1318, %v1577
      %v1633 = vadd.f32 %v1319, %v1580
      %v1634 = vadd.f32 %v1320, %v1583
      %v1635 = vadd.f32 %v1321, %v1586
      %v1636 = vadd.f32 %v1322, %v1589
      %v1637 = vadd.f32 %v1323, %v1592
      %v1638 = vadd.f32 %v1324, %v1595
      %v1639 = vadd.f32 %v1325, %v1598
      %v1640 = vadd.f32 %v1326, %v1601
      %v1641 = vadd.f32 %v1327, %v1604
      %v1642 = vld [vmem:[%s138 + $0x14] sm:$0xff]
      %v1643 = vld [vmem:[%s138 + $0x1c] sm:$0xff]
      %v1644 = vld [vmem:[%s138 + $0x24] sm:$0xff]
      %v1645 = vld [vmem:[%s138 + $0x2c] sm:$0xff]
      %v1646 = vld [vmem:[%s138 + $0x34] sm:$0xff]
      %v1647 = vld [vmem:[%s138 + $0x3c] sm:$0xff]
      %v1648 = vld [vmem:[%s138 + $0x44] sm:$0xff]
      %v1649 = vld [vmem:[%s138 + $0x4c] sm:$0xff]
      %v1650 = vld [vmem:[%s138 + $0x54] sm:$0xff]
      %v1651 = vld [vmem:[%s138 + $0x5c] sm:$0xff]
      %v1652 = vld [vmem:[%s138 + $0x64] sm:$0xff]
      %v1653 = vld [vmem:[%s138 + $0x6c] sm:$0xff]
      %v1654 = vld [vmem:[%s138 + $0x74] sm:$0xff]
      %v1655 = vld [vmem:[%s138 + $0x7c] sm:$0xff]
      %v1656 = vld [vmem:[%s138 + $0x84] sm:$0xff]
      %v1657 = vld [vmem:[%s138 + $0x8c] sm:$0xff]
      %v1658 = vld [vmem:[%s138 + $0x94] sm:$0xff]
      %v1659 = vld [vmem:[%s138 + $0x9c] sm:$0xff]
      %v1660 = vld [vmem:[%s138 + $0xa4] sm:$0xff]
      %v1661 = vld [vmem:[%s138 + $0xac] sm:$0xff]
      %v1662 = vld [vmem:[%s138 + $0xb4] sm:$0xff]
      %v1663 = vld [vmem:[%s138 + $0xbc] sm:$0xff]
      %v1664 = vld [vmem:[%s138 + $0xc4] sm:$0xff]
      %v1665 = vld [vmem:[%s138 + $0xcc] sm:$0xff]
      %v1666 = vld [vmem:[%s138 + $0xd4] sm:$0xff]
      %v1667 = vld [vmem:[%s138 + $0xdc] sm:$0xff]
      %v1668 = vld [vmem:[%s138 + $0xe4] sm:$0xff]
      %v1669 = vld [vmem:[%s138 + $0xec] sm:$0xff]
      %v1670 = vld [vmem:[%s138 + $0xf4] sm:$0xff]
      %v1671 = vld [vmem:[%s138 + $0xfc] sm:$0xff]
      %v1672 = vld [vmem:[%s138 + $0x104] sm:$0xff]
      %v1673 = vld [vmem:[%s138 + $0x10c] sm:$0xff]
      %v1674 = vld [vmem:[%s138 + $0x114] sm:$0xff]
      %v1675 = vld [vmem:[%s138 + $0x11c] sm:$0xff]
      %v1676 = vld [vmem:[%s138 + $0x124] sm:$0xff]
      %v1677 = vld [vmem:[%s138 + $0x12c] sm:$0xff]
      %s1678 = scalar_lea.vmem %s1, 320
      %v1679 = vld [vmem:[%s1678] sm:$0xff]
      %v1680 = vld [vmem:[%s1678 + $0x8] sm:$0xff]
      %v1681 = vld [vmem:[%s1678 + $0x10] sm:$0xff]
      %v1682 = vld [vmem:[%s1678 + $0x18] sm:$0xff]
      %v1683 = vld [vmem:[%s1678 + $0x20] sm:$0xff]
      %v1684 = vld [vmem:[%s1678 + $0x28] sm:$0xff]
      %v1685 = vld [vmem:[%s1678 + $0x30] sm:$0xff]
      %v1686 = vld [vmem:[%s1678 + $0x38] sm:$0xff]
      %v1688 = vsel %vm233, %v1642, 0
      %v1691 = vsel %vm233, %v1643, 0
      %v1694 = vsel %vm233, %v1644, 0
      %v1697 = vsel %vm233, %v1645, 0
      %v1700 = vsel %vm233, %v1646, 0
      %v1703 = vsel %vm233, %v1647, 0
      %v1706 = vsel %vm233, %v1648, 0
      %v1709 = vsel %vm233, %v1649, 0
      %v1712 = vsel %vm233, %v1650, 0
      %v1715 = vsel %vm233, %v1651, 0
      %v1718 = vsel %vm233, %v1652, 0
      %v1721 = vsel %vm233, %v1653, 0
      %v1724 = vsel %vm233, %v1654, 0
      %v1727 = vsel %vm233, %v1655, 0
      %v1730 = vsel %vm233, %v1656, 0
      %v1733 = vsel %vm233, %v1657, 0
      %v1736 = vsel %vm233, %v1658, 0
      %v1739 = vsel %vm233, %v1659, 0
      %v1742 = vsel %vm233, %v1660, 0
      %v1745 = vsel %vm233, %v1661, 0
      %v1748 = vsel %vm233, %v1662, 0
      %v1751 = vsel %vm233, %v1663, 0
      %v1754 = vsel %vm233, %v1664, 0
      %v1757 = vsel %vm233, %v1665, 0
      %v1760 = vsel %vm233, %v1666, 0
      %v1763 = vsel %vm233, %v1667, 0
      %v1766 = vsel %vm233, %v1668, 0
      %v1769 = vsel %vm233, %v1669, 0
      %v1772 = vsel %vm233, %v1670, 0
      %v1775 = vsel %vm233, %v1671, 0
      %v1778 = vsel %vm233, %v1672, 0
      %v1781 = vsel %vm233, %v1673, 0
      %v1784 = vsel %vm233, %v1674, 0
      %v1787 = vsel %vm233, %v1675, 0
      %v1790 = vsel %vm233, %v1676, 0
      %v1793 = vsel %vm233, %v1677, 0
      %1795 = vmatpush.msra.mxu0 0.0
      %1796 = vmatpush.msra.mxu0 0.0
      %1797 = vmatpush.msra.mxu0 0.0
      %1798 = vmatpush.msra.mxu0 0.0
      %1799 = vmatpush.msra.mxu0 0.0
      %1800 = vmatpush.msra.mxu0 0.0
      %1801 = vmatpush.msra.mxu0 0.0
      %1802 = vmatpush.msra.mxu0 0.0
      %1803 = vmatpush.msra.mxu0 %v1686
      %1804 = vmatpush.msra.mxu0 %v1685
      %1805 = vmatpush.msra.mxu0 %v1684
      %1806 = vmatpush.msra.mxu0 %v1683
      %1807 = vmatpush.msra.mxu0 %v1682
      %1808 = vmatpush.msra.mxu0 %v1681
      %1809 = vmatpush.msra.mxu0 %v1680
      %1810 = vmatpush.msra.mxu0 %v1679
      %1811 = vmatmul.f32.gmra.mxu0 %v1688
      %v1812 = vpop.f32.mrf.mxu0
      %v1813 = vadd.f32 0.0, %v1812
      %1814 = vmatmul.f32.gmra.mxu0 %v1691
      %v1815 = vpop.f32.mrf.mxu0
      %v1816 = vadd.f32 0.0, %v1815
      %1817 = vmatmul.f32.gmra.mxu0 %v1694
      %v1818 = vpop.f32.mrf.mxu0
      %v1819 = vadd.f32 0.0, %v1818
      %1820 = vmatmul.f32.gmra.mxu0 %v1697
      %v1821 = vpop.f32.mrf.mxu0
      %v1822 = vadd.f32 0.0, %v1821
      %1823 = vmatmul.f32.gmra.mxu0 %v1700
      %v1824 = vpop.f32.mrf.mxu0
      %v1825 = vadd.f32 0.0, %v1824
      %1826 = vmatmul.f32.gmra.mxu0 %v1703
      %v1827 = vpop.f32.mrf.mxu0
      %v1828 = vadd.f32 0.0, %v1827
      %1829 = vmatmul.f32.gmra.mxu0 %v1706
      %v1830 = vpop.f32.mrf.mxu0
      %v1831 = vadd.f32 0.0, %v1830
      %1832 = vmatmul.f32.gmra.mxu0 %v1709
      %v1833 = vpop.f32.mrf.mxu0
      %v1834 = vadd.f32 0.0, %v1833
      %1835 = vmatmul.f32.gmra.mxu0 %v1712
      %v1836 = vpop.f32.mrf.mxu0
      %v1837 = vadd.f32 0.0, %v1836
      %1838 = vmatmul.f32.gmra.mxu0 %v1715
      %v1839 = vpop.f32.mrf.mxu0
      %v1840 = vadd.f32 0.0, %v1839
      %1841 = vmatmul.f32.gmra.mxu0 %v1718
      %v1842 = vpop.f32.mrf.mxu0
      %v1843 = vadd.f32 0.0, %v1842
      %1844 = vmatmul.f32.gmra.mxu0 %v1721
      %v1845 = vpop.f32.mrf.mxu0
      %v1846 = vadd.f32 0.0, %v1845
      %1847 = vmatmul.f32.gmra.mxu0 %v1724
      %v1848 = vpop.f32.mrf.mxu0
      %v1849 = vadd.f32 0.0, %v1848
      %1850 = vmatmul.f32.gmra.mxu0 %v1727
      %v1851 = vpop.f32.mrf.mxu0
      %v1852 = vadd.f32 0.0, %v1851
      %1853 = vmatmul.f32.gmra.mxu0 %v1730
      %v1854 = vpop.f32.mrf.mxu0
      %v1855 = vadd.f32 0.0, %v1854
      %1856 = vmatmul.f32.gmra.mxu0 %v1733
      %v1857 = vpop.f32.mrf.mxu0
      %v1858 = vadd.f32 0.0, %v1857
      %1859 = vmatmul.f32.gmra.mxu0 %v1736
      %v1860 = vpop.f32.mrf.mxu0
      %v1861 = vadd.f32 0.0, %v1860
      %1862 = vmatmul.f32.gmra.mxu0 %v1739
      %v1863 = vpop.f32.mrf.mxu0
      %v1864 = vadd.f32 0.0, %v1863
      %1865 = vmatmul.f32.gmra.mxu0 %v1742
      %v1866 = vpop.f32.mrf.mxu0
      %v1867 = vadd.f32 0.0, %v1866
      %1868 = vmatmul.f32.gmra.mxu0 %v1745
      %v1869 = vpop.f32.mrf.mxu0
      %v1870 = vadd.f32 0.0, %v1869
      %1871 = vmatmul.f32.gmra.mxu0 %v1748
      %v1872 = vpop.f32.mrf.mxu0
      %v1873 = vadd.f32 0.0, %v1872
      %1874 = vmatmul.f32.gmra.mxu0 %v1751
      %v1875 = vpop.f32.mrf.mxu0
      %v1876 = vadd.f32 0.0, %v1875
      %1877 = vmatmul.f32.gmra.mxu0 %v1754
      %v1878 = vpop.f32.mrf.mxu0
      %v1879 = vadd.f32 0.0, %v1878
      %1880 = vmatmul.f32.gmra.mxu0 %v1757
      %v1881 = vpop.f32.mrf.mxu0
      %v1882 = vadd.f32 0.0, %v1881
      %1883 = vmatmul.f32.gmra.mxu0 %v1760
      %v1884 = vpop.f32.mrf.mxu0
      %v1885 = vadd.f32 0.0, %v1884
      %1886 = vmatmul.f32.gmra.mxu0 %v1763
      %v1887 = vpop.f32.mrf.mxu0
      %v1888 = vadd.f32 0.0, %v1887
      %1889 = vmatmul.f32.gmra.mxu0 %v1766
      %v1890 = vpop.f32.mrf.mxu0
      %v1891 = vadd.f32 0.0, %v1890
      %1892 = vmatmul.f32.gmra.mxu0 %v1769
      %v1893 = vpop.f32.mrf.mxu0
      %v1894 = vadd.f32 0.0, %v1893
      %1895 = vmatmul.f32.gmra.mxu0 %v1772
      %v1896 = vpop.f32.mrf.mxu0
      %v1897 = vadd.f32 0.0, %v1896
      %1898 = vmatmul.f32.gmra.mxu0 %v1775
      %v1899 = vpop.f32.mrf.mxu0
      %v1900 = vadd.f32 0.0, %v1899
      %1901 = vmatmul.f32.gmra.mxu0 %v1778
      %v1902 = vpop.f32.mrf.mxu0
      %v1903 = vadd.f32 0.0, %v1902
      %1904 = vmatmul.f32.gmra.mxu0 %v1781
      %v1905 = vpop.f32.mrf.mxu0
      %v1906 = vadd.f32 0.0, %v1905
      %1907 = vmatmul.f32.gmra.mxu0 %v1784
      %v1908 = vpop.f32.mrf.mxu0
      %v1909 = vadd.f32 0.0, %v1908
      %1910 = vmatmul.f32.gmra.mxu0 %v1787
      %v1911 = vpop.f32.mrf.mxu0
      %v1912 = vadd.f32 0.0, %v1911
      %1913 = vmatmul.f32.gmra.mxu0 %v1790
      %v1914 = vpop.f32.mrf.mxu0
      %v1915 = vadd.f32 0.0, %v1914
      %1916 = vmatmul.f32.gmra.mxu0 %v1793
      %v1917 = vpop.f32.mrf.mxu0
      %v1918 = vadd.f32 0.0, %v1917
      %1919 = vdwg.mxu0
      %v1920 = vadd.f32 %v1606, %v1813
      %v1921 = vadd.f32 %v1607, %v1816
      %v1922 = vadd.f32 %v1608, %v1819
      %v1923 = vadd.f32 %v1609, %v1822
      %v1924 = vadd.f32 %v1610, %v1825
      %v1925 = vadd.f32 %v1611, %v1828
      %v1926 = vadd.f32 %v1612, %v1831
      %v1927 = vadd.f32 %v1613, %v1834
      %v1928 = vadd.f32 %v1614, %v1837
      %v1929 = vadd.f32 %v1615, %v1840
      %v1930 = vadd.f32 %v1616, %v1843
      %v1931 = vadd.f32 %v1617, %v1846
      %v1932 = vadd.f32 %v1618, %v1849
      %v1933 = vadd.f32 %v1619, %v1852
      %v1934 = vadd.f32 %v1620, %v1855
      %v1935 = vadd.f32 %v1621, %v1858
      %v1936 = vadd.f32 %v1622, %v1861
      %v1937 = vadd.f32 %v1623, %v1864
      %v1938 = vadd.f32 %v1624, %v1867
      %v1939 = vadd.f32 %v1625, %v1870
      %v1940 = vadd.f32 %v1626, %v1873
      %v1941 = vadd.f32 %v1627, %v1876
      %v1942 = vadd.f32 %v1628, %v1879
      %v1943 = vadd.f32 %v1629, %v1882
      %v1944 = vadd.f32 %v1630, %v1885
      %v1945 = vadd.f32 %v1631, %v1888
      %v1946 = vadd.f32 %v1632, %v1891
      %v1947 = vadd.f32 %v1633, %v1894
      %v1948 = vadd.f32 %v1634, %v1897
      %v1949 = vadd.f32 %v1635, %v1900
      %v1950 = vadd.f32 %v1636, %v1903
      %v1951 = vadd.f32 %v1637, %v1906
      %v1952 = vadd.f32 %v1638, %v1909
      %v1953 = vadd.f32 %v1639, %v1912
      %v1954 = vadd.f32 %v1640, %v1915
      %v1955 = vadd.f32 %v1641, %v1918
      %v1956 = vld [vmem:[%s138 + $0x24] sm:$0xff]
      %v1957 = vld [vmem:[%s138 + $0x2c] sm:$0xff]
      %v1958 = vld [vmem:[%s138 + $0x34] sm:$0xff]
      %v1959 = vld [vmem:[%s138 + $0x3c] sm:$0xff]
      %v1960 = vld [vmem:[%s138 + $0x44] sm:$0xff]
      %v1961 = vld [vmem:[%s138 + $0x4c] sm:$0xff]
      %v1962 = vld [vmem:[%s138 + $0x54] sm:$0xff]
      %v1963 = vld [vmem:[%s138 + $0x5c] sm:$0xff]
      %v1964 = vld [vmem:[%s138 + $0x64] sm:$0xff]
      %v1965 = vld [vmem:[%s138 + $0x6c] sm:$0xff]
      %v1966 = vld [vmem:[%s138 + $0x74] sm:$0xff]
      %v1967 = vld [vmem:[%s138 + $0x7c] sm:$0xff]
      %v1968 = vld [vmem:[%s138 + $0x84] sm:$0xff]
      %v1969 = vld [vmem:[%s138 + $0x8c] sm:$0xff]
      %v1970 = vld [vmem:[%s138 + $0x94] sm:$0xff]
      %v1971 = vld [vmem:[%s138 + $0x9c] sm:$0xff]
      %v1972 = vld [vmem:[%s138 + $0xa4] sm:$0xff]
      %v1973 = vld [vmem:[%s138 + $0xac] sm:$0xff]
      %v1974 = vld [vmem:[%s138 + $0xb4] sm:$0xff]
      %v1975 = vld [vmem:[%s138 + $0xbc] sm:$0xff]
      %v1976 = vld [vmem:[%s138 + $0xc4] sm:$0xff]
      %v1977 = vld [vmem:[%s138 + $0xcc] sm:$0xff]
      %v1978 = vld [vmem:[%s138 + $0xd4] sm:$0xff]
      %v1979 = vld [vmem:[%s138 + $0xdc] sm:$0xff]
      %v1980 = vld [vmem:[%s138 + $0xe4] sm:$0xff]
      %v1981 = vld [vmem:[%s138 + $0xec] sm:$0xff]
      %v1982 = vld [vmem:[%s138 + $0xf4] sm:$0xff]
      %v1983 = vld [vmem:[%s138 + $0xfc] sm:$0xff]
      %v1984 = vld [vmem:[%s138 + $0x104] sm:$0xff]
      %v1985 = vld [vmem:[%s138 + $0x10c] sm:$0xff]
      %v1986 = vld [vmem:[%s138 + $0x114] sm:$0xff]
      %v1987 = vld [vmem:[%s138 + $0x11c] sm:$0xff]
      %v1988 = vld [vmem:[%s138 + $0x124] sm:$0xff]
      %v1989 = vld [vmem:[%s138 + $0x12c] sm:$0xff]
      %v1990 = vld [vmem:[%s138 + $0x134] sm:$0xff]
      %v1991 = vld [vmem:[%s138 + $0x13c] sm:$0xff]
      %s1992 = scalar_lea.vmem %s1, 384
      %v1993 = vld [vmem:[%s1992] sm:$0xff]
      %v1994 = vld [vmem:[%s1992 + $0x8] sm:$0xff]
      %v1995 = vld [vmem:[%s1992 + $0x10] sm:$0xff]
      %v1996 = vld [vmem:[%s1992 + $0x18] sm:$0xff]
      %v1997 = vld [vmem:[%s1992 + $0x20] sm:$0xff]
      %v1998 = vld [vmem:[%s1992 + $0x28] sm:$0xff]
      %v1999 = vld [vmem:[%s1992 + $0x30] sm:$0xff]
      %v2000 = vld [vmem:[%s1992 + $0x38] sm:$0xff]
      %v2002 = vsel %vm233, %v1956, 0
      %v2005 = vsel %vm233, %v1957, 0
      %v2008 = vsel %vm233, %v1958, 0
      %v2011 = vsel %vm233, %v1959, 0
      %v2014 = vsel %vm233, %v1960, 0
      %v2017 = vsel %vm233, %v1961, 0
      %v2020 = vsel %vm233, %v1962, 0
      %v2023 = vsel %vm233, %v1963, 0
      %v2026 = vsel %vm233, %v1964, 0
      %v2029 = vsel %vm233, %v1965, 0
      %v2032 = vsel %vm233, %v1966, 0
      %v2035 = vsel %vm233, %v1967, 0
      %v2038 = vsel %vm233, %v1968, 0
      %v2041 = vsel %vm233, %v1969, 0
      %v2044 = vsel %vm233, %v1970, 0
      %v2047 = vsel %vm233, %v1971, 0
      %v2050 = vsel %vm233, %v1972, 0
      %v2053 = vsel %vm233, %v1973, 0
      %v2056 = vsel %vm233, %v1974, 0
      %v2059 = vsel %vm233, %v1975, 0
      %v2062 = vsel %vm233, %v1976, 0
      %v2065 = vsel %vm233, %v1977, 0
      %v2068 = vsel %vm233, %v1978, 0
      %v2071 = vsel %vm233, %v1979, 0
      %v2074 = vsel %vm233, %v1980, 0
      %v2077 = vsel %vm233, %v1981, 0
      %v2080 = vsel %vm233, %v1982, 0
      %v2083 = vsel %vm233, %v1983, 0
      %v2086 = vsel %vm233, %v1984, 0
      %v2089 = vsel %vm233, %v1985, 0
      %v2092 = vsel %vm233, %v1986, 0
      %v2095 = vsel %vm233, %v1987, 0
      %v2098 = vsel %vm233, %v1988, 0
      %v2101 = vsel %vm233, %v1989, 0
      %v2104 = vsel %vm233, %v1990, 0
      %v2107 = vsel %vm233, %v1991, 0
      %2109 = vmatpush.msra.mxu0 0.0
      %2110 = vmatpush.msra.mxu0 0.0
      %2111 = vmatpush.msra.mxu0 0.0
      %2112 = vmatpush.msra.mxu0 0.0
      %2113 = vmatpush.msra.mxu0 0.0
      %2114 = vmatpush.msra.mxu0 0.0
      %2115 = vmatpush.msra.mxu0 0.0
      %2116 = vmatpush.msra.mxu0 0.0
      %2117 = vmatpush.msra.mxu0 %v2000
      %2118 = vmatpush.msra.mxu0 %v1999
      %2119 = vmatpush.msra.mxu0 %v1998
      %2120 = vmatpush.msra.mxu0 %v1997
      %2121 = vmatpush.msra.mxu0 %v1996
      %2122 = vmatpush.msra.mxu0 %v1995
      %2123 = vmatpush.msra.mxu0 %v1994
      %2124 = vmatpush.msra.mxu0 %v1993
      %2125 = vmatmul.f32.gmra.mxu0 %v2002
      %v2126 = vpop.f32.mrf.mxu0
      %v2127 = vadd.f32 0.0, %v2126
      %2128 = vmatmul.f32.gmra.mxu0 %v2005
      %v2129 = vpop.f32.mrf.mxu0
      %v2130 = vadd.f32 0.0, %v2129
      %2131 = vmatmul.f32.gmra.mxu0 %v2008
      %v2132 = vpop.f32.mrf.mxu0
      %v2133 = vadd.f32 0.0, %v2132
      %2134 = vmatmul.f32.gmra.mxu0 %v2011
      %v2135 = vpop.f32.mrf.mxu0
      %v2136 = vadd.f32 0.0, %v2135
      %2137 = vmatmul.f32.gmra.mxu0 %v2014
      %v2138 = vpop.f32.mrf.mxu0
      %v2139 = vadd.f32 0.0, %v2138
      %2140 = vmatmul.f32.gmra.mxu0 %v2017
      %v2141 = vpop.f32.mrf.mxu0
      %v2142 = vadd.f32 0.0, %v2141
      %2143 = vmatmul.f32.gmra.mxu0 %v2020
      %v2144 = vpop.f32.mrf.mxu0
      %v2145 = vadd.f32 0.0, %v2144
      %2146 = vmatmul.f32.gmra.mxu0 %v2023
      %v2147 = vpop.f32.mrf.mxu0
      %v2148 = vadd.f32 0.0, %v2147
      %2149 = vmatmul.f32.gmra.mxu0 %v2026
      %v2150 = vpop.f32.mrf.mxu0
      %v2151 = vadd.f32 0.0, %v2150
      %2152 = vmatmul.f32.gmra.mxu0 %v2029
      %v2153 = vpop.f32.mrf.mxu0
      %v2154 = vadd.f32 0.0, %v2153
      %2155 = vmatmul.f32.gmra.mxu0 %v2032
      %v2156 = vpop.f32.mrf.mxu0
      %v2157 = vadd.f32 0.0, %v2156
      %2158 = vmatmul.f32.gmra.mxu0 %v2035
      %v2159 = vpop.f32.mrf.mxu0
      %v2160 = vadd.f32 0.0, %v2159
      %2161 = vmatmul.f32.gmra.mxu0 %v2038
      %v2162 = vpop.f32.mrf.mxu0
      %v2163 = vadd.f32 0.0, %v2162
      %2164 = vmatmul.f32.gmra.mxu0 %v2041
      %v2165 = vpop.f32.mrf.mxu0
      %v2166 = vadd.f32 0.0, %v2165
      %2167 = vmatmul.f32.gmra.mxu0 %v2044
      %v2168 = vpop.f32.mrf.mxu0
      %v2169 = vadd.f32 0.0, %v2168
      %2170 = vmatmul.f32.gmra.mxu0 %v2047
      %v2171 = vpop.f32.mrf.mxu0
      %v2172 = vadd.f32 0.0, %v2171
      %2173 = vmatmul.f32.gmra.mxu0 %v2050
      %v2174 = vpop.f32.mrf.mxu0
      %v2175 = vadd.f32 0.0, %v2174
      %2176 = vmatmul.f32.gmra.mxu0 %v2053
      %v2177 = vpop.f32.mrf.mxu0
      %v2178 = vadd.f32 0.0, %v2177
      %2179 = vmatmul.f32.gmra.mxu0 %v2056
      %v2180 = vpop.f32.mrf.mxu0
      %v2181 = vadd.f32 0.0, %v2180
      %2182 = vmatmul.f32.gmra.mxu0 %v2059
      %v2183 = vpop.f32.mrf.mxu0
      %v2184 = vadd.f32 0.0, %v2183
      %2185 = vmatmul.f32.gmra.mxu0 %v2062
      %v2186 = vpop.f32.mrf.mxu0
      %v2187 = vadd.f32 0.0, %v2186
      %2188 = vmatmul.f32.gmra.mxu0 %v2065
      %v2189 = vpop.f32.mrf.mxu0
      %v2190 = vadd.f32 0.0, %v2189
      %2191 = vmatmul.f32.gmra.mxu0 %v2068
      %v2192 = vpop.f32.mrf.mxu0
      %v2193 = vadd.f32 0.0, %v2192
      %2194 = vmatmul.f32.gmra.mxu0 %v2071
      %v2195 = vpop.f32.mrf.mxu0
      %v2196 = vadd.f32 0.0, %v2195
      %2197 = vmatmul.f32.gmra.mxu0 %v2074
      %v2198 = vpop.f32.mrf.mxu0
      %v2199 = vadd.f32 0.0, %v2198
      %2200 = vmatmul.f32.gmra.mxu0 %v2077
      %v2201 = vpop.f32.mrf.mxu0
      %v2202 = vadd.f32 0.0, %v2201
      %2203 = vmatmul.f32.gmra.mxu0 %v2080
      %v2204 = vpop.f32.mrf.mxu0
      %v2205 = vadd.f32 0.0, %v2204
      %2206 = vmatmul.f32.gmra.mxu0 %v2083
      %v2207 = vpop.f32.mrf.mxu0
      %v2208 = vadd.f32 0.0, %v2207
      %2209 = vmatmul.f32.gmra.mxu0 %v2086
      %v2210 = vpop.f32.mrf.mxu0
      %v2211 = vadd.f32 0.0, %v2210
      %2212 = vmatmul.f32.gmra.mxu0 %v2089
      %v2213 = vpop.f32.mrf.mxu0
      %v2214 = vadd.f32 0.0, %v2213
      %2215 = vmatmul.f32.gmra.mxu0 %v2092
      %v2216 = vpop.f32.mrf.mxu0
      %v2217 = vadd.f32 0.0, %v2216
      %2218 = vmatmul.f32.gmra.mxu0 %v2095
      %v2219 = vpop.f32.mrf.mxu0
      %v2220 = vadd.f32 0.0, %v2219
      %2221 = vmatmul.f32.gmra.mxu0 %v2098
      %v2222 = vpop.f32.mrf.mxu0
      %v2223 = vadd.f32 0.0, %v2222
      %2224 = vmatmul.f32.gmra.mxu0 %v2101
      %v2225 = vpop.f32.mrf.mxu0
      %v2226 = vadd.f32 0.0, %v2225
      %2227 = vmatmul.f32.gmra.mxu0 %v2104
      %v2228 = vpop.f32.mrf.mxu0
      %v2229 = vadd.f32 0.0, %v2228
      %2230 = vmatmul.f32.gmra.mxu0 %v2107
      %v2231 = vpop.f32.mrf.mxu0
      %v2232 = vadd.f32 0.0, %v2231
      %2233 = vdwg.mxu0
      %v2234 = vadd.f32 %v1920, %v2127
      %v2235 = vadd.f32 %v1921, %v2130
      %v2236 = vadd.f32 %v1922, %v2133
      %v2237 = vadd.f32 %v1923, %v2136
      %v2238 = vadd.f32 %v1924, %v2139
      %v2239 = vadd.f32 %v1925, %v2142
      %v2240 = vadd.f32 %v1926, %v2145
      %v2241 = vadd.f32 %v1927, %v2148
      %v2242 = vadd.f32 %v1928, %v2151
      %v2243 = vadd.f32 %v1929, %v2154
      %v2244 = vadd.f32 %v1930, %v2157
      %v2245 = vadd.f32 %v1931, %v2160
      %v2246 = vadd.f32 %v1932, %v2163
      %v2247 = vadd.f32 %v1933, %v2166
      %v2248 = vadd.f32 %v1934, %v2169
      %v2249 = vadd.f32 %v1935, %v2172
      %v2250 = vadd.f32 %v1936, %v2175
      %v2251 = vadd.f32 %v1937, %v2178
      %v2252 = vadd.f32 %v1938, %v2181
      %v2253 = vadd.f32 %v1939, %v2184
      %v2254 = vadd.f32 %v1940, %v2187
      %v2255 = vadd.f32 %v1941, %v2190
      %v2256 = vadd.f32 %v1942, %v2193
      %v2257 = vadd.f32 %v1943, %v2196
      %v2258 = vadd.f32 %v1944, %v2199
      %v2259 = vadd.f32 %v1945, %v2202
      %v2260 = vadd.f32 %v1946, %v2205
      %v2261 = vadd.f32 %v1947, %v2208
      %v2262 = vadd.f32 %v1948, %v2211
      %v2263 = vadd.f32 %v1949, %v2214
      %v2264 = vadd.f32 %v1950, %v2217
      %v2265 = vadd.f32 %v1951, %v2220
      %v2266 = vadd.f32 %v1952, %v2223
      %v2267 = vadd.f32 %v1953, %v2226
      %v2268 = vadd.f32 %v1954, %v2229
      %v2269 = vadd.f32 %v1955, %v2232
      %v2270 = vld [vmem:[%s138 + $0x25] sm:$0xff]
      %v2271 = vld [vmem:[%s138 + $0x2d] sm:$0xff]
      %v2272 = vld [vmem:[%s138 + $0x35] sm:$0xff]
      %v2273 = vld [vmem:[%s138 + $0x3d] sm:$0xff]
      %v2274 = vld [vmem:[%s138 + $0x45] sm:$0xff]
      %v2275 = vld [vmem:[%s138 + $0x4d] sm:$0xff]
      %v2276 = vld [vmem:[%s138 + $0x55] sm:$0xff]
      %v2277 = vld [vmem:[%s138 + $0x5d] sm:$0xff]
      %v2278 = vld [vmem:[%s138 + $0x65] sm:$0xff]
      %v2279 = vld [vmem:[%s138 + $0x6d] sm:$0xff]
      %v2280 = vld [vmem:[%s138 + $0x75] sm:$0xff]
      %v2281 = vld [vmem:[%s138 + $0x7d] sm:$0xff]
      %v2282 = vld [vmem:[%s138 + $0x85] sm:$0xff]
      %v2283 = vld [vmem:[%s138 + $0x8d] sm:$0xff]
      %v2284 = vld [vmem:[%s138 + $0x95] sm:$0xff]
      %v2285 = vld [vmem:[%s138 + $0x9d] sm:$0xff]
      %v2286 = vld [vmem:[%s138 + $0xa5] sm:$0xff]
      %v2287 = vld [vmem:[%s138 + $0xad] sm:$0xff]
      %v2288 = vld [vmem:[%s138 + $0xb5] sm:$0xff]
      %v2289 = vld [vmem:[%s138 + $0xbd] sm:$0xff]
      %v2290 = vld [vmem:[%s138 + $0xc5] sm:$0xff]
      %v2291 = vld [vmem:[%s138 + $0xcd] sm:$0xff]
      %v2292 = vld [vmem:[%s138 + $0xd5] sm:$0xff]
      %v2293 = vld [vmem:[%s138 + $0xdd] sm:$0xff]
      %v2294 = vld [vmem:[%s138 + $0xe5] sm:$0xff]
      %v2295 = vld [vmem:[%s138 + $0xed] sm:$0xff]
      %v2296 = vld [vmem:[%s138 + $0xf5] sm:$0xff]
      %v2297 = vld [vmem:[%s138 + $0xfd] sm:$0xff]
      %v2298 = vld [vmem:[%s138 + $0x105] sm:$0xff]
      %v2299 = vld [vmem:[%s138 + $0x10d] sm:$0xff]
      %v2300 = vld [vmem:[%s138 + $0x115] sm:$0xff]
      %v2301 = vld [vmem:[%s138 + $0x11d] sm:$0xff]
      %v2302 = vld [vmem:[%s138 + $0x125] sm:$0xff]
      %v2303 = vld [vmem:[%s138 + $0x12d] sm:$0xff]
      %v2304 = vld [vmem:[%s138 + $0x135] sm:$0xff]
      %v2305 = vld [vmem:[%s138 + $0x13d] sm:$0xff]
      %s2306 = scalar_lea.vmem %s1, 448
      %v2307 = vld [vmem:[%s2306] sm:$0xff]
      %v2308 = vld [vmem:[%s2306 + $0x8] sm:$0xff]
      %v2309 = vld [vmem:[%s2306 + $0x10] sm:$0xff]
      %v2310 = vld [vmem:[%s2306 + $0x18] sm:$0xff]
      %v2311 = vld [vmem:[%s2306 + $0x20] sm:$0xff]
      %v2312 = vld [vmem:[%s2306 + $0x28] sm:$0xff]
      %v2313 = vld [vmem:[%s2306 + $0x30] sm:$0xff]
      %v2314 = vld [vmem:[%s2306 + $0x38] sm:$0xff]
      %v2316 = vsel %vm233, %v2270, 0
      %v2319 = vsel %vm233, %v2271, 0
      %v2322 = vsel %vm233, %v2272, 0
      %v2325 = vsel %vm233, %v2273, 0
      %v2328 = vsel %vm233, %v2274, 0
      %v2331 = vsel %vm233, %v2275, 0
      %v2334 = vsel %vm233, %v2276, 0
      %v2337 = vsel %vm233, %v2277, 0
      %v2340 = vsel %vm233, %v2278, 0
      %v2343 = vsel %vm233, %v2279, 0
      %v2346 = vsel %vm233, %v2280, 0
      %v2349 = vsel %vm233, %v2281, 0
      %v2352 = vsel %vm233, %v2282, 0
      %v2355 = vsel %vm233, %v2283, 0
      %v2358 = vsel %vm233, %v2284, 0
      %v2361 = vsel %vm233, %v2285, 0
      %v2364 = vsel %vm233, %v2286, 0
      %v2367 = vsel %vm233, %v2287, 0
      %v2370 = vsel %vm233, %v2288, 0
      %v2373 = vsel %vm233, %v2289, 0
      %v2376 = vsel %vm233, %v2290, 0
      %v2379 = vsel %vm233, %v2291, 0
      %v2382 = vsel %vm233, %v2292, 0
      %v2385 = vsel %vm233, %v2293, 0
      %v2388 = vsel %vm233, %v2294, 0
      %v2391 = vsel %vm233, %v2295, 0
      %v2394 = vsel %vm233, %v2296, 0
      %v2397 = vsel %vm233, %v2297, 0
      %v2400 = vsel %vm233, %v2298, 0
      %v2403 = vsel %vm233, %v2299, 0
      %v2406 = vsel %vm233, %v2300, 0
      %v2409 = vsel %vm233, %v2301, 0
      %v2412 = vsel %vm233, %v2302, 0
      %v2415 = vsel %vm233, %v2303, 0
      %v2418 = vsel %vm233, %v2304, 0
      %v2421 = vsel %vm233, %v2305, 0
      %2423 = vmatpush.msra.mxu0 0.0
      %2424 = vmatpush.msra.mxu0 0.0
      %2425 = vmatpush.msra.mxu0 0.0
      %2426 = vmatpush.msra.mxu0 0.0
      %2427 = vmatpush.msra.mxu0 0.0
      %2428 = vmatpush.msra.mxu0 0.0
      %2429 = vmatpush.msra.mxu0 0.0
      %2430 = vmatpush.msra.mxu0 0.0
      %2431 = vmatpush.msra.mxu0 %v2314
      %2432 = vmatpush.msra.mxu0 %v2313
      %2433 = vmatpush.msra.mxu0 %v2312
      %2434 = vmatpush.msra.mxu0 %v2311
      %2435 = vmatpush.msra.mxu0 %v2310
      %2436 = vmatpush.msra.mxu0 %v2309
      %2437 = vmatpush.msra.mxu0 %v2308
      %2438 = vmatpush.msra.mxu0 %v2307
      %2439 = vmatmul.f32.gmra.mxu0 %v2316
      %v2440 = vpop.f32.mrf.mxu0
      %v2441 = vadd.f32 0.0, %v2440
      %2442 = vmatmul.f32.gmra.mxu0 %v2319
      %v2443 = vpop.f32.mrf.mxu0
      %v2444 = vadd.f32 0.0, %v2443
      %2445 = vmatmul.f32.gmra.mxu0 %v2322
      %v2446 = vpop.f32.mrf.mxu0
      %v2447 = vadd.f32 0.0, %v2446
      %2448 = vmatmul.f32.gmra.mxu0 %v2325
      %v2449 = vpop.f32.mrf.mxu0
      %v2450 = vadd.f32 0.0, %v2449
      %2451 = vmatmul.f32.gmra.mxu0 %v2328
      %v2452 = vpop.f32.mrf.mxu0
      %v2453 = vadd.f32 0.0, %v2452
      %2454 = vmatmul.f32.gmra.mxu0 %v2331
      %v2455 = vpop.f32.mrf.mxu0
      %v2456 = vadd.f32 0.0, %v2455
      %2457 = vmatmul.f32.gmra.mxu0 %v2334
      %v2458 = vpop.f32.mrf.mxu0
      %v2459 = vadd.f32 0.0, %v2458
      %2460 = vmatmul.f32.gmra.mxu0 %v2337
      %v2461 = vpop.f32.mrf.mxu0
      %v2462 = vadd.f32 0.0, %v2461
      %2463 = vmatmul.f32.gmra.mxu0 %v2340
      %v2464 = vpop.f32.mrf.mxu0
      %v2465 = vadd.f32 0.0, %v2464
      %2466 = vmatmul.f32.gmra.mxu0 %v2343
      %v2467 = vpop.f32.mrf.mxu0
      %v2468 = vadd.f32 0.0, %v2467
      %2469 = vmatmul.f32.gmra.mxu0 %v2346
      %v2470 = vpop.f32.mrf.mxu0
      %v2471 = vadd.f32 0.0, %v2470
      %2472 = vmatmul.f32.gmra.mxu0 %v2349
      %v2473 = vpop.f32.mrf.mxu0
      %v2474 = vadd.f32 0.0, %v2473
      %2475 = vmatmul.f32.gmra.mxu0 %v2352
      %v2476 = vpop.f32.mrf.mxu0
      %v2477 = vadd.f32 0.0, %v2476
      %2478 = vmatmul.f32.gmra.mxu0 %v2355
      %v2479 = vpop.f32.mrf.mxu0
      %v2480 = vadd.f32 0.0, %v2479
      %2481 = vmatmul.f32.gmra.mxu0 %v2358
      %v2482 = vpop.f32.mrf.mxu0
      %v2483 = vadd.f32 0.0, %v2482
      %2484 = vmatmul.f32.gmra.mxu0 %v2361
      %v2485 = vpop.f32.mrf.mxu0
      %v2486 = vadd.f32 0.0, %v2485
      %2487 = vmatmul.f32.gmra.mxu0 %v2364
      %v2488 = vpop.f32.mrf.mxu0
      %v2489 = vadd.f32 0.0, %v2488
      %2490 = vmatmul.f32.gmra.mxu0 %v2367
      %v2491 = vpop.f32.mrf.mxu0
      %v2492 = vadd.f32 0.0, %v2491
      %2493 = vmatmul.f32.gmra.mxu0 %v2370
      %v2494 = vpop.f32.mrf.mxu0
      %v2495 = vadd.f32 0.0, %v2494
      %2496 = vmatmul.f32.gmra.mxu0 %v2373
      %v2497 = vpop.f32.mrf.mxu0
      %v2498 = vadd.f32 0.0, %v2497
      %2499 = vmatmul.f32.gmra.mxu0 %v2376
      %v2500 = vpop.f32.mrf.mxu0
      %v2501 = vadd.f32 0.0, %v2500
      %2502 = vmatmul.f32.gmra.mxu0 %v2379
      %v2503 = vpop.f32.mrf.mxu0
      %v2504 = vadd.f32 0.0, %v2503
      %2505 = vmatmul.f32.gmra.mxu0 %v2382
      %v2506 = vpop.f32.mrf.mxu0
      %v2507 = vadd.f32 0.0, %v2506
      %2508 = vmatmul.f32.gmra.mxu0 %v2385
      %v2509 = vpop.f32.mrf.mxu0
      %v2510 = vadd.f32 0.0, %v2509
      %2511 = vmatmul.f32.gmra.mxu0 %v2388
      %v2512 = vpop.f32.mrf.mxu0
      %v2513 = vadd.f32 0.0, %v2512
      %2514 = vmatmul.f32.gmra.mxu0 %v2391
      %v2515 = vpop.f32.mrf.mxu0
      %v2516 = vadd.f32 0.0, %v2515
      %2517 = vmatmul.f32.gmra.mxu0 %v2394
      %v2518 = vpop.f32.mrf.mxu0
      %v2519 = vadd.f32 0.0, %v2518
      %2520 = vmatmul.f32.gmra.mxu0 %v2397
      %v2521 = vpop.f32.mrf.mxu0
      %v2522 = vadd.f32 0.0, %v2521
      %2523 = vmatmul.f32.gmra.mxu0 %v2400
      %v2524 = vpop.f32.mrf.mxu0
      %v2525 = vadd.f32 0.0, %v2524
      %2526 = vmatmul.f32.gmra.mxu0 %v2403
      %v2527 = vpop.f32.mrf.mxu0
      %v2528 = vadd.f32 0.0, %v2527
      %2529 = vmatmul.f32.gmra.mxu0 %v2406
      %v2530 = vpop.f32.mrf.mxu0
      %v2531 = vadd.f32 0.0, %v2530
      %2532 = vmatmul.f32.gmra.mxu0 %v2409
      %v2533 = vpop.f32.mrf.mxu0
      %v2534 = vadd.f32 0.0, %v2533
      %2535 = vmatmul.f32.gmra.mxu0 %v2412
      %v2536 = vpop.f32.mrf.mxu0
      %v2537 = vadd.f32 0.0, %v2536
      %2538 = vmatmul.f32.gmra.mxu0 %v2415
      %v2539 = vpop.f32.mrf.mxu0
      %v2540 = vadd.f32 0.0, %v2539
      %2541 = vmatmul.f32.gmra.mxu0 %v2418
      %v2542 = vpop.f32.mrf.mxu0
      %v2543 = vadd.f32 0.0, %v2542
      %2544 = vmatmul.f32.gmra.mxu0 %v2421
      %v2545 = vpop.f32.mrf.mxu0
      %v2546 = vadd.f32 0.0, %v2545
      %2547 = vdwg.mxu0
      %v2548 = vadd.f32 %v2234, %v2441
      %v2549 = vadd.f32 %v2235, %v2444
      %v2550 = vadd.f32 %v2236, %v2447
      %v2551 = vadd.f32 %v2237, %v2450
      %v2552 = vadd.f32 %v2238, %v2453
      %v2553 = vadd.f32 %v2239, %v2456
      %v2554 = vadd.f32 %v2240, %v2459
      %v2555 = vadd.f32 %v2241, %v2462
      %v2556 = vadd.f32 %v2242, %v2465
      %v2557 = vadd.f32 %v2243, %v2468
      %v2558 = vadd.f32 %v2244, %v2471
      %v2559 = vadd.f32 %v2245, %v2474
      %v2560 = vadd.f32 %v2246, %v2477
      %v2561 = vadd.f32 %v2247, %v2480
      %v2562 = vadd.f32 %v2248, %v2483
      %v2563 = vadd.f32 %v2249, %v2486
      %v2564 = vadd.f32 %v2250, %v2489
      %v2565 = vadd.f32 %v2251, %v2492
      %v2566 = vadd.f32 %v2252, %v2495
      %v2567 = vadd.f32 %v2253, %v2498
      %v2568 = vadd.f32 %v2254, %v2501
      %v2569 = vadd.f32 %v2255, %v2504
      %v2570 = vadd.f32 %v2256, %v2507
      %v2571 = vadd.f32 %v2257, %v2510
      %v2572 = vadd.f32 %v2258, %v2513
      %v2573 = vadd.f32 %v2259, %v2516
      %v2574 = vadd.f32 %v2260, %v2519
      %v2575 = vadd.f32 %v2261, %v2522
      %v2576 = vadd.f32 %v2262, %v2525
      %v2577 = vadd.f32 %v2263, %v2528
      %v2578 = vadd.f32 %v2264, %v2531
      %v2579 = vadd.f32 %v2265, %v2534
      %v2580 = vadd.f32 %v2266, %v2537
      %v2581 = vadd.f32 %v2267, %v2540
      %v2582 = vadd.f32 %v2268, %v2543
      %v2583 = vadd.f32 %v2269, %v2546
      %v2584 = vld [vmem:[%s138 + $0x26] sm:$0xff]
      %v2585 = vld [vmem:[%s138 + $0x2e] sm:$0xff]
      %v2586 = vld [vmem:[%s138 + $0x36] sm:$0xff]
      %v2587 = vld [vmem:[%s138 + $0x3e] sm:$0xff]
      %v2588 = vld [vmem:[%s138 + $0x46] sm:$0xff]
      %v2589 = vld [vmem:[%s138 + $0x4e] sm:$0xff]
      %v2590 = vld [vmem:[%s138 + $0x56] sm:$0xff]
      %v2591 = vld [vmem:[%s138 + $0x5e] sm:$0xff]
      %v2592 = vld [vmem:[%s138 + $0x66] sm:$0xff]
      %v2593 = vld [vmem:[%s138 + $0x6e] sm:$0xff]
      %v2594 = vld [vmem:[%s138 + $0x76] sm:$0xff]
      %v2595 = vld [vmem:[%s138 + $0x7e] sm:$0xff]
      %v2596 = vld [vmem:[%s138 + $0x86] sm:$0xff]
      %v2597 = vld [vmem:[%s138 + $0x8e] sm:$0xff]
      %v2598 = vld [vmem:[%s138 + $0x96] sm:$0xff]
      %v2599 = vld [vmem:[%s138 + $0x9e] sm:$0xff]
      %v2600 = vld [vmem:[%s138 + $0xa6] sm:$0xff]
      %v2601 = vld [vmem:[%s138 + $0xae] sm:$0xff]
      %v2602 = vld [vmem:[%s138 + $0xb6] sm:$0xff]
      %v2603 = vld [vmem:[%s138 + $0xbe] sm:$0xff]
      %v2604 = vld [vmem:[%s138 + $0xc6] sm:$0xff]
      %v2605 = vld [vmem:[%s138 + $0xce] sm:$0xff]
      %v2606 = vld [vmem:[%s138 + $0xd6] sm:$0xff]
      %v2607 = vld [vmem:[%s138 + $0xde] sm:$0xff]
      %v2608 = vld [vmem:[%s138 + $0xe6] sm:$0xff]
      %v2609 = vld [vmem:[%s138 + $0xee] sm:$0xff]
      %v2610 = vld [vmem:[%s138 + $0xf6] sm:$0xff]
      %v2611 = vld [vmem:[%s138 + $0xfe] sm:$0xff]
      %v2612 = vld [vmem:[%s138 + $0x106] sm:$0xff]
      %v2613 = vld [vmem:[%s138 + $0x10e] sm:$0xff]
      %v2614 = vld [vmem:[%s138 + $0x116] sm:$0xff]
      %v2615 = vld [vmem:[%s138 + $0x11e] sm:$0xff]
      %v2616 = vld [vmem:[%s138 + $0x126] sm:$0xff]
      %v2617 = vld [vmem:[%s138 + $0x12e] sm:$0xff]
      %v2618 = vld [vmem:[%s138 + $0x136] sm:$0xff]
      %v2619 = vld [vmem:[%s138 + $0x13e] sm:$0xff]
      %s2620 = scalar_lea.vmem %s1, 512
      %v2621 = vld [vmem:[%s2620] sm:$0xff]
      %v2622 = vld [vmem:[%s2620 + $0x8] sm:$0xff]
      %v2623 = vld [vmem:[%s2620 + $0x10] sm:$0xff]
      %v2624 = vld [vmem:[%s2620 + $0x18] sm:$0xff]
      %v2625 = vld [vmem:[%s2620 + $0x20] sm:$0xff]
      %v2626 = vld [vmem:[%s2620 + $0x28] sm:$0xff]
      %v2627 = vld [vmem:[%s2620 + $0x30] sm:$0xff]
      %v2628 = vld [vmem:[%s2620 + $0x38] sm:$0xff]
      %v2630 = vsel %vm233, %v2584, 0
      %v2633 = vsel %vm233, %v2585, 0
      %v2636 = vsel %vm233, %v2586, 0
      %v2639 = vsel %vm233, %v2587, 0
      %v2642 = vsel %vm233, %v2588, 0
      %v2645 = vsel %vm233, %v2589, 0
      %v2648 = vsel %vm233, %v2590, 0
      %v2651 = vsel %vm233, %v2591, 0
      %v2654 = vsel %vm233, %v2592, 0
      %v2657 = vsel %vm233, %v2593, 0
      %v2660 = vsel %vm233, %v2594, 0
      %v2663 = vsel %vm233, %v2595, 0
      %v2666 = vsel %vm233, %v2596, 0
      %v2669 = vsel %vm233, %v2597, 0
      %v2672 = vsel %vm233, %v2598, 0
      %v2675 = vsel %vm233, %v2599, 0
      %v2678 = vsel %vm233, %v2600, 0
      %v2681 = vsel %vm233, %v2601, 0
      %v2684 = vsel %vm233, %v2602, 0
      %v2687 = vsel %vm233, %v2603, 0
      %v2690 = vsel %vm233, %v2604, 0
      %v2693 = vsel %vm233, %v2605, 0
      %v2696 = vsel %vm233, %v2606, 0
      %v2699 = vsel %vm233, %v2607, 0
      %v2702 = vsel %vm233, %v2608, 0
      %v2705 = vsel %vm233, %v2609, 0
      %v2708 = vsel %vm233, %v2610, 0
      %v2711 = vsel %vm233, %v2611, 0
      %v2714 = vsel %vm233, %v2612, 0
      %v2717 = vsel %vm233, %v2613, 0
      %v2720 = vsel %vm233, %v2614, 0
      %v2723 = vsel %vm233, %v2615, 0
      %v2726 = vsel %vm233, %v2616, 0
      %v2729 = vsel %vm233, %v2617, 0
      %v2732 = vsel %vm233, %v2618, 0
      %v2735 = vsel %vm233, %v2619, 0
      %2737 = vmatpush.msra.mxu0 0.0
      %2738 = vmatpush.msra.mxu0 0.0
      %2739 = vmatpush.msra.mxu0 0.0
      %2740 = vmatpush.msra.mxu0 0.0
      %2741 = vmatpush.msra.mxu0 0.0
      %2742 = vmatpush.msra.mxu0 0.0
      %2743 = vmatpush.msra.mxu0 0.0
      %2744 = vmatpush.msra.mxu0 0.0
      %2745 = vmatpush.msra.mxu0 %v2628
      %2746 = vmatpush.msra.mxu0 %v2627
      %2747 = vmatpush.msra.mxu0 %v2626
      %2748 = vmatpush.msra.mxu0 %v2625
      %2749 = vmatpush.msra.mxu0 %v2624
      %2750 = vmatpush.msra.mxu0 %v2623
      %2751 = vmatpush.msra.mxu0 %v2622
      %2752 = vmatpush.msra.mxu0 %v2621
      %2753 = vmatmul.f32.gmra.mxu0 %v2630
      %v2754 = vpop.f32.mrf.mxu0
      %v2755 = vadd.f32 0.0, %v2754
      %2756 = vmatmul.f32.gmra.mxu0 %v2633
      %v2757 = vpop.f32.mrf.mxu0
      %v2758 = vadd.f32 0.0, %v2757
      %2759 = vmatmul.f32.gmra.mxu0 %v2636
      %v2760 = vpop.f32.mrf.mxu0
      %v2761 = vadd.f32 0.0, %v2760
      %2762 = vmatmul.f32.gmra.mxu0 %v2639
      %v2763 = vpop.f32.mrf.mxu0
      %v2764 = vadd.f32 0.0, %v2763
      %2765 = vmatmul.f32.gmra.mxu0 %v2642
      %v2766 = vpop.f32.mrf.mxu0
      %v2767 = vadd.f32 0.0, %v2766
      %2768 = vmatmul.f32.gmra.mxu0 %v2645
      %v2769 = vpop.f32.mrf.mxu0
      %v2770 = vadd.f32 0.0, %v2769
      %2771 = vmatmul.f32.gmra.mxu0 %v2648
      %v2772 = vpop.f32.mrf.mxu0
      %v2773 = vadd.f32 0.0, %v2772
      %2774 = vmatmul.f32.gmra.mxu0 %v2651
      %v2775 = vpop.f32.mrf.mxu0
      %v2776 = vadd.f32 0.0, %v2775
      %2777 = vmatmul.f32.gmra.mxu0 %v2654
      %v2778 = vpop.f32.mrf.mxu0
      %v2779 = vadd.f32 0.0, %v2778
      %2780 = vmatmul.f32.gmra.mxu0 %v2657
      %v2781 = vpop.f32.mrf.mxu0
      %v2782 = vadd.f32 0.0, %v2781
      %2783 = vmatmul.f32.gmra.mxu0 %v2660
      %v2784 = vpop.f32.mrf.mxu0
      %v2785 = vadd.f32 0.0, %v2784
      %2786 = vmatmul.f32.gmra.mxu0 %v2663
      %v2787 = vpop.f32.mrf.mxu0
      %v2788 = vadd.f32 0.0, %v2787
      %2789 = vmatmul.f32.gmra.mxu0 %v2666
      %v2790 = vpop.f32.mrf.mxu0
      %v2791 = vadd.f32 0.0, %v2790
      %2792 = vmatmul.f32.gmra.mxu0 %v2669
      %v2793 = vpop.f32.mrf.mxu0
      %v2794 = vadd.f32 0.0, %v2793
      %2795 = vmatmul.f32.gmra.mxu0 %v2672
      %v2796 = vpop.f32.mrf.mxu0
      %v2797 = vadd.f32 0.0, %v2796
      %2798 = vmatmul.f32.gmra.mxu0 %v2675
      %v2799 = vpop.f32.mrf.mxu0
      %v2800 = vadd.f32 0.0, %v2799
      %2801 = vmatmul.f32.gmra.mxu0 %v2678
      %v2802 = vpop.f32.mrf.mxu0
      %v2803 = vadd.f32 0.0, %v2802
      %2804 = vmatmul.f32.gmra.mxu0 %v2681
      %v2805 = vpop.f32.mrf.mxu0
      %v2806 = vadd.f32 0.0, %v2805
      %2807 = vmatmul.f32.gmra.mxu0 %v2684
      %v2808 = vpop.f32.mrf.mxu0
      %v2809 = vadd.f32 0.0, %v2808
      %2810 = vmatmul.f32.gmra.mxu0 %v2687
      %v2811 = vpop.f32.mrf.mxu0
      %v2812 = vadd.f32 0.0, %v2811
      %2813 = vmatmul.f32.gmra.mxu0 %v2690
      %v2814 = vpop.f32.mrf.mxu0
      %v2815 = vadd.f32 0.0, %v2814
      %2816 = vmatmul.f32.gmra.mxu0 %v2693
      %v2817 = vpop.f32.mrf.mxu0
      %v2818 = vadd.f32 0.0, %v2817
      %2819 = vmatmul.f32.gmra.mxu0 %v2696
      %v2820 = vpop.f32.mrf.mxu0
      %v2821 = vadd.f32 0.0, %v2820
      %2822 = vmatmul.f32.gmra.mxu0 %v2699
      %v2823 = vpop.f32.mrf.mxu0
      %v2824 = vadd.f32 0.0, %v2823
      %2825 = vmatmul.f32.gmra.mxu0 %v2702
      %v2826 = vpop.f32.mrf.mxu0
      %v2827 = vadd.f32 0.0, %v2826
      %2828 = vmatmul.f32.gmra.mxu0 %v2705
      %v2829 = vpop.f32.mrf.mxu0
      %v2830 = vadd.f32 0.0, %v2829
      %2831 = vmatmul.f32.gmra.mxu0 %v2708
      %v2832 = vpop.f32.mrf.mxu0
      %v2833 = vadd.f32 0.0, %v2832
      %2834 = vmatmul.f32.gmra.mxu0 %v2711
      %v2835 = vpop.f32.mrf.mxu0
      %v2836 = vadd.f32 0.0, %v2835
      %2837 = vmatmul.f32.gmra.mxu0 %v2714
      %v2838 = vpop.f32.mrf.mxu0
      %v2839 = vadd.f32 0.0, %v2838
      %2840 = vmatmul.f32.gmra.mxu0 %v2717
      %v2841 = vpop.f32.mrf.mxu0
      %v2842 = vadd.f32 0.0, %v2841
      %2843 = vmatmul.f32.gmra.mxu0 %v2720
      %v2844 = vpop.f32.mrf.mxu0
      %v2845 = vadd.f32 0.0, %v2844
      %2846 = vmatmul.f32.gmra.mxu0 %v2723
      %v2847 = vpop.f32.mrf.mxu0
      %v2848 = vadd.f32 0.0, %v2847
      %2849 = vmatmul.f32.gmra.mxu0 %v2726
      %v2850 = vpop.f32.mrf.mxu0
      %v2851 = vadd.f32 0.0, %v2850
      %2852 = vmatmul.f32.gmra.mxu0 %v2729
      %v2853 = vpop.f32.mrf.mxu0
      %v2854 = vadd.f32 0.0, %v2853
      %2855 = vmatmul.f32.gmra.mxu0 %v2732
      %v2856 = vpop.f32.mrf.mxu0
      %v2857 = vadd.f32 0.0, %v2856
      %2858 = vmatmul.f32.gmra.mxu0 %v2735
      %v2859 = vpop.f32.mrf.mxu0
      %v2860 = vadd.f32 0.0, %v2859
      %2861 = vdwg.mxu0
      %v2862 = vadd.f32 %v2548, %v2755
      %v2863 = vadd.f32 %v2549, %v2758
      %v2864 = vadd.f32 %v2550, %v2761
      %v2865 = vadd.f32 %v2551, %v2764
      %v2866 = vadd.f32 %v2552, %v2767
      %v2867 = vadd.f32 %v2553, %v2770
      %v2868 = vadd.f32 %v2554, %v2773
      %v2869 = vadd.f32 %v2555, %v2776
      %v2870 = vadd.f32 %v2556, %v2779
      %v2871 = vadd.f32 %v2557, %v2782
      %v2872 = vadd.f32 %v2558, %v2785
      %v2873 = vadd.f32 %v2559, %v2788
      %v2874 = vadd.f32 %v2560, %v2791
      %v2875 = vadd.f32 %v2561, %v2794
      %v2876 = vadd.f32 %v2562, %v2797
      %v2877 = vadd.f32 %v2563, %v2800
      %v2878 = vadd.f32 %v2564, %v2803
      %v2879 = vadd.f32 %v2565, %v2806
      %v2880 = vadd.f32 %v2566, %v2809
      %v2881 = vadd.f32 %v2567, %v2812
      %v2882 = vadd.f32 %v2568, %v2815
      %v2883 = vadd.f32 %v2569, %v2818
      %v2884 = vadd.f32 %v2570, %v2821
      %v2885 = vadd.f32 %v2571, %v2824
      %v2886 = vadd.f32 %v2572, %v2827
      %v2887 = vadd.f32 %v2573, %v2830
      %v2888 = vadd.f32 %v2574, %v2833
      %v2889 = vadd.f32 %v2575, %v2836
      %v2890 = vadd.f32 %v2576, %v2839
      %v2891 = vadd.f32 %v2577, %v2842
      %v2892 = vadd.f32 %v2578, %v2845
      %v2893 = vadd.f32 %v2579, %v2848
      %v2894 = vadd.f32 %v2580, %v2851
      %v2895 = vadd.f32 %v2581, %v2854
      %v2896 = vadd.f32 %v2582, %v2857
      %v2897 = vadd.f32 %v2583, %v2860
      %v2898 = vmax.f32 %v2862, 0.0
      %v2899 = vmax.f32 %v2863, 0.0
      %v2900 = vmax.f32 %v2864, 0.0
      %v2901 = vmax.f32 %v2865, 0.0
      %v2902 = vmax.f32 %v2866, 0.0
      %v2903 = vmax.f32 %v2867, 0.0
      %v2904 = vmax.f32 %v2868, 0.0
      %v2905 = vmax.f32 %v2869, 0.0
      %v2906 = vmax.f32 %v2870, 0.0
      %v2907 = vmax.f32 %v2871, 0.0
      %v2908 = vmax.f32 %v2872, 0.0
      %v2909 = vmax.f32 %v2873, 0.0
      %v2910 = vmax.f32 %v2874, 0.0
      %v2911 = vmax.f32 %v2875, 0.0
      %v2912 = vmax.f32 %v2876, 0.0
      %v2913 = vmax.f32 %v2877, 0.0
      %v2914 = vmax.f32 %v2878, 0.0
      %v2915 = vmax.f32 %v2879, 0.0
      %v2916 = vmax.f32 %v2880, 0.0
      %v2917 = vmax.f32 %v2881, 0.0
      %v2918 = vmax.f32 %v2882, 0.0
      %v2919 = vmax.f32 %v2883, 0.0
      %v2920 = vmax.f32 %v2884, 0.0
      %v2921 = vmax.f32 %v2885, 0.0
      %v2922 = vmax.f32 %v2886, 0.0
      %v2923 = vmax.f32 %v2887, 0.0
      %v2924 = vmax.f32 %v2888, 0.0
      %v2925 = vmax.f32 %v2889, 0.0
      %v2926 = vmax.f32 %v2890, 0.0
      %v2927 = vmax.f32 %v2891, 0.0
      %v2928 = vmax.f32 %v2892, 0.0
      %v2929 = vmax.f32 %v2893, 0.0
      %v2930 = vmax.f32 %v2894, 0.0
      %v2931 = vmax.f32 %v2895, 0.0
      %v2932 = vmax.f32 %v2896, 0.0
      %v2933 = vmax.f32 %v2897, 0.0
      %2934 = vst.msk [vmem:[%s143] sm:$0xff] %vm233, %v2898
      %2935 = vst.msk [vmem:[%s143 + $0x8] sm:$0xff] %vm233, %v2899
      %2936 = vst.msk [vmem:[%s143 + $0x10] sm:$0xff] %vm233, %v2900
      %2937 = vst.msk [vmem:[%s143 + $0x18] sm:$0xff] %vm233, %v2901
      %2938 = vst.msk [vmem:[%s143 + $0x20] sm:$0xff] %vm233, %v2902
      %2939 = vst.msk [vmem:[%s143 + $0x28] sm:$0xff] %vm233, %v2903
      %2940 = vst.msk [vmem:[%s143 + $0x30] sm:$0xff] %vm233, %v2904
      %2941 = vst.msk [vmem:[%s143 + $0x38] sm:$0xff] %vm233, %v2905
      %2942 = vst.msk [vmem:[%s143 + $0x40] sm:$0xff] %vm233, %v2906
      %2943 = vst.msk [vmem:[%s143 + $0x48] sm:$0xff] %vm233, %v2907
      %2944 = vst.msk [vmem:[%s143 + $0x50] sm:$0xff] %vm233, %v2908
      %2945 = vst.msk [vmem:[%s143 + $0x58] sm:$0xff] %vm233, %v2909
      %2946 = vst.msk [vmem:[%s143 + $0x60] sm:$0xff] %vm233, %v2910
      %2947 = vst.msk [vmem:[%s143 + $0x68] sm:$0xff] %vm233, %v2911
      %2948 = vst.msk [vmem:[%s143 + $0x70] sm:$0xff] %vm233, %v2912
      %2949 = vst.msk [vmem:[%s143 + $0x78] sm:$0xff] %vm233, %v2913
      %2950 = vst.msk [vmem:[%s143 + $0x80] sm:$0xff] %vm233, %v2914
      %2951 = vst.msk [vmem:[%s143 + $0x88] sm:$0xff] %vm233, %v2915
      %2952 = vst.msk [vmem:[%s143 + $0x90] sm:$0xff] %vm233, %v2916
      %2953 = vst.msk [vmem:[%s143 + $0x98] sm:$0xff] %vm233, %v2917
      %2954 = vst.msk [vmem:[%s143 + $0xa0] sm:$0xff] %vm233, %v2918
      %2955 = vst.msk [vmem:[%s143 + $0xa8] sm:$0xff] %vm233, %v2919
      %2956 = vst.msk [vmem:[%s143 + $0xb0] sm:$0xff] %vm233, %v2920
      %2957 = vst.msk [vmem:[%s143 + $0xb8] sm:$0xff] %vm233, %v2921
      %2958 = vst.msk [vmem:[%s143 + $0xc0] sm:$0xff] %vm233, %v2922
      %2959 = vst.msk [vmem:[%s143 + $0xc8] sm:$0xff] %vm233, %v2923
      %2960 = vst.msk [vmem:[%s143 + $0xd0] sm:$0xff] %vm233, %v2924
      %2961 = vst.msk [vmem:[%s143 + $0xd8] sm:$0xff] %vm233, %v2925
      %2962 = vst.msk [vmem:[%s143 + $0xe0] sm:$0xff] %vm233, %v2926
      %2963 = vst.msk [vmem:[%s143 + $0xe8] sm:$0xff] %vm233, %v2927
      %2964 = vst.msk [vmem:[%s143 + $0xf0] sm:$0xff] %vm233, %v2928
      %2965 = vst.msk [vmem:[%s143 + $0xf8] sm:$0xff] %vm233, %v2929
      %2966 = vst.msk [vmem:[%s143 + $0x100] sm:$0xff] %vm233, %v2930
      %2967 = vst.msk [vmem:[%s143 + $0x108] sm:$0xff] %vm233, %v2931
      %2968 = vst.msk [vmem:[%s143 + $0x110] sm:$0xff] %vm233, %v2932
      %2969 = vst.msk [vmem:[%s143 + $0x118] sm:$0xff] %vm233, %v2933
      %p2970 = scmp.lt.s32.totalorder %s13, 1
      %s2971 = scalar_select %p2970, %s13, 1
      %s2972 = smul.addr %s2971, 36
      %s2973 = smul.addr %s2972, 8
      %s2974 = scalar_lea.vmem %s2, %s2973
      // Predicated region
      $region29: #{inception_d_forward.6} parent=27 // pred_check
        %p2975 = pneg %p78
      $region30: #{inception_d_forward.6} parent=27 // pred_check_branch
        %2977 = sbr.rel (%p2975) target = $region32
      $region31: #{inception_d_forward.6} parent=27 // pred_region
        _
      $region32: #{inception_d_forward.6} parent=27 // pred_fallthru
        _
    $region28: #{inception_d_forward.6} parent=5 // pred_fallthru
      _
    %p2978 = scmp.le.s32.totalorder 2, %s8
    // Predicated region
    $region33: #{inception_d_forward.6} parent=5 // pred_check
      %p2979 = pneg %p2978
    $region34: #{inception_d_forward.6} parent=5 // pred_check_branch
      %2981 = sbr.rel (%p2979) target = $region36
    $region35: #{inception_d_forward.6} parent=5 // pred_region
      %s2982 = ssub.s32 %s8, 2
      // Predicated region
      $region37: #{inception_d_forward.6} parent=35 // pred_check
        %p2983 = pneg %p84
      $region38: #{inception_d_forward.6} parent=35 // pred_check_branch
        %2985 = sbr.rel (%p2983) target = $region40
      $region39: #{inception_d_forward.6} parent=35 // pred_region
        %p2986 = scmp.lt.s32.totalorder %s14, 1
        %s2987 = scalar_select %p2986, %s14, 1
        %s2988 = smul.addr %s2987, 36
        %s2989 = smul.addr %s2988, 8
        %s2990 = scalar_lea.vmem %s2, %s2989
      $region40: #{inception_d_forward.6} parent=35 // pred_fallthru
        _
    $region36: #{inception_d_forward.6} parent=5 // pred_fallthru
      _
  $region6: #{inception_d_forward.6} parent=0 // loop_footer
    %s12 = sadd.s32 1, %s8
  $region7: #{inception_d_forward.6} parent=0 // loop_footer_branch
    %7 = sbr.rel target = $region3
  $region8: #{inception_d_forward.6} parent=0 // loop_exit
    _

// kernel: inception_d_forward.8
$region0: #{inception_d_forward.8}
  #allocation0 [shape = 'u32[]', space=smem, size = 0x4, offset = 0x4, fixed_abs, tag = 'smem constant byte address 0x4 - core index']
  #allocation1 [shape = 'u32[72,128]{1,0:T(1,128)}', space=vmem, size = 0x9000, scoped, tag = 'internal scratch']
  %s0 = inlined_call_operand.vmem [shape: f32[2,326,96], index: 0, kind: input, shape index: {}]
  %s1 = inlined_call_operand.vmem [shape: f32[9,96,96], index: 1, kind: input, shape index: {}]
  %s2 = inlined_call_operand.vmem [shape: f32[2,288,96], index: 2, kind: output, shape index: {}]
  %s3 = sld [smem:[#allocation0]]
  $region41: #{inception_d_forward.8} parent=0
    _
  %s5 = ssub.s32 1, %s3
  %s6 = scalar_select 0, %s5, %s3
  loop: start=0, step=1, limit=4
  $region2: #{inception_d_forward.8} parent=0 // loop_pre_header
    _
  $region3: #{inception_d_forward.8} parent=0 // loop_header
    %s8 = sphi 0, %s12
    %p9 = scmp.ge.s32.totalorder %s8, 4
    %s18 = sphi 0, %s20
    %s21 = sphi 0, %s18
    %s22 = sphi 0, %s21
    %s38 = sphi 0, %s22
    %s42 = sphi 0, %s42
    %s44 = sphi 0, %s42
    %s45 = sphi 0, %s44
    %s59 = sphi 0, %s45
    %s65 = sphi 0, %s67
    %s68 = sphi 0, %s65
    %s69 = sphi 0, %s68
    %s85 = sphi 0, %s69
  $region4: #{inception_d_forward.8} parent=0 // loop_header_branch
    %11 = sbr.rel (%p9) target = $region8
  $region5: #{inception_d_forward.8} parent=0 // loop_body
    %s13 = ssub.s32 %s8, 1
    %s14 = ssub.s32 %s8, 2
    %s15 = sadd.s32 %s8, 1
    %s16 = ssub.s32 %s8, %s15
    %p17 = scmp.eq.s32.totalorder %s16, 0
    %s19 = sadd.s32 %s18, 1
    %s20 = scalar_select %p17, %s18, %s19
    %p23 = pneg %p17
    %p24 = scmp.eq.s32.totalorder %s8, 1
    %p25 = por %p23, %p24
    %p26 = scmp.ne.s32.totalorder %s18, %s21
    %p27 = scmp.eq.s32.totalorder %s8, 0
    %p28 = por %p26, %p27
    %p29 = scmp.ne.s32.totalorder %s18, %s21
    %p30 = scmp.eq.s32.totalorder %s13, 1
    %p31 = por %p29, %p30
    %p32 = scmp.ne.s32.totalorder %s21, %s22
    %p33 = scmp.eq.s32.totalorder %s13, 0
    %p34 = por %p32, %p33
    %p35 = scmp.ne.s32.totalorder %s21, %s22
    %p36 = scmp.eq.s32.totalorder %s14, 1
    %p37 = por %p35, %p36
    %p39 = scmp.ne.s32.totalorder %s22, %s38
    %p40 = scmp.eq.s32.totalorder %s14, 0
    %p41 = por %p39, %p40
    %s43 = sadd.s32 %s42, 1
    %p46 = scmp.eq.s32.totalorder %s8, 1
    %p47 = scmp.ne.s32.totalorder %s42, %s44
    %p48 = scmp.eq.s32.totalorder %s8, 0
    %p49 = por %p47, %p48
    %p50 = scmp.ne.s32.totalorder %s42, %s44
    %p51 = scmp.eq.s32.totalorder %s13, 1
    %p52 = por %p50, %p51
    %p53 = scmp.ne.s32.totalorder %s44, %s45
    %p54 = scmp.eq.s32.totalorder %s13, 0
    %p55 = por %p53, %p54
    %p56 = scmp.ne.s32.totalorder %s44, %s45
    %p57 = scmp.eq.s32.totalorder %s14, 1
    %p58 = por %p56, %p57
    %p60 = scmp.ne.s32.totalorder %s45, %s59
    %p61 = scmp.eq.s32.totalorder %s14, 0
    %p62 = por %p60, %p61
    %s63 = ssub.s32 %s8, %s15
    %p64 = scmp.eq.s32.totalorder %s63, 0
    %s66 = sadd.s32 %s65, 1
    %s67 = scalar_select %p64, %s65, %s66
    %p70 = pneg %p64
    %p71 = scmp.eq.s32.totalorder %s8, 1
    %p72 = por %p70, %p71
    %p73 = scmp.ne.s32.totalorder %s65, %s68
    %p74 = scmp.eq.s32.totalorder %s8, 0
    %p75 = por %p73, %p74
    %p76 = scmp.ne.s32.totalorder %s65, %s68
    %p77 = scmp.eq.s32.totalorder %s13, 1
    %p78 = por %p76, %p77
    %p79 = scmp.ne.s32.totalorder %s68, %s69
    %p80 = scmp.eq.s32.totalorder %s13, 0
    %p81 = por %p79, %p80
    %p82 = scmp.ne.s32.totalorder %s68, %s69
    %p83 = scmp.eq.s32.totalorder %s14, 1
    %p84 = por %p82, %p83
    %p86 = scmp.ne.s32.totalorder %s69, %s85
    %p87 = scmp.eq.s32.totalorder %s14, 0
    %p88 = por %p86, %p87
    %p89 = scmp.le.s32.totalorder 1, %s8
    %p90 = scmp.lt.s32.totalorder %s8, 3
    %p91 = pnand %p89, %p90
    %p92 = pneg %p91
    // Predicated region
    $region9: #{inception_d_forward.8} parent=5 // pred_check
      _
    $region10: #{inception_d_forward.8} parent=5 // pred_check_branch
      %94 = sbr.rel (%p91) target = $region12
    $region11: #{inception_d_forward.8} parent=5 // pred_region
      %s95 = ssub.s32 %s8, 1
      // Predicated region
      $region13: #{inception_d_forward.8} parent=11 // pred_check
        %p96 = pneg %p55
      $region14: #{inception_d_forward.8} parent=11 // pred_check_branch
        %98 = sbr.rel (%p96) target = $region16
      $region15: #{inception_d_forward.8} parent=11 // pred_region
        _
      $region16: #{inception_d_forward.8} parent=11 // pred_fallthru
        _
    $region12: #{inception_d_forward.8} parent=5 // pred_fallthru
      _
    %p99 = scmp.lt.s32.totalorder %s8, 2
    // Predicated region
    $region17: #{inception_d_forward.8} parent=5 // pred_check
      %p100 = pneg %p99
    $region18: #{inception_d_forward.8} parent=5 // pred_check_branch
      %102 = sbr.rel (%p100) target = $region20
    $region19: #{inception_d_forward.8} parent=5 // pred_region
      // Predicated region
      $region21: #{inception_d_forward.8} parent=19 // pred_check
        %p103 = pneg %p28
      $region22: #{inception_d_forward.8} parent=19 // pred_check_branch
        %105 = sbr.rel (%p103) target = $region24
      $region23: #{inception_d_forward.8} parent=19 // pred_region
        %p106 = scmp.lt.s32.totalorder %s8, 1
        %s107 = scalar_select %p106, %s8, 1
        %s108 = smul.addr %s107, 41
        %s109 = smul.addr %s108, 8
        %s110 = scalar_lea.vmem %s0, %s109
      $region24: #{inception_d_forward.8} parent=19 // pred_fallthru
        _
    $region20: #{inception_d_forward.8} parent=5 // pred_fallthru
      _
    %p111 = scmp.le.s32.totalorder 1, %s8
    %p112 = scmp.lt.s32.totalorder %s8, 3
    %p113 = pnand %p111, %p112
    %p114 = pneg %p113
    // Predicated region
    $region25: #{inception_d_forward.8} parent=5 // pred_check
      _
    $region26: #{inception_d_forward.8} parent=5 // pred_check_branch
      %116 = sbr.rel (%p113) target = $region28
    $region27: #{inception_d_forward.8} parent=5 // pred_region
      %s117 = ssub.s32 %s8, 1
      %p118 = scmp.lt.s32.totalorder %s13, 1
      %s119 = scalar_select %p118, %s13, 1
      %s120 = smul.addr %s119, 41
      %s121 = smul.addr %s120, 8
      %s122 = scalar_lea.vmem %s0, %s121
      %p123 = pneg %p34
      %p124 = pneg %p31
      %p125 = pneg %p55
      %p126 = pneg %p52
      %p127 = pneg %p81
      %p128 = pneg %p78
      %p129 = scmp.lt.s32.totalorder %s13, 1
      %s130 = scalar_select %p129, %s13, 1
      %s131 = smul.addr %s130, 36
      %s132 = smul.addr %s131, 8
      %s133 = scalar_lea.vmem %s2, %s132
      %p134 = scmp.lt.s32.totalorder %s13, 1
      %s135 = scalar_select %p134, %s13, 1
      %s136 = smul.addr %s135, 41
      %s137 = smul.addr %s136, 8
      %s138 = scalar_lea.vmem %s0, %s137
      %p139 = scmp.lt.s32.totalorder %s13, 1
      %s140 = scalar_select %p139, %s13, 1
      %s141 = smul.addr %s140, 36
      %s142 = smul.addr %s141, 8
      %s143 = scalar_lea.vmem %s2, %s142
      %v144 = vld [vmem:[%s138] sm:$0xff]
      %v145 = vld [vmem:[%s138 + $0x8] sm:$0xff]
      %v146 = vld [vmem:[%s138 + $0x10] sm:$0xff]
      %v147 = vld [vmem:[%s138 + $0x18] sm:$0xff]
      %v148 = vld [vmem:[%s138 + $0x20] sm:$0xff]
      %v149 = vld [vmem:[%s138 + $0x28] sm:$0xff]
      %v150 = vld [vmem:[%s138 + $0x30] sm:$0xff]
      %v151 = vld [vmem:[%s138 + $0x38] sm:$0xff]
      %v152 = vld [vmem:[%s138 + $0x40] sm:$0xff]
      %v153 = vld [vmem:[%s138 + $0x48] sm:$0xff]
      %v154 = vld [vmem:[%s138 + $0x50] sm:$0xff]
      %v155 = vld [vmem:[%s138 + $0x58] sm:$0xff]
      %v156 = vld [vmem:[%s138 + $0x60] sm:$0xff]
      %v157 = vld [vmem:[%s138 + $0x68] sm:$0xff]
      %v158 = vld [vmem:[%s138 + $0x70] sm:$0xff]
      %v159 = vld [vmem:[%s138 + $0x78] sm:$0xff]
      %v160 = vld [vmem:[%s138 + $0x80] sm:$0xff]
      %v161 = vld [vmem:[%s138 + $0x88] sm:$0xff]
      %v162 = vld [vmem:[%s138 + $0x90] sm:$0xff]
      %v163 = vld [vmem:[%s138 + $0x98] sm:$0xff]
      %v164 = vld [vmem:[%s138 + $0xa0] sm:$0xff]
      %v165 = vld [vmem:[%s138 + $0xa8] sm:$0xff]
      %v166 = vld [vmem:[%s138 + $0xb0] sm:$0xff]
      %v167 = vld [vmem:[%s138 + $0xb8] sm:$0xff]
      %v168 = vld [vmem:[%s138 + $0xc0] sm:$0xff]
      %v169 = vld [vmem:[%s138 + $0xc8] sm:$0xff]
      %v170 = vld [vmem:[%s138 + $0xd0] sm:$0xff]
      %v171 = vld [vmem:[%s138 + $0xd8] sm:$0xff]
      %v172 = vld [vmem:[%s138 + $0xe0] sm:$0xff]
      %v173 = vld [vmem:[%s138 + $0xe8] sm:$0xff]
      %v174 = vld [vmem:[%s138 + $0xf0] sm:$0xff]
      %v175 = vld [vmem:[%s138 + $0xf8] sm:$0xff]
      %v176 = vld [vmem:[%s138 + $0x100] sm:$0xff]
      %v177 = vld [vmem:[%s138 + $0x108] sm:$0xff]
      %v178 = vld [vmem:[%s138 + $0x110] sm:$0xff]
      %v179 = vld [vmem:[%s138 + $0x118] sm:$0xff]
      %v180 = vld [vmem:[%s1] sm:$0xff]
      %v181 = vld [vmem:[%s1 + $0x8] sm:$0xff]
      %v182 = vld [vmem:[%s1 + $0x10] sm:$0xff]
      %v183 = vld [vmem:[%s1 + $0x18] sm:$0xff]
      %v184 = vld [vmem:[%s1 + $0x20] sm:$0xff]
      %v185 = vld [vmem:[%s1 + $0x28] sm:$0xff]
      %v186 = vld [vmem:[%s1 + $0x30] sm:$0xff]
      %v187 = vld [vmem:[%s1 + $0x38] sm:$0xff]
      %v188 = vld [vmem:[%s1 + $0x40] sm:$0xff]
      %v189 = vld [vmem:[%s1 + $0x48] sm:$0xff]
      %v190 = vld [vmem:[%s1 + $0x50] sm:$0xff]
      %v191 = vld [vmem:[%s1 + $0x58] sm:$0xff]
      %v192 = vld [vmem:[%s138 + $0x1] sm:$0xff]
      %v193 = vld [vmem:[%s138 + $0x9] sm:$0xff]
      %v194 = vld [vmem:[%s138 + $0x11] sm:$0xff]
      %v195 = vld [vmem:[%s138 + $0x19] sm:$0xff]
      %v196 = vld [vmem:[%s138 + $0x21] sm:$0xff]
      %v197 = vld [vmem:[%s138 + $0x29] sm:$0xff]
      %v198 = vld [vmem:[%s138 + $0x31] sm:$0xff]
      %v199 = vld [vmem:[%s138 + $0x39] sm:$0xff]
      %v200 = vld [vmem:[%s138 + $0x41] sm:$0xff]
      %v201 = vld [vmem:[%s138 + $0x49] sm:$0xff]
      %v202 = vld [vmem:[%s138 + $0x51] sm:$0xff]
      %v203 = vld [vmem:[%s138 + $0x59] sm:$0xff]
      %v204 = vld [vmem:[%s138 + $0x61] sm:$0xff]
      %v205 = vld [vmem:[%s138 + $0x69] sm:$0xff]
      %v206 = vld [vmem:[%s138 + $0x71] sm:$0xff]
      %v207 = vld [vmem:[%s138 + $0x79] sm:$0xff]
      %v208 = vld [vmem:[%s138 + $0x81] sm:$0xff]
      %v209 = vld [vmem:[%s138 + $0x89] sm:$0xff]
      %v210 = vld [vmem:[%s138 + $0x91] sm:$0xff]
      %v211 = vld [vmem:[%s138 + $0x99] sm:$0xff]
      %v212 = vld [vmem:[%s138 + $0xa1] sm:$0xff]
      %v213 = vld [vmem:[%s138 + $0xa9] sm:$0xff]
      %v214 = vld [vmem:[%s138 + $0xb1] sm:$0xff]
      %v215 = vld [vmem:[%s138 + $0xb9] sm:$0xff]
      %v216 = vld [vmem:[%s138 + $0xc1] sm:$0xff]
      %v217 = vld [vmem:[%s138 + $0xc9] sm:$0xff]
      %v218 = vld [vmem:[%s138 + $0xd1] sm:$0xff]
      %v219 = vld [vmem:[%s138 + $0xd9] sm:$0xff]
      %v220 = vld [vmem:[%s138 + $0xe1] sm:$0xff]
      %v221 = vld [vmem:[%s138 + $0xe9] sm:$0xff]
      %v222 = vld [vmem:[%s138 + $0xf1] sm:$0xff]
      %v223 = vld [vmem:[%s138 + $0xf9] sm:$0xff]
      %v224 = vld [vmem:[%s138 + $0x101] sm:$0xff]
      %v225 = vld [vmem:[%s138 + $0x109] sm:$0xff]
      %v226 = vld [vmem:[%s138 + $0x111] sm:$0xff]
      %v227 = vld [vmem:[%s138 + $0x119] sm:$0xff]
      %s228 = scalar_lea.vmem %s1, 96
      %v229 = vld [vmem:[%s228] sm:$0xff]
      %v230 = vld [vmem:[%s228 + $0x8] sm:$0xff]
      %v231 = vld [vmem:[%s228 + $0x10] sm:$0xff]
      %v232 = vld [vmem:[%s228 + $0x18] sm:$0xff]
      %v233 = vld [vmem:[%s228 + $0x20] sm:$0xff]
      %v234 = vld [vmem:[%s228 + $0x28] sm:$0xff]
      %v235 = vld [vmem:[%s228 + $0x30] sm:$0xff]
      %v236 = vld [vmem:[%s228 + $0x38] sm:$0xff]
      %v237 = vld [vmem:[%s228 + $0x40] sm:$0xff]
      %v238 = vld [vmem:[%s228 + $0x48] sm:$0xff]
      %v239 = vld [vmem:[%s228 + $0x50] sm:$0xff]
      %v240 = vld [vmem:[%s228 + $0x58] sm:$0xff]
      %vm241 = vcmask 785408
      %v243 = vsel %vm241, %v192, 0
      %v246 = vsel %vm241, %v193, 0
      %v249 = vsel %vm241, %v194, 0
      %v252 = vsel %vm241, %v195, 0
      %v255 = vsel %vm241, %v196, 0
      %v258 = vsel %vm241, %v197, 0
      %v261 = vsel %vm241, %v198, 0
      %v264 = vsel %vm241, %v199, 0
      %v267 = vsel %vm241, %v200, 0
      %v270 = vsel %vm241, %v201, 0
      %v273 = vsel %vm241, %v202, 0
      %v276 = vsel %vm241, %v203, 0
      %v279 = vsel %vm241, %v204, 0
      %v282 = vsel %vm241, %v205, 0
      %v285 = vsel %vm241, %v206, 0
      %v288 = vsel %vm241, %v207, 0
      %v291 = vsel %vm241, %v208, 0
      %v294 = vsel %vm241, %v209, 0
      %v297 = vsel %vm241, %v210, 0
      %v300 = vsel %vm241, %v211, 0
      %v303 = vsel %vm241, %v212, 0
      %v306 = vsel %vm241, %v213, 0
      %v309 = vsel %vm241, %v214, 0
      %v312 = vsel %vm241, %v215, 0
      %v315 = vsel %vm241, %v216, 0
      %v318 = vsel %vm241, %v217, 0
      %v321 = vsel %vm241, %v218, 0
      %v324 = vsel %vm241, %v219, 0
      %v327 = vsel %vm241, %v220, 0
      %v330 = vsel %vm241, %v221, 0
      %v333 = vsel %vm241, %v222, 0
      %v336 = vsel %vm241, %v223, 0
      %v339 = vsel %vm241, %v224, 0
      %v342 = vsel %vm241, %v225, 0
      %v345 = vsel %vm241, %v226, 0
      %v348 = vsel %vm241, %v227, 0
      %350 = vmatpush.msra.mxu0 0.0
      %351 = vmatpush.msra.mxu0 0.0
      %352 = vmatpush.msra.mxu0 0.0
      %353 = vmatpush.msra.mxu0 0.0
      %354 = vmatpush.msra.mxu0 %v240
      %355 = vmatpush.msra.mxu0 %v239
      %356 = vmatpush.msra.mxu0 %v238
      %357 = vmatpush.msra.mxu0 %v237
      %358 = vmatpush.msra.mxu0 %v236
      %359 = vmatpush.msra.mxu0 %v235
      %360 = vmatpush.msra.mxu0 %v234
      %361 = vmatpush.msra.mxu0 %v233
      %362 = vmatpush.msra.mxu0 %v232
      %363 = vmatpush.msra.mxu0 %v231
      %364 = vmatpush.msra.mxu0 %v230
      %365 = vmatpush.msra.mxu0 %v229
      %366 = vmatmul.f32.gmra.mxu0 %v243
      %v367 = vpop.f32.mrf.mxu0
      %v368 = vadd.f32 0.0, %v367
      %369 = vmatmul.f32.gmra.mxu0 %v246
      %v370 = vpop.f32.mrf.mxu0
      %v371 = vadd.f32 0.0, %v370
      %372 = vmatmul.f32.gmra.mxu0 %v249
      %v373 = vpop.f32.mrf.mxu0
      %v374 = vadd.f32 0.0, %v373
      %375 = vmatmul.f32.gmra.mxu0 %v252
      %v376 = vpop.f32.mrf.mxu0
      %v377 = vadd.f32 0.0, %v376
      %378 = vmatmul.f32.gmra.mxu0 %v255
      %v379 = vpop.f32.mrf.mxu0
      %v380 = vadd.f32 0.0, %v379
      %381 = vmatmul.f32.gmra.mxu0 %v258
      %v382 = vpop.f32.mrf.mxu0
      %v383 = vadd.f32 0.0, %v382
      %384 = vmatmul.f32.gmra.mxu0 %v261
      %v385 = vpop.f32.mrf.mxu0
      %v386 = vadd.f32 0.0, %v385
      %387 = vmatmul.f32.gmra.mxu0 %v264
      %v388 = vpop.f32.mrf.mxu0
      %v389 = vadd.f32 0.0, %v388
      %390 = vmatmul.f32.gmra.mxu0 %v267
      %v391 = vpop.f32.mrf.mxu0
      %v392 = vadd.f32 0.0, %v391
      %393 = vmatmul.f32.gmra.mxu0 %v270
      %v394 = vpop.f32.mrf.mxu0
      %v395 = vadd.f32 0.0, %v394
      %396 = vmatmul.f32.gmra.mxu0 %v273
      %v397 = vpop.f32.mrf.mxu0
      %v398 = vadd.f32 0.0, %v397
      %399 = vmatmul.f32.gmra.mxu0 %v276
      %v400 = vpop.f32.mrf.mxu0
      %v401 = vadd.f32 0.0, %v400
      %402 = vmatmul.f32.gmra.mxu0 %v279
      %v403 = vpop.f32.mrf.mxu0
      %v404 = vadd.f32 0.0, %v403
      %405 = vmatmul.f32.gmra.mxu0 %v282
      %v406 = vpop.f32.mrf.mxu0
      %v407 = vadd.f32 0.0, %v406
      %408 = vmatmul.f32.gmra.mxu0 %v285
      %v409 = vpop.f32.mrf.mxu0
      %v410 = vadd.f32 0.0, %v409
      %411 = vmatmul.f32.gmra.mxu0 %v288
      %v412 = vpop.f32.mrf.mxu0
      %v413 = vadd.f32 0.0, %v412
      %414 = vmatmul.f32.gmra.mxu0 %v291
      %v415 = vpop.f32.mrf.mxu0
      %v416 = vadd.f32 0.0, %v415
      %417 = vmatmul.f32.gmra.mxu0 %v294
      %v418 = vpop.f32.mrf.mxu0
      %v419 = vadd.f32 0.0, %v418
      %420 = vmatmul.f32.gmra.mxu0 %v297
      %v421 = vpop.f32.mrf.mxu0
      %v422 = vadd.f32 0.0, %v421
      %423 = vmatmul.f32.gmra.mxu0 %v300
      %v424 = vpop.f32.mrf.mxu0
      %v425 = vadd.f32 0.0, %v424
      %426 = vmatmul.f32.gmra.mxu0 %v303
      %v427 = vpop.f32.mrf.mxu0
      %v428 = vadd.f32 0.0, %v427
      %429 = vmatmul.f32.gmra.mxu0 %v306
      %v430 = vpop.f32.mrf.mxu0
      %v431 = vadd.f32 0.0, %v430
      %432 = vmatmul.f32.gmra.mxu0 %v309
      %v433 = vpop.f32.mrf.mxu0
      %v434 = vadd.f32 0.0, %v433
      %435 = vmatmul.f32.gmra.mxu0 %v312
      %v436 = vpop.f32.mrf.mxu0
      %v437 = vadd.f32 0.0, %v436
      %438 = vmatmul.f32.gmra.mxu0 %v315
      %v439 = vpop.f32.mrf.mxu0
      %v440 = vadd.f32 0.0, %v439
      %441 = vmatmul.f32.gmra.mxu0 %v318
      %v442 = vpop.f32.mrf.mxu0
      %v443 = vadd.f32 0.0, %v442
      %444 = vmatmul.f32.gmra.mxu0 %v321
      %v445 = vpop.f32.mrf.mxu0
      %v446 = vadd.f32 0.0, %v445
      %447 = vmatmul.f32.gmra.mxu0 %v324
      %v448 = vpop.f32.mrf.mxu0
      %v449 = vadd.f32 0.0, %v448
      %450 = vmatmul.f32.gmra.mxu0 %v327
      %v451 = vpop.f32.mrf.mxu0
      %v452 = vadd.f32 0.0, %v451
      %453 = vmatmul.f32.gmra.mxu0 %v330
      %v454 = vpop.f32.mrf.mxu0
      %v455 = vadd.f32 0.0, %v454
      %456 = vmatmul.f32.gmra.mxu0 %v333
      %v457 = vpop.f32.mrf.mxu0
      %v458 = vadd.f32 0.0, %v457
      %459 = vmatmul.f32.gmra.mxu0 %v336
      %v460 = vpop.f32.mrf.mxu0
      %v461 = vadd.f32 0.0, %v460
      %462 = vmatmul.f32.gmra.mxu0 %v339
      %v463 = vpop.f32.mrf.mxu0
      %v464 = vadd.f32 0.0, %v463
      %465 = vmatmul.f32.gmra.mxu0 %v342
      %v466 = vpop.f32.mrf.mxu0
      %v467 = vadd.f32 0.0, %v466
      %468 = vmatmul.f32.gmra.mxu0 %v345
      %v469 = vpop.f32.mrf.mxu0
      %v470 = vadd.f32 0.0, %v469
      %471 = vmatmul.f32.gmra.mxu0 %v348
      %v472 = vpop.f32.mrf.mxu0
      %v473 = vadd.f32 0.0, %v472
      %474 = vdwg.mxu0
      %v476 = vsel %vm241, %v144, 0
      %v479 = vsel %vm241, %v145, 0
      %v482 = vsel %vm241, %v146, 0
      %v485 = vsel %vm241, %v147, 0
      %v488 = vsel %vm241, %v148, 0
      %v491 = vsel %vm241, %v149, 0
      %v494 = vsel %vm241, %v150, 0
      %v497 = vsel %vm241, %v151, 0
      %v500 = vsel %vm241, %v152, 0
      %v503 = vsel %vm241, %v153, 0
      %v506 = vsel %vm241, %v154, 0
      %v509 = vsel %vm241, %v155, 0
      %v512 = vsel %vm241, %v156, 0
      %v515 = vsel %vm241, %v157, 0
      %v518 = vsel %vm241, %v158, 0
      %v521 = vsel %vm241, %v159, 0
      %v524 = vsel %vm241, %v160, 0
      %v527 = vsel %vm241, %v161, 0
      %v530 = vsel %vm241, %v162, 0
      %v533 = vsel %vm241, %v163, 0
      %v536 = vsel %vm241, %v164, 0
      %v539 = vsel %vm241, %v165, 0
      %v542 = vsel %vm241, %v166, 0
      %v545 = vsel %vm241, %v167, 0
      %v548 = vsel %vm241, %v168, 0
      %v551 = vsel %vm241, %v169, 0
      %v554 = vsel %vm241, %v170, 0
      %v557 = vsel %vm241, %v171, 0
      %v560 = vsel %vm241, %v172, 0
      %v563 = vsel %vm241, %v173, 0
      %v566 = vsel %vm241, %v174, 0
      %v569 = vsel %vm241, %v175, 0
      %v572 = vsel %vm241, %v176, 0
      %v575 = vsel %vm241, %v177, 0
      %v578 = vsel %vm241, %v178, 0
      %v581 = vsel %vm241, %v179, 0
      %583 = vmatpush.msra.mxu0 0.0
      %584 = vmatpush.msra.mxu0 0.0
      %585 = vmatpush.msra.mxu0 0.0
      %586 = vmatpush.msra.mxu0 0.0
      %587 = vmatpush.msra.mxu0 %v191
      %588 = vmatpush.msra.mxu0 %v190
      %589 = vmatpush.msra.mxu0 %v189
      %590 = vmatpush.msra.mxu0 %v188
      %591 = vmatpush.msra.mxu0 %v187
      %592 = vmatpush.msra.mxu0 %v186
      %593 = vmatpush.msra.mxu0 %v185
      %594 = vmatpush.msra.mxu0 %v184
      %595 = vmatpush.msra.mxu0 %v183
      %596 = vmatpush.msra.mxu0 %v182
      %597 = vmatpush.msra.mxu0 %v181
      %598 = vmatpush.msra.mxu0 %v180
      %599 = vmatmul.f32.gmra.mxu0 %v476
      %v600 = vpop.f32.mrf.mxu0
      %v601 = vadd.f32 %v368, %v600
      %602 = vmatmul.f32.gmra.mxu0 %v479
      %v603 = vpop.f32.mrf.mxu0
      %v604 = vadd.f32 %v371, %v603
      %605 = vmatmul.f32.gmra.mxu0 %v482
      %v606 = vpop.f32.mrf.mxu0
      %v607 = vadd.f32 %v374, %v606
      %608 = vmatmul.f32.gmra.mxu0 %v485
      %v609 = vpop.f32.mrf.mxu0
      %v610 = vadd.f32 %v377, %v609
      %611 = vmatmul.f32.gmra.mxu0 %v488
      %v612 = vpop.f32.mrf.mxu0
      %v613 = vadd.f32 %v380, %v612
      %614 = vmatmul.f32.gmra.mxu0 %v491
      %v615 = vpop.f32.mrf.mxu0
      %v616 = vadd.f32 %v383, %v615
      %617 = vmatmul.f32.gmra.mxu0 %v494
      %v618 = vpop.f32.mrf.mxu0
      %v619 = vadd.f32 %v386, %v618
      %620 = vmatmul.f32.gmra.mxu0 %v497
      %v621 = vpop.f32.mrf.mxu0
      %v622 = vadd.f32 %v389, %v621
      %623 = vmatmul.f32.gmra.mxu0 %v500
      %v624 = vpop.f32.mrf.mxu0
      %v625 = vadd.f32 %v392, %v624
      %626 = vmatmul.f32.gmra.mxu0 %v503
      %v627 = vpop.f32.mrf.mxu0
      %v628 = vadd.f32 %v395, %v627
      %629 = vmatmul.f32.gmra.mxu0 %v506
      %v630 = vpop.f32.mrf.mxu0
      %v631 = vadd.f32 %v398, %v630
      %632 = vmatmul.f32.gmra.mxu0 %v509
      %v633 = vpop.f32.mrf.mxu0
      %v634 = vadd.f32 %v401, %v633
      %635 = vmatmul.f32.gmra.mxu0 %v512
      %v636 = vpop.f32.mrf.mxu0
      %v637 = vadd.f32 %v404, %v636
      %638 = vmatmul.f32.gmra.mxu0 %v515
      %v639 = vpop.f32.mrf.mxu0
      %v640 = vadd.f32 %v407, %v639
      %641 = vmatmul.f32.gmra.mxu0 %v518
      %v642 = vpop.f32.mrf.mxu0
      %v643 = vadd.f32 %v410, %v642
      %644 = vmatmul.f32.gmra.mxu0 %v521
      %v645 = vpop.f32.mrf.mxu0
      %v646 = vadd.f32 %v413, %v645
      %647 = vmatmul.f32.gmra.mxu0 %v524
      %v648 = vpop.f32.mrf.mxu0
      %v649 = vadd.f32 %v416, %v648
      %650 = vmatmul.f32.gmra.mxu0 %v527
      %v651 = vpop.f32.mrf.mxu0
      %v652 = vadd.f32 %v419, %v651
      %653 = vmatmul.f32.gmra.mxu0 %v530
      %v654 = vpop.f32.mrf.mxu0
      %v655 = vadd.f32 %v422, %v654
      %656 = vmatmul.f32.gmra.mxu0 %v533
      %v657 = vpop.f32.mrf.mxu0
      %v658 = vadd.f32 %v425, %v657
      %659 = vmatmul.f32.gmra.mxu0 %v536
      %v660 = vpop.f32.mrf.mxu0
      %v661 = vadd.f32 %v428, %v660
      %662 = vmatmul.f32.gmra.mxu0 %v539
      %v663 = vpop.f32.mrf.mxu0
      %v664 = vadd.f32 %v431, %v663
      %665 = vmatmul.f32.gmra.mxu0 %v542
      %v666 = vpop.f32.mrf.mxu0
      %v667 = vadd.f32 %v434, %v666
      %668 = vmatmul.f32.gmra.mxu0 %v545
      %v669 = vpop.f32.mrf.mxu0
      %v670 = vadd.f32 %v437, %v669
      %671 = vmatmul.f32.gmra.mxu0 %v548
      %v672 = vpop.f32.mrf.mxu0
      %v673 = vadd.f32 %v440, %v672
      %674 = vmatmul.f32.gmra.mxu0 %v551
      %v675 = vpop.f32.mrf.mxu0
      %v676 = vadd.f32 %v443, %v675
      %677 = vmatmul.f32.gmra.mxu0 %v554
      %v678 = vpop.f32.mrf.mxu0
      %v679 = vadd.f32 %v446, %v678
      %680 = vmatmul.f32.gmra.mxu0 %v557
      %v681 = vpop.f32.mrf.mxu0
      %v682 = vadd.f32 %v449, %v681
      %683 = vmatmul.f32.gmra.mxu0 %v560
      %v684 = vpop.f32.mrf.mxu0
      %v685 = vadd.f32 %v452, %v684
      %686 = vmatmul.f32.gmra.mxu0 %v563
      %v687 = vpop.f32.mrf.mxu0
      %v688 = vadd.f32 %v455, %v687
      %689 = vmatmul.f32.gmra.mxu0 %v566
      %v690 = vpop.f32.mrf.mxu0
      %v691 = vadd.f32 %v458, %v690
      %692 = vmatmul.f32.gmra.mxu0 %v569
      %v693 = vpop.f32.mrf.mxu0
      %v694 = vadd.f32 %v461, %v693
      %695 = vmatmul.f32.gmra.mxu0 %v572
      %v696 = vpop.f32.mrf.mxu0
      %v697 = vadd.f32 %v464, %v696
      %698 = vmatmul.f32.gmra.mxu0 %v575
      %v699 = vpop.f32.mrf.mxu0
      %v700 = vadd.f32 %v467, %v699
      %701 = vmatmul.f32.gmra.mxu0 %v578
      %v702 = vpop.f32.mrf.mxu0
      %v703 = vadd.f32 %v470, %v702
      %704 = vmatmul.f32.gmra.mxu0 %v581
      %v705 = vpop.f32.mrf.mxu0
      %v706 = vadd.f32 %v473, %v705
      %707 = vdwg.mxu0
      %v708 = vld [vmem:[%s138 + $0x2] sm:$0xff]
      %v709 = vld [vmem:[%s138 + $0xa] sm:$0xff]
      %v710 = vld [vmem:[%s138 + $0x12] sm:$0xff]
      %v711 = vld [vmem:[%s138 + $0x1a] sm:$0xff]
      %v712 = vld [vmem:[%s138 + $0x22] sm:$0xff]
      %v713 = vld [vmem:[%s138 + $0x2a] sm:$0xff]
      %v714 = vld [vmem:[%s138 + $0x32] sm:$0xff]
      %v715 = vld [vmem:[%s138 + $0x3a] sm:$0xff]
      %v716 = vld [vmem:[%s138 + $0x42] sm:$0xff]
      %v717 = vld [vmem:[%s138 + $0x4a] sm:$0xff]
      %v718 = vld [vmem:[%s138 + $0x52] sm:$0xff]
      %v719 = vld [vmem:[%s138 + $0x5a] sm:$0xff]
      %v720 = vld [vmem:[%s138 + $0x62] sm:$0xff]
      %v721 = vld [vmem:[%s138 + $0x6a] sm:$0xff]
      %v722 = vld [vmem:[%s138 + $0x72] sm:$0xff]
      %v723 = vld [vmem:[%s138 + $0x7a] sm:$0xff]
      %v724 = vld [vmem:[%s138 + $0x82] sm:$0xff]
      %v725 = vld [vmem:[%s138 + $0x8a] sm:$0xff]
      %v726 = vld [vmem:[%s138 + $0x92] sm:$0xff]
      %v727 = vld [vmem:[%s138 + $0x9a] sm:$0xff]
      %v728 = vld [vmem:[%s138 + $0xa2] sm:$0xff]
      %v729 = vld [vmem:[%s138 + $0xaa] sm:$0xff]
      %v730 = vld [vmem:[%s138 + $0xb2] sm:$0xff]
      %v731 = vld [vmem:[%s138 + $0xba] sm:$0xff]
      %v732 = vld [vmem:[%s138 + $0xc2] sm:$0xff]
      %v733 = vld [vmem:[%s138 + $0xca] sm:$0xff]
      %v734 = vld [vmem:[%s138 + $0xd2] sm:$0xff]
      %v735 = vld [vmem:[%s138 + $0xda] sm:$0xff]
      %v736 = vld [vmem:[%s138 + $0xe2] sm:$0xff]
      %v737 = vld [vmem:[%s138 + $0xea] sm:$0xff]
      %v738 = vld [vmem:[%s138 + $0xf2] sm:$0xff]
      %v739 = vld [vmem:[%s138 + $0xfa] sm:$0xff]
      %v740 = vld [vmem:[%s138 + $0x102] sm:$0xff]
      %v741 = vld [vmem:[%s138 + $0x10a] sm:$0xff]
      %v742 = vld [vmem:[%s138 + $0x112] sm:$0xff]
      %v743 = vld [vmem:[%s138 + $0x11a] sm:$0xff]
      %s744 = scalar_lea.vmem %s1, 192
      %v745 = vld [vmem:[%s744] sm:$0xff]
      %v746 = vld [vmem:[%s744 + $0x8] sm:$0xff]
      %v747 = vld [vmem:[%s744 + $0x10] sm:$0xff]
      %v748 = vld [vmem:[%s744 + $0x18] sm:$0xff]
      %v749 = vld [vmem:[%s744 + $0x20] sm:$0xff]
      %v750 = vld [vmem:[%s744 + $0x28] sm:$0xff]
      %v751 = vld [vmem:[%s744 + $0x30] sm:$0xff]
      %v752 = vld [vmem:[%s744 + $0x38] sm:$0xff]
      %v753 = vld [vmem:[%s744 + $0x40] sm:$0xff]
      %v754 = vld [vmem:[%s744 + $0x48] sm:$0xff]
      %v755 = vld [vmem:[%s744 + $0x50] sm:$0xff]
      %v756 = vld [vmem:[%s744 + $0x58] sm:$0xff]
      %v758 = vsel %vm241, %v708, 0
      %v761 = vsel %vm241, %v709, 0
      %v764 = vsel %vm241, %v710, 0
      %v767 = vsel %vm241, %v711, 0
      %v770 = vsel %vm241, %v712, 0
      %v773 = vsel %vm241, %v713, 0
      %v776 = vsel %vm241, %v714, 0
      %v779 = vsel %vm241, %v715, 0
      %v782 = vsel %vm241, %v716, 0
      %v785 = vsel %vm241, %v717, 0
      %v788 = vsel %vm241, %v718, 0
      %v791 = vsel %vm241, %v719, 0
      %v794 = vsel %vm241, %v720, 0
      %v797 = vsel %vm241, %v721, 0
      %v800 = vsel %vm241, %v722, 0
      %v803 = vsel %vm241, %v723, 0
      %v806 = vsel %vm241, %v724, 0
      %v809 = vsel %vm241, %v725, 0
      %v812 = vsel %vm241, %v726, 0
      %v815 = vsel %vm241, %v727, 0
      %v818 = vsel %vm241, %v728, 0
      %v821 = vsel %vm241, %v729, 0
      %v824 = vsel %vm241, %v730, 0
      %v827 = vsel %vm241, %v731, 0
      %v830 = vsel %vm241, %v732, 0
      %v833 = vsel %vm241, %v733, 0
      %v836 = vsel %vm241, %v734, 0
      %v839 = vsel %vm241, %v735, 0
      %v842 = vsel %vm241, %v736, 0
      %v845 = vsel %vm241, %v737, 0
      %v848 = vsel %vm241, %v738, 0
      %v851 = vsel %vm241, %v739, 0
      %v854 = vsel %vm241, %v740, 0
      %v857 = vsel %vm241, %v741, 0
      %v860 = vsel %vm241, %v742, 0
      %v863 = vsel %vm241, %v743, 0
      %865 = vmatpush.msra.mxu0 0.0
      %866 = vmatpush.msra.mxu0 0.0
      %867 = vmatpush.msra.mxu0 0.0
      %868 = vmatpush.msra.mxu0 0.0
      %869 = vmatpush.msra.mxu0 %v756
      %870 = vmatpush.msra.mxu0 %v755
      %871 = vmatpush.msra.mxu0 %v754
      %872 = vmatpush.msra.mxu0 %v753
      %873 = vmatpush.msra.mxu0 %v752
      %874 = vmatpush.msra.mxu0 %v751
      %875 = vmatpush.msra.mxu0 %v750
      %876 = vmatpush.msra.mxu0 %v749
      %877 = vmatpush.msra.mxu0 %v748
      %878 = vmatpush.msra.mxu0 %v747
      %879 = vmatpush.msra.mxu0 %v746
      %880 = vmatpush.msra.mxu0 %v745
      %881 = vmatmul.f32.gmra.mxu0 %v758
      %v882 = vpop.f32.mrf.mxu0
      %v883 = vadd.f32 0.0, %v882
      %884 = vmatmul.f32.gmra.mxu0 %v761
      %v885 = vpop.f32.mrf.mxu0
      %v886 = vadd.f32 0.0, %v885
      %887 = vmatmul.f32.gmra.mxu0 %v764
      %v888 = vpop.f32.mrf.mxu0
      %v889 = vadd.f32 0.0, %v888
      %890 = vmatmul.f32.gmra.mxu0 %v767
      %v891 = vpop.f32.mrf.mxu0
      %v892 = vadd.f32 0.0, %v891
      %893 = vmatmul.f32.gmra.mxu0 %v770
      %v894 = vpop.f32.mrf.mxu0
      %v895 = vadd.f32 0.0, %v894
      %896 = vmatmul.f32.gmra.mxu0 %v773
      %v897 = vpop.f32.mrf.mxu0
      %v898 = vadd.f32 0.0, %v897
      %899 = vmatmul.f32.gmra.mxu0 %v776
      %v900 = vpop.f32.mrf.mxu0
      %v901 = vadd.f32 0.0, %v900
      %902 = vmatmul.f32.gmra.mxu0 %v779
      %v903 = vpop.f32.mrf.mxu0
      %v904 = vadd.f32 0.0, %v903
      %905 = vmatmul.f32.gmra.mxu0 %v782
      %v906 = vpop.f32.mrf.mxu0
      %v907 = vadd.f32 0.0, %v906
      %908 = vmatmul.f32.gmra.mxu0 %v785
      %v909 = vpop.f32.mrf.mxu0
      %v910 = vadd.f32 0.0, %v909
      %911 = vmatmul.f32.gmra.mxu0 %v788
      %v912 = vpop.f32.mrf.mxu0
      %v913 = vadd.f32 0.0, %v912
      %914 = vmatmul.f32.gmra.mxu0 %v791
      %v915 = vpop.f32.mrf.mxu0
      %v916 = vadd.f32 0.0, %v915
      %917 = vmatmul.f32.gmra.mxu0 %v794
      %v918 = vpop.f32.mrf.mxu0
      %v919 = vadd.f32 0.0, %v918
      %920 = vmatmul.f32.gmra.mxu0 %v797
      %v921 = vpop.f32.mrf.mxu0
      %v922 = vadd.f32 0.0, %v921
      %923 = vmatmul.f32.gmra.mxu0 %v800
      %v924 = vpop.f32.mrf.mxu0
      %v925 = vadd.f32 0.0, %v924
      %926 = vmatmul.f32.gmra.mxu0 %v803
      %v927 = vpop.f32.mrf.mxu0
      %v928 = vadd.f32 0.0, %v927
      %929 = vmatmul.f32.gmra.mxu0 %v806
      %v930 = vpop.f32.mrf.mxu0
      %v931 = vadd.f32 0.0, %v930
      %932 = vmatmul.f32.gmra.mxu0 %v809
      %v933 = vpop.f32.mrf.mxu0
      %v934 = vadd.f32 0.0, %v933
      %935 = vmatmul.f32.gmra.mxu0 %v812
      %v936 = vpop.f32.mrf.mxu0
      %v937 = vadd.f32 0.0, %v936
      %938 = vmatmul.f32.gmra.mxu0 %v815
      %v939 = vpop.f32.mrf.mxu0
      %v940 = vadd.f32 0.0, %v939
      %941 = vmatmul.f32.gmra.mxu0 %v818
      %v942 = vpop.f32.mrf.mxu0
      %v943 = vadd.f32 0.0, %v942
      %944 = vmatmul.f32.gmra.mxu0 %v821
      %v945 = vpop.f32.mrf.mxu0
      %v946 = vadd.f32 0.0, %v945
      %947 = vmatmul.f32.gmra.mxu0 %v824
      %v948 = vpop.f32.mrf.mxu0
      %v949 = vadd.f32 0.0, %v948
      %950 = vmatmul.f32.gmra.mxu0 %v827
      %v951 = vpop.f32.mrf.mxu0
      %v952 = vadd.f32 0.0, %v951
      %953 = vmatmul.f32.gmra.mxu0 %v830
      %v954 = vpop.f32.mrf.mxu0
      %v955 = vadd.f32 0.0, %v954
      %956 = vmatmul.f32.gmra.mxu0 %v833
      %v957 = vpop.f32.mrf.mxu0
      %v958 = vadd.f32 0.0, %v957
      %959 = vmatmul.f32.gmra.mxu0 %v836
      %v960 = vpop.f32.mrf.mxu0
      %v961 = vadd.f32 0.0, %v960
      %962 = vmatmul.f32.gmra.mxu0 %v839
      %v963 = vpop.f32.mrf.mxu0
      %v964 = vadd.f32 0.0, %v963
      %965 = vmatmul.f32.gmra.mxu0 %v842
      %v966 = vpop.f32.mrf.mxu0
      %v967 = vadd.f32 0.0, %v966
      %968 = vmatmul.f32.gmra.mxu0 %v845
      %v969 = vpop.f32.mrf.mxu0
      %v970 = vadd.f32 0.0, %v969
      %971 = vmatmul.f32.gmra.mxu0 %v848
      %v972 = vpop.f32.mrf.mxu0
      %v973 = vadd.f32 0.0, %v972
      %974 = vmatmul.f32.gmra.mxu0 %v851
      %v975 = vpop.f32.mrf.mxu0
      %v976 = vadd.f32 0.0, %v975
      %977 = vmatmul.f32.gmra.mxu0 %v854
      %v978 = vpop.f32.mrf.mxu0
      %v979 = vadd.f32 0.0, %v978
      %980 = vmatmul.f32.gmra.mxu0 %v857
      %v981 = vpop.f32.mrf.mxu0
      %v982 = vadd.f32 0.0, %v981
      %983 = vmatmul.f32.gmra.mxu0 %v860
      %v984 = vpop.f32.mrf.mxu0
      %v985 = vadd.f32 0.0, %v984
      %986 = vmatmul.f32.gmra.mxu0 %v863
      %v987 = vpop.f32.mrf.mxu0
      %v988 = vadd.f32 0.0, %v987
      %989 = vdwg.mxu0
      %v990 = vadd.f32 %v601, %v883
      %v991 = vadd.f32 %v604, %v886
      %v992 = vadd.f32 %v607, %v889
      %v993 = vadd.f32 %v610, %v892
      %v994 = vadd.f32 %v613, %v895
      %v995 = vadd.f32 %v616, %v898
      %v996 = vadd.f32 %v619, %v901
      %v997 = vadd.f32 %v622, %v904
      %v998 = vadd.f32 %v625, %v907
      %v999 = vadd.f32 %v628, %v910
      %v1000 = vadd.f32 %v631, %v913
      %v1001 = vadd.f32 %v634, %v916
      %v1002 = vadd.f32 %v637, %v919
      %v1003 = vadd.f32 %v640, %v922
      %v1004 = vadd.f32 %v643, %v925
      %v1005 = vadd.f32 %v646, %v928
      %v1006 = vadd.f32 %v649, %v931
      %v1007 = vadd.f32 %v652, %v934
      %v1008 = vadd.f32 %v655, %v937
      %v1009 = vadd.f32 %v658, %v940
      %v1010 = vadd.f32 %v661, %v943
      %v1011 = vadd.f32 %v664, %v946
      %v1012 = vadd.f32 %v667, %v949
      %v1013 = vadd.f32 %v670, %v952
      %v1014 = vadd.f32 %v673, %v955
      %v1015 = vadd.f32 %v676, %v958
      %v1016 = vadd.f32 %v679, %v961
      %v1017 = vadd.f32 %v682, %v964
      %v1018 = vadd.f32 %v685, %v967
      %v1019 = vadd.f32 %v688, %v970
      %v1020 = vadd.f32 %v691, %v973
      %v1021 = vadd.f32 %v694, %v976
      %v1022 = vadd.f32 %v697, %v979
      %v1023 = vadd.f32 %v700, %v982
      %v1024 = vadd.f32 %v703, %v985
      %v1025 = vadd.f32 %v706, %v988
      %v1026 = vld [vmem:[%s138 + $0x12] sm:$0xff]
      %v1027 = vld [vmem:[%s138 + $0x1a] sm:$0xff]
      %v1028 = vld [vmem:[%s138 + $0x22] sm:$0xff]
      %v1029 = vld [vmem:[%s138 + $0x2a] sm:$0xff]
      %v1030 = vld [vmem:[%s138 + $0x32] sm:$0xff]
      %v1031 = vld [vmem:[%s138 + $0x3a] sm:$0xff]
      %v1032 = vld [vmem:[%s138 + $0x42] sm:$0xff]
      %v1033 = vld [vmem:[%s138 + $0x4a] sm:$0xff]
      %v1034 = vld [vmem:[%s138 + $0x52] sm:$0xff]
      %v1035 = vld [vmem:[%s138 + $0x5a] sm:$0xff]
      %v1036 = vld [vmem:[%s138 + $0x62] sm:$0xff]
      %v1037 = vld [vmem:[%s138 + $0x6a] sm:$0xff]
      %v1038 = vld [vmem:[%s138 + $0x72] sm:$0xff]
      %v1039 = vld [vmem:[%s138 + $0x7a] sm:$0xff]
      %v1040 = vld [vmem:[%s138 + $0x82] sm:$0xff]
      %v1041 = vld [vmem:[%s138 + $0x8a] sm:$0xff]
      %v1042 = vld [vmem:[%s138 + $0x92] sm:$0xff]
      %v1043 = vld [vmem:[%s138 + $0x9a] sm:$0xff]
      %v1044 = vld [vmem:[%s138 + $0xa2] sm:$0xff]
      %v1045 = vld [vmem:[%s138 + $0xaa] sm:$0xff]
      %v1046 = vld [vmem:[%s138 + $0xb2] sm:$0xff]
      %v1047 = vld [vmem:[%s138 + $0xba] sm:$0xff]
      %v1048 = vld [vmem:[%s138 + $0xc2] sm:$0xff]
      %v1049 = vld [vmem:[%s138 + $0xca] sm:$0xff]
      %v1050 = vld [vmem:[%s138 + $0xd2] sm:$0xff]
      %v1051 = vld [vmem:[%s138 + $0xda] sm:$0xff]
      %v1052 = vld [vmem:[%s138 + $0xe2] sm:$0xff]
      %v1053 = vld [vmem:[%s138 + $0xea] sm:$0xff]
      %v1054 = vld [vmem:[%s138 + $0xf2] sm:$0xff]
      %v1055 = vld [vmem:[%s138 + $0xfa] sm:$0xff]
      %v1056 = vld [vmem:[%s138 + $0x102] sm:$0xff]
      %v1057 = vld [vmem:[%s138 + $0x10a] sm:$0xff]
      %v1058 = vld [vmem:[%s138 + $0x112] sm:$0xff]
      %v1059 = vld [vmem:[%s138 + $0x11a] sm:$0xff]
      %v1060 = vld [vmem:[%s138 + $0x122] sm:$0xff]
      %v1061 = vld [vmem:[%s138 + $0x12a] sm:$0xff]
      %s1062 = scalar_lea.vmem %s1, 288
      %v1063 = vld [vmem:[%s1062] sm:$0xff]
      %v1064 = vld [vmem:[%s1062 + $0x8] sm:$0xff]
      %v1065 = vld [vmem:[%s1062 + $0x10] sm:$0xff]
      %v1066 = vld [vmem:[%s1062 + $0x18] sm:$0xff]
      %v1067 = vld [vmem:[%s1062 + $0x20] sm:$0xff]
      %v1068 = vld [vmem:[%s1062 + $0x28] sm:$0xff]
      %v1069 = vld [vmem:[%s1062 + $0x30] sm:$0xff]
      %v1070 = vld [vmem:[%s1062 + $0x38] sm:$0xff]
      %v1071 = vld [vmem:[%s1062 + $0x40] sm:$0xff]
      %v1072 = vld [vmem:[%s1062 + $0x48] sm:$0xff]
      %v1073 = vld [vmem:[%s1062 + $0x50] sm:$0xff]
      %v1074 = vld [vmem:[%s1062 + $0x58] sm:$0xff]
      %v1076 = vsel %vm241, %v1026, 0
      %v1079 = vsel %vm241, %v1027, 0
      %v1082 = vsel %vm241, %v1028, 0
      %v1085 = vsel %vm241, %v1029, 0
      %v1088 = vsel %vm241, %v1030, 0
      %v1091 = vsel %vm241, %v1031, 0
      %v1094 = vsel %vm241, %v1032, 0
      %v1097 = vsel %vm241, %v1033, 0
      %v1100 = vsel %vm241, %v1034, 0
      %v1103 = vsel %vm241, %v1035, 0
      %v1106 = vsel %vm241, %v1036, 0
      %v1109 = vsel %vm241, %v1037, 0
      %v1112 = vsel %vm241, %v1038, 0
      %v1115 = vsel %vm241, %v1039, 0
      %v1118 = vsel %vm241, %v1040, 0
      %v1121 = vsel %vm241, %v1041, 0
      %v1124 = vsel %vm241, %v1042, 0
      %v1127 = vsel %vm241, %v1043, 0
      %v1130 = vsel %vm241, %v1044, 0
      %v1133 = vsel %vm241, %v1045, 0
      %v1136 = vsel %vm241, %v1046, 0
      %v1139 = vsel %vm241, %v1047, 0
      %v1142 = vsel %vm241, %v1048, 0
      %v1145 = vsel %vm241, %v1049, 0
      %v1148 = vsel %vm241, %v1050, 0
      %v1151 = vsel %vm241, %v1051, 0
      %v1154 = vsel %vm241, %v1052, 0
      %v1157 = vsel %vm241, %v1053, 0
      %v1160 = vsel %vm241, %v1054, 0
      %v1163 = vsel %vm241, %v1055, 0
      %v1166 = vsel %vm241, %v1056, 0
      %v1169 = vsel %vm241, %v1057, 0
      %v1172 = vsel %vm241, %v1058, 0
      %v1175 = vsel %vm241, %v1059, 0
      %v1178 = vsel %vm241, %v1060, 0
      %v1181 = vsel %vm241, %v1061, 0
      %1183 = vmatpush.msra.mxu0 0.0
      %1184 = vmatpush.msra.mxu0 0.0
      %1185 = vmatpush.msra.mxu0 0.0
      %1186 = vmatpush.msra.mxu0 0.0
      %1187 = vmatpush.msra.mxu0 %v1074
      %1188 = vmatpush.msra.mxu0 %v1073
      %1189 = vmatpush.msra.mxu0 %v1072
      %1190 = vmatpush.msra.mxu0 %v1071
      %1191 = vmatpush.msra.mxu0 %v1070
      %1192 = vmatpush.msra.mxu0 %v1069
      %1193 = vmatpush.msra.mxu0 %v1068
      %1194 = vmatpush.msra.mxu0 %v1067
      %1195 = vmatpush.msra.mxu0 %v1066
      %1196 = vmatpush.msra.mxu0 %v1065
      %1197 = vmatpush.msra.mxu0 %v1064
      %1198 = vmatpush.msra.mxu0 %v1063
      %1199 = vmatmul.f32.gmra.mxu0 %v1076
      %v1200 = vpop.f32.mrf.mxu0
      %v1201 = vadd.f32 0.0, %v1200
      %1202 = vmatmul.f32.gmra.mxu0 %v1079
      %v1203 = vpop.f32.mrf.mxu0
      %v1204 = vadd.f32 0.0, %v1203
      %1205 = vmatmul.f32.gmra.mxu0 %v1082
      %v1206 = vpop.f32.mrf.mxu0
      %v1207 = vadd.f32 0.0, %v1206
      %1208 = vmatmul.f32.gmra.mxu0 %v1085
      %v1209 = vpop.f32.mrf.mxu0
      %v1210 = vadd.f32 0.0, %v1209
      %1211 = vmatmul.f32.gmra.mxu0 %v1088
      %v1212 = vpop.f32.mrf.mxu0
      %v1213 = vadd.f32 0.0, %v1212
      %1214 = vmatmul.f32.gmra.mxu0 %v1091
      %v1215 = vpop.f32.mrf.mxu0
      %v1216 = vadd.f32 0.0, %v1215
      %1217 = vmatmul.f32.gmra.mxu0 %v1094
      %v1218 = vpop.f32.mrf.mxu0
      %v1219 = vadd.f32 0.0, %v1218
      %1220 = vmatmul.f32.gmra.mxu0 %v1097
      %v1221 = vpop.f32.mrf.mxu0
      %v1222 = vadd.f32 0.0, %v1221
      %1223 = vmatmul.f32.gmra.mxu0 %v1100
      %v1224 = vpop.f32.mrf.mxu0
      %v1225 = vadd.f32 0.0, %v1224
      %1226 = vmatmul.f32.gmra.mxu0 %v1103
      %v1227 = vpop.f32.mrf.mxu0
      %v1228 = vadd.f32 0.0, %v1227
      %1229 = vmatmul.f32.gmra.mxu0 %v1106
      %v1230 = vpop.f32.mrf.mxu0
      %v1231 = vadd.f32 0.0, %v1230
      %1232 = vmatmul.f32.gmra.mxu0 %v1109
      %v1233 = vpop.f32.mrf.mxu0
      %v1234 = vadd.f32 0.0, %v1233
      %1235 = vmatmul.f32.gmra.mxu0 %v1112
      %v1236 = vpop.f32.mrf.mxu0
      %v1237 = vadd.f32 0.0, %v1236
      %1238 = vmatmul.f32.gmra.mxu0 %v1115
      %v1239 = vpop.f32.mrf.mxu0
      %v1240 = vadd.f32 0.0, %v1239
      %1241 = vmatmul.f32.gmra.mxu0 %v1118
      %v1242 = vpop.f32.mrf.mxu0
      %v1243 = vadd.f32 0.0, %v1242
      %1244 = vmatmul.f32.gmra.mxu0 %v1121
      %v1245 = vpop.f32.mrf.mxu0
      %v1246 = vadd.f32 0.0, %v1245
      %1247 = vmatmul.f32.gmra.mxu0 %v1124
      %v1248 = vpop.f32.mrf.mxu0
      %v1249 = vadd.f32 0.0, %v1248
      %1250 = vmatmul.f32.gmra.mxu0 %v1127
      %v1251 = vpop.f32.mrf.mxu0
      %v1252 = vadd.f32 0.0, %v1251
      %1253 = vmatmul.f32.gmra.mxu0 %v1130
      %v1254 = vpop.f32.mrf.mxu0
      %v1255 = vadd.f32 0.0, %v1254
      %1256 = vmatmul.f32.gmra.mxu0 %v1133
      %v1257 = vpop.f32.mrf.mxu0
      %v1258 = vadd.f32 0.0, %v1257
      %1259 = vmatmul.f32.gmra.mxu0 %v1136
      %v1260 = vpop.f32.mrf.mxu0
      %v1261 = vadd.f32 0.0, %v1260
      %1262 = vmatmul.f32.gmra.mxu0 %v1139
      %v1263 = vpop.f32.mrf.mxu0
      %v1264 = vadd.f32 0.0, %v1263
      %1265 = vmatmul.f32.gmra.mxu0 %v1142
      %v1266 = vpop.f32.mrf.mxu0
      %v1267 = vadd.f32 0.0, %v1266
      %1268 = vmatmul.f32.gmra.mxu0 %v1145
      %v1269 = vpop.f32.mrf.mxu0
      %v1270 = vadd.f32 0.0, %v1269
      %1271 = vmatmul.f32.gmra.mxu0 %v1148
      %v1272 = vpop.f32.mrf.mxu0
      %v1273 = vadd.f32 0.0, %v1272
      %1274 = vmatmul.f32.gmra.mxu0 %v1151
      %v1275 = vpop.f32.mrf.mxu0
      %v1276 = vadd.f32 0.0, %v1275
      %1277 = vmatmul.f32.gmra.mxu0 %v1154
      %v1278 = vpop.f32.mrf.mxu0
      %v1279 = vadd.f32 0.0, %v1278
      %1280 = vmatmul.f32.gmra.mxu0 %v1157
      %v1281 = vpop.f32.mrf.mxu0
      %v1282 = vadd.f32 0.0, %v1281
      %1283 = vmatmul.f32.gmra.mxu0 %v1160
      %v1284 = vpop.f32.mrf.mxu0
      %v1285 = vadd.f32 0.0, %v1284
      %1286 = vmatmul.f32.gmra.mxu0 %v1163
      %v1287 = vpop.f32.mrf.mxu0
      %v1288 = vadd.f32 0.0, %v1287
      %1289 = vmatmul.f32.gmra.mxu0 %v1166
      %v1290 = vpop.f32.mrf.mxu0
      %v1291 = vadd.f32 0.0, %v1290
      %1292 = vmatmul.f32.gmra.mxu0 %v1169
      %v1293 = vpop.f32.mrf.mxu0
      %v1294 = vadd.f32 0.0, %v1293
      %1295 = vmatmul.f32.gmra.mxu0 %v1172
      %v1296 = vpop.f32.mrf.mxu0
      %v1297 = vadd.f32 0.0, %v1296
      %1298 = vmatmul.f32.gmra.mxu0 %v1175
      %v1299 = vpop.f32.mrf.mxu0
      %v1300 = vadd.f32 0.0, %v1299
      %1301 = vmatmul.f32.gmra.mxu0 %v1178
      %v1302 = vpop.f32.mrf.mxu0
      %v1303 = vadd.f32 0.0, %v1302
      %1304 = vmatmul.f32.gmra.mxu0 %v1181
      %v1305 = vpop.f32.mrf.mxu0
      %v1306 = vadd.f32 0.0, %v1305
      %1307 = vdwg.mxu0
      %v1308 = vadd.f32 %v990, %v1201
      %v1309 = vadd.f32 %v991, %v1204
      %v1310 = vadd.f32 %v992, %v1207
      %v1311 = vadd.f32 %v993, %v1210
      %v1312 = vadd.f32 %v994, %v1213
      %v1313 = vadd.f32 %v995, %v1216
      %v1314 = vadd.f32 %v996, %v1219
      %v1315 = vadd.f32 %v997, %v1222
      %v1316 = vadd.f32 %v998, %v1225
      %v1317 = vadd.f32 %v999, %v1228
      %v1318 = vadd.f32 %v1000, %v1231
      %v1319 = vadd.f32 %v1001, %v1234
      %v1320 = vadd.f32 %v1002, %v1237
      %v1321 = vadd.f32 %v1003, %v1240
      %v1322 = vadd.f32 %v1004, %v1243
      %v1323 = vadd.f32 %v1005, %v1246
      %v1324 = vadd.f32 %v1006, %v1249
      %v1325 = vadd.f32 %v1007, %v1252
      %v1326 = vadd.f32 %v1008, %v1255
      %v1327 = vadd.f32 %v1009, %v1258
      %v1328 = vadd.f32 %v1010, %v1261
      %v1329 = vadd.f32 %v1011, %v1264
      %v1330 = vadd.f32 %v1012, %v1267
      %v1331 = vadd.f32 %v1013, %v1270
      %v1332 = vadd.f32 %v1014, %v1273
      %v1333 = vadd.f32 %v1015, %v1276
      %v1334 = vadd.f32 %v1016, %v1279
      %v1335 = vadd.f32 %v1017, %v1282
      %v1336 = vadd.f32 %v1018, %v1285
      %v1337 = vadd.f32 %v1019, %v1288
      %v1338 = vadd.f32 %v1020, %v1291
      %v1339 = vadd.f32 %v1021, %v1294
      %v1340 = vadd.f32 %v1022, %v1297
      %v1341 = vadd.f32 %v1023, %v1300
      %v1342 = vadd.f32 %v1024, %v1303
      %v1343 = vadd.f32 %v1025, %v1306
      %v1344 = vld [vmem:[%s138 + $0x13] sm:$0xff]
      %v1345 = vld [vmem:[%s138 + $0x1b] sm:$0xff]
      %v1346 = vld [vmem:[%s138 + $0x23] sm:$0xff]
      %v1347 = vld [vmem:[%s138 + $0x2b] sm:$0xff]
      %v1348 = vld [vmem:[%s138 + $0x33] sm:$0xff]
      %v1349 = vld [vmem:[%s138 + $0x3b] sm:$0xff]
      %v1350 = vld [vmem:[%s138 + $0x43] sm:$0xff]
      %v1351 = vld [vmem:[%s138 + $0x4b] sm:$0xff]
      %v1352 = vld [vmem:[%s138 + $0x53] sm:$0xff]
      %v1353 = vld [vmem:[%s138 + $0x5b] sm:$0xff]
      %v1354 = vld [vmem:[%s138 + $0x63] sm:$0xff]
      %v1355 = vld [vmem:[%s138 + $0x6b] sm:$0xff]
      %v1356 = vld [vmem:[%s138 + $0x73] sm:$0xff]
      %v1357 = vld [vmem:[%s138 + $0x7b] sm:$0xff]
      %v1358 = vld [vmem:[%s138 + $0x83] sm:$0xff]
      %v1359 = vld [vmem:[%s138 + $0x8b] sm:$0xff]
      %v1360 = vld [vmem:[%s138 + $0x93] sm:$0xff]
      %v1361 = vld [vmem:[%s138 + $0x9b] sm:$0xff]
      %v1362 = vld [vmem:[%s138 + $0xa3] sm:$0xff]
      %v1363 = vld [vmem:[%s138 + $0xab] sm:$0xff]
      %v1364 = vld [vmem:[%s138 + $0xb3] sm:$0xff]
      %v1365 = vld [vmem:[%s138 + $0xbb] sm:$0xff]
      %v1366 = vld [vmem:[%s138 + $0xc3] sm:$0xff]
      %v1367 = vld [vmem:[%s138 + $0xcb] sm:$0xff]
      %v1368 = vld [vmem:[%s138 + $0xd3] sm:$0xff]
      %v1369 = vld [vmem:[%s138 + $0xdb] sm:$0xff]
      %v1370 = vld [vmem:[%s138 + $0xe3] sm:$0xff]
      %v1371 = vld [vmem:[%s138 + $0xeb] sm:$0xff]
      %v1372 = vld [vmem:[%s138 + $0xf3] sm:$0xff]
      %v1373 = vld [vmem:[%s138 + $0xfb] sm:$0xff]
      %v1374 = vld [vmem:[%s138 + $0x103] sm:$0xff]
      %v1375 = vld [vmem:[%s138 + $0x10b] sm:$0xff]
      %v1376 = vld [vmem:[%s138 + $0x113] sm:$0xff]
      %v1377 = vld [vmem:[%s138 + $0x11b] sm:$0xff]
      %v1378 = vld [vmem:[%s138 + $0x123] sm:$0xff]
      %v1379 = vld [vmem:[%s138 + $0x12b] sm:$0xff]
      %s1380 = scalar_lea.vmem %s1, 384
      %v1381 = vld [vmem:[%s1380] sm:$0xff]
      %v1382 = vld [vmem:[%s1380 + $0x8] sm:$0xff]
      %v1383 = vld [vmem:[%s1380 + $0x10] sm:$0xff]
      %v1384 = vld [vmem:[%s1380 + $0x18] sm:$0xff]
      %v1385 = vld [vmem:[%s1380 + $0x20] sm:$0xff]
      %v1386 = vld [vmem:[%s1380 + $0x28] sm:$0xff]
      %v1387 = vld [vmem:[%s1380 + $0x30] sm:$0xff]
      %v1388 = vld [vmem:[%s1380 + $0x38] sm:$0xff]
      %v1389 = vld [vmem:[%s1380 + $0x40] sm:$0xff]
      %v1390 = vld [vmem:[%s1380 + $0x48] sm:$0xff]
      %v1391 = vld [vmem:[%s1380 + $0x50] sm:$0xff]
      %v1392 = vld [vmem:[%s1380 + $0x58] sm:$0xff]
      %v1394 = vsel %vm241, %v1344, 0
      %v1397 = vsel %vm241, %v1345, 0
      %v1400 = vsel %vm241, %v1346, 0
      %v1403 = vsel %vm241, %v1347, 0
      %v1406 = vsel %vm241, %v1348, 0
      %v1409 = vsel %vm241, %v1349, 0
      %v1412 = vsel %vm241, %v1350, 0
      %v1415 = vsel %vm241, %v1351, 0
      %v1418 = vsel %vm241, %v1352, 0
      %v1421 = vsel %vm241, %v1353, 0
      %v1424 = vsel %vm241, %v1354, 0
      %v1427 = vsel %vm241, %v1355, 0
      %v1430 = vsel %vm241, %v1356, 0
      %v1433 = vsel %vm241, %v1357, 0
      %v1436 = vsel %vm241, %v1358, 0
      %v1439 = vsel %vm241, %v1359, 0
      %v1442 = vsel %vm241, %v1360, 0
      %v1445 = vsel %vm241, %v1361, 0
      %v1448 = vsel %vm241, %v1362, 0
      %v1451 = vsel %vm241, %v1363, 0
      %v1454 = vsel %vm241, %v1364, 0
      %v1457 = vsel %vm241, %v1365, 0
      %v1460 = vsel %vm241, %v1366, 0
      %v1463 = vsel %vm241, %v1367, 0
      %v1466 = vsel %vm241, %v1368, 0
      %v1469 = vsel %vm241, %v1369, 0
      %v1472 = vsel %vm241, %v1370, 0
      %v1475 = vsel %vm241, %v1371, 0
      %v1478 = vsel %vm241, %v1372, 0
      %v1481 = vsel %vm241, %v1373, 0
      %v1484 = vsel %vm241, %v1374, 0
      %v1487 = vsel %vm241, %v1375, 0
      %v1490 = vsel %vm241, %v1376, 0
      %v1493 = vsel %vm241, %v1377, 0
      %v1496 = vsel %vm241, %v1378, 0
      %v1499 = vsel %vm241, %v1379, 0
      %1501 = vmatpush.msra.mxu0 0.0
      %1502 = vmatpush.msra.mxu0 0.0
      %1503 = vmatpush.msra.mxu0 0.0
      %1504 = vmatpush.msra.mxu0 0.0
      %1505 = vmatpush.msra.mxu0 %v1392
      %1506 = vmatpush.msra.mxu0 %v1391
      %1507 = vmatpush.msra.mxu0 %v1390
      %1508 = vmatpush.msra.mxu0 %v1389
      %1509 = vmatpush.msra.mxu0 %v1388
      %1510 = vmatpush.msra.mxu0 %v1387
      %1511 = vmatpush.msra.mxu0 %v1386
      %1512 = vmatpush.msra.mxu0 %v1385
      %1513 = vmatpush.msra.mxu0 %v1384
      %1514 = vmatpush.msra.mxu0 %v1383
      %1515 = vmatpush.msra.mxu0 %v1382
      %1516 = vmatpush.msra.mxu0 %v1381
      %1517 = vmatmul.f32.gmra.mxu0 %v1394
      %v1518 = vpop.f32.mrf.mxu0
      %v1519 = vadd.f32 0.0, %v1518
      %1520 = vmatmul.f32.gmra.mxu0 %v1397
      %v1521 = vpop.f32.mrf.mxu0
      %v1522 = vadd.f32 0.0, %v1521
      %1523 = vmatmul.f32.gmra.mxu0 %v1400
      %v1524 = vpop.f32.mrf.mxu0
      %v1525 = vadd.f32 0.0, %v1524
      %1526 = vmatmul.f32.gmra.mxu0 %v1403
      %v1527 = vpop.f32.mrf.mxu0
      %v1528 = vadd.f32 0.0, %v1527
      %1529 = vmatmul.f32.gmra.mxu0 %v1406
      %v1530 = vpop.f32.mrf.mxu0
      %v1531 = vadd.f32 0.0, %v1530
      %1532 = vmatmul.f32.gmra.mxu0 %v1409
      %v1533 = vpop.f32.mrf.mxu0
      %v1534 = vadd.f32 0.0, %v1533
      %1535 = vmatmul.f32.gmra.mxu0 %v1412
      %v1536 = vpop.f32.mrf.mxu0
      %v1537 = vadd.f32 0.0, %v1536
      %1538 = vmatmul.f32.gmra.mxu0 %v1415
      %v1539 = vpop.f32.mrf.mxu0
      %v1540 = vadd.f32 0.0, %v1539
      %1541 = vmatmul.f32.gmra.mxu0 %v1418
      %v1542 = vpop.f32.mrf.mxu0
      %v1543 = vadd.f32 0.0, %v1542
      %1544 = vmatmul.f32.gmra.mxu0 %v1421
      %v1545 = vpop.f32.mrf.mxu0
      %v1546 = vadd.f32 0.0, %v1545
      %1547 = vmatmul.f32.gmra.mxu0 %v1424
      %v1548 = vpop.f32.mrf.mxu0
      %v1549 = vadd.f32 0.0, %v1548
      %1550 = vmatmul.f32.gmra.mxu0 %v1427
      %v1551 = vpop.f32.mrf.mxu0
      %v1552 = vadd.f32 0.0, %v1551
      %1553 = vmatmul.f32.gmra.mxu0 %v1430
      %v1554 = vpop.f32.mrf.mxu0
      %v1555 = vadd.f32 0.0, %v1554
      %1556 = vmatmul.f32.gmra.mxu0 %v1433
      %v1557 = vpop.f32.mrf.mxu0
      %v1558 = vadd.f32 0.0, %v1557
      %1559 = vmatmul.f32.gmra.mxu0 %v1436
      %v1560 = vpop.f32.mrf.mxu0
      %v1561 = vadd.f32 0.0, %v1560
      %1562 = vmatmul.f32.gmra.mxu0 %v1439
      %v1563 = vpop.f32.mrf.mxu0
      %v1564 = vadd.f32 0.0, %v1563
      %1565 = vmatmul.f32.gmra.mxu0 %v1442
      %v1566 = vpop.f32.mrf.mxu0
      %v1567 = vadd.f32 0.0, %v1566
      %1568 = vmatmul.f32.gmra.mxu0 %v1445
      %v1569 = vpop.f32.mrf.mxu0
      %v1570 = vadd.f32 0.0, %v1569
      %1571 = vmatmul.f32.gmra.mxu0 %v1448
      %v1572 = vpop.f32.mrf.mxu0
      %v1573 = vadd.f32 0.0, %v1572
      %1574 = vmatmul.f32.gmra.mxu0 %v1451
      %v1575 = vpop.f32.mrf.mxu0
      %v1576 = vadd.f32 0.0, %v1575
      %1577 = vmatmul.f32.gmra.mxu0 %v1454
      %v1578 = vpop.f32.mrf.mxu0
      %v1579 = vadd.f32 0.0, %v1578
      %1580 = vmatmul.f32.gmra.mxu0 %v1457
      %v1581 = vpop.f32.mrf.mxu0
      %v1582 = vadd.f32 0.0, %v1581
      %1583 = vmatmul.f32.gmra.mxu0 %v1460
      %v1584 = vpop.f32.mrf.mxu0
      %v1585 = vadd.f32 0.0, %v1584
      %1586 = vmatmul.f32.gmra.mxu0 %v1463
      %v1587 = vpop.f32.mrf.mxu0
      %v1588 = vadd.f32 0.0, %v1587
      %1589 = vmatmul.f32.gmra.mxu0 %v1466
      %v1590 = vpop.f32.mrf.mxu0
      %v1591 = vadd.f32 0.0, %v1590
      %1592 = vmatmul.f32.gmra.mxu0 %v1469
      %v1593 = vpop.f32.mrf.mxu0
      %v1594 = vadd.f32 0.0, %v1593
      %1595 = vmatmul.f32.gmra.mxu0 %v1472
      %v1596 = vpop.f32.mrf.mxu0
      %v1597 = vadd.f32 0.0, %v1596
      %1598 = vmatmul.f32.gmra.mxu0 %v1475
      %v1599 = vpop.f32.mrf.mxu0
      %v1600 = vadd.f32 0.0, %v1599
      %1601 = vmatmul.f32.gmra.mxu0 %v1478
      %v1602 = vpop.f32.mrf.mxu0
      %v1603 = vadd.f32 0.0, %v1602
      %1604 = vmatmul.f32.gmra.mxu0 %v1481
      %v1605 = vpop.f32.mrf.mxu0
      %v1606 = vadd.f32 0.0, %v1605
      %1607 = vmatmul.f32.gmra.mxu0 %v1484
      %v1608 = vpop.f32.mrf.mxu0
      %v1609 = vadd.f32 0.0, %v1608
      %1610 = vmatmul.f32.gmra.mxu0 %v1487
      %v1611 = vpop.f32.mrf.mxu0
      %v1612 = vadd.f32 0.0, %v1611
      %1613 = vmatmul.f32.gmra.mxu0 %v1490
      %v1614 = vpop.f32.mrf.mxu0
      %v1615 = vadd.f32 0.0, %v1614
      %1616 = vmatmul.f32.gmra.mxu0 %v1493
      %v1617 = vpop.f32.mrf.mxu0
      %v1618 = vadd.f32 0.0, %v1617
      %1619 = vmatmul.f32.gmra.mxu0 %v1496
      %v1620 = vpop.f32.mrf.mxu0
      %v1621 = vadd.f32 0.0, %v1620
      %1622 = vmatmul.f32.gmra.mxu0 %v1499
      %v1623 = vpop.f32.mrf.mxu0
      %v1624 = vadd.f32 0.0, %v1623
      %1625 = vdwg.mxu0
      %v1626 = vadd.f32 %v1308, %v1519
      %v1627 = vadd.f32 %v1309, %v1522
      %v1628 = vadd.f32 %v1310, %v1525
      %v1629 = vadd.f32 %v1311, %v1528
      %v1630 = vadd.f32 %v1312, %v1531
      %v1631 = vadd.f32 %v1313, %v1534
      %v1632 = vadd.f32 %v1314, %v1537
      %v1633 = vadd.f32 %v1315, %v1540
      %v1634 = vadd.f32 %v1316, %v1543
      %v1635 = vadd.f32 %v1317, %v1546
      %v1636 = vadd.f32 %v1318, %v1549
      %v1637 = vadd.f32 %v1319, %v1552
      %v1638 = vadd.f32 %v1320, %v1555
      %v1639 = vadd.f32 %v1321, %v1558
      %v1640 = vadd.f32 %v1322, %v1561
      %v1641 = vadd.f32 %v1323, %v1564
      %v1642 = vadd.f32 %v1324, %v1567
      %v1643 = vadd.f32 %v1325, %v1570
      %v1644 = vadd.f32 %v1326, %v1573
      %v1645 = vadd.f32 %v1327, %v1576
      %v1646 = vadd.f32 %v1328, %v1579
      %v1647 = vadd.f32 %v1329, %v1582
      %v1648 = vadd.f32 %v1330, %v1585
      %v1649 = vadd.f32 %v1331, %v1588
      %v1650 = vadd.f32 %v1332, %v1591
      %v1651 = vadd.f32 %v1333, %v1594
      %v1652 = vadd.f32 %v1334, %v1597
      %v1653 = vadd.f32 %v1335, %v1600
      %v1654 = vadd.f32 %v1336, %v1603
      %v1655 = vadd.f32 %v1337, %v1606
      %v1656 = vadd.f32 %v1338, %v1609
      %v1657 = vadd.f32 %v1339, %v1612
      %v1658 = vadd.f32 %v1340, %v1615
      %v1659 = vadd.f32 %v1341, %v1618
      %v1660 = vadd.f32 %v1342, %v1621
      %v1661 = vadd.f32 %v1343, %v1624
      %v1662 = vld [vmem:[%s138 + $0x14] sm:$0xff]
      %v1663 = vld [vmem:[%s138 + $0x1c] sm:$0xff]
      %v1664 = vld [vmem:[%s138 + $0x24] sm:$0xff]
      %v1665 = vld [vmem:[%s138 + $0x2c] sm:$0xff]
      %v1666 = vld [vmem:[%s138 + $0x34] sm:$0xff]
      %v1667 = vld [vmem:[%s138 + $0x3c] sm:$0xff]
      %v1668 = vld [vmem:[%s138 + $0x44] sm:$0xff]
      %v1669 = vld [vmem:[%s138 + $0x4c] sm:$0xff]
      %v1670 = vld [vmem:[%s138 + $0x54] sm:$0xff]
      %v1671 = vld [vmem:[%s138 + $0x5c] sm:$0xff]
      %v1672 = vld [vmem:[%s138 + $0x64] sm:$0xff]
      %v1673 = vld [vmem:[%s138 + $0x6c] sm:$0xff]
      %v1674 = vld [vmem:[%s138 + $0x74] sm:$0xff]
      %v1675 = vld [vmem:[%s138 + $0x7c] sm:$0xff]
      %v1676 = vld [vmem:[%s138 + $0x84] sm:$0xff]
      %v1677 = vld [vmem:[%s138 + $0x8c] sm:$0xff]
      %v1678 = vld [vmem:[%s138 + $0x94] sm:$0xff]
      %v1679 = vld [vmem:[%s138 + $0x9c] sm:$0xff]
      %v1680 = vld [vmem:[%s138 + $0xa4] sm:$0xff]
      %v1681 = vld [vmem:[%s138 + $0xac] sm:$0xff]
      %v1682 = vld [vmem:[%s138 + $0xb4] sm:$0xff]
      %v1683 = vld [vmem:[%s138 + $0xbc] sm:$0xff]
      %v1684 = vld [vmem:[%s138 + $0xc4] sm:$0xff]
      %v1685 = vld [vmem:[%s138 + $0xcc] sm:$0xff]
      %v1686 = vld [vmem:[%s138 + $0xd4] sm:$0xff]
      %v1687 = vld [vmem:[%s138 + $0xdc] sm:$0xff]
      %v1688 = vld [vmem:[%s138 + $0xe4] sm:$0xff]
      %v1689 = vld [vmem:[%s138 + $0xec] sm:$0xff]
      %v1690 = vld [vmem:[%s138 + $0xf4] sm:$0xff]
      %v1691 = vld [vmem:[%s138 + $0xfc] sm:$0xff]
      %v1692 = vld [vmem:[%s138 + $0x104] sm:$0xff]
      %v1693 = vld [vmem:[%s138 + $0x10c] sm:$0xff]
      %v1694 = vld [vmem:[%s138 + $0x114] sm:$0xff]
      %v1695 = vld [vmem:[%s138 + $0x11c] sm:$0xff]
      %v1696 = vld [vmem:[%s138 + $0x124] sm:$0xff]
      %v1697 = vld [vmem:[%s138 + $0x12c] sm:$0xff]
      %s1698 = scalar_lea.vmem %s1, 480
      %v1699 = vld [vmem:[%s1698] sm:$0xff]
      %v1700 = vld [vmem:[%s1698 + $0x8] sm:$0xff]
      %v1701 = vld [vmem:[%s1698 + $0x10] sm:$0xff]
      %v1702 = vld [vmem:[%s1698 + $0x18] sm:$0xff]
      %v1703 = vld [vmem:[%s1698 + $0x20] sm:$0xff]
      %v1704 = vld [vmem:[%s1698 + $0x28] sm:$0xff]
      %v1705 = vld [vmem:[%s1698 + $0x30] sm:$0xff]
      %v1706 = vld [vmem:[%s1698 + $0x38] sm:$0xff]
      %v1707 = vld [vmem:[%s1698 + $0x40] sm:$0xff]
      %v1708 = vld [vmem:[%s1698 + $0x48] sm:$0xff]
      %v1709 = vld [vmem:[%s1698 + $0x50] sm:$0xff]
      %v1710 = vld [vmem:[%s1698 + $0x58] sm:$0xff]
      %v1712 = vsel %vm241, %v1662, 0
      %v1715 = vsel %vm241, %v1663, 0
      %v1718 = vsel %vm241, %v1664, 0
      %v1721 = vsel %vm241, %v1665, 0
      %v1724 = vsel %vm241, %v1666, 0
      %v1727 = vsel %vm241, %v1667, 0
      %v1730 = vsel %vm241, %v1668, 0
      %v1733 = vsel %vm241, %v1669, 0
      %v1736 = vsel %vm241, %v1670, 0
      %v1739 = vsel %vm241, %v1671, 0
      %v1742 = vsel %vm241, %v1672, 0
      %v1745 = vsel %vm241, %v1673, 0
      %v1748 = vsel %vm241, %v1674, 0
      %v1751 = vsel %vm241, %v1675, 0
      %v1754 = vsel %vm241, %v1676, 0
      %v1757 = vsel %vm241, %v1677, 0
      %v1760 = vsel %vm241, %v1678, 0
      %v1763 = vsel %vm241, %v1679, 0
      %v1766 = vsel %vm241, %v1680, 0
      %v1769 = vsel %vm241, %v1681, 0
      %v1772 = vsel %vm241, %v1682, 0
      %v1775 = vsel %vm241, %v1683, 0
      %v1778 = vsel %vm241, %v1684, 0
      %v1781 = vsel %vm241, %v1685, 0
      %v1784 = vsel %vm241, %v1686, 0
      %v1787 = vsel %vm241, %v1687, 0
      %v1790 = vsel %vm241, %v1688, 0
      %v1793 = vsel %vm241, %v1689, 0
      %v1796 = vsel %vm241, %v1690, 0
      %v1799 = vsel %vm241, %v1691, 0
      %v1802 = vsel %vm241, %v1692, 0
      %v1805 = vsel %vm241, %v1693, 0
      %v1808 = vsel %vm241, %v1694, 0
      %v1811 = vsel %vm241, %v1695, 0
      %v1814 = vsel %vm241, %v1696, 0
      %v1817 = vsel %vm241, %v1697, 0
      %1819 = vmatpush.msra.mxu0 0.0
      %1820 = vmatpush.msra.mxu0 0.0
      %1821 = vmatpush.msra.mxu0 0.0
      %1822 = vmatpush.msra.mxu0 0.0
      %1823 = vmatpush.msra.mxu0 %v1710
      %1824 = vmatpush.msra.mxu0 %v1709
      %1825 = vmatpush.msra.mxu0 %v1708
      %1826 = vmatpush.msra.mxu0 %v1707
      %1827 = vmatpush.msra.mxu0 %v1706
      %1828 = vmatpush.msra.mxu0 %v1705
      %1829 = vmatpush.msra.mxu0 %v1704
      %1830 = vmatpush.msra.mxu0 %v1703
      %1831 = vmatpush.msra.mxu0 %v1702
      %1832 = vmatpush.msra.mxu0 %v1701
      %1833 = vmatpush.msra.mxu0 %v1700
      %1834 = vmatpush.msra.mxu0 %v1699
      %1835 = vmatmul.f32.gmra.mxu0 %v1712
      %v1836 = vpop.f32.mrf.mxu0
      %v1837 = vadd.f32 0.0, %v1836
      %1838 = vmatmul.f32.gmra.mxu0 %v1715
      %v1839 = vpop.f32.mrf.mxu0
      %v1840 = vadd.f32 0.0, %v1839
      %1841 = vmatmul.f32.gmra.mxu0 %v1718
      %v1842 = vpop.f32.mrf.mxu0
      %v1843 = vadd.f32 0.0, %v1842
      %1844 = vmatmul.f32.gmra.mxu0 %v1721
      %v1845 = vpop.f32.mrf.mxu0
      %v1846 = vadd.f32 0.0, %v1845
      %1847 = vmatmul.f32.gmra.mxu0 %v1724
      %v1848 = vpop.f32.mrf.mxu0
      %v1849 = vadd.f32 0.0, %v1848
      %1850 = vmatmul.f32.gmra.mxu0 %v1727
      %v1851 = vpop.f32.mrf.mxu0
      %v1852 = vadd.f32 0.0, %v1851
      %1853 = vmatmul.f32.gmra.mxu0 %v1730
      %v1854 = vpop.f32.mrf.mxu0
      %v1855 = vadd.f32 0.0, %v1854
      %1856 = vmatmul.f32.gmra.mxu0 %v1733
      %v1857 = vpop.f32.mrf.mxu0
      %v1858 = vadd.f32 0.0, %v1857
      %1859 = vmatmul.f32.gmra.mxu0 %v1736
      %v1860 = vpop.f32.mrf.mxu0
      %v1861 = vadd.f32 0.0, %v1860
      %1862 = vmatmul.f32.gmra.mxu0 %v1739
      %v1863 = vpop.f32.mrf.mxu0
      %v1864 = vadd.f32 0.0, %v1863
      %1865 = vmatmul.f32.gmra.mxu0 %v1742
      %v1866 = vpop.f32.mrf.mxu0
      %v1867 = vadd.f32 0.0, %v1866
      %1868 = vmatmul.f32.gmra.mxu0 %v1745
      %v1869 = vpop.f32.mrf.mxu0
      %v1870 = vadd.f32 0.0, %v1869
      %1871 = vmatmul.f32.gmra.mxu0 %v1748
      %v1872 = vpop.f32.mrf.mxu0
      %v1873 = vadd.f32 0.0, %v1872
      %1874 = vmatmul.f32.gmra.mxu0 %v1751
      %v1875 = vpop.f32.mrf.mxu0
      %v1876 = vadd.f32 0.0, %v1875
      %1877 = vmatmul.f32.gmra.mxu0 %v1754
      %v1878 = vpop.f32.mrf.mxu0
      %v1879 = vadd.f32 0.0, %v1878
      %1880 = vmatmul.f32.gmra.mxu0 %v1757
      %v1881 = vpop.f32.mrf.mxu0
      %v1882 = vadd.f32 0.0, %v1881
      %1883 = vmatmul.f32.gmra.mxu0 %v1760
      %v1884 = vpop.f32.mrf.mxu0
      %v1885 = vadd.f32 0.0, %v1884
      %1886 = vmatmul.f32.gmra.mxu0 %v1763
      %v1887 = vpop.f32.mrf.mxu0
      %v1888 = vadd.f32 0.0, %v1887
      %1889 = vmatmul.f32.gmra.mxu0 %v1766
      %v1890 = vpop.f32.mrf.mxu0
      %v1891 = vadd.f32 0.0, %v1890
      %1892 = vmatmul.f32.gmra.mxu0 %v1769
      %v1893 = vpop.f32.mrf.mxu0
      %v1894 = vadd.f32 0.0, %v1893
      %1895 = vmatmul.f32.gmra.mxu0 %v1772
      %v1896 = vpop.f32.mrf.mxu0
      %v1897 = vadd.f32 0.0, %v1896
      %1898 = vmatmul.f32.gmra.mxu0 %v1775
      %v1899 = vpop.f32.mrf.mxu0
      %v1900 = vadd.f32 0.0, %v1899
      %1901 = vmatmul.f32.gmra.mxu0 %v1778
      %v1902 = vpop.f32.mrf.mxu0
      %v1903 = vadd.f32 0.0, %v1902
      %1904 = vmatmul.f32.gmra.mxu0 %v1781
      %v1905 = vpop.f32.mrf.mxu0
      %v1906 = vadd.f32 0.0, %v1905
      %1907 = vmatmul.f32.gmra.mxu0 %v1784
      %v1908 = vpop.f32.mrf.mxu0
      %v1909 = vadd.f32 0.0, %v1908
      %1910 = vmatmul.f32.gmra.mxu0 %v1787
      %v1911 = vpop.f32.mrf.mxu0
      %v1912 = vadd.f32 0.0, %v1911
      %1913 = vmatmul.f32.gmra.mxu0 %v1790
      %v1914 = vpop.f32.mrf.mxu0
      %v1915 = vadd.f32 0.0, %v1914
      %1916 = vmatmul.f32.gmra.mxu0 %v1793
      %v1917 = vpop.f32.mrf.mxu0
      %v1918 = vadd.f32 0.0, %v1917
      %1919 = vmatmul.f32.gmra.mxu0 %v1796
      %v1920 = vpop.f32.mrf.mxu0
      %v1921 = vadd.f32 0.0, %v1920
      %1922 = vmatmul.f32.gmra.mxu0 %v1799
      %v1923 = vpop.f32.mrf.mxu0
      %v1924 = vadd.f32 0.0, %v1923
      %1925 = vmatmul.f32.gmra.mxu0 %v1802
      %v1926 = vpop.f32.mrf.mxu0
      %v1927 = vadd.f32 0.0, %v1926
      %1928 = vmatmul.f32.gmra.mxu0 %v1805
      %v1929 = vpop.f32.mrf.mxu0
      %v1930 = vadd.f32 0.0, %v1929
      %1931 = vmatmul.f32.gmra.mxu0 %v1808
      %v1932 = vpop.f32.mrf.mxu0
      %v1933 = vadd.f32 0.0, %v1932
      %1934 = vmatmul.f32.gmra.mxu0 %v1811
      %v1935 = vpop.f32.mrf.mxu0
      %v1936 = vadd.f32 0.0, %v1935
      %1937 = vmatmul.f32.gmra.mxu0 %v1814
      %v1938 = vpop.f32.mrf.mxu0
      %v1939 = vadd.f32 0.0, %v1938
      %1940 = vmatmul.f32.gmra.mxu0 %v1817
      %v1941 = vpop.f32.mrf.mxu0
      %v1942 = vadd.f32 0.0, %v1941
      %1943 = vdwg.mxu0
      %v1944 = vadd.f32 %v1626, %v1837
      %v1945 = vadd.f32 %v1627, %v1840
      %v1946 = vadd.f32 %v1628, %v1843
      %v1947 = vadd.f32 %v1629, %v1846
      %v1948 = vadd.f32 %v1630, %v1849
      %v1949 = vadd.f32 %v1631, %v1852
      %v1950 = vadd.f32 %v1632, %v1855
      %v1951 = vadd.f32 %v1633, %v1858
      %v1952 = vadd.f32 %v1634, %v1861
      %v1953 = vadd.f32 %v1635, %v1864
      %v1954 = vadd.f32 %v1636, %v1867
      %v1955 = vadd.f32 %v1637, %v1870
      %v1956 = vadd.f32 %v1638, %v1873
      %v1957 = vadd.f32 %v1639, %v1876
      %v1958 = vadd.f32 %v1640, %v1879
      %v1959 = vadd.f32 %v1641, %v1882
      %v1960 = vadd.f32 %v1642, %v1885
      %v1961 = vadd.f32 %v1643, %v1888
      %v1962 = vadd.f32 %v1644, %v1891
      %v1963 = vadd.f32 %v1645, %v1894
      %v1964 = vadd.f32 %v1646, %v1897
      %v1965 = vadd.f32 %v1647, %v1900
      %v1966 = vadd.f32 %v1648, %v1903
      %v1967 = vadd.f32 %v1649, %v1906
      %v1968 = vadd.f32 %v1650, %v1909
      %v1969 = vadd.f32 %v1651, %v1912
      %v1970 = vadd.f32 %v1652, %v1915
      %v1971 = vadd.f32 %v1653, %v1918
      %v1972 = vadd.f32 %v1654, %v1921
      %v1973 = vadd.f32 %v1655, %v1924
      %v1974 = vadd.f32 %v1656, %v1927
      %v1975 = vadd.f32 %v1657, %v1930
      %v1976 = vadd.f32 %v1658, %v1933
      %v1977 = vadd.f32 %v1659, %v1936
      %v1978 = vadd.f32 %v1660, %v1939
      %v1979 = vadd.f32 %v1661, %v1942
      %v1980 = vld [vmem:[%s138 + $0x24] sm:$0xff]
      %v1981 = vld [vmem:[%s138 + $0x2c] sm:$0xff]
      %v1982 = vld [vmem:[%s138 + $0x34] sm:$0xff]
      %v1983 = vld [vmem:[%s138 + $0x3c] sm:$0xff]
      %v1984 = vld [vmem:[%s138 + $0x44] sm:$0xff]
      %v1985 = vld [vmem:[%s138 + $0x4c] sm:$0xff]
      %v1986 = vld [vmem:[%s138 + $0x54] sm:$0xff]
      %v1987 = vld [vmem:[%s138 + $0x5c] sm:$0xff]
      %v1988 = vld [vmem:[%s138 + $0x64] sm:$0xff]
      %v1989 = vld [vmem:[%s138 + $0x6c] sm:$0xff]
      %v1990 = vld [vmem:[%s138 + $0x74] sm:$0xff]
      %v1991 = vld [vmem:[%s138 + $0x7c] sm:$0xff]
      %v1992 = vld [vmem:[%s138 + $0x84] sm:$0xff]
      %v1993 = vld [vmem:[%s138 + $0x8c] sm:$0xff]
      %v1994 = vld [vmem:[%s138 + $0x94] sm:$0xff]
      %v1995 = vld [vmem:[%s138 + $0x9c] sm:$0xff]
      %v1996 = vld [vmem:[%s138 + $0xa4] sm:$0xff]
      %v1997 = vld [vmem:[%s138 + $0xac] sm:$0xff]
      %v1998 = vld [vmem:[%s138 + $0xb4] sm:$0xff]
      %v1999 = vld [vmem:[%s138 + $0xbc] sm:$0xff]
      %v2000 = vld [vmem:[%s138 + $0xc4] sm:$0xff]
      %v2001 = vld [vmem:[%s138 + $0xcc] sm:$0xff]
      %v2002 = vld [vmem:[%s138 + $0xd4] sm:$0xff]
      %v2003 = vld [vmem:[%s138 + $0xdc] sm:$0xff]
      %v2004 = vld [vmem:[%s138 + $0xe4] sm:$0xff]
      %v2005 = vld [vmem:[%s138 + $0xec] sm:$0xff]
      %v2006 = vld [vmem:[%s138 + $0xf4] sm:$0xff]
      %v2007 = vld [vmem:[%s138 + $0xfc] sm:$0xff]
      %v2008 = vld [vmem:[%s138 + $0x104] sm:$0xff]
      %v2009 = vld [vmem:[%s138 + $0x10c] sm:$0xff]
      %v2010 = vld [vmem:[%s138 + $0x114] sm:$0xff]
      %v2011 = vld [vmem:[%s138 + $0x11c] sm:$0xff]
      %v2012 = vld [vmem:[%s138 + $0x124] sm:$0xff]
      %v2013 = vld [vmem:[%s138 + $0x12c] sm:$0xff]
      %v2014 = vld [vmem:[%s138 + $0x134] sm:$0xff]
      %v2015 = vld [vmem:[%s138 + $0x13c] sm:$0xff]
      %s2016 = scalar_lea.vmem %s1, 576
      %v2017 = vld [vmem:[%s2016] sm:$0xff]
      %v2018 = vld [vmem:[%s2016 + $0x8] sm:$0xff]
      %v2019 = vld [vmem:[%s2016 + $0x10] sm:$0xff]
      %v2020 = vld [vmem:[%s2016 + $0x18] sm:$0xff]
      %v2021 = vld [vmem:[%s2016 + $0x20] sm:$0xff]
      %v2022 = vld [vmem:[%s2016 + $0x28] sm:$0xff]
      %v2023 = vld [vmem:[%s2016 + $0x30] sm:$0xff]
      %v2024 = vld [vmem:[%s2016 + $0x38] sm:$0xff]
      %v2025 = vld [vmem:[%s2016 + $0x40] sm:$0xff]
      %v2026 = vld [vmem:[%s2016 + $0x48] sm:$0xff]
      %v2027 = vld [vmem:[%s2016 + $0x50] sm:$0xff]
      %v2028 = vld [vmem:[%s2016 + $0x58] sm:$0xff]
      %v2030 = vsel %vm241, %v1980, 0
      %v2033 = vsel %vm241, %v1981, 0
      %v2036 = vsel %vm241, %v1982, 0
      %v2039 = vsel %vm241, %v1983, 0
      %v2042 = vsel %vm241, %v1984, 0
      %v2045 = vsel %vm241, %v1985, 0
      %v2048 = vsel %vm241, %v1986, 0
      %v2051 = vsel %vm241, %v1987, 0
      %v2054 = vsel %vm241, %v1988, 0
      %v2057 = vsel %vm241, %v1989, 0
      %v2060 = vsel %vm241, %v1990, 0
      %v2063 = vsel %vm241, %v1991, 0
      %v2066 = vsel %vm241, %v1992, 0
      %v2069 = vsel %vm241, %v1993, 0
      %v2072 = vsel %vm241, %v1994, 0
      %v2075 = vsel %vm241, %v1995, 0
      %v2078 = vsel %vm241, %v1996, 0
      %v2081 = vsel %vm241, %v1997, 0
      %v2084 = vsel %vm241, %v1998, 0
      %v2087 = vsel %vm241, %v1999, 0
      %v2090 = vsel %vm241, %v2000, 0
      %v2093 = vsel %vm241, %v2001, 0
      %v2096 = vsel %vm241, %v2002, 0
      %v2099 = vsel %vm241, %v2003, 0
      %v2102 = vsel %vm241, %v2004, 0
      %v2105 = vsel %vm241, %v2005, 0
      %v2108 = vsel %vm241, %v2006, 0
      %v2111 = vsel %vm241, %v2007, 0
      %v2114 = vsel %vm241, %v2008, 0
      %v2117 = vsel %vm241, %v2009, 0
      %v2120 = vsel %vm241, %v2010, 0
      %v2123 = vsel %vm241, %v2011, 0
      %v2126 = vsel %vm241, %v2012, 0
      %v2129 = vsel %vm241, %v2013, 0
      %v2132 = vsel %vm241, %v2014, 0
      %v2135 = vsel %vm241, %v2015, 0
      %2137 = vmatpush.msra.mxu0 0.0
      %2138 = vmatpush.msra.mxu0 0.0
      %2139 = vmatpush.msra.mxu0 0.0
      %2140 = vmatpush.msra.mxu0 0.0
      %2141 = vmatpush.msra.mxu0 %v2028
      %2142 = vmatpush.msra.mxu0 %v2027
      %2143 = vmatpush.msra.mxu0 %v2026
      %2144 = vmatpush.msra.mxu0 %v2025
      %2145 = vmatpush.msra.mxu0 %v2024
      %2146 = vmatpush.msra.mxu0 %v2023
      %2147 = vmatpush.msra.mxu0 %v2022
      %2148 = vmatpush.msra.mxu0 %v2021
      %2149 = vmatpush.msra.mxu0 %v2020
      %2150 = vmatpush.msra.mxu0 %v2019
      %2151 = vmatpush.msra.mxu0 %v2018
      %2152 = vmatpush.msra.mxu0 %v2017
      %2153 = vmatmul.f32.gmra.mxu0 %v2030
      %v2154 = vpop.f32.mrf.mxu0
      %v2155 = vadd.f32 0.0, %v2154
      %2156 = vmatmul.f32.gmra.mxu0 %v2033
      %v2157 = vpop.f32.mrf.mxu0
      %v2158 = vadd.f32 0.0, %v2157
      %2159 = vmatmul.f32.gmra.mxu0 %v2036
      %v2160 = vpop.f32.mrf.mxu0
      %v2161 = vadd.f32 0.0, %v2160
      %2162 = vmatmul.f32.gmra.mxu0 %v2039
      %v2163 = vpop.f32.mrf.mxu0
      %v2164 = vadd.f32 0.0, %v2163
      %2165 = vmatmul.f32.gmra.mxu0 %v2042
      %v2166 = vpop.f32.mrf.mxu0
      %v2167 = vadd.f32 0.0, %v2166
      %2168 = vmatmul.f32.gmra.mxu0 %v2045
      %v2169 = vpop.f32.mrf.mxu0
      %v2170 = vadd.f32 0.0, %v2169
      %2171 = vmatmul.f32.gmra.mxu0 %v2048
      %v2172 = vpop.f32.mrf.mxu0
      %v2173 = vadd.f32 0.0, %v2172
      %2174 = vmatmul.f32.gmra.mxu0 %v2051
      %v2175 = vpop.f32.mrf.mxu0
      %v2176 = vadd.f32 0.0, %v2175
      %2177 = vmatmul.f32.gmra.mxu0 %v2054
      %v2178 = vpop.f32.mrf.mxu0
      %v2179 = vadd.f32 0.0, %v2178
      %2180 = vmatmul.f32.gmra.mxu0 %v2057
      %v2181 = vpop.f32.mrf.mxu0
      %v2182 = vadd.f32 0.0, %v2181
      %2183 = vmatmul.f32.gmra.mxu0 %v2060
      %v2184 = vpop.f32.mrf.mxu0
      %v2185 = vadd.f32 0.0, %v2184
      %2186 = vmatmul.f32.gmra.mxu0 %v2063
      %v2187 = vpop.f32.mrf.mxu0
      %v2188 = vadd.f32 0.0, %v2187
      %2189 = vmatmul.f32.gmra.mxu0 %v2066
      %v2190 = vpop.f32.mrf.mxu0
      %v2191 = vadd.f32 0.0, %v2190
      %2192 = vmatmul.f32.gmra.mxu0 %v2069
      %v2193 = vpop.f32.mrf.mxu0
      %v2194 = vadd.f32 0.0, %v2193
      %2195 = vmatmul.f32.gmra.mxu0 %v2072
      %v2196 = vpop.f32.mrf.mxu0
      %v2197 = vadd.f32 0.0, %v2196
      %2198 = vmatmul.f32.gmra.mxu0 %v2075
      %v2199 = vpop.f32.mrf.mxu0
      %v2200 = vadd.f32 0.0, %v2199
      %2201 = vmatmul.f32.gmra.mxu0 %v2078
      %v2202 = vpop.f32.mrf.mxu0
      %v2203 = vadd.f32 0.0, %v2202
      %2204 = vmatmul.f32.gmra.mxu0 %v2081
      %v2205 = vpop.f32.mrf.mxu0
      %v2206 = vadd.f32 0.0, %v2205
      %2207 = vmatmul.f32.gmra.mxu0 %v2084
      %v2208 = vpop.f32.mrf.mxu0
      %v2209 = vadd.f32 0.0, %v2208
      %2210 = vmatmul.f32.gmra.mxu0 %v2087
      %v2211 = vpop.f32.mrf.mxu0
      %v2212 = vadd.f32 0.0, %v2211
      %2213 = vmatmul.f32.gmra.mxu0 %v2090
      %v2214 = vpop.f32.mrf.mxu0
      %v2215 = vadd.f32 0.0, %v2214
      %2216 = vmatmul.f32.gmra.mxu0 %v2093
      %v2217 = vpop.f32.mrf.mxu0
      %v2218 = vadd.f32 0.0, %v2217
      %2219 = vmatmul.f32.gmra.mxu0 %v2096
      %v2220 = vpop.f32.mrf.mxu0
      %v2221 = vadd.f32 0.0, %v2220
      %2222 = vmatmul.f32.gmra.mxu0 %v2099
      %v2223 = vpop.f32.mrf.mxu0
      %v2224 = vadd.f32 0.0, %v2223
      %2225 = vmatmul.f32.gmra.mxu0 %v2102
      %v2226 = vpop.f32.mrf.mxu0
      %v2227 = vadd.f32 0.0, %v2226
      %2228 = vmatmul.f32.gmra.mxu0 %v2105
      %v2229 = vpop.f32.mrf.mxu0
      %v2230 = vadd.f32 0.0, %v2229
      %2231 = vmatmul.f32.gmra.mxu0 %v2108
      %v2232 = vpop.f32.mrf.mxu0
      %v2233 = vadd.f32 0.0, %v2232
      %2234 = vmatmul.f32.gmra.mxu0 %v2111
      %v2235 = vpop.f32.mrf.mxu0
      %v2236 = vadd.f32 0.0, %v2235
      %2237 = vmatmul.f32.gmra.mxu0 %v2114
      %v2238 = vpop.f32.mrf.mxu0
      %v2239 = vadd.f32 0.0, %v2238
      %2240 = vmatmul.f32.gmra.mxu0 %v2117
      %v2241 = vpop.f32.mrf.mxu0
      %v2242 = vadd.f32 0.0, %v2241
      %2243 = vmatmul.f32.gmra.mxu0 %v2120
      %v2244 = vpop.f32.mrf.mxu0
      %v2245 = vadd.f32 0.0, %v2244
      %2246 = vmatmul.f32.gmra.mxu0 %v2123
      %v2247 = vpop.f32.mrf.mxu0
      %v2248 = vadd.f32 0.0, %v2247
      %2249 = vmatmul.f32.gmra.mxu0 %v2126
      %v2250 = vpop.f32.mrf.mxu0
      %v2251 = vadd.f32 0.0, %v2250
      %2252 = vmatmul.f32.gmra.mxu0 %v2129
      %v2253 = vpop.f32.mrf.mxu0
      %v2254 = vadd.f32 0.0, %v2253
      %2255 = vmatmul.f32.gmra.mxu0 %v2132
      %v2256 = vpop.f32.mrf.mxu0
      %v2257 = vadd.f32 0.0, %v2256
      %2258 = vmatmul.f32.gmra.mxu0 %v2135
      %v2259 = vpop.f32.mrf.mxu0
      %v2260 = vadd.f32 0.0, %v2259
      %2261 = vdwg.mxu0
      %v2262 = vadd.f32 %v1944, %v2155
      %v2263 = vadd.f32 %v1945, %v2158
      %v2264 = vadd.f32 %v1946, %v2161
      %v2265 = vadd.f32 %v1947, %v2164
      %v2266 = vadd.f32 %v1948, %v2167
      %v2267 = vadd.f32 %v1949, %v2170
      %v2268 = vadd.f32 %v1950, %v2173
      %v2269 = vadd.f32 %v1951, %v2176
      %v2270 = vadd.f32 %v1952, %v2179
      %v2271 = vadd.f32 %v1953, %v2182
      %v2272 = vadd.f32 %v1954, %v2185
      %v2273 = vadd.f32 %v1955, %v2188
      %v2274 = vadd.f32 %v1956, %v2191
      %v2275 = vadd.f32 %v1957, %v2194
      %v2276 = vadd.f32 %v1958, %v2197
      %v2277 = vadd.f32 %v1959, %v2200
      %v2278 = vadd.f32 %v1960, %v2203
      %v2279 = vadd.f32 %v1961, %v2206
      %v2280 = vadd.f32 %v1962, %v2209
      %v2281 = vadd.f32 %v1963, %v2212
      %v2282 = vadd.f32 %v1964, %v2215
      %v2283 = vadd.f32 %v1965, %v2218
      %v2284 = vadd.f32 %v1966, %v2221
      %v2285 = vadd.f32 %v1967, %v2224
      %v2286 = vadd.f32 %v1968, %v2227
      %v2287 = vadd.f32 %v1969, %v2230
      %v2288 = vadd.f32 %v1970, %v2233
      %v2289 = vadd.f32 %v1971, %v2236
      %v2290 = vadd.f32 %v1972, %v2239
      %v2291 = vadd.f32 %v1973, %v2242
      %v2292 = vadd.f32 %v1974, %v2245
      %v2293 = vadd.f32 %v1975, %v2248
      %v2294 = vadd.f32 %v1976, %v2251
      %v2295 = vadd.f32 %v1977, %v2254
      %v2296 = vadd.f32 %v1978, %v2257
      %v2297 = vadd.f32 %v1979, %v2260
      %v2298 = vld [vmem:[%s138 + $0x25] sm:$0xff]
      %v2299 = vld [vmem:[%s138 + $0x2d] sm:$0xff]
      %v2300 = vld [vmem:[%s138 + $0x35] sm:$0xff]
      %v2301 = vld [vmem:[%s138 + $0x3d] sm:$0xff]
      %v2302 = vld [vmem:[%s138 + $0x45] sm:$0xff]
      %v2303 = vld [vmem:[%s138 + $0x4d] sm:$0xff]
      %v2304 = vld [vmem:[%s138 + $0x55] sm:$0xff]
      %v2305 = vld [vmem:[%s138 + $0x5d] sm:$0xff]
      %v2306 = vld [vmem:[%s138 + $0x65] sm:$0xff]
      %v2307 = vld [vmem:[%s138 + $0x6d] sm:$0xff]
      %v2308 = vld [vmem:[%s138 + $0x75] sm:$0xff]
      %v2309 = vld [vmem:[%s138 + $0x7d] sm:$0xff]
      %v2310 = vld [vmem:[%s138 + $0x85] sm:$0xff]
      %v2311 = vld [vmem:[%s138 + $0x8d] sm:$0xff]
      %v2312 = vld [vmem:[%s138 + $0x95] sm:$0xff]
      %v2313 = vld [vmem:[%s138 + $0x9d] sm:$0xff]
      %v2314 = vld [vmem:[%s138 + $0xa5] sm:$0xff]
      %v2315 = vld [vmem:[%s138 + $0xad] sm:$0xff]
      %v2316 = vld [vmem:[%s138 + $0xb5] sm:$0xff]
      %v2317 = vld [vmem:[%s138 + $0xbd] sm:$0xff]
      %v2318 = vld [vmem:[%s138 + $0xc5] sm:$0xff]
      %v2319 = vld [vmem:[%s138 + $0xcd] sm:$0xff]
      %v2320 = vld [vmem:[%s138 + $0xd5] sm:$0xff]
      %v2321 = vld [vmem:[%s138 + $0xdd] sm:$0xff]
      %v2322 = vld [vmem:[%s138 + $0xe5] sm:$0xff]
      %v2323 = vld [vmem:[%s138 + $0xed] sm:$0xff]
      %v2324 = vld [vmem:[%s138 + $0xf5] sm:$0xff]
      %v2325 = vld [vmem:[%s138 + $0xfd] sm:$0xff]
      %v2326 = vld [vmem:[%s138 + $0x105] sm:$0xff]
      %v2327 = vld [vmem:[%s138 + $0x10d] sm:$0xff]
      %v2328 = vld [vmem:[%s138 + $0x115] sm:$0xff]
      %v2329 = vld [vmem:[%s138 + $0x11d] sm:$0xff]
      %v2330 = vld [vmem:[%s138 + $0x125] sm:$0xff]
      %v2331 = vld [vmem:[%s138 + $0x12d] sm:$0xff]
      %v2332 = vld [vmem:[%s138 + $0x135] sm:$0xff]
      %v2333 = vld [vmem:[%s138 + $0x13d] sm:$0xff]
      %s2334 = scalar_lea.vmem %s1, 672
      %v2335 = vld [vmem:[%s2334] sm:$0xff]
      %v2336 = vld [vmem:[%s2334 + $0x8] sm:$0xff]
      %v2337 = vld [vmem:[%s2334 + $0x10] sm:$0xff]
      %v2338 = vld [vmem:[%s2334 + $0x18] sm:$0xff]
      %v2339 = vld [vmem:[%s2334 + $0x20] sm:$0xff]
      %v2340 = vld [vmem:[%s2334 + $0x28] sm:$0xff]
      %v2341 = vld [vmem:[%s2334 + $0x30] sm:$0xff]
      %v2342 = vld [vmem:[%s2334 + $0x38] sm:$0xff]
      %v2343 = vld [vmem:[%s2334 + $0x40] sm:$0xff]
      %v2344 = vld [vmem:[%s2334 + $0x48] sm:$0xff]
      %v2345 = vld [vmem:[%s2334 + $0x50] sm:$0xff]
      %v2346 = vld [vmem:[%s2334 + $0x58] sm:$0xff]
      %v2348 = vsel %vm241, %v2298, 0
      %v2351 = vsel %vm241, %v2299, 0
      %v2354 = vsel %vm241, %v2300, 0
      %v2357 = vsel %vm241, %v2301, 0
      %v2360 = vsel %vm241, %v2302, 0
      %v2363 = vsel %vm241, %v2303, 0
      %v2366 = vsel %vm241, %v2304, 0
      %v2369 = vsel %vm241, %v2305, 0
      %v2372 = vsel %vm241, %v2306, 0
      %v2375 = vsel %vm241, %v2307, 0
      %v2378 = vsel %vm241, %v2308, 0
      %v2381 = vsel %vm241, %v2309, 0
      %v2384 = vsel %vm241, %v2310, 0
      %v2387 = vsel %vm241, %v2311, 0
      %v2390 = vsel %vm241, %v2312, 0
      %v2393 = vsel %vm241, %v2313, 0
      %v2396 = vsel %vm241, %v2314, 0
      %v2399 = vsel %vm241, %v2315, 0
      %v2402 = vsel %vm241, %v2316, 0
      %v2405 = vsel %vm241, %v2317, 0
      %v2408 = vsel %vm241, %v2318, 0
      %v2411 = vsel %vm241, %v2319, 0
      %v2414 = vsel %vm241, %v2320, 0
      %v2417 = vsel %vm241, %v2321, 0
      %v2420 = vsel %vm241, %v2322, 0
      %v2423 = vsel %vm241, %v2323, 0
      %v2426 = vsel %vm241, %v2324, 0
      %v2429 = vsel %vm241, %v2325, 0
      %v2432 = vsel %vm241, %v2326, 0
      %v2435 = vsel %vm241, %v2327, 0
      %v2438 = vsel %vm241, %v2328, 0
      %v2441 = vsel %vm241, %v2329, 0
      %v2444 = vsel %vm241, %v2330, 0
      %v2447 = vsel %vm241, %v2331, 0
      %v2450 = vsel %vm241, %v2332, 0
      %v2453 = vsel %vm241, %v2333, 0
      %2455 = vmatpush.msra.mxu0 0.0
      %2456 = vmatpush.msra.mxu0 0.0
      %2457 = vmatpush.msra.mxu0 0.0
      %2458 = vmatpush.msra.mxu0 0.0
      %2459 = vmatpush.msra.mxu0 %v2346
      %2460 = vmatpush.msra.mxu0 %v2345
      %2461 = vmatpush.msra.mxu0 %v2344
      %2462 = vmatpush.msra.mxu0 %v2343
      %2463 = vmatpush.msra.mxu0 %v2342
      %2464 = vmatpush.msra.mxu0 %v2341
      %2465 = vmatpush.msra.mxu0 %v2340
      %2466 = vmatpush.msra.mxu0 %v2339
      %2467 = vmatpush.msra.mxu0 %v2338
      %2468 = vmatpush.msra.mxu0 %v2337
      %2469 = vmatpush.msra.mxu0 %v2336
      %2470 = vmatpush.msra.mxu0 %v2335
      %2471 = vmatmul.f32.gmra.mxu0 %v2348
      %v2472 = vpop.f32.mrf.mxu0
      %v2473 = vadd.f32 0.0, %v2472
      %2474 = vmatmul.f32.gmra.mxu0 %v2351
      %v2475 = vpop.f32.mrf.mxu0
      %v2476 = vadd.f32 0.0, %v2475
      %2477 = vmatmul.f32.gmra.mxu0 %v2354
      %v2478 = vpop.f32.mrf.mxu0
      %v2479 = vadd.f32 0.0, %v2478
      %2480 = vmatmul.f32.gmra.mxu0 %v2357
      %v2481 = vpop.f32.mrf.mxu0
      %v2482 = vadd.f32 0.0, %v2481
      %2483 = vmatmul.f32.gmra.mxu0 %v2360
      %v2484 = vpop.f32.mrf.mxu0
      %v2485 = vadd.f32 0.0, %v2484
      %2486 = vmatmul.f32.gmra.mxu0 %v2363
      %v2487 = vpop.f32.mrf.mxu0
      %v2488 = vadd.f32 0.0, %v2487
      %2489 = vmatmul.f32.gmra.mxu0 %v2366
      %v2490 = vpop.f32.mrf.mxu0
      %v2491 = vadd.f32 0.0, %v2490
      %2492 = vmatmul.f32.gmra.mxu0 %v2369
      %v2493 = vpop.f32.mrf.mxu0
      %v2494 = vadd.f32 0.0, %v2493
      %2495 = vmatmul.f32.gmra.mxu0 %v2372
      %v2496 = vpop.f32.mrf.mxu0
      %v2497 = vadd.f32 0.0, %v2496
      %2498 = vmatmul.f32.gmra.mxu0 %v2375
      %v2499 = vpop.f32.mrf.mxu0
      %v2500 = vadd.f32 0.0, %v2499
      %2501 = vmatmul.f32.gmra.mxu0 %v2378
      %v2502 = vpop.f32.mrf.mxu0
      %v2503 = vadd.f32 0.0, %v2502
      %2504 = vmatmul.f32.gmra.mxu0 %v2381
      %v2505 = vpop.f32.mrf.mxu0
      %v2506 = vadd.f32 0.0, %v2505
      %2507 = vmatmul.f32.gmra.mxu0 %v2384
      %v2508 = vpop.f32.mrf.mxu0
      %v2509 = vadd.f32 0.0, %v2508
      %2510 = vmatmul.f32.gmra.mxu0 %v2387
      %v2511 = vpop.f32.mrf.mxu0
      %v2512 = vadd.f32 0.0, %v2511
      %2513 = vmatmul.f32.gmra.mxu0 %v2390
      %v2514 = vpop.f32.mrf.mxu0
      %v2515 = vadd.f32 0.0, %v2514
      %2516 = vmatmul.f32.gmra.mxu0 %v2393
      %v2517 = vpop.f32.mrf.mxu0
      %v2518 = vadd.f32 0.0, %v2517
      %2519 = vmatmul.f32.gmra.mxu0 %v2396
      %v2520 = vpop.f32.mrf.mxu0
      %v2521 = vadd.f32 0.0, %v2520
      %2522 = vmatmul.f32.gmra.mxu0 %v2399
      %v2523 = vpop.f32.mrf.mxu0
      %v2524 = vadd.f32 0.0, %v2523
      %2525 = vmatmul.f32.gmra.mxu0 %v2402
      %v2526 = vpop.f32.mrf.mxu0
      %v2527 = vadd.f32 0.0, %v2526
      %2528 = vmatmul.f32.gmra.mxu0 %v2405
      %v2529 = vpop.f32.mrf.mxu0
      %v2530 = vadd.f32 0.0, %v2529
      %2531 = vmatmul.f32.gmra.mxu0 %v2408
      %v2532 = vpop.f32.mrf.mxu0
      %v2533 = vadd.f32 0.0, %v2532
      %2534 = vmatmul.f32.gmra.mxu0 %v2411
      %v2535 = vpop.f32.mrf.mxu0
      %v2536 = vadd.f32 0.0, %v2535
      %2537 = vmatmul.f32.gmra.mxu0 %v2414
      %v2538 = vpop.f32.mrf.mxu0
      %v2539 = vadd.f32 0.0, %v2538
      %2540 = vmatmul.f32.gmra.mxu0 %v2417
      %v2541 = vpop.f32.mrf.mxu0
      %v2542 = vadd.f32 0.0, %v2541
      %2543 = vmatmul.f32.gmra.mxu0 %v2420
      %v2544 = vpop.f32.mrf.mxu0
      %v2545 = vadd.f32 0.0, %v2544
      %2546 = vmatmul.f32.gmra.mxu0 %v2423
      %v2547 = vpop.f32.mrf.mxu0
      %v2548 = vadd.f32 0.0, %v2547
      %2549 = vmatmul.f32.gmra.mxu0 %v2426
      %v2550 = vpop.f32.mrf.mxu0
      %v2551 = vadd.f32 0.0, %v2550
      %2552 = vmatmul.f32.gmra.mxu0 %v2429
      %v2553 = vpop.f32.mrf.mxu0
      %v2554 = vadd.f32 0.0, %v2553
      %2555 = vmatmul.f32.gmra.mxu0 %v2432
      %v2556 = vpop.f32.mrf.mxu0
      %v2557 = vadd.f32 0.0, %v2556
      %2558 = vmatmul.f32.gmra.mxu0 %v2435
      %v2559 = vpop.f32.mrf.mxu0
      %v2560 = vadd.f32 0.0, %v2559
      %2561 = vmatmul.f32.gmra.mxu0 %v2438
      %v2562 = vpop.f32.mrf.mxu0
      %v2563 = vadd.f32 0.0, %v2562
      %2564 = vmatmul.f32.gmra.mxu0 %v2441
      %v2565 = vpop.f32.mrf.mxu0
      %v2566 = vadd.f32 0.0, %v2565
      %2567 = vmatmul.f32.gmra.mxu0 %v2444
      %v2568 = vpop.f32.mrf.mxu0
      %v2569 = vadd.f32 0.0, %v2568
      %2570 = vmatmul.f32.gmra.mxu0 %v2447
      %v2571 = vpop.f32.mrf.mxu0
      %v2572 = vadd.f32 0.0, %v2571
      %2573 = vmatmul.f32.gmra.mxu0 %v2450
      %v2574 = vpop.f32.mrf.mxu0
      %v2575 = vadd.f32 0.0, %v2574
      %2576 = vmatmul.f32.gmra.mxu0 %v2453
      %v2577 = vpop.f32.mrf.mxu0
      %v2578 = vadd.f32 0.0, %v2577
      %2579 = vdwg.mxu0
      %v2580 = vadd.f32 %v2262, %v2473
      %v2581 = vadd.f32 %v2263, %v2476
      %v2582 = vadd.f32 %v2264, %v2479
      %v2583 = vadd.f32 %v2265, %v2482
      %v2584 = vadd.f32 %v2266, %v2485
      %v2585 = vadd.f32 %v2267, %v2488
      %v2586 = vadd.f32 %v2268, %v2491
      %v2587 = vadd.f32 %v2269, %v2494
      %v2588 = vadd.f32 %v2270, %v2497
      %v2589 = vadd.f32 %v2271, %v2500
      %v2590 = vadd.f32 %v2272, %v2503
      %v2591 = vadd.f32 %v2273, %v2506
      %v2592 = vadd.f32 %v2274, %v2509
      %v2593 = vadd.f32 %v2275, %v2512
      %v2594 = vadd.f32 %v2276, %v2515
      %v2595 = vadd.f32 %v2277, %v2518
      %v2596 = vadd.f32 %v2278, %v2521
      %v2597 = vadd.f32 %v2279, %v2524
      %v2598 = vadd.f32 %v2280, %v2527
      %v2599 = vadd.f32 %v2281, %v2530
      %v2600 = vadd.f32 %v2282, %v2533
      %v2601 = vadd.f32 %v2283, %v2536
      %v2602 = vadd.f32 %v2284, %v2539
      %v2603 = vadd.f32 %v2285, %v2542
      %v2604 = vadd.f32 %v2286, %v2545
      %v2605 = vadd.f32 %v2287, %v2548
      %v2606 = vadd.f32 %v2288, %v2551
      %v2607 = vadd.f32 %v2289, %v2554
      %v2608 = vadd.f32 %v2290, %v2557
      %v2609 = vadd.f32 %v2291, %v2560
      %v2610 = vadd.f32 %v2292, %v2563
      %v2611 = vadd.f32 %v2293, %v2566
      %v2612 = vadd.f32 %v2294, %v2569
      %v2613 = vadd.f32 %v2295, %v2572
      %v2614 = vadd.f32 %v2296, %v2575
      %v2615 = vadd.f32 %v2297, %v2578
      %v2616 = vld [vmem:[%s138 + $0x26] sm:$0xff]
      %v2617 = vld [vmem:[%s138 + $0x2e] sm:$0xff]
      %v2618 = vld [vmem:[%s138 + $0x36] sm:$0xff]
      %v2619 = vld [vmem:[%s138 + $0x3e] sm:$0xff]
      %v2620 = vld [vmem:[%s138 + $0x46] sm:$0xff]
      %v2621 = vld [vmem:[%s138 + $0x4e] sm:$0xff]
      %v2622 = vld [vmem:[%s138 + $0x56] sm:$0xff]
      %v2623 = vld [vmem:[%s138 + $0x5e] sm:$0xff]
      %v2624 = vld [vmem:[%s138 + $0x66] sm:$0xff]
      %v2625 = vld [vmem:[%s138 + $0x6e] sm:$0xff]
      %v2626 = vld [vmem:[%s138 + $0x76] sm:$0xff]
      %v2627 = vld [vmem:[%s138 + $0x7e] sm:$0xff]
      %v2628 = vld [vmem:[%s138 + $0x86] sm:$0xff]
      %v2629 = vld [vmem:[%s138 + $0x8e] sm:$0xff]
      %v2630 = vld [vmem:[%s138 + $0x96] sm:$0xff]
      %v2631 = vld [vmem:[%s138 + $0x9e] sm:$0xff]
      %v2632 = vld [vmem:[%s138 + $0xa6] sm:$0xff]
      %v2633 = vld [vmem:[%s138 + $0xae] sm:$0xff]
      %v2634 = vld [vmem:[%s138 + $0xb6] sm:$0xff]
      %v2635 = vld [vmem:[%s138 + $0xbe] sm:$0xff]
      %v2636 = vld [vmem:[%s138 + $0xc6] sm:$0xff]
      %v2637 = vld [vmem:[%s138 + $0xce] sm:$0xff]
      %v2638 = vld [vmem:[%s138 + $0xd6] sm:$0xff]
      %v2639 = vld [vmem:[%s138 + $0xde] sm:$0xff]
      %v2640 = vld [vmem:[%s138 + $0xe6] sm:$0xff]
      %v2641 = vld [vmem:[%s138 + $0xee] sm:$0xff]
      %v2642 = vld [vmem:[%s138 + $0xf6] sm:$0xff]
      %v2643 = vld [vmem:[%s138 + $0xfe] sm:$0xff]
      %v2644 = vld [vmem:[%s138 + $0x106] sm:$0xff]
      %v2645 = vld [vmem:[%s138 + $0x10e] sm:$0xff]
      %v2646 = vld [vmem:[%s138 + $0x116] sm:$0xff]
      %v2647 = vld [vmem:[%s138 + $0x11e] sm:$0xff]
      %v2648 = vld [vmem:[%s138 + $0x126] sm:$0xff]
      %v2649 = vld [vmem:[%s138 + $0x12e] sm:$0xff]
      %v2650 = vld [vmem:[%s138 + $0x136] sm:$0xff]
      %v2651 = vld [vmem:[%s138 + $0x13e] sm:$0xff]
      %s2652 = scalar_lea.vmem %s1, 768
      %v2653 = vld [vmem:[%s2652] sm:$0xff]
      %v2654 = vld [vmem:[%s2652 + $0x8] sm:$0xff]
      %v2655 = vld [vmem:[%s2652 + $0x10] sm:$0xff]
      %v2656 = vld [vmem:[%s2652 + $0x18] sm:$0xff]
      %v2657 = vld [vmem:[%s2652 + $0x20] sm:$0xff]
      %v2658 = vld [vmem:[%s2652 + $0x28] sm:$0xff]
      %v2659 = vld [vmem:[%s2652 + $0x30] sm:$0xff]
      %v2660 = vld [vmem:[%s2652 + $0x38] sm:$0xff]
      %v2661 = vld [vmem:[%s2652 + $0x40] sm:$0xff]
      %v2662 = vld [vmem:[%s2652 + $0x48] sm:$0xff]
      %v2663 = vld [vmem:[%s2652 + $0x50] sm:$0xff]
      %v2664 = vld [vmem:[%s2652 + $0x58] sm:$0xff]
      %v2666 = vsel %vm241, %v2616, 0
      %v2669 = vsel %vm241, %v2617, 0
      %v2672 = vsel %vm241, %v2618, 0
      %v2675 = vsel %vm241, %v2619, 0
      %v2678 = vsel %vm241, %v2620, 0
      %v2681 = vsel %vm241, %v2621, 0
      %v2684 = vsel %vm241, %v2622, 0
      %v2687 = vsel %vm241, %v2623, 0
      %v2690 = vsel %vm241, %v2624, 0
      %v2693 = vsel %vm241, %v2625, 0
      %v2696 = vsel %vm241, %v2626, 0
      %v2699 = vsel %vm241, %v2627, 0
      %v2702 = vsel %vm241, %v2628, 0
      %v2705 = vsel %vm241, %v2629, 0
      %v2708 = vsel %vm241, %v2630, 0
      %v2711 = vsel %vm241, %v2631, 0
      %v2714 = vsel %vm241, %v2632, 0
      %v2717 = vsel %vm241, %v2633, 0
      %v2720 = vsel %vm241, %v2634, 0
      %v2723 = vsel %vm241, %v2635, 0
      %v2726 = vsel %vm241, %v2636, 0
      %v2729 = vsel %vm241, %v2637, 0
      %v2732 = vsel %vm241, %v2638, 0
      %v2735 = vsel %vm241, %v2639, 0
      %v2738 = vsel %vm241, %v2640, 0
      %v2741 = vsel %vm241, %v2641, 0
      %v2744 = vsel %vm241, %v2642, 0
      %v2747 = vsel %vm241, %v2643, 0
      %v2750 = vsel %vm241, %v2644, 0
      %v2753 = vsel %vm241, %v2645, 0
      %v2756 = vsel %vm241, %v2646, 0
      %v2759 = vsel %vm241, %v2647, 0
      %v2762 = vsel %vm241, %v2648, 0
      %v2765 = vsel %vm241, %v2649, 0
      %v2768 = vsel %vm241, %v2650, 0
      %v2771 = vsel %vm241, %v2651, 0
      %2773 = vmatpush.msra.mxu0 0.0
      %2774 = vmatpush.msra.mxu0 0.0
      %2775 = vmatpush.msra.mxu0 0.0
      %2776 = vmatpush.msra.mxu0 0.0
      %2777 = vmatpush.msra.mxu0 %v2664
      %2778 = vmatpush.msra.mxu0 %v2663
      %2779 = vmatpush.msra.mxu0 %v2662
      %2780 = vmatpush.msra.mxu0 %v2661
      %2781 = vmatpush.msra.mxu0 %v2660
      %2782 = vmatpush.msra.mxu0 %v2659
      %2783 = vmatpush.msra.mxu0 %v2658
      %2784 = vmatpush.msra.mxu0 %v2657
      %2785 = vmatpush.msra.mxu0 %v2656
      %2786 = vmatpush.msra.mxu0 %v2655
      %2787 = vmatpush.msra.mxu0 %v2654
      %2788 = vmatpush.msra.mxu0 %v2653
      %2789 = vmatmul.f32.gmra.mxu0 %v2666
      %v2790 = vpop.f32.mrf.mxu0
      %v2791 = vadd.f32 0.0, %v2790
      %2792 = vmatmul.f32.gmra.mxu0 %v2669
      %v2793 = vpop.f32.mrf.mxu0
      %v2794 = vadd.f32 0.0, %v2793
      %2795 = vmatmul.f32.gmra.mxu0 %v2672
      %v2796 = vpop.f32.mrf.mxu0
      %v2797 = vadd.f32 0.0, %v2796
      %2798 = vmatmul.f32.gmra.mxu0 %v2675
      %v2799 = vpop.f32.mrf.mxu0
      %v2800 = vadd.f32 0.0, %v2799
      %2801 = vmatmul.f32.gmra.mxu0 %v2678
      %v2802 = vpop.f32.mrf.mxu0
      %v2803 = vadd.f32 0.0, %v2802
      %2804 = vmatmul.f32.gmra.mxu0 %v2681
      %v2805 = vpop.f32.mrf.mxu0
      %v2806 = vadd.f32 0.0, %v2805
      %2807 = vmatmul.f32.gmra.mxu0 %v2684
      %v2808 = vpop.f32.mrf.mxu0
      %v2809 = vadd.f32 0.0, %v2808
      %2810 = vmatmul.f32.gmra.mxu0 %v2687
      %v2811 = vpop.f32.mrf.mxu0
      %v2812 = vadd.f32 0.0, %v2811
      %2813 = vmatmul.f32.gmra.mxu0 %v2690
      %v2814 = vpop.f32.mrf.mxu0
      %v2815 = vadd.f32 0.0, %v2814
      %2816 = vmatmul.f32.gmra.mxu0 %v2693
      %v2817 = vpop.f32.mrf.mxu0
      %v2818 = vadd.f32 0.0, %v2817
      %2819 = vmatmul.f32.gmra.mxu0 %v2696
      %v2820 = vpop.f32.mrf.mxu0
      %v2821 = vadd.f32 0.0, %v2820
      %2822 = vmatmul.f32.gmra.mxu0 %v2699
      %v2823 = vpop.f32.mrf.mxu0
      %v2824 = vadd.f32 0.0, %v2823
      %2825 = vmatmul.f32.gmra.mxu0 %v2702
      %v2826 = vpop.f32.mrf.mxu0
      %v2827 = vadd.f32 0.0, %v2826
      %2828 = vmatmul.f32.gmra.mxu0 %v2705
      %v2829 = vpop.f32.mrf.mxu0
      %v2830 = vadd.f32 0.0, %v2829
      %2831 = vmatmul.f32.gmra.mxu0 %v2708
      %v2832 = vpop.f32.mrf.mxu0
      %v2833 = vadd.f32 0.0, %v2832
      %2834 = vmatmul.f32.gmra.mxu0 %v2711
      %v2835 = vpop.f32.mrf.mxu0
      %v2836 = vadd.f32 0.0, %v2835
      %2837 = vmatmul.f32.gmra.mxu0 %v2714
      %v2838 = vpop.f32.mrf.mxu0
      %v2839 = vadd.f32 0.0, %v2838
      %2840 = vmatmul.f32.gmra.mxu0 %v2717
      %v2841 = vpop.f32.mrf.mxu0
      %v2842 = vadd.f32 0.0, %v2841
      %2843 = vmatmul.f32.gmra.mxu0 %v2720
      %v2844 = vpop.f32.mrf.mxu0
      %v2845 = vadd.f32 0.0, %v2844
      %2846 = vmatmul.f32.gmra.mxu0 %v2723
      %v2847 = vpop.f32.mrf.mxu0
      %v2848 = vadd.f32 0.0, %v2847
      %2849 = vmatmul.f32.gmra.mxu0 %v2726
      %v2850 = vpop.f32.mrf.mxu0
      %v2851 = vadd.f32 0.0, %v2850
      %2852 = vmatmul.f32.gmra.mxu0 %v2729
      %v2853 = vpop.f32.mrf.mxu0
      %v2854 = vadd.f32 0.0, %v2853
      %2855 = vmatmul.f32.gmra.mxu0 %v2732
      %v2856 = vpop.f32.mrf.mxu0
      %v2857 = vadd.f32 0.0, %v2856
      %2858 = vmatmul.f32.gmra.mxu0 %v2735
      %v2859 = vpop.f32.mrf.mxu0
      %v2860 = vadd.f32 0.0, %v2859
      %2861 = vmatmul.f32.gmra.mxu0 %v2738
      %v2862 = vpop.f32.mrf.mxu0
      %v2863 = vadd.f32 0.0, %v2862
      %2864 = vmatmul.f32.gmra.mxu0 %v2741
      %v2865 = vpop.f32.mrf.mxu0
      %v2866 = vadd.f32 0.0, %v2865
      %2867 = vmatmul.f32.gmra.mxu0 %v2744
      %v2868 = vpop.f32.mrf.mxu0
      %v2869 = vadd.f32 0.0, %v2868
      %2870 = vmatmul.f32.gmra.mxu0 %v2747
      %v2871 = vpop.f32.mrf.mxu0
      %v2872 = vadd.f32 0.0, %v2871
      %2873 = vmatmul.f32.gmra.mxu0 %v2750
      %v2874 = vpop.f32.mrf.mxu0
      %v2875 = vadd.f32 0.0, %v2874
      %2876 = vmatmul.f32.gmra.mxu0 %v2753
      %v2877 = vpop.f32.mrf.mxu0
      %v2878 = vadd.f32 0.0, %v2877
      %2879 = vmatmul.f32.gmra.mxu0 %v2756
      %v2880 = vpop.f32.mrf.mxu0
      %v2881 = vadd.f32 0.0, %v2880
      %2882 = vmatmul.f32.gmra.mxu0 %v2759
      %v2883 = vpop.f32.mrf.mxu0
      %v2884 = vadd.f32 0.0, %v2883
      %2885 = vmatmul.f32.gmra.mxu0 %v2762
      %v2886 = vpop.f32.mrf.mxu0
      %v2887 = vadd.f32 0.0, %v2886
      %2888 = vmatmul.f32.gmra.mxu0 %v2765
      %v2889 = vpop.f32.mrf.mxu0
      %v2890 = vadd.f32 0.0, %v2889
      %2891 = vmatmul.f32.gmra.mxu0 %v2768
      %v2892 = vpop.f32.mrf.mxu0
      %v2893 = vadd.f32 0.0, %v2892
      %2894 = vmatmul.f32.gmra.mxu0 %v2771
      %v2895 = vpop.f32.mrf.mxu0
      %v2896 = vadd.f32 0.0, %v2895
      %2897 = vdwg.mxu0
      %v2898 = vadd.f32 %v2580, %v2791
      %v2899 = vadd.f32 %v2581, %v2794
      %v2900 = vadd.f32 %v2582, %v2797
      %v2901 = vadd.f32 %v2583, %v2800
      %v2902 = vadd.f32 %v2584, %v2803
      %v2903 = vadd.f32 %v2585, %v2806
      %v2904 = vadd.f32 %v2586, %v2809
      %v2905 = vadd.f32 %v2587, %v2812
      %v2906 = vadd.f32 %v2588, %v2815
      %v2907 = vadd.f32 %v2589, %v2818
      %v2908 = vadd.f32 %v2590, %v2821
      %v2909 = vadd.f32 %v2591, %v2824
      %v2910 = vadd.f32 %v2592, %v2827
      %v2911 = vadd.f32 %v2593, %v2830
      %v2912 = vadd.f32 %v2594, %v2833
      %v2913 = vadd.f32 %v2595, %v2836
      %v2914 = vadd.f32 %v2596, %v2839
      %v2915 = vadd.f32 %v2597, %v2842
      %v2916 = vadd.f32 %v2598, %v2845
      %v2917 = vadd.f32 %v2599, %v2848
      %v2918 = vadd.f32 %v2600, %v2851
      %v2919 = vadd.f32 %v2601, %v2854
      %v2920 = vadd.f32 %v2602, %v2857
      %v2921 = vadd.f32 %v2603, %v2860
      %v2922 = vadd.f32 %v2604, %v2863
      %v2923 = vadd.f32 %v2605, %v2866
      %v2924 = vadd.f32 %v2606, %v2869
      %v2925 = vadd.f32 %v2607, %v2872
      %v2926 = vadd.f32 %v2608, %v2875
      %v2927 = vadd.f32 %v2609, %v2878
      %v2928 = vadd.f32 %v2610, %v2881
      %v2929 = vadd.f32 %v2611, %v2884
      %v2930 = vadd.f32 %v2612, %v2887
      %v2931 = vadd.f32 %v2613, %v2890
      %v2932 = vadd.f32 %v2614, %v2893
      %v2933 = vadd.f32 %v2615, %v2896
      %v2934 = vmax.f32 %v2898, 0.0
      %v2935 = vmax.f32 %v2899, 0.0
      %v2936 = vmax.f32 %v2900, 0.0
      %v2937 = vmax.f32 %v2901, 0.0
      %v2938 = vmax.f32 %v2902, 0.0
      %v2939 = vmax.f32 %v2903, 0.0
      %v2940 = vmax.f32 %v2904, 0.0
      %v2941 = vmax.f32 %v2905, 0.0
      %v2942 = vmax.f32 %v2906, 0.0
      %v2943 = vmax.f32 %v2907, 0.0
      %v2944 = vmax.f32 %v2908, 0.0
      %v2945 = vmax.f32 %v2909, 0.0
      %v2946 = vmax.f32 %v2910, 0.0
      %v2947 = vmax.f32 %v2911, 0.0
      %v2948 = vmax.f32 %v2912, 0.0
      %v2949 = vmax.f32 %v2913, 0.0
      %v2950 = vmax.f32 %v2914, 0.0
      %v2951 = vmax.f32 %v2915, 0.0
      %v2952 = vmax.f32 %v2916, 0.0
      %v2953 = vmax.f32 %v2917, 0.0
      %v2954 = vmax.f32 %v2918, 0.0
      %v2955 = vmax.f32 %v2919, 0.0
      %v2956 = vmax.f32 %v2920, 0.0
      %v2957 = vmax.f32 %v2921, 0.0
      %v2958 = vmax.f32 %v2922, 0.0
      %v2959 = vmax.f32 %v2923, 0.0
      %v2960 = vmax.f32 %v2924, 0.0
      %v2961 = vmax.f32 %v2925, 0.0
      %v2962 = vmax.f32 %v2926, 0.0
      %v2963 = vmax.f32 %v2927, 0.0
      %v2964 = vmax.f32 %v2928, 0.0
      %v2965 = vmax.f32 %v2929, 0.0
      %v2966 = vmax.f32 %v2930, 0.0
      %v2967 = vmax.f32 %v2931, 0.0
      %v2968 = vmax.f32 %v2932, 0.0
      %v2969 = vmax.f32 %v2933, 0.0
      %2970 = vst.msk [vmem:[%s143] sm:$0xff] %vm241, %v2934
      %2971 = vst.msk [vmem:[%s143 + $0x8] sm:$0xff] %vm241, %v2935
      %2972 = vst.msk [vmem:[%s143 + $0x10] sm:$0xff] %vm241, %v2936
      %2973 = vst.msk [vmem:[%s143 + $0x18] sm:$0xff] %vm241, %v2937
      %2974 = vst.msk [vmem:[%s143 + $0x20] sm:$0xff] %vm241, %v2938
      %2975 = vst.msk [vmem:[%s143 + $0x28] sm:$0xff] %vm241, %v2939
      %2976 = vst.msk [vmem:[%s143 + $0x30] sm:$0xff] %vm241, %v2940
      %2977 = vst.msk [vmem:[%s143 + $0x38] sm:$0xff] %vm241, %v2941
      %2978 = vst.msk [vmem:[%s143 + $0x40] sm:$0xff] %vm241, %v2942
      %2979 = vst.msk [vmem:[%s143 + $0x48] sm:$0xff] %vm241, %v2943
      %2980 = vst.msk [vmem:[%s143 + $0x50] sm:$0xff] %vm241, %v2944
      %2981 = vst.msk [vmem:[%s143 + $0x58] sm:$0xff] %vm241, %v2945
      %2982 = vst.msk [vmem:[%s143 + $0x60] sm:$0xff] %vm241, %v2946
      %2983 = vst.msk [vmem:[%s143 + $0x68] sm:$0xff] %vm241, %v2947
      %2984 = vst.msk [vmem:[%s143 + $0x70] sm:$0xff] %vm241, %v2948
      %2985 = vst.msk [vmem:[%s143 + $0x78] sm:$0xff] %vm241, %v2949
      %2986 = vst.msk [vmem:[%s143 + $0x80] sm:$0xff] %vm241, %v2950
      %2987 = vst.msk [vmem:[%s143 + $0x88] sm:$0xff] %vm241, %v2951
      %2988 = vst.msk [vmem:[%s143 + $0x90] sm:$0xff] %vm241, %v2952
      %2989 = vst.msk [vmem:[%s143 + $0x98] sm:$0xff] %vm241, %v2953
      %2990 = vst.msk [vmem:[%s143 + $0xa0] sm:$0xff] %vm241, %v2954
      %2991 = vst.msk [vmem:[%s143 + $0xa8] sm:$0xff] %vm241, %v2955
      %2992 = vst.msk [vmem:[%s143 + $0xb0] sm:$0xff] %vm241, %v2956
      %2993 = vst.msk [vmem:[%s143 + $0xb8] sm:$0xff] %vm241, %v2957
      %2994 = vst.msk [vmem:[%s143 + $0xc0] sm:$0xff] %vm241, %v2958
      %2995 = vst.msk [vmem:[%s143 + $0xc8] sm:$0xff] %vm241, %v2959
      %2996 = vst.msk [vmem:[%s143 + $0xd0] sm:$0xff] %vm241, %v2960
      %2997 = vst.msk [vmem:[%s143 + $0xd8] sm:$0xff] %vm241, %v2961
      %2998 = vst.msk [vmem:[%s143 + $0xe0] sm:$0xff] %vm241, %v2962
      %2999 = vst.msk [vmem:[%s143 + $0xe8] sm:$0xff] %vm241, %v2963
      %3000 = vst.msk [vmem:[%s143 + $0xf0] sm:$0xff] %vm241, %v2964
      %3001 = vst.msk [vmem:[%s143 + $0xf8] sm:$0xff] %vm241, %v2965
      %3002 = vst.msk [vmem:[%s143 + $0x100] sm:$0xff] %vm241, %v2966
      %3003 = vst.msk [vmem:[%s143 + $0x108] sm:$0xff] %vm241, %v2967
      %3004 = vst.msk [vmem:[%s143 + $0x110] sm:$0xff] %vm241, %v2968
      %3005 = vst.msk [vmem:[%s143 + $0x118] sm:$0xff] %vm241, %v2969
      %p3006 = scmp.lt.s32.totalorder %s13, 1
      %s3007 = scalar_select %p3006, %s13, 1
      %s3008 = smul.addr %s3007, 36
      %s3009 = smul.addr %s3008, 8
      %s3010 = scalar_lea.vmem %s2, %s3009
      // Predicated region
      $region29: #{inception_d_forward.8} parent=27 // pred_check
        %p3011 = pneg %p78
      $region30: #{inception_d_forward.8} parent=27 // pred_check_branch
        %3013 = sbr.rel (%p3011) target = $region32
      $region31: #{inception_d_forward.8} parent=27 // pred_region
        _
      $region32: #{inception_d_forward.8} parent=27 // pred_fallthru
        _
    $region28: #{inception_d_forward.8} parent=5 // pred_fallthru
      _
    %p3014 = scmp.le.s32.totalorder 2, %s8
    // Predicated region
    $region33: #{inception_d_forward.8} parent=5 // pred_check
      %p3015 = pneg %p3014
    $region34: #{inception_d_forward.8} parent=5 // pred_check_branch
      %3017 = sbr.rel (%p3015) target = $region36
    $region35: #{inception_d_forward.8} parent=5 // pred_region
      %s3018 = ssub.s32 %s8, 2
      // Predicated region
      $region37: #{inception_d_forward.8} parent=35 // pred_check
        %p3019 = pneg %p84
      $region38: #{inception_d_forward.8} parent=35 // pred_check_branch
        %3021 = sbr.rel (%p3019) target = $region40
      $region39: #{inception_d_forward.8} parent=35 // pred_region
        %p3022 = scmp.lt.s32.totalorder %s14, 1
        %s3023 = scalar_select %p3022, %s14, 1
        %s3024 = smul.addr %s3023, 36
        %s3025 = smul.addr %s3024, 8
        %s3026 = scalar_lea.vmem %s2, %s3025
      $region40: #{inception_d_forward.8} parent=35 // pred_fallthru
        _
    $region36: #{inception_d_forward.8} parent=5 // pred_fallthru
      _
  $region6: #{inception_d_forward.8} parent=0 // loop_footer
    %s12 = sadd.s32 1, %s8
  $region7: #{inception_d_forward.8} parent=0 // loop_footer_branch
    %7 = sbr.rel target = $region3
  $region8: #{inception_d_forward.8} parent=0 // loop_exit
    _

</llo_original>
